<compile_context>
chip_gen: v5e
topology: v5e:2x2
jax: 0.10.0
libtpu: 0.0.40
codegen_flags: <defaults>
</compile_context>

<pallas_src>
import functools

import jax
import jax.numpy as jnp
import numpy as np
from jax import lax
from jax.experimental import pallas as pl
from jax.experimental.pallas import tpu as pltpu

D = 4              # spatial dimension d
F = D + 1          # input features: d spatial + 1 time
PAD = 128          # lane width of the fused hidden layers
K0 = 8             # layer-0 contraction width (x padded 5 -> 8 lanes)
HM = 50            # N_main hidden width  (lanes 0..HM-1)
HG = 20            # N_gamma hidden width (lanes GOFF..GOFF+HG-1)
GOFF = 64          # lane offset of the gamma block
N_LAYERS = 5       # packed layer count (layers 0..3 fused, layer 4 = main head)
TM_DEFAULT = 1024  # batch tile

MAIN_DIMS = [F] + 4 * [HM] + [F]     # [5, 50, 50, 50, 50, 5]
GAMMA_DIMS = [F] + 3 * [HG] + [D]    # [5, 20, 20, 20, 4]


def hcnn_kernel(x_ref, w_ref, b_ref, out_ref):
    """One batch tile of the HCNN forward pass.

    x_ref  : (tm, F)            f32  narrow input  [x_0..x_{d-1}, t]
    w_ref  : (5, 128, 128)      bf16 fused block-diagonal weights
    b_ref  : (5, 1, 128)        f32  fused biases
    out_ref: (tm, F)            f32  [HCC_T, HCC_p_0 .. HCC_p_{d-1}]

    NOTE: on a partial last tile the out-of-range rows hold garbage; exp/rsqrt
    on them may produce inf/NaN, but those rows are never stored (masked vst).
    Do not hoist those values out of this kernel.
    """
    x_n = x_ref[...]                                   # (tm, F) f32
    tm = x_n.shape[0]

    # Pad x to 8 lanes only (layer-0 K dim).  No 128-lane widening.
    x8 = jnp.concatenate(
        [x_n, jnp.zeros((tm, K0 - F), jnp.float32)], axis=1)        # (tm, 8)
    col8 = lax.broadcasted_iota(jnp.int32, (tm, K0), 1)
    xs8 = jnp.where(col8 < D, x8, 0.0)                 # spatial lanes only

    # ---- fused MLPs: bf16 MXU matmuls, f32 accumulation ------------------------
    # layer 0: narrow contraction K=8
    z = jnp.dot(x8.astype(jnp.bfloat16), w_ref[0, :K0, :],
                preferred_element_type=jnp.float32) + b_ref[0]      # (tm, 128)
    h = jnp.tanh(z).astype(jnp.bfloat16)
    for l in range(1, N_LAYERS - 1):                   # layers 1..3
        z = jnp.dot(h, w_ref[l], preferred_element_type=jnp.float32) + b_ref[l]
        if l < N_LAYERS - 2:
            h = jnp.tanh(z).astype(jnp.bfloat16)
    z3 = z                                             # lanes 64..67 = gamma output (linear head)

    # gamma lanes of h3 only multiply zero weight rows in layer 4, so a plain
    # full-width tanh is fine (no lane-masked select needed).
    h3 = jnp.tanh(z3).astype(jnp.bfloat16)
    main_out = jnp.dot(h3, w_ref[N_LAYERS - 1],
                       preferred_element_type=jnp.float32) + b_ref[N_LAYERS - 1]

    # gamma output -> lanes 0..3 of an 8-lane slab (lanes 4..7 are exact zeros
    # because weight/bias columns 68.. of layer 3 are zero).
    gamma8 = pltpu.roll(z3, shift=PAD - GOFF, axis=1)[:, :K0]        # (tm, 8) f32

    # ---- per-row scalars: narrow 8-lane reductions, (tm,1) math -----------------
    sq_norm = jnp.sum(xs8 * xs8, axis=1, keepdims=True)              # ||x_{:d}||^2
    t = jnp.sum(jnp.where(col8 == D, x8, 0.0), axis=1, keepdims=True)  # time column

    u_ref = jnp.exp(0.5 * sq_norm + t)                 # reference_solution_pt(x)
    time_factor = jnp.exp(-10.0 * t)
    dist = 1.0 - sq_norm                               # dist_sphere(x)

    # ---- hc_gamma.get_p_i(x, i): Neumann hard-constraint boundary extension ----
    # TODO(synk): HardConstraintNeumannND / NormalFunctionSphere sources were not
    # provided; implemented as the standard unified-HC Neumann extension
    #   p~ = M + (du_ref/dn - M.n) n,  n = x/||x|| (outer sphere normal),
    # with closed-form du_ref/dn = ||x|| * u_ref.
    inv_norm = lax.rsqrt(jnp.maximum(sq_norm, 1e-24))  # EUP rsqrt, no divide
    norm = sq_norm * inv_norm
    n_vec8 = xs8 * inv_norm                            # (tm, 8), lanes 0..D-1
    m_dot_n = jnp.sum(gamma8 * n_vec8, axis=1, keepdims=True)
    p8 = gamma8 + (norm * u_ref - m_dot_n) * n_vec8    # fused single FMA pass

    # ---- HCC_T / HCC_p_i, assembled narrow and stored narrow -------------------
    hcc_T = main_out[:, 0:1] * (1.0 - time_factor) + u_ref * time_factor  # (tm, 1)
    hcc_p = main_out[:, 1:F] * dist + p8[:, :D]                           # (tm, D)
    out_ref[...] = jnp.concatenate([hcc_T, hcc_p], axis=1)                # (tm, F)


def _round8(v):
    return max(8, ((v + 7) // 8) * 8)


@functools.partial(jax.jit, static_argnames=("tm",))
def hcnn_forward(x, w_packed, b_packed, tm=TM_DEFAULT):
    """x: (n, d+1) f32 -> (n, d+1) f32 = [HCC_T, HCC_p_0..HCC_p_{d-1}]."""
    n = x.shape[0]
    if n < 2 * tm:
        if n >= 1024:
            # keep at least 2 grid blocks so both v7x TensorCores get work
            tm = _round8((n + 1) // 2)
        else:
            tm = _round8(min(n, tm))
    grid = (pl.cdiv(n, tm),)                     # partial last tile is masked

    cost = pl.CostEstimate(
        flops=2 * N_LAYERS * PAD * PAD * n,
        transcendentals=(4 * PAD + 3) * n,       # 4 tanh layers + 2 exp + 1 rsqrt per row
        bytes_accessed=2 * 4 * F * n + N_LAYERS * PAD * PAD * 2 + N_LAYERS * PAD * 4,
    )

    return pl.pallas_call(
        hcnn_kernel,
        out_shape=jax.ShapeDtypeStruct((n, F), jnp.float32),
        grid=grid,
        in_specs=[
            pl.BlockSpec((tm, F), lambda i: (i, 0)),
            pl.BlockSpec((N_LAYERS, PAD, PAD), lambda i: (0, 0, 0)),
            pl.BlockSpec((N_LAYERS, 1, PAD), lambda i: (0, 0, 0)),
        ],
        out_specs=pl.BlockSpec((tm, F), lambda i: (i, 0)),
        compiler_params=pltpu.CompilerParams(
            dimension_semantics=("parallel",),
            vmem_limit_bytes=32 * 1024 * 1024),
        cost_estimate=cost,
    )(x, w_packed, b_packed)


# ----------------------------- parameters -------------------------------------
def build_params(key):
    """Deterministic Glorot-normal weights, zero biases (deepxde FNN defaults)."""
    def glorot(k, fan_in, fan_out):
        std = np.sqrt(2.0 / (fan_in + fan_out))
        return jax.random.normal(k, (fan_in, fan_out), jnp.float32) * std

    n_w = (len(MAIN_DIMS) - 1) + (len(GAMMA_DIMS) - 1)
    keys = jax.random.split(key, n_w)
    Wm = [glorot(keys[i], MAIN_DIMS[i], MAIN_DIMS[i + 1])
          for i in range(len(MAIN_DIMS) - 1)]
    bm = [jnp.zeros((MAIN_DIMS[i + 1],), jnp.float32)
          for i in range(len(MAIN_DIMS) - 1)]
    off = len(MAIN_DIMS) - 1
    Wg = [glorot(keys[off + i], GAMMA_DIMS[i], GAMMA_DIMS[i + 1])
          for i in range(len(GAMMA_DIMS) - 1)]
    bg = [jnp.zeros((GAMMA_DIMS[i + 1],), jnp.float32)
          for i in range(len(GAMMA_DIMS) - 1)]
    return Wm, bm, Wg, bg


def pack_params(Wm, bm, Wg, bg):
    """Pack N_main + N_gamma block-diagonally into (5,128,128) bf16 / (5,1,128) f32."""
    w = np.zeros((N_LAYERS, PAD, PAD), np.float32)
    b = np.zeros((N_LAYERS, 1, PAD), np.float32)
    for l in range(N_LAYERS - 1):                 # fused layers 0..3
        wm = np.asarray(Wm[l])
        w[l, :wm.shape[0], :wm.shape[1]] = wm
        b[l, 0, :np.asarray(bm[l]).shape[0]] = np.asarray(bm[l])
        wg = np.asarray(Wg[l])
        r0 = 0 if l == 0 else GOFF                # layer 0 reads x; later layers read gamma block
        w[l, r0:r0 + wg.shape[0], GOFF:GOFF + wg.shape[1]] = wg
        b[l, 0, GOFF:GOFF + np.asarray(bg[l]).shape[0]] = np.asarray(bg[l])
    wm = np.asarray(Wm[N_LAYERS - 1])             # layer 4: main output head only
    w[N_LAYERS - 1, :wm.shape[0], :wm.shape[1]] = wm
    b[N_LAYERS - 1, 0, :np.asarray(bm[-1]).shape[0]] = np.asarray(bm[-1])
    return jnp.asarray(w, dtype=jnp.bfloat16), jnp.asarray(b, dtype=jnp.float32)


# ----------------------------- pure-JAX reference ------------------------------
def ref_forward(x, Wm, bm, Wg, bg):
    """Pure-f32 JAX reference mirroring the PyTorch forward()."""
    def fnn(h, Ws, bs):
        for i, (W, b) in enumerate(zip(Ws, bs)):
            h = h @ W + b
            if i < len(Ws) - 1:
                h = jnp.tanh(h)
        return h

    main = fnn(x, Wm, bm)
    gam = fnn(x, Wg, bg)
    xs, t = x[:, :D], x[:, D:D + 1]
    sq = jnp.sum(xs ** 2, axis=1, keepdims=True)
    u_ref = jnp.exp(0.5 * sq + t)
    tf = jnp.exp(-10.0 * t)
    hcc_T = main[:, 0:1] * (1.0 - tf) + u_ref * tf
    dist = 1.0 - sq
    norm = jnp.sqrt(sq)
    nvec = xs / jnp.maximum(norm, 1e-12)
    mdotn = jnp.sum(gam * nvec, axis=1, keepdims=True)
    p = gam - mdotn * nvec + (norm * u_ref) * nvec
    hcc_p = main[:, 1:D + 1] * dist + p
    return jnp.concatenate([hcc_T, hcc_p], axis=1)


if __name__ == "__main__":
    key = jax.random.PRNGKey(0)
    kx, kt, kp = jax.random.split(key, 3)

    N = 2048                                                 # grid = 2 tiles of 1024
    xs = jax.random.normal(kx, (N, D), jnp.float32) * 0.5    # points near unit ball
    t = jax.random.uniform(kt, (N, 1), jnp.float32)          # time in [0, 1)
    x = jnp.concatenate([xs, t], axis=1)                      # (N, d+1)

    Wm, bm, Wg, bg = build_params(kp)
    w_packed, b_packed = pack_params(Wm, bm, Wg, bg)

    out = hcnn_forward(x, w_packed, b_packed)
    out = jax.block_until_ready(out)

    assert out.shape == (N, F)
    ref = ref_forward(x, Wm, bm, Wg, bg)
    # bf16 matmuls / bf16 activations (f32 accumulate) vs pure-f32 reference.
    np.testing.assert_allclose(np.asarray(out), np.asarray(ref), rtol=2e-2, atol=2e-2)
    print("KERNEL_OK")
</pallas_src>

<mosaic_0001>
module attributes {stable_mosaic.version = 11 : i64} {
  func.func @hcnn_kernel(%arg0: i32, %arg1: memref<1024x5xf32, #tpu.memory_space<vmem>>, %arg2: memref<5x128x128xbf16, #tpu.memory_space<vmem>>, %arg3: memref<5x1x128xf32, #tpu.memory_space<vmem>>, %arg4: memref<1024x5xf32, #tpu.memory_space<vmem>>) attributes {dimension_semantics = [#tpu.dimension_semantics<parallel>], iteration_bounds = array<i64: 2>, scalar_prefetch = 0 : i64, scratch_operands = 0 : i64, tpu.core_type = #tpu.core_type<tc>, window_params = [{transform_indices = @transform_0, window_bounds = array<i64: 1024, 5>}, {pipeline_mode = #tpu.pipeline_mode<synchronous>, transform_indices = @transform_1, window_bounds = array<i64: 5, 128, 128>}, {pipeline_mode = #tpu.pipeline_mode<synchronous>, transform_indices = @transform_2, window_bounds = array<i64: 5, 1, 128>}, {transform_indices = @transform_3, window_bounds = array<i64: 1024, 5>}]} {
    %c0 = arith.constant 0 : index
    %c0_0 = arith.constant 0 : index
    %0 = vector.load %arg1[%c0, %c0_0] : memref<1024x5xf32, #tpu.memory_space<vmem>>, vector<1024x5xf32>
    %cst = arith.constant 0.000000e+00 : f32
    %1 = vector.broadcast %cst : f32 to vector<1024x3xf32>
    %2 = tpu.concatenate %0, %1 in 1 : vector<1024x5xf32>, vector<1024x3xf32> -> vector<1024x8xf32>
    %3 = tpu.iota {dimensions = array<i32: 1>} : vector<1024x8xi32>
    %c4_i32 = arith.constant 4 : i32
    %4 = vector.broadcast %c4_i32 : i32 to vector<1024x8xi32>
    %5 = arith.cmpi slt, %3, %4 : vector<1024x8xi32>
    %cst_1 = arith.constant 0.000000e+00 : f32
    %6 = vector.broadcast %cst_1 : f32 to vector<1024x8xf32>
    %7 = arith.select %5, %2, %6 : vector<1024x8xi1>, vector<1024x8xf32>
    %8 = arith.truncf %2 : vector<1024x8xf32> to vector<1024x8xbf16>
    %c0_2 = arith.constant 0 : index
    %c0_3 = arith.constant 0 : index
    %c0_4 = arith.constant 0 : index
    %9 = vector.load %arg2[%c0_2, %c0_3, %c0_4] : memref<5x128x128xbf16, #tpu.memory_space<vmem>>, vector<1x8x128xbf16>
    %10 = vector.shape_cast %9 : vector<1x8x128xbf16> to vector<8x128xbf16>
    %cst_5 = arith.constant dense<0.000000e+00> : vector<1024x128xf32>
    %11 = tpu.matmul %8, %10, %cst_5 {dimension_numbers = #tpu.dot_dimension_numbers<[1], [0], [0], [1], [0, 0, 1, 1], [], []>} : vector<1024x8xbf16>, vector<8x128xbf16>, vector<1024x128xf32> -> vector<1024x128xf32>
    %c0_6 = arith.constant 0 : index
    %c0_7 = arith.constant 0 : index
    %c0_8 = arith.constant 0 : index
    %12 = vector.load %arg3[%c0_6, %c0_7, %c0_8] : memref<5x1x128xf32, #tpu.memory_space<vmem>>, vector<1x1x128xf32>
    %13 = vector.shape_cast %12 : vector<1x1x128xf32> to vector<1x128xf32>
    %14 = vector.broadcast %13 : vector<1x128xf32> to vector<1024x128xf32>
    %15 = arith.addf %11, %14 : vector<1024x128xf32>
    %16 = math.tanh %15 : vector<1024x128xf32>
    %17 = arith.truncf %16 : vector<1024x128xf32> to vector<1024x128xbf16>
    %c1 = arith.constant 1 : index
    %c0_9 = arith.constant 0 : index
    %c0_10 = arith.constant 0 : index
    %18 = vector.load %arg2[%c1, %c0_9, %c0_10] : memref<5x128x128xbf16, #tpu.memory_space<vmem>>, vector<1x128x128xbf16>
    %19 = vector.shape_cast %18 : vector<1x128x128xbf16> to vector<128x128xbf16>
    %cst_11 = arith.constant dense<0.000000e+00> : vector<1024x128xf32>
    %20 = tpu.matmul %17, %19, %cst_11 {dimension_numbers = #tpu.dot_dimension_numbers<[1], [0], [0], [1], [0, 0, 1, 1], [], []>} : vector<1024x128xbf16>, vector<128x128xbf16>, vector<1024x128xf32> -> vector<1024x128xf32>
    %c1_12 = arith.constant 1 : index
    %c0_13 = arith.constant 0 : index
    %c0_14 = arith.constant 0 : index
    %21 = vector.load %arg3[%c1_12, %c0_13, %c0_14] : memref<5x1x128xf32, #tpu.memory_space<vmem>>, vector<1x1x128xf32>
    %22 = vector.shape_cast %21 : vector<1x1x128xf32> to vector<1x128xf32>
    %23 = vector.broadcast %22 : vector<1x128xf32> to vector<1024x128xf32>
    %24 = arith.addf %20, %23 : vector<1024x128xf32>
    %25 = math.tanh %24 : vector<1024x128xf32>
    %26 = arith.truncf %25 : vector<1024x128xf32> to vector<1024x128xbf16>
    %c2 = arith.constant 2 : index
    %c0_15 = arith.constant 0 : index
    %c0_16 = arith.constant 0 : index
    %27 = vector.load %arg2[%c2, %c0_15, %c0_16] : memref<5x128x128xbf16, #tpu.memory_space<vmem>>, vector<1x128x128xbf16>
    %28 = vector.shape_cast %27 : vector<1x128x128xbf16> to vector<128x128xbf16>
    %cst_17 = arith.constant dense<0.000000e+00> : vector<1024x128xf32>
    %29 = tpu.matmul %26, %28, %cst_17 {dimension_numbers = #tpu.dot_dimension_numbers<[1], [0], [0], [1], [0, 0, 1, 1], [], []>} : vector<1024x128xbf16>, vector<128x128xbf16>, vector<1024x128xf32> -> vector<1024x128xf32>
    %c2_18 = arith.constant 2 : index
    %c0_19 = arith.constant 0 : index
    %c0_20 = arith.constant 0 : index
    %30 = vector.load %arg3[%c2_18, %c0_19, %c0_20] : memref<5x1x128xf32, #tpu.memory_space<vmem>>, vector<1x1x128xf32>
    %31 = vector.shape_cast %30 : vector<1x1x128xf32> to vector<1x128xf32>
    %32 = vector.broadcast %31 : vector<1x128xf32> to vector<1024x128xf32>
    %33 = arith.addf %29, %32 : vector<1024x128xf32>
    %34 = math.tanh %33 : vector<1024x128xf32>
    %35 = arith.truncf %34 : vector<1024x128xf32> to vector<1024x128xbf16>
    %c3 = arith.constant 3 : index
    %c0_21 = arith.constant 0 : index
    %c0_22 = arith.constant 0 : index
    %36 = vector.load %arg2[%c3, %c0_21, %c0_22] : memref<5x128x128xbf16, #tpu.memory_space<vmem>>, vector<1x128x128xbf16>
    %37 = vector.shape_cast %36 : vector<1x128x128xbf16> to vector<128x128xbf16>
    %cst_23 = arith.constant dense<0.000000e+00> : vector<1024x128xf32>
    %38 = tpu.matmul %35, %37, %cst_23 {dimension_numbers = #tpu.dot_dimension_numbers<[1], [0], [0], [1], [0, 0, 1, 1], [], []>} : vector<1024x128xbf16>, vector<128x128xbf16>, vector<1024x128xf32> -> vector<1024x128xf32>
    %c3_24 = arith.constant 3 : index
    %c0_25 = arith.constant 0 : index
    %c0_26 = arith.constant 0 : index
    %39 = vector.load %arg3[%c3_24, %c0_25, %c0_26] : memref<5x1x128xf32, #tpu.memory_space<vmem>>, vector<1x1x128xf32>
    %40 = vector.shape_cast %39 : vector<1x1x128xf32> to vector<1x128xf32>
    %41 = vector.broadcast %40 : vector<1x128xf32> to vector<1024x128xf32>
    %42 = arith.addf %38, %41 : vector<1024x128xf32>
    %43 = math.tanh %42 : vector<1024x128xf32>
    %44 = arith.truncf %43 : vector<1024x128xf32> to vector<1024x128xbf16>
    %c4 = arith.constant 4 : index
    %c0_27 = arith.constant 0 : index
    %c0_28 = arith.constant 0 : index
    %45 = vector.load %arg2[%c4, %c0_27, %c0_28] : memref<5x128x128xbf16, #tpu.memory_space<vmem>>, vector<1x128x128xbf16>
    %46 = vector.shape_cast %45 : vector<1x128x128xbf16> to vector<128x128xbf16>
    %cst_29 = arith.constant dense<0.000000e+00> : vector<1024x128xf32>
    %47 = tpu.matmul %44, %46, %cst_29 {dimension_numbers = #tpu.dot_dimension_numbers<[1], [0], [0], [1], [0, 0, 1, 1], [], []>} : vector<1024x128xbf16>, vector<128x128xbf16>, vector<1024x128xf32> -> vector<1024x128xf32>
    %c4_30 = arith.constant 4 : index
    %c0_31 = arith.constant 0 : index
    %c0_32 = arith.constant 0 : index
    %48 = vector.load %arg3[%c4_30, %c0_31, %c0_32] : memref<5x1x128xf32, #tpu.memory_space<vmem>>, vector<1x1x128xf32>
    %49 = vector.shape_cast %48 : vector<1x1x128xf32> to vector<1x128xf32>
    %50 = vector.broadcast %49 : vector<1x128xf32> to vector<1024x128xf32>
    %51 = arith.addf %47, %50 : vector<1024x128xf32>
    %c64_i32 = arith.constant 64 : i32
    %52 = tpu.dynamic_rotate %42 by %c64_i32 dim 1 : vector<1024x128xf32>, i32 -> vector<1024x128xf32>
    %53 = vector.extract_strided_slice %52 {offsets = [0, 0], sizes = [1024, 8], strides = [1, 1]} : vector<1024x128xf32> to vector<1024x8xf32>
    %54 = arith.mulf %7, %7 : vector<1024x8xf32>
    %cst_33 = arith.constant dense<0.000000e+00> : vector<1024xf32>
    %55 = vector.multi_reduction <add>, %54, %cst_33 [1] : vector<1024x8xf32> to vector<1024xf32>
    %56 = vector.shape_cast %55 : vector<1024xf32> to vector<1024x1xf32>
    %c4_i32_34 = arith.constant 4 : i32
    %57 = vector.broadcast %c4_i32_34 : i32 to vector<1024x8xi32>
    %58 = arith.cmpi eq, %3, %57 : vector<1024x8xi32>
    %cst_35 = arith.constant 0.000000e+00 : f32
    %59 = vector.broadcast %cst_35 : f32 to vector<1024x8xf32>
    %60 = arith.select %58, %2, %59 : vector<1024x8xi1>, vector<1024x8xf32>
    %cst_36 = arith.constant dense<0.000000e+00> : vector<1024xf32>
    %61 = vector.multi_reduction <add>, %60, %cst_36 [1] : vector<1024x8xf32> to vector<1024xf32>
    %62 = vector.shape_cast %61 : vector<1024xf32> to vector<1024x1xf32>
    %cst_37 = arith.constant 5.000000e-01 : f32
    %63 = vector.broadcast %cst_37 : f32 to vector<1024x1xf32>
    %64 = arith.mulf %63, %56 : vector<1024x1xf32>
    %65 = arith.addf %64, %62 : vector<1024x1xf32>
    %66 = math.exp %65 : vector<1024x1xf32>
    %cst_38 = arith.constant -1.000000e+01 : f32
    %67 = vector.broadcast %cst_38 : f32 to vector<1024x1xf32>
    %68 = arith.mulf %67, %62 : vector<1024x1xf32>
    %69 = math.exp %68 : vector<1024x1xf32>
    %cst_39 = arith.constant 1.000000e+00 : f32
    %70 = vector.broadcast %cst_39 : f32 to vector<1024x1xf32>
    %71 = arith.subf %70, %56 : vector<1024x1xf32>
    %cst_40 = arith.constant 1.000000e-24 : f32
    %72 = vector.broadcast %cst_40 : f32 to vector<1024x1xf32>
    %73 = arith.maximumf %56, %72 : vector<1024x1xf32>
    %74 = math.rsqrt %73 : vector<1024x1xf32>
    %75 = arith.mulf %56, %74 : vector<1024x1xf32>
    %76 = vector.broadcast %74 : vector<1024x1xf32> to vector<1024x8xf32>
    %77 = arith.mulf %7, %76 : vector<1024x8xf32>
    %78 = arith.mulf %53, %77 : vector<1024x8xf32>
    %cst_41 = arith.constant dense<0.000000e+00> : vector<1024xf32>
    %79 = vector.multi_reduction <add>, %78, %cst_41 [1] : vector<1024x8xf32> to vector<1024xf32>
    %80 = vector.shape_cast %79 : vector<1024xf32> to vector<1024x1xf32>
    %81 = arith.mulf %75, %66 : vector<1024x1xf32>
    %82 = arith.subf %81, %80 : vector<1024x1xf32>
    %83 = vector.broadcast %82 : vector<1024x1xf32> to vector<1024x8xf32>
    %84 = arith.mulf %83, %77 : vector<1024x8xf32>
    %85 = arith.addf %53, %84 : vector<1024x8xf32>
    %86 = vector.extract_strided_slice %51 {offsets = [0, 0], sizes = [1024, 1], strides = [1, 1]} : vector<1024x128xf32> to vector<1024x1xf32>
    %cst_42 = arith.constant 1.000000e+00 : f32
    %87 = vector.broadcast %cst_42 : f32 to vector<1024x1xf32>
    %88 = arith.subf %87, %69 : vector<1024x1xf32>
    %89 = arith.mulf %86, %88 : vector<1024x1xf32>
    %90 = arith.mulf %66, %69 : vector<1024x1xf32>
    %91 = arith.addf %89, %90 : vector<1024x1xf32>
    %92 = vector.extract_strided_slice %51 {offsets = [0, 1], sizes = [1024, 4], strides = [1, 1]} : vector<1024x128xf32> to vector<1024x4xf32>
    %93 = vector.broadcast %71 : vector<1024x1xf32> to vector<1024x4xf32>
    %94 = arith.mulf %92, %93 : vector<1024x4xf32>
    %95 = vector.extract_strided_slice %85 {offsets = [0, 0], sizes = [1024, 4], strides = [1, 1]} : vector<1024x8xf32> to vector<1024x4xf32>
    %96 = arith.addf %94, %95 : vector<1024x4xf32>
    %97 = tpu.concatenate %91, %96 in 1 : vector<1024x1xf32>, vector<1024x4xf32> -> vector<1024x5xf32>
    %c0_43 = arith.constant 0 : index
    %c0_44 = arith.constant 0 : index
    %98 = vector.load %arg4[%c0_43, %c0_44] : memref<1024x5xf32, #tpu.memory_space<vmem>>, vector<1024x5xf32>
    tpu.vector_store %arg4[%c0_43, %c0_44], %97 {strides = array<i32>} : memref<1024x5xf32, #tpu.memory_space<vmem>>, vector<1024x5xf32>,
    return
  }
  func.func @transform_0(%arg0: i32) -> (i32, i32) {
    %c0_i32 = arith.constant 0 : i32
    %c0_i32_0 = arith.constant 0 : i32
    return %arg0, %c0_i32 : i32, i32
  }
  func.func @transform_1(%arg0: i32) -> (i32, i32, i32) {
    %c0_i32 = arith.constant 0 : i32
    %c0_i32_0 = arith.constant 0 : i32
    %c0_i32_1 = arith.constant 0 : i32
    %c0_i32_2 = arith.constant 0 : i32
    return %c0_i32, %c0_i32_0, %c0_i32_1 : i32, i32, i32
  }
  func.func @transform_2(%arg0: i32) -> (i32, i32, i32) {
    %c0_i32 = arith.constant 0 : i32
    %c0_i32_0 = arith.constant 0 : i32
    %c0_i32_1 = arith.constant 0 : i32
    %c0_i32_2 = arith.constant 0 : i32
    return %c0_i32, %c0_i32_0, %c0_i32_1 : i32, i32, i32
  }
  func.func @transform_3(%arg0: i32) -> (i32, i32) {
    %c0_i32 = arith.constant 0 : i32
    %c0_i32_0 = arith.constant 0 : i32
    return %arg0, %c0_i32 : i32, i32
  }
}

</mosaic_0001>

<llo_original>
// kernel: hcnn_forward.1
$region0: #{hcnn_forward.1}
  #allocation0 [shape = 'u32[]', space=smem, size = 0x4, offset = 0x4, fixed_abs, tag = 'smem constant byte address 0x4 - core index']
  #allocation1 [shape = 'u32[72,128]{1,0:T(1,128)}', space=vmem, size = 0x9000, scoped, tag = 'internal scratch']
  %s0 = inlined_call_operand.vmem [shape: f32[2048,5], index: 0, kind: input, shape index: {}]
  %s1 = inlined_call_operand.vmem [shape: bf16[5,128,128], index: 1, kind: input, shape index: {}]
  %s2 = inlined_call_operand.vmem [shape: f32[5,1,128], index: 2, kind: input, shape index: {}]
  %s3 = inlined_call_operand.vmem [shape: f32[2048,5], index: 3, kind: output, shape index: {}]
  %s4 = sld [smem:[#allocation0]]
  $region45: #{hcnn_forward.1} parent=0
    _
  %s6 = ssub.s32 1, %s4
  %s7 = scalar_select 0, %s6, %s4
  loop: start=0, step=1, limit=4
  $region2: #{hcnn_forward.1} parent=0 // loop_pre_header
    _
  $region3: #{hcnn_forward.1} parent=0 // loop_header
    %s9 = sphi 0, %s13
    %p10 = scmp.ge.s32.totalorder %s9, 4
    %s19 = sphi 0, %s21
    %s22 = sphi 0, %s19
    %s23 = sphi 0, %s22
    %s39 = sphi 0, %s23
    %s43 = sphi 0, %s43
    %s45 = sphi 0, %s43
    %s46 = sphi 0, %s45
    %s60 = sphi 0, %s46
    %s64 = sphi 0, %s64
    %s66 = sphi 0, %s64
    %s67 = sphi 0, %s66
    %s81 = sphi 0, %s67
    %s87 = sphi 0, %s89
    %s90 = sphi 0, %s87
    %s91 = sphi 0, %s90
    %s107 = sphi 0, %s91
  $region4: #{hcnn_forward.1} parent=0 // loop_header_branch
    %12 = sbr.rel (%p10) target = $region8
  $region5: #{hcnn_forward.1} parent=0 // loop_body
    %s14 = ssub.s32 %s9, 1
    %s15 = ssub.s32 %s9, 2
    %s16 = sadd.s32 %s9, 1
    %s17 = ssub.s32 %s9, %s16
    %p18 = scmp.eq.s32.totalorder %s17, 0
    %s20 = sadd.s32 %s19, 1
    %s21 = scalar_select %p18, %s19, %s20
    %p24 = pneg %p18
    %p25 = scmp.eq.s32.totalorder %s9, 1
    %p26 = por %p24, %p25
    %p27 = scmp.ne.s32.totalorder %s19, %s22
    %p28 = scmp.eq.s32.totalorder %s9, 0
    %p29 = por %p27, %p28
    %p30 = scmp.ne.s32.totalorder %s19, %s22
    %p31 = scmp.eq.s32.totalorder %s14, 1
    %p32 = por %p30, %p31
    %p33 = scmp.ne.s32.totalorder %s22, %s23
    %p34 = scmp.eq.s32.totalorder %s14, 0
    %p35 = por %p33, %p34
    %p36 = scmp.ne.s32.totalorder %s22, %s23
    %p37 = scmp.eq.s32.totalorder %s15, 1
    %p38 = por %p36, %p37
    %p40 = scmp.ne.s32.totalorder %s23, %s39
    %p41 = scmp.eq.s32.totalorder %s15, 0
    %p42 = por %p40, %p41
    %s44 = sadd.s32 %s43, 1
    %p47 = scmp.eq.s32.totalorder %s9, 1
    %p48 = scmp.ne.s32.totalorder %s43, %s45
    %p49 = scmp.eq.s32.totalorder %s9, 0
    %p50 = por %p48, %p49
    %p51 = scmp.ne.s32.totalorder %s43, %s45
    %p52 = scmp.eq.s32.totalorder %s14, 1
    %p53 = por %p51, %p52
    %p54 = scmp.ne.s32.totalorder %s45, %s46
    %p55 = scmp.eq.s32.totalorder %s14, 0
    %p56 = por %p54, %p55
    %p57 = scmp.ne.s32.totalorder %s45, %s46
    %p58 = scmp.eq.s32.totalorder %s15, 1
    %p59 = por %p57, %p58
    %p61 = scmp.ne.s32.totalorder %s46, %s60
    %p62 = scmp.eq.s32.totalorder %s15, 0
    %p63 = por %p61, %p62
    %s65 = sadd.s32 %s64, 1
    %p68 = scmp.eq.s32.totalorder %s9, 1
    %p69 = scmp.ne.s32.totalorder %s64, %s66
    %p70 = scmp.eq.s32.totalorder %s9, 0
    %p71 = por %p69, %p70
    %p72 = scmp.ne.s32.totalorder %s64, %s66
    %p73 = scmp.eq.s32.totalorder %s14, 1
    %p74 = por %p72, %p73
    %p75 = scmp.ne.s32.totalorder %s66, %s67
    %p76 = scmp.eq.s32.totalorder %s14, 0
    %p77 = por %p75, %p76
    %p78 = scmp.ne.s32.totalorder %s66, %s67
    %p79 = scmp.eq.s32.totalorder %s15, 1
    %p80 = por %p78, %p79
    %p82 = scmp.ne.s32.totalorder %s67, %s81
    %p83 = scmp.eq.s32.totalorder %s15, 0
    %p84 = por %p82, %p83
    %s85 = ssub.s32 %s9, %s16
    %p86 = scmp.eq.s32.totalorder %s85, 0
    %s88 = sadd.s32 %s87, 1
    %s89 = scalar_select %p86, %s87, %s88
    %p92 = pneg %p86
    %p93 = scmp.eq.s32.totalorder %s9, 1
    %p94 = por %p92, %p93
    %p95 = scmp.ne.s32.totalorder %s87, %s90
    %p96 = scmp.eq.s32.totalorder %s9, 0
    %p97 = por %p95, %p96
    %p98 = scmp.ne.s32.totalorder %s87, %s90
    %p99 = scmp.eq.s32.totalorder %s14, 1
    %p100 = por %p98, %p99
    %p101 = scmp.ne.s32.totalorder %s90, %s91
    %p102 = scmp.eq.s32.totalorder %s14, 0
    %p103 = por %p101, %p102
    %p104 = scmp.ne.s32.totalorder %s90, %s91
    %p105 = scmp.eq.s32.totalorder %s15, 1
    %p106 = por %p104, %p105
    %p108 = scmp.ne.s32.totalorder %s91, %s107
    %p109 = scmp.eq.s32.totalorder %s15, 0
    %p110 = por %p108, %p109
    %p111 = scmp.le.s32.totalorder 1, %s9
    %p112 = scmp.lt.s32.totalorder %s9, 3
    %p113 = pnand %p111, %p112
    %p114 = pneg %p113
    // Predicated region
    $region9: #{hcnn_forward.1} parent=5 // pred_check
      _
    $region10: #{hcnn_forward.1} parent=5 // pred_check_branch
      %116 = sbr.rel (%p113) target = $region12
    $region11: #{hcnn_forward.1} parent=5 // pred_region
      %s117 = ssub.s32 %s9, 1
      // Predicated region
      $region13: #{hcnn_forward.1} parent=11 // pred_check
        %p118 = pneg %p56
      $region14: #{hcnn_forward.1} parent=11 // pred_check_branch
        %120 = sbr.rel (%p118) target = $region16
      $region15: #{hcnn_forward.1} parent=11 // pred_region
        _
      $region16: #{hcnn_forward.1} parent=11 // pred_fallthru
        _
      // Predicated region
      $region17: #{hcnn_forward.1} parent=11 // pred_check
        %p121 = pneg %p77
      $region18: #{hcnn_forward.1} parent=11 // pred_check_branch
        %123 = sbr.rel (%p121) target = $region20
      $region19: #{hcnn_forward.1} parent=11 // pred_region
        _
      $region20: #{hcnn_forward.1} parent=11 // pred_fallthru
        _
    $region12: #{hcnn_forward.1} parent=5 // pred_fallthru
      _
    %p124 = scmp.lt.s32.totalorder %s9, 2
    // Predicated region
    $region21: #{hcnn_forward.1} parent=5 // pred_check
      %p125 = pneg %p124
    $region22: #{hcnn_forward.1} parent=5 // pred_check_branch
      %127 = sbr.rel (%p125) target = $region24
    $region23: #{hcnn_forward.1} parent=5 // pred_region
      // Predicated region
      $region25: #{hcnn_forward.1} parent=23 // pred_check
        %p128 = pneg %p29
      $region26: #{hcnn_forward.1} parent=23 // pred_check_branch
        %130 = sbr.rel (%p128) target = $region28
      $region27: #{hcnn_forward.1} parent=23 // pred_region
        %s131 = smul.u32 128, %s9
        %p132 = scmp.lt.s32.totalorder %s131, 255
        %s133 = scalar_select %p132, %s131, 255
        %s134 = smul.addr %s133, 8
        %s135 = scalar_lea.vmem %s0, %s134
        %s136 = smul.u32 128, %s9
      $region28: #{hcnn_forward.1} parent=23 // pred_fallthru
        _
    $region24: #{hcnn_forward.1} parent=5 // pred_fallthru
      _
    %p137 = scmp.le.s32.totalorder 1, %s9
    %p138 = scmp.lt.s32.totalorder %s9, 3
    %p139 = pnand %p137, %p138
    %p140 = pneg %p139
    // Predicated region
    $region29: #{hcnn_forward.1} parent=5 // pred_check
      _
    $region30: #{hcnn_forward.1} parent=5 // pred_check_branch
      %142 = sbr.rel (%p139) target = $region32
    $region31: #{hcnn_forward.1} parent=5 // pred_region
      %s143 = ssub.s32 %s9, 1
      %s144 = smul.u32 128, %s14
      %p145 = scmp.lt.s32.totalorder %s144, 255
      %s146 = scalar_select %p145, %s144, 255
      %s147 = smul.addr %s146, 8
      %s148 = scalar_lea.vmem %s0, %s147
      %p149 = pneg %p35
      %p150 = pneg %p32
      %p151 = pneg %p56
      %p152 = pneg %p53
      %p153 = pneg %p77
      %p154 = pneg %p74
      %p155 = pneg %p103
      %p156 = pneg %p100
      %s157 = smul.u32 128, %s14
      %p158 = scmp.lt.s32.totalorder %s157, 255
      %s159 = scalar_select %p158, %s157, 255
      %s160 = smul.addr %s159, 8
      %s161 = scalar_lea.vmem %s3, %s160
      %s162 = smul.u32 128, %s14
      %p163 = scmp.lt.s32.totalorder %s162, 255
      %s164 = scalar_select %p163, %s162, 255
      %s165 = smul.addr %s164, 8
      %s166 = scalar_lea.vmem %s0, %s165
      %s167 = smul.u32 128, %s14
      %s168 = smul.u32 128, %s14
      %p169 = scmp.lt.s32.totalorder %s168, 255
      %s170 = scalar_select %p169, %s168, 255
      %s171 = smul.addr %s170, 8
      %s172 = scalar_lea.vmem %s3, %s171
      %s173 = smul.u32 128, %s14
      %v175 = vld [vmem:[%s166] sm:$0xff]
      %v176 = vld [vmem:[%s166 + $0x8] sm:$0xff]
      %v177 = vld [vmem:[%s166 + $0x10] sm:$0xff]
      %v178 = vld [vmem:[%s166 + $0x18] sm:$0xff]
      %v179 = vld [vmem:[%s166 + $0x20] sm:$0xff]
      %v180 = vld [vmem:[%s166 + $0x28] sm:$0xff]
      %v181 = vld [vmem:[%s166 + $0x30] sm:$0xff]
      %v182 = vld [vmem:[%s166 + $0x38] sm:$0xff]
      %v183 = vld [vmem:[%s166 + $0x40] sm:$0xff]
      %v184 = vld [vmem:[%s166 + $0x48] sm:$0xff]
      %v185 = vld [vmem:[%s166 + $0x50] sm:$0xff]
      %v186 = vld [vmem:[%s166 + $0x58] sm:$0xff]
      %v187 = vld [vmem:[%s166 + $0x60] sm:$0xff]
      %v188 = vld [vmem:[%s166 + $0x68] sm:$0xff]
      %v189 = vld [vmem:[%s166 + $0x70] sm:$0xff]
      %v190 = vld [vmem:[%s166 + $0x78] sm:$0xff]
      %v191 = vld [vmem:[%s166 + $0x80] sm:$0xff]
      %v192 = vld [vmem:[%s166 + $0x88] sm:$0xff]
      %v193 = vld [vmem:[%s166 + $0x90] sm:$0xff]
      %v194 = vld [vmem:[%s166 + $0x98] sm:$0xff]
      %v195 = vld [vmem:[%s166 + $0xa0] sm:$0xff]
      %v196 = vld [vmem:[%s166 + $0xa8] sm:$0xff]
      %v197 = vld [vmem:[%s166 + $0xb0] sm:$0xff]
      %v198 = vld [vmem:[%s166 + $0xb8] sm:$0xff]
      %v199 = vld [vmem:[%s166 + $0xc0] sm:$0xff]
      %v200 = vld [vmem:[%s166 + $0xc8] sm:$0xff]
      %v201 = vld [vmem:[%s166 + $0xd0] sm:$0xff]
      %v202 = vld [vmem:[%s166 + $0xd8] sm:$0xff]
      %v203 = vld [vmem:[%s166 + $0xe0] sm:$0xff]
      %v204 = vld [vmem:[%s166 + $0xe8] sm:$0xff]
      %v205 = vld [vmem:[%s166 + $0xf0] sm:$0xff]
      %v206 = vld [vmem:[%s166 + $0xf8] sm:$0xff]
      %v207 = vld [vmem:[%s166 + $0x100] sm:$0xff]
      %v208 = vld [vmem:[%s166 + $0x108] sm:$0xff]
      %v209 = vld [vmem:[%s166 + $0x110] sm:$0xff]
      %v210 = vld [vmem:[%s166 + $0x118] sm:$0xff]
      %v211 = vld [vmem:[%s166 + $0x120] sm:$0xff]
      %v212 = vld [vmem:[%s166 + $0x128] sm:$0xff]
      %v213 = vld [vmem:[%s166 + $0x130] sm:$0xff]
      %v214 = vld [vmem:[%s166 + $0x138] sm:$0xff]
      %v215 = vld [vmem:[%s166 + $0x140] sm:$0xff]
      %v216 = vld [vmem:[%s166 + $0x148] sm:$0xff]
      %v217 = vld [vmem:[%s166 + $0x150] sm:$0xff]
      %v218 = vld [vmem:[%s166 + $0x158] sm:$0xff]
      %v219 = vld [vmem:[%s166 + $0x160] sm:$0xff]
      %v220 = vld [vmem:[%s166 + $0x168] sm:$0xff]
      %v221 = vld [vmem:[%s166 + $0x170] sm:$0xff]
      %v222 = vld [vmem:[%s166 + $0x178] sm:$0xff]
      %v223 = vld [vmem:[%s166 + $0x180] sm:$0xff]
      %v224 = vld [vmem:[%s166 + $0x188] sm:$0xff]
      %v225 = vld [vmem:[%s166 + $0x190] sm:$0xff]
      %v226 = vld [vmem:[%s166 + $0x198] sm:$0xff]
      %v227 = vld [vmem:[%s166 + $0x1a0] sm:$0xff]
      %v228 = vld [vmem:[%s166 + $0x1a8] sm:$0xff]
      %v229 = vld [vmem:[%s166 + $0x1b0] sm:$0xff]
      %v230 = vld [vmem:[%s166 + $0x1b8] sm:$0xff]
      %v231 = vld [vmem:[%s166 + $0x1c0] sm:$0xff]
      %v232 = vld [vmem:[%s166 + $0x1c8] sm:$0xff]
      %v233 = vld [vmem:[%s166 + $0x1d0] sm:$0xff]
      %v234 = vld [vmem:[%s166 + $0x1d8] sm:$0xff]
      %v235 = vld [vmem:[%s166 + $0x1e0] sm:$0xff]
      %v236 = vld [vmem:[%s166 + $0x1e8] sm:$0xff]
      %v237 = vld [vmem:[%s166 + $0x1f0] sm:$0xff]
      %v238 = vld [vmem:[%s166 + $0x1f8] sm:$0xff]
      %v239 = vld [vmem:[%s166 + $0x200] sm:$0xff]
      %v240 = vld [vmem:[%s166 + $0x208] sm:$0xff]
      %v241 = vld [vmem:[%s166 + $0x210] sm:$0xff]
      %v242 = vld [vmem:[%s166 + $0x218] sm:$0xff]
      %v243 = vld [vmem:[%s166 + $0x220] sm:$0xff]
      %v244 = vld [vmem:[%s166 + $0x228] sm:$0xff]
      %v245 = vld [vmem:[%s166 + $0x230] sm:$0xff]
      %v246 = vld [vmem:[%s166 + $0x238] sm:$0xff]
      %v247 = vld [vmem:[%s166 + $0x240] sm:$0xff]
      %v248 = vld [vmem:[%s166 + $0x248] sm:$0xff]
      %v249 = vld [vmem:[%s166 + $0x250] sm:$0xff]
      %v250 = vld [vmem:[%s166 + $0x258] sm:$0xff]
      %v251 = vld [vmem:[%s166 + $0x260] sm:$0xff]
      %v252 = vld [vmem:[%s166 + $0x268] sm:$0xff]
      %v253 = vld [vmem:[%s166 + $0x270] sm:$0xff]
      %v254 = vld [vmem:[%s166 + $0x278] sm:$0xff]
      %v255 = vld [vmem:[%s166 + $0x280] sm:$0xff]
      %v256 = vld [vmem:[%s166 + $0x288] sm:$0xff]
      %v257 = vld [vmem:[%s166 + $0x290] sm:$0xff]
      %v258 = vld [vmem:[%s166 + $0x298] sm:$0xff]
      %v259 = vld [vmem:[%s166 + $0x2a0] sm:$0xff]
      %v260 = vld [vmem:[%s166 + $0x2a8] sm:$0xff]
      %v261 = vld [vmem:[%s166 + $0x2b0] sm:$0xff]
      %v262 = vld [vmem:[%s166 + $0x2b8] sm:$0xff]
      %v263 = vld [vmem:[%s166 + $0x2c0] sm:$0xff]
      %v264 = vld [vmem:[%s166 + $0x2c8] sm:$0xff]
      %v265 = vld [vmem:[%s166 + $0x2d0] sm:$0xff]
      %v266 = vld [vmem:[%s166 + $0x2d8] sm:$0xff]
      %v267 = vld [vmem:[%s166 + $0x2e0] sm:$0xff]
      %v268 = vld [vmem:[%s166 + $0x2e8] sm:$0xff]
      %v269 = vld [vmem:[%s166 + $0x2f0] sm:$0xff]
      %v270 = vld [vmem:[%s166 + $0x2f8] sm:$0xff]
      %v271 = vld [vmem:[%s166 + $0x300] sm:$0xff]
      %v272 = vld [vmem:[%s166 + $0x308] sm:$0xff]
      %v273 = vld [vmem:[%s166 + $0x310] sm:$0xff]
      %v274 = vld [vmem:[%s166 + $0x318] sm:$0xff]
      %v275 = vld [vmem:[%s166 + $0x320] sm:$0xff]
      %v276 = vld [vmem:[%s166 + $0x328] sm:$0xff]
      %v277 = vld [vmem:[%s166 + $0x330] sm:$0xff]
      %v278 = vld [vmem:[%s166 + $0x338] sm:$0xff]
      %v279 = vld [vmem:[%s166 + $0x340] sm:$0xff]
      %v280 = vld [vmem:[%s166 + $0x348] sm:$0xff]
      %v281 = vld [vmem:[%s166 + $0x350] sm:$0xff]
      %v282 = vld [vmem:[%s166 + $0x358] sm:$0xff]
      %v283 = vld [vmem:[%s166 + $0x360] sm:$0xff]
      %v284 = vld [vmem:[%s166 + $0x368] sm:$0xff]
      %v285 = vld [vmem:[%s166 + $0x370] sm:$0xff]
      %v286 = vld [vmem:[%s166 + $0x378] sm:$0xff]
      %v287 = vld [vmem:[%s166 + $0x380] sm:$0xff]
      %v288 = vld [vmem:[%s166 + $0x388] sm:$0xff]
      %v289 = vld [vmem:[%s166 + $0x390] sm:$0xff]
      %v290 = vld [vmem:[%s166 + $0x398] sm:$0xff]
      %v291 = vld [vmem:[%s166 + $0x3a0] sm:$0xff]
      %v292 = vld [vmem:[%s166 + $0x3a8] sm:$0xff]
      %v293 = vld [vmem:[%s166 + $0x3b0] sm:$0xff]
      %v294 = vld [vmem:[%s166 + $0x3b8] sm:$0xff]
      %v295 = vld [vmem:[%s166 + $0x3c0] sm:$0xff]
      %v296 = vld [vmem:[%s166 + $0x3c8] sm:$0xff]
      %v297 = vld [vmem:[%s166 + $0x3d0] sm:$0xff]
      %v298 = vld [vmem:[%s166 + $0x3d8] sm:$0xff]
      %v299 = vld [vmem:[%s166 + $0x3e0] sm:$0xff]
      %v300 = vld [vmem:[%s166 + $0x3e8] sm:$0xff]
      %v301 = vld [vmem:[%s166 + $0x3f0] sm:$0xff]
      %v302 = vld [vmem:[%s166 + $0x3f8] sm:$0xff]
      %vm303 = vcmask 39936
      %v304 = vsel %vm303, %v175, 0.0
      %v305 = vsel %vm303, %v176, 0.0
      %v306 = vsel %vm303, %v177, 0.0
      %v307 = vsel %vm303, %v178, 0.0
      %v308 = vsel %vm303, %v179, 0.0
      %v309 = vsel %vm303, %v180, 0.0
      %v310 = vsel %vm303, %v181, 0.0
      %v311 = vsel %vm303, %v182, 0.0
      %v312 = vsel %vm303, %v183, 0.0
      %v313 = vsel %vm303, %v184, 0.0
      %v314 = vsel %vm303, %v185, 0.0
      %v315 = vsel %vm303, %v186, 0.0
      %v316 = vsel %vm303, %v187, 0.0
      %v317 = vsel %vm303, %v188, 0.0
      %v318 = vsel %vm303, %v189, 0.0
      %v319 = vsel %vm303, %v190, 0.0
      %v320 = vsel %vm303, %v191, 0.0
      %v321 = vsel %vm303, %v192, 0.0
      %v322 = vsel %vm303, %v193, 0.0
      %v323 = vsel %vm303, %v194, 0.0
      %v324 = vsel %vm303, %v195, 0.0
      %v325 = vsel %vm303, %v196, 0.0
      %v326 = vsel %vm303, %v197, 0.0
      %v327 = vsel %vm303, %v198, 0.0
      %v328 = vsel %vm303, %v199, 0.0
      %v329 = vsel %vm303, %v200, 0.0
      %v330 = vsel %vm303, %v201, 0.0
      %v331 = vsel %vm303, %v202, 0.0
      %v332 = vsel %vm303, %v203, 0.0
      %v333 = vsel %vm303, %v204, 0.0
      %v334 = vsel %vm303, %v205, 0.0
      %v335 = vsel %vm303, %v206, 0.0
      %v336 = vsel %vm303, %v207, 0.0
      %v337 = vsel %vm303, %v208, 0.0
      %v338 = vsel %vm303, %v209, 0.0
      %v339 = vsel %vm303, %v210, 0.0
      %v340 = vsel %vm303, %v211, 0.0
      %v341 = vsel %vm303, %v212, 0.0
      %v342 = vsel %vm303, %v213, 0.0
      %v343 = vsel %vm303, %v214, 0.0
      %v344 = vsel %vm303, %v215, 0.0
      %v345 = vsel %vm303, %v216, 0.0
      %v346 = vsel %vm303, %v217, 0.0
      %v347 = vsel %vm303, %v218, 0.0
      %v348 = vsel %vm303, %v219, 0.0
      %v349 = vsel %vm303, %v220, 0.0
      %v350 = vsel %vm303, %v221, 0.0
      %v351 = vsel %vm303, %v222, 0.0
      %v352 = vsel %vm303, %v223, 0.0
      %v353 = vsel %vm303, %v224, 0.0
      %v354 = vsel %vm303, %v225, 0.0
      %v355 = vsel %vm303, %v226, 0.0
      %v356 = vsel %vm303, %v227, 0.0
      %v357 = vsel %vm303, %v228, 0.0
      %v358 = vsel %vm303, %v229, 0.0
      %v359 = vsel %vm303, %v230, 0.0
      %v360 = vsel %vm303, %v231, 0.0
      %v361 = vsel %vm303, %v232, 0.0
      %v362 = vsel %vm303, %v233, 0.0
      %v363 = vsel %vm303, %v234, 0.0
      %v364 = vsel %vm303, %v235, 0.0
      %v365 = vsel %vm303, %v236, 0.0
      %v366 = vsel %vm303, %v237, 0.0
      %v367 = vsel %vm303, %v238, 0.0
      %v368 = vsel %vm303, %v239, 0.0
      %v369 = vsel %vm303, %v240, 0.0
      %v370 = vsel %vm303, %v241, 0.0
      %v371 = vsel %vm303, %v242, 0.0
      %v372 = vsel %vm303, %v243, 0.0
      %v373 = vsel %vm303, %v244, 0.0
      %v374 = vsel %vm303, %v245, 0.0
      %v375 = vsel %vm303, %v246, 0.0
      %v376 = vsel %vm303, %v247, 0.0
      %v377 = vsel %vm303, %v248, 0.0
      %v378 = vsel %vm303, %v249, 0.0
      %v379 = vsel %vm303, %v250, 0.0
      %v380 = vsel %vm303, %v251, 0.0
      %v381 = vsel %vm303, %v252, 0.0
      %v382 = vsel %vm303, %v253, 0.0
      %v383 = vsel %vm303, %v254, 0.0
      %v384 = vsel %vm303, %v255, 0.0
      %v385 = vsel %vm303, %v256, 0.0
      %v386 = vsel %vm303, %v257, 0.0
      %v387 = vsel %vm303, %v258, 0.0
      %v388 = vsel %vm303, %v259, 0.0
      %v389 = vsel %vm303, %v260, 0.0
      %v390 = vsel %vm303, %v261, 0.0
      %v391 = vsel %vm303, %v262, 0.0
      %v392 = vsel %vm303, %v263, 0.0
      %v393 = vsel %vm303, %v264, 0.0
      %v394 = vsel %vm303, %v265, 0.0
      %v395 = vsel %vm303, %v266, 0.0
      %v396 = vsel %vm303, %v267, 0.0
      %v397 = vsel %vm303, %v268, 0.0
      %v398 = vsel %vm303, %v269, 0.0
      %v399 = vsel %vm303, %v270, 0.0
      %v400 = vsel %vm303, %v271, 0.0
      %v401 = vsel %vm303, %v272, 0.0
      %v402 = vsel %vm303, %v273, 0.0
      %v403 = vsel %vm303, %v274, 0.0
      %v404 = vsel %vm303, %v275, 0.0
      %v405 = vsel %vm303, %v276, 0.0
      %v406 = vsel %vm303, %v277, 0.0
      %v407 = vsel %vm303, %v278, 0.0
      %v408 = vsel %vm303, %v279, 0.0
      %v409 = vsel %vm303, %v280, 0.0
      %v410 = vsel %vm303, %v281, 0.0
      %v411 = vsel %vm303, %v282, 0.0
      %v412 = vsel %vm303, %v283, 0.0
      %v413 = vsel %vm303, %v284, 0.0
      %v414 = vsel %vm303, %v285, 0.0
      %v415 = vsel %vm303, %v286, 0.0
      %v416 = vsel %vm303, %v287, 0.0
      %v417 = vsel %vm303, %v288, 0.0
      %v418 = vsel %vm303, %v289, 0.0
      %v419 = vsel %vm303, %v290, 0.0
      %v420 = vsel %vm303, %v291, 0.0
      %v421 = vsel %vm303, %v292, 0.0
      %v422 = vsel %vm303, %v293, 0.0
      %v423 = vsel %vm303, %v294, 0.0
      %v424 = vsel %vm303, %v295, 0.0
      %v425 = vsel %vm303, %v296, 0.0
      %v426 = vsel %vm303, %v297, 0.0
      %v427 = vsel %vm303, %v298, 0.0
      %v428 = vsel %vm303, %v299, 0.0
      %v429 = vsel %vm303, %v300, 0.0
      %v430 = vsel %vm303, %v301, 0.0
      %v431 = vsel %vm303, %v302, 0.0
      %v432 = vlaneseq
      %v433 = vand.u32 %v432, 127
      %vm434 = vcmp.lt.s32.totalorder %v433, 4
      %v435 = vsel %vm434, %v304, 0.0
      %v436 = vsel %vm434, %v305, 0.0
      %v437 = vsel %vm434, %v306, 0.0
      %v438 = vsel %vm434, %v307, 0.0
      %v439 = vsel %vm434, %v308, 0.0
      %v440 = vsel %vm434, %v309, 0.0
      %v441 = vsel %vm434, %v310, 0.0
      %v442 = vsel %vm434, %v311, 0.0
      %v443 = vsel %vm434, %v312, 0.0
      %v444 = vsel %vm434, %v313, 0.0
      %v445 = vsel %vm434, %v314, 0.0
      %v446 = vsel %vm434, %v315, 0.0
      %v447 = vsel %vm434, %v316, 0.0
      %v448 = vsel %vm434, %v317, 0.0
      %v449 = vsel %vm434, %v318, 0.0
      %v450 = vsel %vm434, %v319, 0.0
      %v451 = vsel %vm434, %v320, 0.0
      %v452 = vsel %vm434, %v321, 0.0
      %v453 = vsel %vm434, %v322, 0.0
      %v454 = vsel %vm434, %v323, 0.0
      %v455 = vsel %vm434, %v324, 0.0
      %v456 = vsel %vm434, %v325, 0.0
      %v457 = vsel %vm434, %v326, 0.0
      %v458 = vsel %vm434, %v327, 0.0
      %v459 = vsel %vm434, %v328, 0.0
      %v460 = vsel %vm434, %v329, 0.0
      %v461 = vsel %vm434, %v330, 0.0
      %v462 = vsel %vm434, %v331, 0.0
      %v463 = vsel %vm434, %v332, 0.0
      %v464 = vsel %vm434, %v333, 0.0
      %v465 = vsel %vm434, %v334, 0.0
      %v466 = vsel %vm434, %v335, 0.0
      %v467 = vsel %vm434, %v336, 0.0
      %v468 = vsel %vm434, %v337, 0.0
      %v469 = vsel %vm434, %v338, 0.0
      %v470 = vsel %vm434, %v339, 0.0
      %v471 = vsel %vm434, %v340, 0.0
      %v472 = vsel %vm434, %v341, 0.0
      %v473 = vsel %vm434, %v342, 0.0
      %v474 = vsel %vm434, %v343, 0.0
      %v475 = vsel %vm434, %v344, 0.0
      %v476 = vsel %vm434, %v345, 0.0
      %v477 = vsel %vm434, %v346, 0.0
      %v478 = vsel %vm434, %v347, 0.0
      %v479 = vsel %vm434, %v348, 0.0
      %v480 = vsel %vm434, %v349, 0.0
      %v481 = vsel %vm434, %v350, 0.0
      %v482 = vsel %vm434, %v351, 0.0
      %v483 = vsel %vm434, %v352, 0.0
      %v484 = vsel %vm434, %v353, 0.0
      %v485 = vsel %vm434, %v354, 0.0
      %v486 = vsel %vm434, %v355, 0.0
      %v487 = vsel %vm434, %v356, 0.0
      %v488 = vsel %vm434, %v357, 0.0
      %v489 = vsel %vm434, %v358, 0.0
      %v490 = vsel %vm434, %v359, 0.0
      %v491 = vsel %vm434, %v360, 0.0
      %v492 = vsel %vm434, %v361, 0.0
      %v493 = vsel %vm434, %v362, 0.0
      %v494 = vsel %vm434, %v363, 0.0
      %v495 = vsel %vm434, %v364, 0.0
      %v496 = vsel %vm434, %v365, 0.0
      %v497 = vsel %vm434, %v366, 0.0
      %v498 = vsel %vm434, %v367, 0.0
      %v499 = vsel %vm434, %v368, 0.0
      %v500 = vsel %vm434, %v369, 0.0
      %v501 = vsel %vm434, %v370, 0.0
      %v502 = vsel %vm434, %v371, 0.0
      %v503 = vsel %vm434, %v372, 0.0
      %v504 = vsel %vm434, %v373, 0.0
      %v505 = vsel %vm434, %v374, 0.0
      %v506 = vsel %vm434, %v375, 0.0
      %v507 = vsel %vm434, %v376, 0.0
      %v508 = vsel %vm434, %v377, 0.0
      %v509 = vsel %vm434, %v378, 0.0
      %v510 = vsel %vm434, %v379, 0.0
      %v511 = vsel %vm434, %v380, 0.0
      %v512 = vsel %vm434, %v381, 0.0
      %v513 = vsel %vm434, %v382, 0.0
      %v514 = vsel %vm434, %v383, 0.0
      %v515 = vsel %vm434, %v384, 0.0
      %v516 = vsel %vm434, %v385, 0.0
      %v517 = vsel %vm434, %v386, 0.0
      %v518 = vsel %vm434, %v387, 0.0
      %v519 = vsel %vm434, %v388, 0.0
      %v520 = vsel %vm434, %v389, 0.0
      %v521 = vsel %vm434, %v390, 0.0
      %v522 = vsel %vm434, %v391, 0.0
      %v523 = vsel %vm434, %v392, 0.0
      %v524 = vsel %vm434, %v393, 0.0
      %v525 = vsel %vm434, %v394, 0.0
      %v526 = vsel %vm434, %v395, 0.0
      %v527 = vsel %vm434, %v396, 0.0
      %v528 = vsel %vm434, %v397, 0.0
      %v529 = vsel %vm434, %v398, 0.0
      %v530 = vsel %vm434, %v399, 0.0
      %v531 = vsel %vm434, %v400, 0.0
      %v532 = vsel %vm434, %v401, 0.0
      %v533 = vsel %vm434, %v402, 0.0
      %v534 = vsel %vm434, %v403, 0.0
      %v535 = vsel %vm434, %v404, 0.0
      %v536 = vsel %vm434, %v405, 0.0
      %v537 = vsel %vm434, %v406, 0.0
      %v538 = vsel %vm434, %v407, 0.0
      %v539 = vsel %vm434, %v408, 0.0
      %v540 = vsel %vm434, %v409, 0.0
      %v541 = vsel %vm434, %v410, 0.0
      %v542 = vsel %vm434, %v411, 0.0
      %v543 = vsel %vm434, %v412, 0.0
      %v544 = vsel %vm434, %v413, 0.0
      %v545 = vsel %vm434, %v414, 0.0
      %v546 = vsel %vm434, %v415, 0.0
      %v547 = vsel %vm434, %v416, 0.0
      %v548 = vsel %vm434, %v417, 0.0
      %v549 = vsel %vm434, %v418, 0.0
      %v550 = vsel %vm434, %v419, 0.0
      %v551 = vsel %vm434, %v420, 0.0
      %v552 = vsel %vm434, %v421, 0.0
      %v553 = vsel %vm434, %v422, 0.0
      %v554 = vsel %vm434, %v423, 0.0
      %v555 = vsel %vm434, %v424, 0.0
      %v556 = vsel %vm434, %v425, 0.0
      %v557 = vsel %vm434, %v426, 0.0
      %v558 = vsel %vm434, %v427, 0.0
      %v559 = vsel %vm434, %v428, 0.0
      %v560 = vsel %vm434, %v429, 0.0
      %v561 = vsel %vm434, %v430, 0.0
      %v562 = vsel %vm434, %v431, 0.0
      %v563 = vpack.c.bf16 %v305, %v304
      %v564 = vpack.c.bf16 %v307, %v306
      %v565 = vpack.c.bf16 %v309, %v308
      %v566 = vpack.c.bf16 %v311, %v310
      %v567 = vpack.c.bf16 %v313, %v312
      %v568 = vpack.c.bf16 %v315, %v314
      %v569 = vpack.c.bf16 %v317, %v316
      %v570 = vpack.c.bf16 %v319, %v318
      %v571 = vpack.c.bf16 %v321, %v320
      %v572 = vpack.c.bf16 %v323, %v322
      %v573 = vpack.c.bf16 %v325, %v324
      %v574 = vpack.c.bf16 %v327, %v326
      %v575 = vpack.c.bf16 %v329, %v328
      %v576 = vpack.c.bf16 %v331, %v330
      %v577 = vpack.c.bf16 %v333, %v332
      %v578 = vpack.c.bf16 %v335, %v334
      %v579 = vpack.c.bf16 %v337, %v336
      %v580 = vpack.c.bf16 %v339, %v338
      %v581 = vpack.c.bf16 %v341, %v340
      %v582 = vpack.c.bf16 %v343, %v342
      %v583 = vpack.c.bf16 %v345, %v344
      %v584 = vpack.c.bf16 %v347, %v346
      %v585 = vpack.c.bf16 %v349, %v348
      %v586 = vpack.c.bf16 %v351, %v350
      %v587 = vpack.c.bf16 %v353, %v352
      %v588 = vpack.c.bf16 %v355, %v354
      %v589 = vpack.c.bf16 %v357, %v356
      %v590 = vpack.c.bf16 %v359, %v358
      %v591 = vpack.c.bf16 %v361, %v360
      %v592 = vpack.c.bf16 %v363, %v362
      %v593 = vpack.c.bf16 %v365, %v364
      %v594 = vpack.c.bf16 %v367, %v366
      %v595 = vpack.c.bf16 %v369, %v368
      %v596 = vpack.c.bf16 %v371, %v370
      %v597 = vpack.c.bf16 %v373, %v372
      %v598 = vpack.c.bf16 %v375, %v374
      %v599 = vpack.c.bf16 %v377, %v376
      %v600 = vpack.c.bf16 %v379, %v378
      %v601 = vpack.c.bf16 %v381, %v380
      %v602 = vpack.c.bf16 %v383, %v382
      %v603 = vpack.c.bf16 %v385, %v384
      %v604 = vpack.c.bf16 %v387, %v386
      %v605 = vpack.c.bf16 %v389, %v388
      %v606 = vpack.c.bf16 %v391, %v390
      %v607 = vpack.c.bf16 %v393, %v392
      %v608 = vpack.c.bf16 %v395, %v394
      %v609 = vpack.c.bf16 %v397, %v396
      %v610 = vpack.c.bf16 %v399, %v398
      %v611 = vpack.c.bf16 %v401, %v400
      %v612 = vpack.c.bf16 %v403, %v402
      %v613 = vpack.c.bf16 %v405, %v404
      %v614 = vpack.c.bf16 %v407, %v406
      %v615 = vpack.c.bf16 %v409, %v408
      %v616 = vpack.c.bf16 %v411, %v410
      %v617 = vpack.c.bf16 %v413, %v412
      %v618 = vpack.c.bf16 %v415, %v414
      %v619 = vpack.c.bf16 %v417, %v416
      %v620 = vpack.c.bf16 %v419, %v418
      %v621 = vpack.c.bf16 %v421, %v420
      %v622 = vpack.c.bf16 %v423, %v422
      %v623 = vpack.c.bf16 %v425, %v424
      %v624 = vpack.c.bf16 %v427, %v426
      %v625 = vpack.c.bf16 %v429, %v428
      %v626 = vpack.c.bf16 %v431, %v430
      %v627 = vld [vmem:[%s1] sm:$0xf]
      %v628 = vld [vmem:[%s2] sm:$0x1]
      %v630 = vperm.slane %v628, 0
      %vm632 = vcmask 64512
      %v634 = vsel %vm632, %v563, 0
      %v637 = vsel %vm632, %v564, 0
      %v640 = vsel %vm632, %v565, 0
      %v643 = vsel %vm632, %v566, 0
      %v646 = vsel %vm632, %v567, 0
      %v649 = vsel %vm632, %v568, 0
      %v652 = vsel %vm632, %v569, 0
      %v655 = vsel %vm632, %v570, 0
      %v658 = vsel %vm632, %v571, 0
      %v661 = vsel %vm632, %v572, 0
      %v664 = vsel %vm632, %v573, 0
      %v667 = vsel %vm632, %v574, 0
      %v670 = vsel %vm632, %v575, 0
      %v673 = vsel %vm632, %v576, 0
      %v676 = vsel %vm632, %v577, 0
      %v679 = vsel %vm632, %v578, 0
      %v682 = vsel %vm632, %v579, 0
      %v685 = vsel %vm632, %v580, 0
      %v688 = vsel %vm632, %v581, 0
      %v691 = vsel %vm632, %v582, 0
      %v694 = vsel %vm632, %v583, 0
      %v697 = vsel %vm632, %v584, 0
      %v700 = vsel %vm632, %v585, 0
      %v703 = vsel %vm632, %v586, 0
      %v706 = vsel %vm632, %v587, 0
      %v709 = vsel %vm632, %v588, 0
      %v712 = vsel %vm632, %v589, 0
      %v715 = vsel %vm632, %v590, 0
      %v718 = vsel %vm632, %v591, 0
      %v721 = vsel %vm632, %v592, 0
      %v724 = vsel %vm632, %v593, 0
      %v727 = vsel %vm632, %v594, 0
      %v730 = vsel %vm632, %v595, 0
      %v733 = vsel %vm632, %v596, 0
      %v736 = vsel %vm632, %v597, 0
      %v739 = vsel %vm632, %v598, 0
      %v742 = vsel %vm632, %v599, 0
      %v745 = vsel %vm632, %v600, 0
      %v748 = vsel %vm632, %v601, 0
      %v751 = vsel %vm632, %v602, 0
      %v754 = vsel %vm632, %v603, 0
      %v757 = vsel %vm632, %v604, 0
      %v760 = vsel %vm632, %v605, 0
      %v763 = vsel %vm632, %v606, 0
      %v766 = vsel %vm632, %v607, 0
      %v769 = vsel %vm632, %v608, 0
      %v772 = vsel %vm632, %v609, 0
      %v775 = vsel %vm632, %v610, 0
      %v778 = vsel %vm632, %v611, 0
      %v781 = vsel %vm632, %v612, 0
      %v784 = vsel %vm632, %v613, 0
      %v787 = vsel %vm632, %v614, 0
      %v790 = vsel %vm632, %v615, 0
      %v793 = vsel %vm632, %v616, 0
      %v796 = vsel %vm632, %v617, 0
      %v799 = vsel %vm632, %v618, 0
      %v802 = vsel %vm632, %v619, 0
      %v805 = vsel %vm632, %v620, 0
      %v808 = vsel %vm632, %v621, 0
      %v811 = vsel %vm632, %v622, 0
      %v814 = vsel %vm632, %v623, 0
      %v817 = vsel %vm632, %v624, 0
      %v820 = vsel %vm632, %v625, 0
      %v823 = vsel %vm632, %v626, 0
      %vm825 = vcmask 1043456
      %v827 = vsel %vm825, %v627, 0
      %829 = vmatpush.bf16.msra.mxu0 0
      %830 = vmatpush.bf16.msra.mxu0 0
      %831 = vmatpush.bf16.msra.mxu0 0
      %832 = vmatpush.bf16.msra.mxu0 0
      %833 = vmatpush.bf16.msra.mxu0 0
      %834 = vmatpush.bf16.msra.mxu0 0
      %835 = vmatpush.bf16.msra.mxu0 0
      %836 = vmatpush.bf16.msra.mxu0 %v827
      %837 = vmatmul.bf16.gmra.mxu0 %v634
      %v838 = vpop.f32.mrf.mxu0
      %v839 = vadd.f32 %v630, %v838
      %v840 = vpop.f32.mrf.mxu0
      %v841 = vadd.f32 %v630, %v840
      %842 = vmatmul.bf16.gmra.mxu0 %v637
      %v843 = vpop.f32.mrf.mxu0
      %v844 = vadd.f32 %v630, %v843
      %v845 = vpop.f32.mrf.mxu0
      %v846 = vadd.f32 %v630, %v845
      %847 = vmatmul.bf16.gmra.mxu0 %v640
      %v848 = vpop.f32.mrf.mxu0
      %v849 = vadd.f32 %v630, %v848
      %v850 = vpop.f32.mrf.mxu0
      %v851 = vadd.f32 %v630, %v850
      %852 = vmatmul.bf16.gmra.mxu0 %v643
      %v853 = vpop.f32.mrf.mxu0
      %v854 = vadd.f32 %v630, %v853
      %v855 = vpop.f32.mrf.mxu0
      %v856 = vadd.f32 %v630, %v855
      %857 = vmatmul.bf16.gmra.mxu0 %v646
      %v858 = vpop.f32.mrf.mxu0
      %v859 = vadd.f32 %v630, %v858
      %v860 = vpop.f32.mrf.mxu0
      %v861 = vadd.f32 %v630, %v860
      %862 = vmatmul.bf16.gmra.mxu0 %v649
      %v863 = vpop.f32.mrf.mxu0
      %v864 = vadd.f32 %v630, %v863
      %v865 = vpop.f32.mrf.mxu0
      %v866 = vadd.f32 %v630, %v865
      %867 = vmatmul.bf16.gmra.mxu0 %v652
      %v868 = vpop.f32.mrf.mxu0
      %v869 = vadd.f32 %v630, %v868
      %v870 = vpop.f32.mrf.mxu0
      %v871 = vadd.f32 %v630, %v870
      %872 = vmatmul.bf16.gmra.mxu0 %v655
      %v873 = vpop.f32.mrf.mxu0
      %v874 = vadd.f32 %v630, %v873
      %v875 = vpop.f32.mrf.mxu0
      %v876 = vadd.f32 %v630, %v875
      %877 = vmatmul.bf16.gmra.mxu0 %v658
      %v878 = vpop.f32.mrf.mxu0
      %v879 = vadd.f32 %v630, %v878
      %v880 = vpop.f32.mrf.mxu0
      %v881 = vadd.f32 %v630, %v880
      %882 = vmatmul.bf16.gmra.mxu0 %v661
      %v883 = vpop.f32.mrf.mxu0
      %v884 = vadd.f32 %v630, %v883
      %v885 = vpop.f32.mrf.mxu0
      %v886 = vadd.f32 %v630, %v885
      %887 = vmatmul.bf16.gmra.mxu0 %v664
      %v888 = vpop.f32.mrf.mxu0
      %v889 = vadd.f32 %v630, %v888
      %v890 = vpop.f32.mrf.mxu0
      %v891 = vadd.f32 %v630, %v890
      %892 = vmatmul.bf16.gmra.mxu0 %v667
      %v893 = vpop.f32.mrf.mxu0
      %v894 = vadd.f32 %v630, %v893
      %v895 = vpop.f32.mrf.mxu0
      %v896 = vadd.f32 %v630, %v895
      %897 = vmatmul.bf16.gmra.mxu0 %v670
      %v898 = vpop.f32.mrf.mxu0
      %v899 = vadd.f32 %v630, %v898
      %v900 = vpop.f32.mrf.mxu0
      %v901 = vadd.f32 %v630, %v900
      %902 = vmatmul.bf16.gmra.mxu0 %v673
      %v903 = vpop.f32.mrf.mxu0
      %v904 = vadd.f32 %v630, %v903
      %v905 = vpop.f32.mrf.mxu0
      %v906 = vadd.f32 %v630, %v905
      %907 = vmatmul.bf16.gmra.mxu0 %v676
      %v908 = vpop.f32.mrf.mxu0
      %v909 = vadd.f32 %v630, %v908
      %v910 = vpop.f32.mrf.mxu0
      %v911 = vadd.f32 %v630, %v910
      %912 = vmatmul.bf16.gmra.mxu0 %v679
      %v913 = vpop.f32.mrf.mxu0
      %v914 = vadd.f32 %v630, %v913
      %v915 = vpop.f32.mrf.mxu0
      %v916 = vadd.f32 %v630, %v915
      %917 = vmatmul.bf16.gmra.mxu0 %v682
      %v918 = vpop.f32.mrf.mxu0
      %v919 = vadd.f32 %v630, %v918
      %v920 = vpop.f32.mrf.mxu0
      %v921 = vadd.f32 %v630, %v920
      %922 = vmatmul.bf16.gmra.mxu0 %v685
      %v923 = vpop.f32.mrf.mxu0
      %v924 = vadd.f32 %v630, %v923
      %v925 = vpop.f32.mrf.mxu0
      %v926 = vadd.f32 %v630, %v925
      %927 = vmatmul.bf16.gmra.mxu0 %v688
      %v928 = vpop.f32.mrf.mxu0
      %v929 = vadd.f32 %v630, %v928
      %v930 = vpop.f32.mrf.mxu0
      %v931 = vadd.f32 %v630, %v930
      %932 = vmatmul.bf16.gmra.mxu0 %v691
      %v933 = vpop.f32.mrf.mxu0
      %v934 = vadd.f32 %v630, %v933
      %v935 = vpop.f32.mrf.mxu0
      %v936 = vadd.f32 %v630, %v935
      %937 = vmatmul.bf16.gmra.mxu0 %v694
      %v938 = vpop.f32.mrf.mxu0
      %v939 = vadd.f32 %v630, %v938
      %v940 = vpop.f32.mrf.mxu0
      %v941 = vadd.f32 %v630, %v940
      %942 = vmatmul.bf16.gmra.mxu0 %v697
      %v943 = vpop.f32.mrf.mxu0
      %v944 = vadd.f32 %v630, %v943
      %v945 = vpop.f32.mrf.mxu0
      %v946 = vadd.f32 %v630, %v945
      %947 = vmatmul.bf16.gmra.mxu0 %v700
      %v948 = vpop.f32.mrf.mxu0
      %v949 = vadd.f32 %v630, %v948
      %v950 = vpop.f32.mrf.mxu0
      %v951 = vadd.f32 %v630, %v950
      %952 = vmatmul.bf16.gmra.mxu0 %v703
      %v953 = vpop.f32.mrf.mxu0
      %v954 = vadd.f32 %v630, %v953
      %v955 = vpop.f32.mrf.mxu0
      %v956 = vadd.f32 %v630, %v955
      %957 = vmatmul.bf16.gmra.mxu0 %v706
      %v958 = vpop.f32.mrf.mxu0
      %v959 = vadd.f32 %v630, %v958
      %v960 = vpop.f32.mrf.mxu0
      %v961 = vadd.f32 %v630, %v960
      %962 = vmatmul.bf16.gmra.mxu0 %v709
      %v963 = vpop.f32.mrf.mxu0
      %v964 = vadd.f32 %v630, %v963
      %v965 = vpop.f32.mrf.mxu0
      %v966 = vadd.f32 %v630, %v965
      %967 = vmatmul.bf16.gmra.mxu0 %v712
      %v968 = vpop.f32.mrf.mxu0
      %v969 = vadd.f32 %v630, %v968
      %v970 = vpop.f32.mrf.mxu0
      %v971 = vadd.f32 %v630, %v970
      %972 = vmatmul.bf16.gmra.mxu0 %v715
      %v973 = vpop.f32.mrf.mxu0
      %v974 = vadd.f32 %v630, %v973
      %v975 = vpop.f32.mrf.mxu0
      %v976 = vadd.f32 %v630, %v975
      %977 = vmatmul.bf16.gmra.mxu0 %v718
      %v978 = vpop.f32.mrf.mxu0
      %v979 = vadd.f32 %v630, %v978
      %v980 = vpop.f32.mrf.mxu0
      %v981 = vadd.f32 %v630, %v980
      %982 = vmatmul.bf16.gmra.mxu0 %v721
      %v983 = vpop.f32.mrf.mxu0
      %v984 = vadd.f32 %v630, %v983
      %v985 = vpop.f32.mrf.mxu0
      %v986 = vadd.f32 %v630, %v985
      %987 = vmatmul.bf16.gmra.mxu0 %v724
      %v988 = vpop.f32.mrf.mxu0
      %v989 = vadd.f32 %v630, %v988
      %v990 = vpop.f32.mrf.mxu0
      %v991 = vadd.f32 %v630, %v990
      %992 = vmatmul.bf16.gmra.mxu0 %v727
      %v993 = vpop.f32.mrf.mxu0
      %v994 = vadd.f32 %v630, %v993
      %v995 = vpop.f32.mrf.mxu0
      %v996 = vadd.f32 %v630, %v995
      %997 = vmatmul.bf16.gmra.mxu0 %v730
      %v998 = vpop.f32.mrf.mxu0
      %v999 = vadd.f32 %v630, %v998
      %v1000 = vpop.f32.mrf.mxu0
      %v1001 = vadd.f32 %v630, %v1000
      %1002 = vmatmul.bf16.gmra.mxu0 %v733
      %v1003 = vpop.f32.mrf.mxu0
      %v1004 = vadd.f32 %v630, %v1003
      %v1005 = vpop.f32.mrf.mxu0
      %v1006 = vadd.f32 %v630, %v1005
      %1007 = vmatmul.bf16.gmra.mxu0 %v736
      %v1008 = vpop.f32.mrf.mxu0
      %v1009 = vadd.f32 %v630, %v1008
      %v1010 = vpop.f32.mrf.mxu0
      %v1011 = vadd.f32 %v630, %v1010
      %1012 = vmatmul.bf16.gmra.mxu0 %v739
      %v1013 = vpop.f32.mrf.mxu0
      %v1014 = vadd.f32 %v630, %v1013
      %v1015 = vpop.f32.mrf.mxu0
      %v1016 = vadd.f32 %v630, %v1015
      %1017 = vmatmul.bf16.gmra.mxu0 %v742
      %v1018 = vpop.f32.mrf.mxu0
      %v1019 = vadd.f32 %v630, %v1018
      %v1020 = vpop.f32.mrf.mxu0
      %v1021 = vadd.f32 %v630, %v1020
      %1022 = vmatmul.bf16.gmra.mxu0 %v745
      %v1023 = vpop.f32.mrf.mxu0
      %v1024 = vadd.f32 %v630, %v1023
      %v1025 = vpop.f32.mrf.mxu0
      %v1026 = vadd.f32 %v630, %v1025
      %1027 = vmatmul.bf16.gmra.mxu0 %v748
      %v1028 = vpop.f32.mrf.mxu0
      %v1029 = vadd.f32 %v630, %v1028
      %v1030 = vpop.f32.mrf.mxu0
      %v1031 = vadd.f32 %v630, %v1030
      %1032 = vmatmul.bf16.gmra.mxu0 %v751
      %v1033 = vpop.f32.mrf.mxu0
      %v1034 = vadd.f32 %v630, %v1033
      %v1035 = vpop.f32.mrf.mxu0
      %v1036 = vadd.f32 %v630, %v1035
      %1037 = vmatmul.bf16.gmra.mxu0 %v754
      %v1038 = vpop.f32.mrf.mxu0
      %v1039 = vadd.f32 %v630, %v1038
      %v1040 = vpop.f32.mrf.mxu0
      %v1041 = vadd.f32 %v630, %v1040
      %1042 = vmatmul.bf16.gmra.mxu0 %v757
      %v1043 = vpop.f32.mrf.mxu0
      %v1044 = vadd.f32 %v630, %v1043
      %v1045 = vpop.f32.mrf.mxu0
      %v1046 = vadd.f32 %v630, %v1045
      %1047 = vmatmul.bf16.gmra.mxu0 %v760
      %v1048 = vpop.f32.mrf.mxu0
      %v1049 = vadd.f32 %v630, %v1048
      %v1050 = vpop.f32.mrf.mxu0
      %v1051 = vadd.f32 %v630, %v1050
      %1052 = vmatmul.bf16.gmra.mxu0 %v763
      %v1053 = vpop.f32.mrf.mxu0
      %v1054 = vadd.f32 %v630, %v1053
      %v1055 = vpop.f32.mrf.mxu0
      %v1056 = vadd.f32 %v630, %v1055
      %1057 = vmatmul.bf16.gmra.mxu0 %v766
      %v1058 = vpop.f32.mrf.mxu0
      %v1059 = vadd.f32 %v630, %v1058
      %v1060 = vpop.f32.mrf.mxu0
      %v1061 = vadd.f32 %v630, %v1060
      %1062 = vmatmul.bf16.gmra.mxu0 %v769
      %v1063 = vpop.f32.mrf.mxu0
      %v1064 = vadd.f32 %v630, %v1063
      %v1065 = vpop.f32.mrf.mxu0
      %v1066 = vadd.f32 %v630, %v1065
      %1067 = vmatmul.bf16.gmra.mxu0 %v772
      %v1068 = vpop.f32.mrf.mxu0
      %v1069 = vadd.f32 %v630, %v1068
      %v1070 = vpop.f32.mrf.mxu0
      %v1071 = vadd.f32 %v630, %v1070
      %1072 = vmatmul.bf16.gmra.mxu0 %v775
      %v1073 = vpop.f32.mrf.mxu0
      %v1074 = vadd.f32 %v630, %v1073
      %v1075 = vpop.f32.mrf.mxu0
      %v1076 = vadd.f32 %v630, %v1075
      %1077 = vmatmul.bf16.gmra.mxu0 %v778
      %v1078 = vpop.f32.mrf.mxu0
      %v1079 = vadd.f32 %v630, %v1078
      %v1080 = vpop.f32.mrf.mxu0
      %v1081 = vadd.f32 %v630, %v1080
      %1082 = vmatmul.bf16.gmra.mxu0 %v781
      %v1083 = vpop.f32.mrf.mxu0
      %v1084 = vadd.f32 %v630, %v1083
      %v1085 = vpop.f32.mrf.mxu0
      %v1086 = vadd.f32 %v630, %v1085
      %1087 = vmatmul.bf16.gmra.mxu0 %v784
      %v1088 = vpop.f32.mrf.mxu0
      %v1089 = vadd.f32 %v630, %v1088
      %v1090 = vpop.f32.mrf.mxu0
      %v1091 = vadd.f32 %v630, %v1090
      %1092 = vmatmul.bf16.gmra.mxu0 %v787
      %v1093 = vpop.f32.mrf.mxu0
      %v1094 = vadd.f32 %v630, %v1093
      %v1095 = vpop.f32.mrf.mxu0
      %v1096 = vadd.f32 %v630, %v1095
      %1097 = vmatmul.bf16.gmra.mxu0 %v790
      %v1098 = vpop.f32.mrf.mxu0
      %v1099 = vadd.f32 %v630, %v1098
      %v1100 = vpop.f32.mrf.mxu0
      %v1101 = vadd.f32 %v630, %v1100
      %1102 = vmatmul.bf16.gmra.mxu0 %v793
      %v1103 = vpop.f32.mrf.mxu0
      %v1104 = vadd.f32 %v630, %v1103
      %v1105 = vpop.f32.mrf.mxu0
      %v1106 = vadd.f32 %v630, %v1105
      %1107 = vmatmul.bf16.gmra.mxu0 %v796
      %v1108 = vpop.f32.mrf.mxu0
      %v1109 = vadd.f32 %v630, %v1108
      %v1110 = vpop.f32.mrf.mxu0
      %v1111 = vadd.f32 %v630, %v1110
      %1112 = vmatmul.bf16.gmra.mxu0 %v799
      %v1113 = vpop.f32.mrf.mxu0
      %v1114 = vadd.f32 %v630, %v1113
      %v1115 = vpop.f32.mrf.mxu0
      %v1116 = vadd.f32 %v630, %v1115
      %1117 = vmatmul.bf16.gmra.mxu0 %v802
      %v1118 = vpop.f32.mrf.mxu0
      %v1119 = vadd.f32 %v630, %v1118
      %v1120 = vpop.f32.mrf.mxu0
      %v1121 = vadd.f32 %v630, %v1120
      %1122 = vmatmul.bf16.gmra.mxu0 %v805
      %v1123 = vpop.f32.mrf.mxu0
      %v1124 = vadd.f32 %v630, %v1123
      %v1125 = vpop.f32.mrf.mxu0
      %v1126 = vadd.f32 %v630, %v1125
      %1127 = vmatmul.bf16.gmra.mxu0 %v808
      %v1128 = vpop.f32.mrf.mxu0
      %v1129 = vadd.f32 %v630, %v1128
      %v1130 = vpop.f32.mrf.mxu0
      %v1131 = vadd.f32 %v630, %v1130
      %1132 = vmatmul.bf16.gmra.mxu0 %v811
      %v1133 = vpop.f32.mrf.mxu0
      %v1134 = vadd.f32 %v630, %v1133
      %v1135 = vpop.f32.mrf.mxu0
      %v1136 = vadd.f32 %v630, %v1135
      %1137 = vmatmul.bf16.gmra.mxu0 %v814
      %v1138 = vpop.f32.mrf.mxu0
      %v1139 = vadd.f32 %v630, %v1138
      %v1140 = vpop.f32.mrf.mxu0
      %v1141 = vadd.f32 %v630, %v1140
      %1142 = vmatmul.bf16.gmra.mxu0 %v817
      %v1143 = vpop.f32.mrf.mxu0
      %v1144 = vadd.f32 %v630, %v1143
      %v1145 = vpop.f32.mrf.mxu0
      %v1146 = vadd.f32 %v630, %v1145
      %1147 = vmatmul.bf16.gmra.mxu0 %v820
      %v1148 = vpop.f32.mrf.mxu0
      %v1149 = vadd.f32 %v630, %v1148
      %v1150 = vpop.f32.mrf.mxu0
      %v1151 = vadd.f32 %v630, %v1150
      %1152 = vmatmul.bf16.gmra.mxu0 %v823
      %v1153 = vpop.f32.mrf.mxu0
      %v1154 = vadd.f32 %v630, %v1153
      %v1155 = vpop.f32.mrf.mxu0
      %v1156 = vadd.f32 %v630, %v1155
      %1157 = vdwg.mxu0
      %v1158 = vtanh.pop %v839
      %v1159 = vtanh.pop %v841
      %v1160 = vtanh.pop %v844
      %v1161 = vtanh.pop %v846
      %v1162 = vtanh.pop %v849
      %v1163 = vtanh.pop %v851
      %v1164 = vtanh.pop %v854
      %v1165 = vtanh.pop %v856
      %v1166 = vtanh.pop %v859
      %v1167 = vtanh.pop %v861
      %v1168 = vtanh.pop %v864
      %v1169 = vtanh.pop %v866
      %v1170 = vtanh.pop %v869
      %v1171 = vtanh.pop %v871
      %v1172 = vtanh.pop %v874
      %v1173 = vtanh.pop %v876
      %v1174 = vtanh.pop %v879
      %v1175 = vtanh.pop %v881
      %v1176 = vtanh.pop %v884
      %v1177 = vtanh.pop %v886
      %v1178 = vtanh.pop %v889
      %v1179 = vtanh.pop %v891
      %v1180 = vtanh.pop %v894
      %v1181 = vtanh.pop %v896
      %v1182 = vtanh.pop %v899
      %v1183 = vtanh.pop %v901
      %v1184 = vtanh.pop %v904
      %v1185 = vtanh.pop %v906
      %v1186 = vtanh.pop %v909
      %v1187 = vtanh.pop %v911
      %v1188 = vtanh.pop %v914
      %v1189 = vtanh.pop %v916
      %v1190 = vtanh.pop %v919
      %v1191 = vtanh.pop %v921
      %v1192 = vtanh.pop %v924
      %v1193 = vtanh.pop %v926
      %v1194 = vtanh.pop %v929
      %v1195 = vtanh.pop %v931
      %v1196 = vtanh.pop %v934
      %v1197 = vtanh.pop %v936
      %v1198 = vtanh.pop %v939
      %v1199 = vtanh.pop %v941
      %v1200 = vtanh.pop %v944
      %v1201 = vtanh.pop %v946
      %v1202 = vtanh.pop %v949
      %v1203 = vtanh.pop %v951
      %v1204 = vtanh.pop %v954
      %v1205 = vtanh.pop %v956
      %v1206 = vtanh.pop %v959
      %v1207 = vtanh.pop %v961
      %v1208 = vtanh.pop %v964
      %v1209 = vtanh.pop %v966
      %v1210 = vtanh.pop %v969
      %v1211 = vtanh.pop %v971
      %v1212 = vtanh.pop %v974
      %v1213 = vtanh.pop %v976
      %v1214 = vtanh.pop %v979
      %v1215 = vtanh.pop %v981
      %v1216 = vtanh.pop %v984
      %v1217 = vtanh.pop %v986
      %v1218 = vtanh.pop %v989
      %v1219 = vtanh.pop %v991
      %v1220 = vtanh.pop %v994
      %v1221 = vtanh.pop %v996
      %v1222 = vtanh.pop %v999
      %v1223 = vtanh.pop %v1001
      %v1224 = vtanh.pop %v1004
      %v1225 = vtanh.pop %v1006
      %v1226 = vtanh.pop %v1009
      %v1227 = vtanh.pop %v1011
      %v1228 = vtanh.pop %v1014
      %v1229 = vtanh.pop %v1016
      %v1230 = vtanh.pop %v1019
      %v1231 = vtanh.pop %v1021
      %v1232 = vtanh.pop %v1024
      %v1233 = vtanh.pop %v1026
      %v1234 = vtanh.pop %v1029
      %v1235 = vtanh.pop %v1031
      %v1236 = vtanh.pop %v1034
      %v1237 = vtanh.pop %v1036
      %v1238 = vtanh.pop %v1039
      %v1239 = vtanh.pop %v1041
      %v1240 = vtanh.pop %v1044
      %v1241 = vtanh.pop %v1046
      %v1242 = vtanh.pop %v1049
      %v1243 = vtanh.pop %v1051
      %v1244 = vtanh.pop %v1054
      %v1245 = vtanh.pop %v1056
      %v1246 = vtanh.pop %v1059
      %v1247 = vtanh.pop %v1061
      %v1248 = vtanh.pop %v1064
      %v1249 = vtanh.pop %v1066
      %v1250 = vtanh.pop %v1069
      %v1251 = vtanh.pop %v1071
      %v1252 = vtanh.pop %v1074
      %v1253 = vtanh.pop %v1076
      %v1254 = vtanh.pop %v1079
      %v1255 = vtanh.pop %v1081
      %v1256 = vtanh.pop %v1084
      %v1257 = vtanh.pop %v1086
      %v1258 = vtanh.pop %v1089
      %v1259 = vtanh.pop %v1091
      %v1260 = vtanh.pop %v1094
      %v1261 = vtanh.pop %v1096
      %v1262 = vtanh.pop %v1099
      %v1263 = vtanh.pop %v1101
      %v1264 = vtanh.pop %v1104
      %v1265 = vtanh.pop %v1106
      %v1266 = vtanh.pop %v1109
      %v1267 = vtanh.pop %v1111
      %v1268 = vtanh.pop %v1114
      %v1269 = vtanh.pop %v1116
      %v1270 = vtanh.pop %v1119
      %v1271 = vtanh.pop %v1121
      %v1272 = vtanh.pop %v1124
      %v1273 = vtanh.pop %v1126
      %v1274 = vtanh.pop %v1129
      %v1275 = vtanh.pop %v1131
      %v1276 = vtanh.pop %v1134
      %v1277 = vtanh.pop %v1136
      %v1278 = vtanh.pop %v1139
      %v1279 = vtanh.pop %v1141
      %v1280 = vtanh.pop %v1144
      %v1281 = vtanh.pop %v1146
      %v1282 = vtanh.pop %v1149
      %v1283 = vtanh.pop %v1151
      %v1284 = vtanh.pop %v1154
      %v1285 = vtanh.pop %v1156
      %v1286 = vpack.c.bf16 %v1159, %v1158
      %v1287 = vpack.c.bf16 %v1161, %v1160
      %v1288 = vpack.c.bf16 %v1163, %v1162
      %v1289 = vpack.c.bf16 %v1165, %v1164
      %v1290 = vpack.c.bf16 %v1167, %v1166
      %v1291 = vpack.c.bf16 %v1169, %v1168
      %v1292 = vpack.c.bf16 %v1171, %v1170
      %v1293 = vpack.c.bf16 %v1173, %v1172
      %v1294 = vpack.c.bf16 %v1175, %v1174
      %v1295 = vpack.c.bf16 %v1177, %v1176
      %v1296 = vpack.c.bf16 %v1179, %v1178
      %v1297 = vpack.c.bf16 %v1181, %v1180
      %v1298 = vpack.c.bf16 %v1183, %v1182
      %v1299 = vpack.c.bf16 %v1185, %v1184
      %v1300 = vpack.c.bf16 %v1187, %v1186
      %v1301 = vpack.c.bf16 %v1189, %v1188
      %v1302 = vpack.c.bf16 %v1191, %v1190
      %v1303 = vpack.c.bf16 %v1193, %v1192
      %v1304 = vpack.c.bf16 %v1195, %v1194
      %v1305 = vpack.c.bf16 %v1197, %v1196
      %v1306 = vpack.c.bf16 %v1199, %v1198
      %v1307 = vpack.c.bf16 %v1201, %v1200
      %v1308 = vpack.c.bf16 %v1203, %v1202
      %v1309 = vpack.c.bf16 %v1205, %v1204
      %v1310 = vpack.c.bf16 %v1207, %v1206
      %v1311 = vpack.c.bf16 %v1209, %v1208
      %v1312 = vpack.c.bf16 %v1211, %v1210
      %v1313 = vpack.c.bf16 %v1213, %v1212
      %v1314 = vpack.c.bf16 %v1215, %v1214
      %v1315 = vpack.c.bf16 %v1217, %v1216
      %v1316 = vpack.c.bf16 %v1219, %v1218
      %v1317 = vpack.c.bf16 %v1221, %v1220
      %v1318 = vpack.c.bf16 %v1223, %v1222
      %v1319 = vpack.c.bf16 %v1225, %v1224
      %v1320 = vpack.c.bf16 %v1227, %v1226
      %v1321 = vpack.c.bf16 %v1229, %v1228
      %v1322 = vpack.c.bf16 %v1231, %v1230
      %v1323 = vpack.c.bf16 %v1233, %v1232
      %v1324 = vpack.c.bf16 %v1235, %v1234
      %v1325 = vpack.c.bf16 %v1237, %v1236
      %v1326 = vpack.c.bf16 %v1239, %v1238
      %v1327 = vpack.c.bf16 %v1241, %v1240
      %v1328 = vpack.c.bf16 %v1243, %v1242
      %v1329 = vpack.c.bf16 %v1245, %v1244
      %v1330 = vpack.c.bf16 %v1247, %v1246
      %v1331 = vpack.c.bf16 %v1249, %v1248
      %v1332 = vpack.c.bf16 %v1251, %v1250
      %v1333 = vpack.c.bf16 %v1253, %v1252
      %v1334 = vpack.c.bf16 %v1255, %v1254
      %v1335 = vpack.c.bf16 %v1257, %v1256
      %v1336 = vpack.c.bf16 %v1259, %v1258
      %v1337 = vpack.c.bf16 %v1261, %v1260
      %v1338 = vpack.c.bf16 %v1263, %v1262
      %v1339 = vpack.c.bf16 %v1265, %v1264
      %v1340 = vpack.c.bf16 %v1267, %v1266
      %v1341 = vpack.c.bf16 %v1269, %v1268
      %v1342 = vpack.c.bf16 %v1271, %v1270
      %v1343 = vpack.c.bf16 %v1273, %v1272
      %v1344 = vpack.c.bf16 %v1275, %v1274
      %v1345 = vpack.c.bf16 %v1277, %v1276
      %v1346 = vpack.c.bf16 %v1279, %v1278
      %v1347 = vpack.c.bf16 %v1281, %v1280
      %v1348 = vpack.c.bf16 %v1283, %v1282
      %v1349 = vpack.c.bf16 %v1285, %v1284
      %s1350 = scalar_lea.vmem %s1, 64
      %v1351 = vld [vmem:[%s1350] sm:$0xf]
      %v1352 = vld [vmem:[%s1350 + $0x4] sm:$0xf]
      %v1353 = vld [vmem:[%s1350 + $0x8] sm:$0xf]
      %v1354 = vld [vmem:[%s1350 + $0xc] sm:$0xf]
      %v1355 = vld [vmem:[%s1350 + $0x10] sm:$0xf]
      %v1356 = vld [vmem:[%s1350 + $0x14] sm:$0xf]
      %v1357 = vld [vmem:[%s1350 + $0x18] sm:$0xf]
      %v1358 = vld [vmem:[%s1350 + $0x1c] sm:$0xf]
      %v1359 = vld [vmem:[%s1350 + $0x20] sm:$0xf]
      %v1360 = vld [vmem:[%s1350 + $0x24] sm:$0xf]
      %v1361 = vld [vmem:[%s1350 + $0x28] sm:$0xf]
      %v1362 = vld [vmem:[%s1350 + $0x2c] sm:$0xf]
      %v1363 = vld [vmem:[%s1350 + $0x30] sm:$0xf]
      %v1364 = vld [vmem:[%s1350 + $0x34] sm:$0xf]
      %v1365 = vld [vmem:[%s1350 + $0x38] sm:$0xf]
      %v1366 = vld [vmem:[%s1350 + $0x3c] sm:$0xf]
      %s1367 = scalar_lea.vmem %s2, 1
      %v1368 = vld [vmem:[%s1367] sm:$0x1]
      %v1370 = vperm.slane %v1368, 0
      %v1388 = vunpack.c.l.b16 %v1351
      %v1389 = vunpack.c.l.b16 %v1352
      %v1390 = vunpack.c.l.b16 %v1353
      %v1391 = vunpack.c.l.b16 %v1354
      %v1392 = vunpack.c.l.b16 %v1355
      %v1393 = vunpack.c.l.b16 %v1356
      %v1394 = vunpack.c.l.b16 %v1357
      %v1395 = vunpack.c.l.b16 %v1358
      %v1396 = vunpack.c.l.b16 %v1359
      %v1397 = vunpack.c.l.b16 %v1360
      %v1398 = vunpack.c.l.b16 %v1361
      %v1399 = vunpack.c.l.b16 %v1362
      %v1400 = vunpack.c.l.b16 %v1363
      %v1401 = vunpack.c.l.b16 %v1364
      %v1402 = vunpack.c.l.b16 %v1365
      %v1403 = vunpack.c.l.b16 %v1366
      %v1404 = vpack.c.b16 %v1389, %v1388
      %v1405 = vpack.c.b16 %v1391, %v1390
      %v1406 = vpack.c.b16 %v1393, %v1392
      %v1407 = vpack.c.b16 %v1395, %v1394
      %v1408 = vpack.c.b16 %v1397, %v1396
      %v1409 = vpack.c.b16 %v1399, %v1398
      %v1410 = vpack.c.b16 %v1401, %v1400
      %v1411 = vpack.c.b16 %v1403, %v1402
      %1420 = vmatpush.bf16.msra.mxu0 %v1411
      %1421 = vmatpush.bf16.msra.mxu0 %v1410
      %1422 = vmatpush.bf16.msra.mxu0 %v1409
      %1423 = vmatpush.bf16.msra.mxu0 %v1408
      %1424 = vmatpush.bf16.msra.mxu0 %v1407
      %1425 = vmatpush.bf16.msra.mxu0 %v1406
      %1426 = vmatpush.bf16.msra.mxu0 %v1405
      %1427 = vmatpush.bf16.msra.mxu0 %v1404
      %1428 = vmatmul.bf16.gmra.mxu0 %v1286
      %v1429 = vpop.f32.mrf.mxu0
      %v1430 = vadd.f32 %v1370, %v1429
      %v1431 = vpop.f32.mrf.mxu0
      %v1432 = vadd.f32 %v1370, %v1431
      %1433 = vmatmul.bf16.gmra.mxu0 %v1287
      %v1434 = vpop.f32.mrf.mxu0
      %v1435 = vadd.f32 %v1370, %v1434
      %v1436 = vpop.f32.mrf.mxu0
      %v1437 = vadd.f32 %v1370, %v1436
      %1438 = vmatmul.bf16.gmra.mxu0 %v1288
      %v1439 = vpop.f32.mrf.mxu0
      %v1440 = vadd.f32 %v1370, %v1439
      %v1441 = vpop.f32.mrf.mxu0
      %v1442 = vadd.f32 %v1370, %v1441
      %1443 = vmatmul.bf16.gmra.mxu0 %v1289
      %v1444 = vpop.f32.mrf.mxu0
      %v1445 = vadd.f32 %v1370, %v1444
      %v1446 = vpop.f32.mrf.mxu0
      %v1447 = vadd.f32 %v1370, %v1446
      %1448 = vmatmul.bf16.gmra.mxu0 %v1290
      %v1449 = vpop.f32.mrf.mxu0
      %v1450 = vadd.f32 %v1370, %v1449
      %v1451 = vpop.f32.mrf.mxu0
      %v1452 = vadd.f32 %v1370, %v1451
      %1453 = vmatmul.bf16.gmra.mxu0 %v1291
      %v1454 = vpop.f32.mrf.mxu0
      %v1455 = vadd.f32 %v1370, %v1454
      %v1456 = vpop.f32.mrf.mxu0
      %v1457 = vadd.f32 %v1370, %v1456
      %1458 = vmatmul.bf16.gmra.mxu0 %v1292
      %v1459 = vpop.f32.mrf.mxu0
      %v1460 = vadd.f32 %v1370, %v1459
      %v1461 = vpop.f32.mrf.mxu0
      %v1462 = vadd.f32 %v1370, %v1461
      %1463 = vmatmul.bf16.gmra.mxu0 %v1293
      %v1464 = vpop.f32.mrf.mxu0
      %v1465 = vadd.f32 %v1370, %v1464
      %v1466 = vpop.f32.mrf.mxu0
      %v1467 = vadd.f32 %v1370, %v1466
      %1468 = vmatmul.bf16.gmra.mxu0 %v1294
      %v1469 = vpop.f32.mrf.mxu0
      %v1470 = vadd.f32 %v1370, %v1469
      %v1471 = vpop.f32.mrf.mxu0
      %v1472 = vadd.f32 %v1370, %v1471
      %1473 = vmatmul.bf16.gmra.mxu0 %v1295
      %v1474 = vpop.f32.mrf.mxu0
      %v1475 = vadd.f32 %v1370, %v1474
      %v1476 = vpop.f32.mrf.mxu0
      %v1477 = vadd.f32 %v1370, %v1476
      %1478 = vmatmul.bf16.gmra.mxu0 %v1296
      %v1479 = vpop.f32.mrf.mxu0
      %v1480 = vadd.f32 %v1370, %v1479
      %v1481 = vpop.f32.mrf.mxu0
      %v1482 = vadd.f32 %v1370, %v1481
      %1483 = vmatmul.bf16.gmra.mxu0 %v1297
      %v1484 = vpop.f32.mrf.mxu0
      %v1485 = vadd.f32 %v1370, %v1484
      %v1486 = vpop.f32.mrf.mxu0
      %v1487 = vadd.f32 %v1370, %v1486
      %1488 = vmatmul.bf16.gmra.mxu0 %v1298
      %v1489 = vpop.f32.mrf.mxu0
      %v1490 = vadd.f32 %v1370, %v1489
      %v1491 = vpop.f32.mrf.mxu0
      %v1492 = vadd.f32 %v1370, %v1491
      %1493 = vmatmul.bf16.gmra.mxu0 %v1299
      %v1494 = vpop.f32.mrf.mxu0
      %v1495 = vadd.f32 %v1370, %v1494
      %v1496 = vpop.f32.mrf.mxu0
      %v1497 = vadd.f32 %v1370, %v1496
      %1498 = vmatmul.bf16.gmra.mxu0 %v1300
      %v1499 = vpop.f32.mrf.mxu0
      %v1500 = vadd.f32 %v1370, %v1499
      %v1501 = vpop.f32.mrf.mxu0
      %v1502 = vadd.f32 %v1370, %v1501
      %1503 = vmatmul.bf16.gmra.mxu0 %v1301
      %v1504 = vpop.f32.mrf.mxu0
      %v1505 = vadd.f32 %v1370, %v1504
      %v1506 = vpop.f32.mrf.mxu0
      %v1507 = vadd.f32 %v1370, %v1506
      %1508 = vmatmul.bf16.gmra.mxu0 %v1302
      %v1509 = vpop.f32.mrf.mxu0
      %v1510 = vadd.f32 %v1370, %v1509
      %v1511 = vpop.f32.mrf.mxu0
      %v1512 = vadd.f32 %v1370, %v1511
      %1513 = vmatmul.bf16.gmra.mxu0 %v1303
      %v1514 = vpop.f32.mrf.mxu0
      %v1515 = vadd.f32 %v1370, %v1514
      %v1516 = vpop.f32.mrf.mxu0
      %v1517 = vadd.f32 %v1370, %v1516
      %1518 = vmatmul.bf16.gmra.mxu0 %v1304
      %v1519 = vpop.f32.mrf.mxu0
      %v1520 = vadd.f32 %v1370, %v1519
      %v1521 = vpop.f32.mrf.mxu0
      %v1522 = vadd.f32 %v1370, %v1521
      %1523 = vmatmul.bf16.gmra.mxu0 %v1305
      %v1524 = vpop.f32.mrf.mxu0
      %v1525 = vadd.f32 %v1370, %v1524
      %v1526 = vpop.f32.mrf.mxu0
      %v1527 = vadd.f32 %v1370, %v1526
      %1528 = vmatmul.bf16.gmra.mxu0 %v1306
      %v1529 = vpop.f32.mrf.mxu0
      %v1530 = vadd.f32 %v1370, %v1529
      %v1531 = vpop.f32.mrf.mxu0
      %v1532 = vadd.f32 %v1370, %v1531
      %1533 = vmatmul.bf16.gmra.mxu0 %v1307
      %v1534 = vpop.f32.mrf.mxu0
      %v1535 = vadd.f32 %v1370, %v1534
      %v1536 = vpop.f32.mrf.mxu0
      %v1537 = vadd.f32 %v1370, %v1536
      %1538 = vmatmul.bf16.gmra.mxu0 %v1308
      %v1539 = vpop.f32.mrf.mxu0
      %v1540 = vadd.f32 %v1370, %v1539
      %v1541 = vpop.f32.mrf.mxu0
      %v1542 = vadd.f32 %v1370, %v1541
      %1543 = vmatmul.bf16.gmra.mxu0 %v1309
      %v1544 = vpop.f32.mrf.mxu0
      %v1545 = vadd.f32 %v1370, %v1544
      %v1546 = vpop.f32.mrf.mxu0
      %v1547 = vadd.f32 %v1370, %v1546
      %1548 = vmatmul.bf16.gmra.mxu0 %v1310
      %v1549 = vpop.f32.mrf.mxu0
      %v1550 = vadd.f32 %v1370, %v1549
      %v1551 = vpop.f32.mrf.mxu0
      %v1552 = vadd.f32 %v1370, %v1551
      %1553 = vmatmul.bf16.gmra.mxu0 %v1311
      %v1554 = vpop.f32.mrf.mxu0
      %v1555 = vadd.f32 %v1370, %v1554
      %v1556 = vpop.f32.mrf.mxu0
      %v1557 = vadd.f32 %v1370, %v1556
      %1558 = vmatmul.bf16.gmra.mxu0 %v1312
      %v1559 = vpop.f32.mrf.mxu0
      %v1560 = vadd.f32 %v1370, %v1559
      %v1561 = vpop.f32.mrf.mxu0
      %v1562 = vadd.f32 %v1370, %v1561
      %1563 = vmatmul.bf16.gmra.mxu0 %v1313
      %v1564 = vpop.f32.mrf.mxu0
      %v1565 = vadd.f32 %v1370, %v1564
      %v1566 = vpop.f32.mrf.mxu0
      %v1567 = vadd.f32 %v1370, %v1566
      %1568 = vmatmul.bf16.gmra.mxu0 %v1314
      %v1569 = vpop.f32.mrf.mxu0
      %v1570 = vadd.f32 %v1370, %v1569
      %v1571 = vpop.f32.mrf.mxu0
      %v1572 = vadd.f32 %v1370, %v1571
      %1573 = vmatmul.bf16.gmra.mxu0 %v1315
      %v1574 = vpop.f32.mrf.mxu0
      %v1575 = vadd.f32 %v1370, %v1574
      %v1576 = vpop.f32.mrf.mxu0
      %v1577 = vadd.f32 %v1370, %v1576
      %1578 = vmatmul.bf16.gmra.mxu0 %v1316
      %v1579 = vpop.f32.mrf.mxu0
      %v1580 = vadd.f32 %v1370, %v1579
      %v1581 = vpop.f32.mrf.mxu0
      %v1582 = vadd.f32 %v1370, %v1581
      %1583 = vmatmul.bf16.gmra.mxu0 %v1317
      %v1584 = vpop.f32.mrf.mxu0
      %v1585 = vadd.f32 %v1370, %v1584
      %v1586 = vpop.f32.mrf.mxu0
      %v1587 = vadd.f32 %v1370, %v1586
      %1588 = vmatmul.bf16.gmra.mxu0 %v1318
      %v1589 = vpop.f32.mrf.mxu0
      %v1590 = vadd.f32 %v1370, %v1589
      %v1591 = vpop.f32.mrf.mxu0
      %v1592 = vadd.f32 %v1370, %v1591
      %1593 = vmatmul.bf16.gmra.mxu0 %v1319
      %v1594 = vpop.f32.mrf.mxu0
      %v1595 = vadd.f32 %v1370, %v1594
      %v1596 = vpop.f32.mrf.mxu0
      %v1597 = vadd.f32 %v1370, %v1596
      %1598 = vmatmul.bf16.gmra.mxu0 %v1320
      %v1599 = vpop.f32.mrf.mxu0
      %v1600 = vadd.f32 %v1370, %v1599
      %v1601 = vpop.f32.mrf.mxu0
      %v1602 = vadd.f32 %v1370, %v1601
      %1603 = vmatmul.bf16.gmra.mxu0 %v1321
      %v1604 = vpop.f32.mrf.mxu0
      %v1605 = vadd.f32 %v1370, %v1604
      %v1606 = vpop.f32.mrf.mxu0
      %v1607 = vadd.f32 %v1370, %v1606
      %1608 = vmatmul.bf16.gmra.mxu0 %v1322
      %v1609 = vpop.f32.mrf.mxu0
      %v1610 = vadd.f32 %v1370, %v1609
      %v1611 = vpop.f32.mrf.mxu0
      %v1612 = vadd.f32 %v1370, %v1611
      %1613 = vmatmul.bf16.gmra.mxu0 %v1323
      %v1614 = vpop.f32.mrf.mxu0
      %v1615 = vadd.f32 %v1370, %v1614
      %v1616 = vpop.f32.mrf.mxu0
      %v1617 = vadd.f32 %v1370, %v1616
      %1618 = vmatmul.bf16.gmra.mxu0 %v1324
      %v1619 = vpop.f32.mrf.mxu0
      %v1620 = vadd.f32 %v1370, %v1619
      %v1621 = vpop.f32.mrf.mxu0
      %v1622 = vadd.f32 %v1370, %v1621
      %1623 = vmatmul.bf16.gmra.mxu0 %v1325
      %v1624 = vpop.f32.mrf.mxu0
      %v1625 = vadd.f32 %v1370, %v1624
      %v1626 = vpop.f32.mrf.mxu0
      %v1627 = vadd.f32 %v1370, %v1626
      %1628 = vmatmul.bf16.gmra.mxu0 %v1326
      %v1629 = vpop.f32.mrf.mxu0
      %v1630 = vadd.f32 %v1370, %v1629
      %v1631 = vpop.f32.mrf.mxu0
      %v1632 = vadd.f32 %v1370, %v1631
      %1633 = vmatmul.bf16.gmra.mxu0 %v1327
      %v1634 = vpop.f32.mrf.mxu0
      %v1635 = vadd.f32 %v1370, %v1634
      %v1636 = vpop.f32.mrf.mxu0
      %v1637 = vadd.f32 %v1370, %v1636
      %1638 = vmatmul.bf16.gmra.mxu0 %v1328
      %v1639 = vpop.f32.mrf.mxu0
      %v1640 = vadd.f32 %v1370, %v1639
      %v1641 = vpop.f32.mrf.mxu0
      %v1642 = vadd.f32 %v1370, %v1641
      %1643 = vmatmul.bf16.gmra.mxu0 %v1329
      %v1644 = vpop.f32.mrf.mxu0
      %v1645 = vadd.f32 %v1370, %v1644
      %v1646 = vpop.f32.mrf.mxu0
      %v1647 = vadd.f32 %v1370, %v1646
      %1648 = vmatmul.bf16.gmra.mxu0 %v1330
      %v1649 = vpop.f32.mrf.mxu0
      %v1650 = vadd.f32 %v1370, %v1649
      %v1651 = vpop.f32.mrf.mxu0
      %v1652 = vadd.f32 %v1370, %v1651
      %1653 = vmatmul.bf16.gmra.mxu0 %v1331
      %v1654 = vpop.f32.mrf.mxu0
      %v1655 = vadd.f32 %v1370, %v1654
      %v1656 = vpop.f32.mrf.mxu0
      %v1657 = vadd.f32 %v1370, %v1656
      %1658 = vmatmul.bf16.gmra.mxu0 %v1332
      %v1659 = vpop.f32.mrf.mxu0
      %v1660 = vadd.f32 %v1370, %v1659
      %v1661 = vpop.f32.mrf.mxu0
      %v1662 = vadd.f32 %v1370, %v1661
      %1663 = vmatmul.bf16.gmra.mxu0 %v1333
      %v1664 = vpop.f32.mrf.mxu0
      %v1665 = vadd.f32 %v1370, %v1664
      %v1666 = vpop.f32.mrf.mxu0
      %v1667 = vadd.f32 %v1370, %v1666
      %1668 = vmatmul.bf16.gmra.mxu0 %v1334
      %v1669 = vpop.f32.mrf.mxu0
      %v1670 = vadd.f32 %v1370, %v1669
      %v1671 = vpop.f32.mrf.mxu0
      %v1672 = vadd.f32 %v1370, %v1671
      %1673 = vmatmul.bf16.gmra.mxu0 %v1335
      %v1674 = vpop.f32.mrf.mxu0
      %v1675 = vadd.f32 %v1370, %v1674
      %v1676 = vpop.f32.mrf.mxu0
      %v1677 = vadd.f32 %v1370, %v1676
      %1678 = vmatmul.bf16.gmra.mxu0 %v1336
      %v1679 = vpop.f32.mrf.mxu0
      %v1680 = vadd.f32 %v1370, %v1679
      %v1681 = vpop.f32.mrf.mxu0
      %v1682 = vadd.f32 %v1370, %v1681
      %1683 = vmatmul.bf16.gmra.mxu0 %v1337
      %v1684 = vpop.f32.mrf.mxu0
      %v1685 = vadd.f32 %v1370, %v1684
      %v1686 = vpop.f32.mrf.mxu0
      %v1687 = vadd.f32 %v1370, %v1686
      %1688 = vmatmul.bf16.gmra.mxu0 %v1338
      %v1689 = vpop.f32.mrf.mxu0
      %v1690 = vadd.f32 %v1370, %v1689
      %v1691 = vpop.f32.mrf.mxu0
      %v1692 = vadd.f32 %v1370, %v1691
      %1693 = vmatmul.bf16.gmra.mxu0 %v1339
      %v1694 = vpop.f32.mrf.mxu0
      %v1695 = vadd.f32 %v1370, %v1694
      %v1696 = vpop.f32.mrf.mxu0
      %v1697 = vadd.f32 %v1370, %v1696
      %1698 = vmatmul.bf16.gmra.mxu0 %v1340
      %v1699 = vpop.f32.mrf.mxu0
      %v1700 = vadd.f32 %v1370, %v1699
      %v1701 = vpop.f32.mrf.mxu0
      %v1702 = vadd.f32 %v1370, %v1701
      %1703 = vmatmul.bf16.gmra.mxu0 %v1341
      %v1704 = vpop.f32.mrf.mxu0
      %v1705 = vadd.f32 %v1370, %v1704
      %v1706 = vpop.f32.mrf.mxu0
      %v1707 = vadd.f32 %v1370, %v1706
      %1708 = vmatmul.bf16.gmra.mxu0 %v1342
      %v1709 = vpop.f32.mrf.mxu0
      %v1710 = vadd.f32 %v1370, %v1709
      %v1711 = vpop.f32.mrf.mxu0
      %v1712 = vadd.f32 %v1370, %v1711
      %1713 = vmatmul.bf16.gmra.mxu0 %v1343
      %v1714 = vpop.f32.mrf.mxu0
      %v1715 = vadd.f32 %v1370, %v1714
      %v1716 = vpop.f32.mrf.mxu0
      %v1717 = vadd.f32 %v1370, %v1716
      %1718 = vmatmul.bf16.gmra.mxu0 %v1344
      %v1719 = vpop.f32.mrf.mxu0
      %v1720 = vadd.f32 %v1370, %v1719
      %v1721 = vpop.f32.mrf.mxu0
      %v1722 = vadd.f32 %v1370, %v1721
      %1723 = vmatmul.bf16.gmra.mxu0 %v1345
      %v1724 = vpop.f32.mrf.mxu0
      %v1725 = vadd.f32 %v1370, %v1724
      %v1726 = vpop.f32.mrf.mxu0
      %v1727 = vadd.f32 %v1370, %v1726
      %1728 = vmatmul.bf16.gmra.mxu0 %v1346
      %v1729 = vpop.f32.mrf.mxu0
      %v1730 = vadd.f32 %v1370, %v1729
      %v1731 = vpop.f32.mrf.mxu0
      %v1732 = vadd.f32 %v1370, %v1731
      %1733 = vmatmul.bf16.gmra.mxu0 %v1347
      %v1734 = vpop.f32.mrf.mxu0
      %v1735 = vadd.f32 %v1370, %v1734
      %v1736 = vpop.f32.mrf.mxu0
      %v1737 = vadd.f32 %v1370, %v1736
      %1738 = vmatmul.bf16.gmra.mxu0 %v1348
      %v1739 = vpop.f32.mrf.mxu0
      %v1740 = vadd.f32 %v1370, %v1739
      %v1741 = vpop.f32.mrf.mxu0
      %v1742 = vadd.f32 %v1370, %v1741
      %1743 = vmatmul.bf16.gmra.mxu0 %v1349
      %v1744 = vpop.f32.mrf.mxu0
      %v1745 = vadd.f32 %v1370, %v1744
      %v1746 = vpop.f32.mrf.mxu0
      %v1747 = vadd.f32 %v1370, %v1746
      %1748 = vdwg.mxu0
      %v1749 = vtanh.pop %v1430
      %v1750 = vtanh.pop %v1432
      %v1751 = vtanh.pop %v1435
      %v1752 = vtanh.pop %v1437
      %v1753 = vtanh.pop %v1440
      %v1754 = vtanh.pop %v1442
      %v1755 = vtanh.pop %v1445
      %v1756 = vtanh.pop %v1447
      %v1757 = vtanh.pop %v1450
      %v1758 = vtanh.pop %v1452
      %v1759 = vtanh.pop %v1455
      %v1760 = vtanh.pop %v1457
      %v1761 = vtanh.pop %v1460
      %v1762 = vtanh.pop %v1462
      %v1763 = vtanh.pop %v1465
      %v1764 = vtanh.pop %v1467
      %v1765 = vtanh.pop %v1470
      %v1766 = vtanh.pop %v1472
      %v1767 = vtanh.pop %v1475
      %v1768 = vtanh.pop %v1477
      %v1769 = vtanh.pop %v1480
      %v1770 = vtanh.pop %v1482
      %v1771 = vtanh.pop %v1485
      %v1772 = vtanh.pop %v1487
      %v1773 = vtanh.pop %v1490
      %v1774 = vtanh.pop %v1492
      %v1775 = vtanh.pop %v1495
      %v1776 = vtanh.pop %v1497
      %v1777 = vtanh.pop %v1500
      %v1778 = vtanh.pop %v1502
      %v1779 = vtanh.pop %v1505
      %v1780 = vtanh.pop %v1507
      %v1781 = vtanh.pop %v1510
      %v1782 = vtanh.pop %v1512
      %v1783 = vtanh.pop %v1515
      %v1784 = vtanh.pop %v1517
      %v1785 = vtanh.pop %v1520
      %v1786 = vtanh.pop %v1522
      %v1787 = vtanh.pop %v1525
      %v1788 = vtanh.pop %v1527
      %v1789 = vtanh.pop %v1530
      %v1790 = vtanh.pop %v1532
      %v1791 = vtanh.pop %v1535
      %v1792 = vtanh.pop %v1537
      %v1793 = vtanh.pop %v1540
      %v1794 = vtanh.pop %v1542
      %v1795 = vtanh.pop %v1545
      %v1796 = vtanh.pop %v1547
      %v1797 = vtanh.pop %v1550
      %v1798 = vtanh.pop %v1552
      %v1799 = vtanh.pop %v1555
      %v1800 = vtanh.pop %v1557
      %v1801 = vtanh.pop %v1560
      %v1802 = vtanh.pop %v1562
      %v1803 = vtanh.pop %v1565
      %v1804 = vtanh.pop %v1567
      %v1805 = vtanh.pop %v1570
      %v1806 = vtanh.pop %v1572
      %v1807 = vtanh.pop %v1575
      %v1808 = vtanh.pop %v1577
      %v1809 = vtanh.pop %v1580
      %v1810 = vtanh.pop %v1582
      %v1811 = vtanh.pop %v1585
      %v1812 = vtanh.pop %v1587
      %v1813 = vtanh.pop %v1590
      %v1814 = vtanh.pop %v1592
      %v1815 = vtanh.pop %v1595
      %v1816 = vtanh.pop %v1597
      %v1817 = vtanh.pop %v1600
      %v1818 = vtanh.pop %v1602
      %v1819 = vtanh.pop %v1605
      %v1820 = vtanh.pop %v1607
      %v1821 = vtanh.pop %v1610
      %v1822 = vtanh.pop %v1612
      %v1823 = vtanh.pop %v1615
      %v1824 = vtanh.pop %v1617
      %v1825 = vtanh.pop %v1620
      %v1826 = vtanh.pop %v1622
      %v1827 = vtanh.pop %v1625
      %v1828 = vtanh.pop %v1627
      %v1829 = vtanh.pop %v1630
      %v1830 = vtanh.pop %v1632
      %v1831 = vtanh.pop %v1635
      %v1832 = vtanh.pop %v1637
      %v1833 = vtanh.pop %v1640
      %v1834 = vtanh.pop %v1642
      %v1835 = vtanh.pop %v1645
      %v1836 = vtanh.pop %v1647
      %v1837 = vtanh.pop %v1650
      %v1838 = vtanh.pop %v1652
      %v1839 = vtanh.pop %v1655
      %v1840 = vtanh.pop %v1657
      %v1841 = vtanh.pop %v1660
      %v1842 = vtanh.pop %v1662
      %v1843 = vtanh.pop %v1665
      %v1844 = vtanh.pop %v1667
      %v1845 = vtanh.pop %v1670
      %v1846 = vtanh.pop %v1672
      %v1847 = vtanh.pop %v1675
      %v1848 = vtanh.pop %v1677
      %v1849 = vtanh.pop %v1680
      %v1850 = vtanh.pop %v1682
      %v1851 = vtanh.pop %v1685
      %v1852 = vtanh.pop %v1687
      %v1853 = vtanh.pop %v1690
      %v1854 = vtanh.pop %v1692
      %v1855 = vtanh.pop %v1695
      %v1856 = vtanh.pop %v1697
      %v1857 = vtanh.pop %v1700
      %v1858 = vtanh.pop %v1702
      %v1859 = vtanh.pop %v1705
      %v1860 = vtanh.pop %v1707
      %v1861 = vtanh.pop %v1710
      %v1862 = vtanh.pop %v1712
      %v1863 = vtanh.pop %v1715
      %v1864 = vtanh.pop %v1717
      %v1865 = vtanh.pop %v1720
      %v1866 = vtanh.pop %v1722
      %v1867 = vtanh.pop %v1725
      %v1868 = vtanh.pop %v1727
      %v1869 = vtanh.pop %v1730
      %v1870 = vtanh.pop %v1732
      %v1871 = vtanh.pop %v1735
      %v1872 = vtanh.pop %v1737
      %v1873 = vtanh.pop %v1740
      %v1874 = vtanh.pop %v1742
      %v1875 = vtanh.pop %v1745
      %v1876 = vtanh.pop %v1747
      %v1877 = vpack.c.bf16 %v1750, %v1749
      %v1878 = vpack.c.bf16 %v1752, %v1751
      %v1879 = vpack.c.bf16 %v1754, %v1753
      %v1880 = vpack.c.bf16 %v1756, %v1755
      %v1881 = vpack.c.bf16 %v1758, %v1757
      %v1882 = vpack.c.bf16 %v1760, %v1759
      %v1883 = vpack.c.bf16 %v1762, %v1761
      %v1884 = vpack.c.bf16 %v1764, %v1763
      %v1885 = vpack.c.bf16 %v1766, %v1765
      %v1886 = vpack.c.bf16 %v1768, %v1767
      %v1887 = vpack.c.bf16 %v1770, %v1769
      %v1888 = vpack.c.bf16 %v1772, %v1771
      %v1889 = vpack.c.bf16 %v1774, %v1773
      %v1890 = vpack.c.bf16 %v1776, %v1775
      %v1891 = vpack.c.bf16 %v1778, %v1777
      %v1892 = vpack.c.bf16 %v1780, %v1779
      %v1893 = vpack.c.bf16 %v1782, %v1781
      %v1894 = vpack.c.bf16 %v1784, %v1783
      %v1895 = vpack.c.bf16 %v1786, %v1785
      %v1896 = vpack.c.bf16 %v1788, %v1787
      %v1897 = vpack.c.bf16 %v1790, %v1789
      %v1898 = vpack.c.bf16 %v1792, %v1791
      %v1899 = vpack.c.bf16 %v1794, %v1793
      %v1900 = vpack.c.bf16 %v1796, %v1795
      %v1901 = vpack.c.bf16 %v1798, %v1797
      %v1902 = vpack.c.bf16 %v1800, %v1799
      %v1903 = vpack.c.bf16 %v1802, %v1801
      %v1904 = vpack.c.bf16 %v1804, %v1803
      %v1905 = vpack.c.bf16 %v1806, %v1805
      %v1906 = vpack.c.bf16 %v1808, %v1807
      %v1907 = vpack.c.bf16 %v1810, %v1809
      %v1908 = vpack.c.bf16 %v1812, %v1811
      %v1909 = vpack.c.bf16 %v1814, %v1813
      %v1910 = vpack.c.bf16 %v1816, %v1815
      %v1911 = vpack.c.bf16 %v1818, %v1817
      %v1912 = vpack.c.bf16 %v1820, %v1819
      %v1913 = vpack.c.bf16 %v1822, %v1821
      %v1914 = vpack.c.bf16 %v1824, %v1823
      %v1915 = vpack.c.bf16 %v1826, %v1825
      %v1916 = vpack.c.bf16 %v1828, %v1827
      %v1917 = vpack.c.bf16 %v1830, %v1829
      %v1918 = vpack.c.bf16 %v1832, %v1831
      %v1919 = vpack.c.bf16 %v1834, %v1833
      %v1920 = vpack.c.bf16 %v1836, %v1835
      %v1921 = vpack.c.bf16 %v1838, %v1837
      %v1922 = vpack.c.bf16 %v1840, %v1839
      %v1923 = vpack.c.bf16 %v1842, %v1841
      %v1924 = vpack.c.bf16 %v1844, %v1843
      %v1925 = vpack.c.bf16 %v1846, %v1845
      %v1926 = vpack.c.bf16 %v1848, %v1847
      %v1927 = vpack.c.bf16 %v1850, %v1849
      %v1928 = vpack.c.bf16 %v1852, %v1851
      %v1929 = vpack.c.bf16 %v1854, %v1853
      %v1930 = vpack.c.bf16 %v1856, %v1855
      %v1931 = vpack.c.bf16 %v1858, %v1857
      %v1932 = vpack.c.bf16 %v1860, %v1859
      %v1933 = vpack.c.bf16 %v1862, %v1861
      %v1934 = vpack.c.bf16 %v1864, %v1863
      %v1935 = vpack.c.bf16 %v1866, %v1865
      %v1936 = vpack.c.bf16 %v1868, %v1867
      %v1937 = vpack.c.bf16 %v1870, %v1869
      %v1938 = vpack.c.bf16 %v1872, %v1871
      %v1939 = vpack.c.bf16 %v1874, %v1873
      %v1940 = vpack.c.bf16 %v1876, %v1875
      %s1941 = scalar_lea.vmem %s1, 128
      %v1942 = vld [vmem:[%s1941] sm:$0xf]
      %v1943 = vld [vmem:[%s1941 + $0x4] sm:$0xf]
      %v1944 = vld [vmem:[%s1941 + $0x8] sm:$0xf]
      %v1945 = vld [vmem:[%s1941 + $0xc] sm:$0xf]
      %v1946 = vld [vmem:[%s1941 + $0x10] sm:$0xf]
      %v1947 = vld [vmem:[%s1941 + $0x14] sm:$0xf]
      %v1948 = vld [vmem:[%s1941 + $0x18] sm:$0xf]
      %v1949 = vld [vmem:[%s1941 + $0x1c] sm:$0xf]
      %v1950 = vld [vmem:[%s1941 + $0x20] sm:$0xf]
      %v1951 = vld [vmem:[%s1941 + $0x24] sm:$0xf]
      %v1952 = vld [vmem:[%s1941 + $0x28] sm:$0xf]
      %v1953 = vld [vmem:[%s1941 + $0x2c] sm:$0xf]
      %v1954 = vld [vmem:[%s1941 + $0x30] sm:$0xf]
      %v1955 = vld [vmem:[%s1941 + $0x34] sm:$0xf]
      %v1956 = vld [vmem:[%s1941 + $0x38] sm:$0xf]
      %v1957 = vld [vmem:[%s1941 + $0x3c] sm:$0xf]
      %s1958 = scalar_lea.vmem %s2, 2
      %v1959 = vld [vmem:[%s1958] sm:$0x1]
      %v1961 = vperm.slane %v1959, 0
      %v1979 = vunpack.c.l.b16 %v1942
      %v1980 = vunpack.c.l.b16 %v1943
      %v1981 = vunpack.c.l.b16 %v1944
      %v1982 = vunpack.c.l.b16 %v1945
      %v1983 = vunpack.c.l.b16 %v1946
      %v1984 = vunpack.c.l.b16 %v1947
      %v1985 = vunpack.c.l.b16 %v1948
      %v1986 = vunpack.c.l.b16 %v1949
      %v1987 = vunpack.c.l.b16 %v1950
      %v1988 = vunpack.c.l.b16 %v1951
      %v1989 = vunpack.c.l.b16 %v1952
      %v1990 = vunpack.c.l.b16 %v1953
      %v1991 = vunpack.c.l.b16 %v1954
      %v1992 = vunpack.c.l.b16 %v1955
      %v1993 = vunpack.c.l.b16 %v1956
      %v1994 = vunpack.c.l.b16 %v1957
      %v1995 = vpack.c.b16 %v1980, %v1979
      %v1996 = vpack.c.b16 %v1982, %v1981
      %v1997 = vpack.c.b16 %v1984, %v1983
      %v1998 = vpack.c.b16 %v1986, %v1985
      %v1999 = vpack.c.b16 %v1988, %v1987
      %v2000 = vpack.c.b16 %v1990, %v1989
      %v2001 = vpack.c.b16 %v1992, %v1991
      %v2002 = vpack.c.b16 %v1994, %v1993
      %2011 = vmatpush.bf16.msra.mxu0 %v2002
      %2012 = vmatpush.bf16.msra.mxu0 %v2001
      %2013 = vmatpush.bf16.msra.mxu0 %v2000
      %2014 = vmatpush.bf16.msra.mxu0 %v1999
      %2015 = vmatpush.bf16.msra.mxu0 %v1998
      %2016 = vmatpush.bf16.msra.mxu0 %v1997
      %2017 = vmatpush.bf16.msra.mxu0 %v1996
      %2018 = vmatpush.bf16.msra.mxu0 %v1995
      %2019 = vmatmul.bf16.gmra.mxu0 %v1877
      %v2020 = vpop.f32.mrf.mxu0
      %v2021 = vadd.f32 %v1961, %v2020
      %v2022 = vpop.f32.mrf.mxu0
      %v2023 = vadd.f32 %v1961, %v2022
      %2024 = vmatmul.bf16.gmra.mxu0 %v1878
      %v2025 = vpop.f32.mrf.mxu0
      %v2026 = vadd.f32 %v1961, %v2025
      %v2027 = vpop.f32.mrf.mxu0
      %v2028 = vadd.f32 %v1961, %v2027
      %2029 = vmatmul.bf16.gmra.mxu0 %v1879
      %v2030 = vpop.f32.mrf.mxu0
      %v2031 = vadd.f32 %v1961, %v2030
      %v2032 = vpop.f32.mrf.mxu0
      %v2033 = vadd.f32 %v1961, %v2032
      %2034 = vmatmul.bf16.gmra.mxu0 %v1880
      %v2035 = vpop.f32.mrf.mxu0
      %v2036 = vadd.f32 %v1961, %v2035
      %v2037 = vpop.f32.mrf.mxu0
      %v2038 = vadd.f32 %v1961, %v2037
      %2039 = vmatmul.bf16.gmra.mxu0 %v1881
      %v2040 = vpop.f32.mrf.mxu0
      %v2041 = vadd.f32 %v1961, %v2040
      %v2042 = vpop.f32.mrf.mxu0
      %v2043 = vadd.f32 %v1961, %v2042
      %2044 = vmatmul.bf16.gmra.mxu0 %v1882
      %v2045 = vpop.f32.mrf.mxu0
      %v2046 = vadd.f32 %v1961, %v2045
      %v2047 = vpop.f32.mrf.mxu0
      %v2048 = vadd.f32 %v1961, %v2047
      %2049 = vmatmul.bf16.gmra.mxu0 %v1883
      %v2050 = vpop.f32.mrf.mxu0
      %v2051 = vadd.f32 %v1961, %v2050
      %v2052 = vpop.f32.mrf.mxu0
      %v2053 = vadd.f32 %v1961, %v2052
      %2054 = vmatmul.bf16.gmra.mxu0 %v1884
      %v2055 = vpop.f32.mrf.mxu0
      %v2056 = vadd.f32 %v1961, %v2055
      %v2057 = vpop.f32.mrf.mxu0
      %v2058 = vadd.f32 %v1961, %v2057
      %2059 = vmatmul.bf16.gmra.mxu0 %v1885
      %v2060 = vpop.f32.mrf.mxu0
      %v2061 = vadd.f32 %v1961, %v2060
      %v2062 = vpop.f32.mrf.mxu0
      %v2063 = vadd.f32 %v1961, %v2062
      %2064 = vmatmul.bf16.gmra.mxu0 %v1886
      %v2065 = vpop.f32.mrf.mxu0
      %v2066 = vadd.f32 %v1961, %v2065
      %v2067 = vpop.f32.mrf.mxu0
      %v2068 = vadd.f32 %v1961, %v2067
      %2069 = vmatmul.bf16.gmra.mxu0 %v1887
      %v2070 = vpop.f32.mrf.mxu0
      %v2071 = vadd.f32 %v1961, %v2070
      %v2072 = vpop.f32.mrf.mxu0
      %v2073 = vadd.f32 %v1961, %v2072
      %2074 = vmatmul.bf16.gmra.mxu0 %v1888
      %v2075 = vpop.f32.mrf.mxu0
      %v2076 = vadd.f32 %v1961, %v2075
      %v2077 = vpop.f32.mrf.mxu0
      %v2078 = vadd.f32 %v1961, %v2077
      %2079 = vmatmul.bf16.gmra.mxu0 %v1889
      %v2080 = vpop.f32.mrf.mxu0
      %v2081 = vadd.f32 %v1961, %v2080
      %v2082 = vpop.f32.mrf.mxu0
      %v2083 = vadd.f32 %v1961, %v2082
      %2084 = vmatmul.bf16.gmra.mxu0 %v1890
      %v2085 = vpop.f32.mrf.mxu0
      %v2086 = vadd.f32 %v1961, %v2085
      %v2087 = vpop.f32.mrf.mxu0
      %v2088 = vadd.f32 %v1961, %v2087
      %2089 = vmatmul.bf16.gmra.mxu0 %v1891
      %v2090 = vpop.f32.mrf.mxu0
      %v2091 = vadd.f32 %v1961, %v2090
      %v2092 = vpop.f32.mrf.mxu0
      %v2093 = vadd.f32 %v1961, %v2092
      %2094 = vmatmul.bf16.gmra.mxu0 %v1892
      %v2095 = vpop.f32.mrf.mxu0
      %v2096 = vadd.f32 %v1961, %v2095
      %v2097 = vpop.f32.mrf.mxu0
      %v2098 = vadd.f32 %v1961, %v2097
      %2099 = vmatmul.bf16.gmra.mxu0 %v1893
      %v2100 = vpop.f32.mrf.mxu0
      %v2101 = vadd.f32 %v1961, %v2100
      %v2102 = vpop.f32.mrf.mxu0
      %v2103 = vadd.f32 %v1961, %v2102
      %2104 = vmatmul.bf16.gmra.mxu0 %v1894
      %v2105 = vpop.f32.mrf.mxu0
      %v2106 = vadd.f32 %v1961, %v2105
      %v2107 = vpop.f32.mrf.mxu0
      %v2108 = vadd.f32 %v1961, %v2107
      %2109 = vmatmul.bf16.gmra.mxu0 %v1895
      %v2110 = vpop.f32.mrf.mxu0
      %v2111 = vadd.f32 %v1961, %v2110
      %v2112 = vpop.f32.mrf.mxu0
      %v2113 = vadd.f32 %v1961, %v2112
      %2114 = vmatmul.bf16.gmra.mxu0 %v1896
      %v2115 = vpop.f32.mrf.mxu0
      %v2116 = vadd.f32 %v1961, %v2115
      %v2117 = vpop.f32.mrf.mxu0
      %v2118 = vadd.f32 %v1961, %v2117
      %2119 = vmatmul.bf16.gmra.mxu0 %v1897
      %v2120 = vpop.f32.mrf.mxu0
      %v2121 = vadd.f32 %v1961, %v2120
      %v2122 = vpop.f32.mrf.mxu0
      %v2123 = vadd.f32 %v1961, %v2122
      %2124 = vmatmul.bf16.gmra.mxu0 %v1898
      %v2125 = vpop.f32.mrf.mxu0
      %v2126 = vadd.f32 %v1961, %v2125
      %v2127 = vpop.f32.mrf.mxu0
      %v2128 = vadd.f32 %v1961, %v2127
      %2129 = vmatmul.bf16.gmra.mxu0 %v1899
      %v2130 = vpop.f32.mrf.mxu0
      %v2131 = vadd.f32 %v1961, %v2130
      %v2132 = vpop.f32.mrf.mxu0
      %v2133 = vadd.f32 %v1961, %v2132
      %2134 = vmatmul.bf16.gmra.mxu0 %v1900
      %v2135 = vpop.f32.mrf.mxu0
      %v2136 = vadd.f32 %v1961, %v2135
      %v2137 = vpop.f32.mrf.mxu0
      %v2138 = vadd.f32 %v1961, %v2137
      %2139 = vmatmul.bf16.gmra.mxu0 %v1901
      %v2140 = vpop.f32.mrf.mxu0
      %v2141 = vadd.f32 %v1961, %v2140
      %v2142 = vpop.f32.mrf.mxu0
      %v2143 = vadd.f32 %v1961, %v2142
      %2144 = vmatmul.bf16.gmra.mxu0 %v1902
      %v2145 = vpop.f32.mrf.mxu0
      %v2146 = vadd.f32 %v1961, %v2145
      %v2147 = vpop.f32.mrf.mxu0
      %v2148 = vadd.f32 %v1961, %v2147
      %2149 = vmatmul.bf16.gmra.mxu0 %v1903
      %v2150 = vpop.f32.mrf.mxu0
      %v2151 = vadd.f32 %v1961, %v2150
      %v2152 = vpop.f32.mrf.mxu0
      %v2153 = vadd.f32 %v1961, %v2152
      %2154 = vmatmul.bf16.gmra.mxu0 %v1904
      %v2155 = vpop.f32.mrf.mxu0
      %v2156 = vadd.f32 %v1961, %v2155
      %v2157 = vpop.f32.mrf.mxu0
      %v2158 = vadd.f32 %v1961, %v2157
      %2159 = vmatmul.bf16.gmra.mxu0 %v1905
      %v2160 = vpop.f32.mrf.mxu0
      %v2161 = vadd.f32 %v1961, %v2160
      %v2162 = vpop.f32.mrf.mxu0
      %v2163 = vadd.f32 %v1961, %v2162
      %2164 = vmatmul.bf16.gmra.mxu0 %v1906
      %v2165 = vpop.f32.mrf.mxu0
      %v2166 = vadd.f32 %v1961, %v2165
      %v2167 = vpop.f32.mrf.mxu0
      %v2168 = vadd.f32 %v1961, %v2167
      %2169 = vmatmul.bf16.gmra.mxu0 %v1907
      %v2170 = vpop.f32.mrf.mxu0
      %v2171 = vadd.f32 %v1961, %v2170
      %v2172 = vpop.f32.mrf.mxu0
      %v2173 = vadd.f32 %v1961, %v2172
      %2174 = vmatmul.bf16.gmra.mxu0 %v1908
      %v2175 = vpop.f32.mrf.mxu0
      %v2176 = vadd.f32 %v1961, %v2175
      %v2177 = vpop.f32.mrf.mxu0
      %v2178 = vadd.f32 %v1961, %v2177
      %2179 = vmatmul.bf16.gmra.mxu0 %v1909
      %v2180 = vpop.f32.mrf.mxu0
      %v2181 = vadd.f32 %v1961, %v2180
      %v2182 = vpop.f32.mrf.mxu0
      %v2183 = vadd.f32 %v1961, %v2182
      %2184 = vmatmul.bf16.gmra.mxu0 %v1910
      %v2185 = vpop.f32.mrf.mxu0
      %v2186 = vadd.f32 %v1961, %v2185
      %v2187 = vpop.f32.mrf.mxu0
      %v2188 = vadd.f32 %v1961, %v2187
      %2189 = vmatmul.bf16.gmra.mxu0 %v1911
      %v2190 = vpop.f32.mrf.mxu0
      %v2191 = vadd.f32 %v1961, %v2190
      %v2192 = vpop.f32.mrf.mxu0
      %v2193 = vadd.f32 %v1961, %v2192
      %2194 = vmatmul.bf16.gmra.mxu0 %v1912
      %v2195 = vpop.f32.mrf.mxu0
      %v2196 = vadd.f32 %v1961, %v2195
      %v2197 = vpop.f32.mrf.mxu0
      %v2198 = vadd.f32 %v1961, %v2197
      %2199 = vmatmul.bf16.gmra.mxu0 %v1913
      %v2200 = vpop.f32.mrf.mxu0
      %v2201 = vadd.f32 %v1961, %v2200
      %v2202 = vpop.f32.mrf.mxu0
      %v2203 = vadd.f32 %v1961, %v2202
      %2204 = vmatmul.bf16.gmra.mxu0 %v1914
      %v2205 = vpop.f32.mrf.mxu0
      %v2206 = vadd.f32 %v1961, %v2205
      %v2207 = vpop.f32.mrf.mxu0
      %v2208 = vadd.f32 %v1961, %v2207
      %2209 = vmatmul.bf16.gmra.mxu0 %v1915
      %v2210 = vpop.f32.mrf.mxu0
      %v2211 = vadd.f32 %v1961, %v2210
      %v2212 = vpop.f32.mrf.mxu0
      %v2213 = vadd.f32 %v1961, %v2212
      %2214 = vmatmul.bf16.gmra.mxu0 %v1916
      %v2215 = vpop.f32.mrf.mxu0
      %v2216 = vadd.f32 %v1961, %v2215
      %v2217 = vpop.f32.mrf.mxu0
      %v2218 = vadd.f32 %v1961, %v2217
      %2219 = vmatmul.bf16.gmra.mxu0 %v1917
      %v2220 = vpop.f32.mrf.mxu0
      %v2221 = vadd.f32 %v1961, %v2220
      %v2222 = vpop.f32.mrf.mxu0
      %v2223 = vadd.f32 %v1961, %v2222
      %2224 = vmatmul.bf16.gmra.mxu0 %v1918
      %v2225 = vpop.f32.mrf.mxu0
      %v2226 = vadd.f32 %v1961, %v2225
      %v2227 = vpop.f32.mrf.mxu0
      %v2228 = vadd.f32 %v1961, %v2227
      %2229 = vmatmul.bf16.gmra.mxu0 %v1919
      %v2230 = vpop.f32.mrf.mxu0
      %v2231 = vadd.f32 %v1961, %v2230
      %v2232 = vpop.f32.mrf.mxu0
      %v2233 = vadd.f32 %v1961, %v2232
      %2234 = vmatmul.bf16.gmra.mxu0 %v1920
      %v2235 = vpop.f32.mrf.mxu0
      %v2236 = vadd.f32 %v1961, %v2235
      %v2237 = vpop.f32.mrf.mxu0
      %v2238 = vadd.f32 %v1961, %v2237
      %2239 = vmatmul.bf16.gmra.mxu0 %v1921
      %v2240 = vpop.f32.mrf.mxu0
      %v2241 = vadd.f32 %v1961, %v2240
      %v2242 = vpop.f32.mrf.mxu0
      %v2243 = vadd.f32 %v1961, %v2242
      %2244 = vmatmul.bf16.gmra.mxu0 %v1922
      %v2245 = vpop.f32.mrf.mxu0
      %v2246 = vadd.f32 %v1961, %v2245
      %v2247 = vpop.f32.mrf.mxu0
      %v2248 = vadd.f32 %v1961, %v2247
      %2249 = vmatmul.bf16.gmra.mxu0 %v1923
      %v2250 = vpop.f32.mrf.mxu0
      %v2251 = vadd.f32 %v1961, %v2250
      %v2252 = vpop.f32.mrf.mxu0
      %v2253 = vadd.f32 %v1961, %v2252
      %2254 = vmatmul.bf16.gmra.mxu0 %v1924
      %v2255 = vpop.f32.mrf.mxu0
      %v2256 = vadd.f32 %v1961, %v2255
      %v2257 = vpop.f32.mrf.mxu0
      %v2258 = vadd.f32 %v1961, %v2257
      %2259 = vmatmul.bf16.gmra.mxu0 %v1925
      %v2260 = vpop.f32.mrf.mxu0
      %v2261 = vadd.f32 %v1961, %v2260
      %v2262 = vpop.f32.mrf.mxu0
      %v2263 = vadd.f32 %v1961, %v2262
      %2264 = vmatmul.bf16.gmra.mxu0 %v1926
      %v2265 = vpop.f32.mrf.mxu0
      %v2266 = vadd.f32 %v1961, %v2265
      %v2267 = vpop.f32.mrf.mxu0
      %v2268 = vadd.f32 %v1961, %v2267
      %2269 = vmatmul.bf16.gmra.mxu0 %v1927
      %v2270 = vpop.f32.mrf.mxu0
      %v2271 = vadd.f32 %v1961, %v2270
      %v2272 = vpop.f32.mrf.mxu0
      %v2273 = vadd.f32 %v1961, %v2272
      %2274 = vmatmul.bf16.gmra.mxu0 %v1928
      %v2275 = vpop.f32.mrf.mxu0
      %v2276 = vadd.f32 %v1961, %v2275
      %v2277 = vpop.f32.mrf.mxu0
      %v2278 = vadd.f32 %v1961, %v2277
      %2279 = vmatmul.bf16.gmra.mxu0 %v1929
      %v2280 = vpop.f32.mrf.mxu0
      %v2281 = vadd.f32 %v1961, %v2280
      %v2282 = vpop.f32.mrf.mxu0
      %v2283 = vadd.f32 %v1961, %v2282
      %2284 = vmatmul.bf16.gmra.mxu0 %v1930
      %v2285 = vpop.f32.mrf.mxu0
      %v2286 = vadd.f32 %v1961, %v2285
      %v2287 = vpop.f32.mrf.mxu0
      %v2288 = vadd.f32 %v1961, %v2287
      %2289 = vmatmul.bf16.gmra.mxu0 %v1931
      %v2290 = vpop.f32.mrf.mxu0
      %v2291 = vadd.f32 %v1961, %v2290
      %v2292 = vpop.f32.mrf.mxu0
      %v2293 = vadd.f32 %v1961, %v2292
      %2294 = vmatmul.bf16.gmra.mxu0 %v1932
      %v2295 = vpop.f32.mrf.mxu0
      %v2296 = vadd.f32 %v1961, %v2295
      %v2297 = vpop.f32.mrf.mxu0
      %v2298 = vadd.f32 %v1961, %v2297
      %2299 = vmatmul.bf16.gmra.mxu0 %v1933
      %v2300 = vpop.f32.mrf.mxu0
      %v2301 = vadd.f32 %v1961, %v2300
      %v2302 = vpop.f32.mrf.mxu0
      %v2303 = vadd.f32 %v1961, %v2302
      %2304 = vmatmul.bf16.gmra.mxu0 %v1934
      %v2305 = vpop.f32.mrf.mxu0
      %v2306 = vadd.f32 %v1961, %v2305
      %v2307 = vpop.f32.mrf.mxu0
      %v2308 = vadd.f32 %v1961, %v2307
      %2309 = vmatmul.bf16.gmra.mxu0 %v1935
      %v2310 = vpop.f32.mrf.mxu0
      %v2311 = vadd.f32 %v1961, %v2310
      %v2312 = vpop.f32.mrf.mxu0
      %v2313 = vadd.f32 %v1961, %v2312
      %2314 = vmatmul.bf16.gmra.mxu0 %v1936
      %v2315 = vpop.f32.mrf.mxu0
      %v2316 = vadd.f32 %v1961, %v2315
      %v2317 = vpop.f32.mrf.mxu0
      %v2318 = vadd.f32 %v1961, %v2317
      %2319 = vmatmul.bf16.gmra.mxu0 %v1937
      %v2320 = vpop.f32.mrf.mxu0
      %v2321 = vadd.f32 %v1961, %v2320
      %v2322 = vpop.f32.mrf.mxu0
      %v2323 = vadd.f32 %v1961, %v2322
      %2324 = vmatmul.bf16.gmra.mxu0 %v1938
      %v2325 = vpop.f32.mrf.mxu0
      %v2326 = vadd.f32 %v1961, %v2325
      %v2327 = vpop.f32.mrf.mxu0
      %v2328 = vadd.f32 %v1961, %v2327
      %2329 = vmatmul.bf16.gmra.mxu0 %v1939
      %v2330 = vpop.f32.mrf.mxu0
      %v2331 = vadd.f32 %v1961, %v2330
      %v2332 = vpop.f32.mrf.mxu0
      %v2333 = vadd.f32 %v1961, %v2332
      %2334 = vmatmul.bf16.gmra.mxu0 %v1940
      %v2335 = vpop.f32.mrf.mxu0
      %v2336 = vadd.f32 %v1961, %v2335
      %v2337 = vpop.f32.mrf.mxu0
      %v2338 = vadd.f32 %v1961, %v2337
      %2339 = vdwg.mxu0
      %v2340 = vtanh.pop %v2021
      %v2341 = vtanh.pop %v2023
      %v2342 = vtanh.pop %v2026
      %v2343 = vtanh.pop %v2028
      %v2344 = vtanh.pop %v2031
      %v2345 = vtanh.pop %v2033
      %v2346 = vtanh.pop %v2036
      %v2347 = vtanh.pop %v2038
      %v2348 = vtanh.pop %v2041
      %v2349 = vtanh.pop %v2043
      %v2350 = vtanh.pop %v2046
      %v2351 = vtanh.pop %v2048
      %v2352 = vtanh.pop %v2051
      %v2353 = vtanh.pop %v2053
      %v2354 = vtanh.pop %v2056
      %v2355 = vtanh.pop %v2058
      %v2356 = vtanh.pop %v2061
      %v2357 = vtanh.pop %v2063
      %v2358 = vtanh.pop %v2066
      %v2359 = vtanh.pop %v2068
      %v2360 = vtanh.pop %v2071
      %v2361 = vtanh.pop %v2073
      %v2362 = vtanh.pop %v2076
      %v2363 = vtanh.pop %v2078
      %v2364 = vtanh.pop %v2081
      %v2365 = vtanh.pop %v2083
      %v2366 = vtanh.pop %v2086
      %v2367 = vtanh.pop %v2088
      %v2368 = vtanh.pop %v2091
      %v2369 = vtanh.pop %v2093
      %v2370 = vtanh.pop %v2096
      %v2371 = vtanh.pop %v2098
      %v2372 = vtanh.pop %v2101
      %v2373 = vtanh.pop %v2103
      %v2374 = vtanh.pop %v2106
      %v2375 = vtanh.pop %v2108
      %v2376 = vtanh.pop %v2111
      %v2377 = vtanh.pop %v2113
      %v2378 = vtanh.pop %v2116
      %v2379 = vtanh.pop %v2118
      %v2380 = vtanh.pop %v2121
      %v2381 = vtanh.pop %v2123
      %v2382 = vtanh.pop %v2126
      %v2383 = vtanh.pop %v2128
      %v2384 = vtanh.pop %v2131
      %v2385 = vtanh.pop %v2133
      %v2386 = vtanh.pop %v2136
      %v2387 = vtanh.pop %v2138
      %v2388 = vtanh.pop %v2141
      %v2389 = vtanh.pop %v2143
      %v2390 = vtanh.pop %v2146
      %v2391 = vtanh.pop %v2148
      %v2392 = vtanh.pop %v2151
      %v2393 = vtanh.pop %v2153
      %v2394 = vtanh.pop %v2156
      %v2395 = vtanh.pop %v2158
      %v2396 = vtanh.pop %v2161
      %v2397 = vtanh.pop %v2163
      %v2398 = vtanh.pop %v2166
      %v2399 = vtanh.pop %v2168
      %v2400 = vtanh.pop %v2171
      %v2401 = vtanh.pop %v2173
      %v2402 = vtanh.pop %v2176
      %v2403 = vtanh.pop %v2178
      %v2404 = vtanh.pop %v2181
      %v2405 = vtanh.pop %v2183
      %v2406 = vtanh.pop %v2186
      %v2407 = vtanh.pop %v2188
      %v2408 = vtanh.pop %v2191
      %v2409 = vtanh.pop %v2193
      %v2410 = vtanh.pop %v2196
      %v2411 = vtanh.pop %v2198
      %v2412 = vtanh.pop %v2201
      %v2413 = vtanh.pop %v2203
      %v2414 = vtanh.pop %v2206
      %v2415 = vtanh.pop %v2208
      %v2416 = vtanh.pop %v2211
      %v2417 = vtanh.pop %v2213
      %v2418 = vtanh.pop %v2216
      %v2419 = vtanh.pop %v2218
      %v2420 = vtanh.pop %v2221
      %v2421 = vtanh.pop %v2223
      %v2422 = vtanh.pop %v2226
      %v2423 = vtanh.pop %v2228
      %v2424 = vtanh.pop %v2231
      %v2425 = vtanh.pop %v2233
      %v2426 = vtanh.pop %v2236
      %v2427 = vtanh.pop %v2238
      %v2428 = vtanh.pop %v2241
      %v2429 = vtanh.pop %v2243
      %v2430 = vtanh.pop %v2246
      %v2431 = vtanh.pop %v2248
      %v2432 = vtanh.pop %v2251
      %v2433 = vtanh.pop %v2253
      %v2434 = vtanh.pop %v2256
      %v2435 = vtanh.pop %v2258
      %v2436 = vtanh.pop %v2261
      %v2437 = vtanh.pop %v2263
      %v2438 = vtanh.pop %v2266
      %v2439 = vtanh.pop %v2268
      %v2440 = vtanh.pop %v2271
      %v2441 = vtanh.pop %v2273
      %v2442 = vtanh.pop %v2276
      %v2443 = vtanh.pop %v2278
      %v2444 = vtanh.pop %v2281
      %v2445 = vtanh.pop %v2283
      %v2446 = vtanh.pop %v2286
      %v2447 = vtanh.pop %v2288
      %v2448 = vtanh.pop %v2291
      %v2449 = vtanh.pop %v2293
      %v2450 = vtanh.pop %v2296
      %v2451 = vtanh.pop %v2298
      %v2452 = vtanh.pop %v2301
      %v2453 = vtanh.pop %v2303
      %v2454 = vtanh.pop %v2306
      %v2455 = vtanh.pop %v2308
      %v2456 = vtanh.pop %v2311
      %v2457 = vtanh.pop %v2313
      %v2458 = vtanh.pop %v2316
      %v2459 = vtanh.pop %v2318
      %v2460 = vtanh.pop %v2321
      %v2461 = vtanh.pop %v2323
      %v2462 = vtanh.pop %v2326
      %v2463 = vtanh.pop %v2328
      %v2464 = vtanh.pop %v2331
      %v2465 = vtanh.pop %v2333
      %v2466 = vtanh.pop %v2336
      %v2467 = vtanh.pop %v2338
      %v2468 = vpack.c.bf16 %v2341, %v2340
      %v2469 = vpack.c.bf16 %v2343, %v2342
      %v2470 = vpack.c.bf16 %v2345, %v2344
      %v2471 = vpack.c.bf16 %v2347, %v2346
      %v2472 = vpack.c.bf16 %v2349, %v2348
      %v2473 = vpack.c.bf16 %v2351, %v2350
      %v2474 = vpack.c.bf16 %v2353, %v2352
      %v2475 = vpack.c.bf16 %v2355, %v2354
      %v2476 = vpack.c.bf16 %v2357, %v2356
      %v2477 = vpack.c.bf16 %v2359, %v2358
      %v2478 = vpack.c.bf16 %v2361, %v2360
      %v2479 = vpack.c.bf16 %v2363, %v2362
      %v2480 = vpack.c.bf16 %v2365, %v2364
      %v2481 = vpack.c.bf16 %v2367, %v2366
      %v2482 = vpack.c.bf16 %v2369, %v2368
      %v2483 = vpack.c.bf16 %v2371, %v2370
      %v2484 = vpack.c.bf16 %v2373, %v2372
      %v2485 = vpack.c.bf16 %v2375, %v2374
      %v2486 = vpack.c.bf16 %v2377, %v2376
      %v2487 = vpack.c.bf16 %v2379, %v2378
      %v2488 = vpack.c.bf16 %v2381, %v2380
      %v2489 = vpack.c.bf16 %v2383, %v2382
      %v2490 = vpack.c.bf16 %v2385, %v2384
      %v2491 = vpack.c.bf16 %v2387, %v2386
      %v2492 = vpack.c.bf16 %v2389, %v2388
      %v2493 = vpack.c.bf16 %v2391, %v2390
      %v2494 = vpack.c.bf16 %v2393, %v2392
      %v2495 = vpack.c.bf16 %v2395, %v2394
      %v2496 = vpack.c.bf16 %v2397, %v2396
      %v2497 = vpack.c.bf16 %v2399, %v2398
      %v2498 = vpack.c.bf16 %v2401, %v2400
      %v2499 = vpack.c.bf16 %v2403, %v2402
      %v2500 = vpack.c.bf16 %v2405, %v2404
      %v2501 = vpack.c.bf16 %v2407, %v2406
      %v2502 = vpack.c.bf16 %v2409, %v2408
      %v2503 = vpack.c.bf16 %v2411, %v2410
      %v2504 = vpack.c.bf16 %v2413, %v2412
      %v2505 = vpack.c.bf16 %v2415, %v2414
      %v2506 = vpack.c.bf16 %v2417, %v2416
      %v2507 = vpack.c.bf16 %v2419, %v2418
      %v2508 = vpack.c.bf16 %v2421, %v2420
      %v2509 = vpack.c.bf16 %v2423, %v2422
      %v2510 = vpack.c.bf16 %v2425, %v2424
      %v2511 = vpack.c.bf16 %v2427, %v2426
      %v2512 = vpack.c.bf16 %v2429, %v2428
      %v2513 = vpack.c.bf16 %v2431, %v2430
      %v2514 = vpack.c.bf16 %v2433, %v2432
      %v2515 = vpack.c.bf16 %v2435, %v2434
      %v2516 = vpack.c.bf16 %v2437, %v2436
      %v2517 = vpack.c.bf16 %v2439, %v2438
      %v2518 = vpack.c.bf16 %v2441, %v2440
      %v2519 = vpack.c.bf16 %v2443, %v2442
      %v2520 = vpack.c.bf16 %v2445, %v2444
      %v2521 = vpack.c.bf16 %v2447, %v2446
      %v2522 = vpack.c.bf16 %v2449, %v2448
      %v2523 = vpack.c.bf16 %v2451, %v2450
      %v2524 = vpack.c.bf16 %v2453, %v2452
      %v2525 = vpack.c.bf16 %v2455, %v2454
      %v2526 = vpack.c.bf16 %v2457, %v2456
      %v2527 = vpack.c.bf16 %v2459, %v2458
      %v2528 = vpack.c.bf16 %v2461, %v2460
      %v2529 = vpack.c.bf16 %v2463, %v2462
      %v2530 = vpack.c.bf16 %v2465, %v2464
      %v2531 = vpack.c.bf16 %v2467, %v2466
      %s2532 = scalar_lea.vmem %s1, 192
      %v2533 = vld [vmem:[%s2532] sm:$0xf]
      %v2534 = vld [vmem:[%s2532 + $0x4] sm:$0xf]
      %v2535 = vld [vmem:[%s2532 + $0x8] sm:$0xf]
      %v2536 = vld [vmem:[%s2532 + $0xc] sm:$0xf]
      %v2537 = vld [vmem:[%s2532 + $0x10] sm:$0xf]
      %v2538 = vld [vmem:[%s2532 + $0x14] sm:$0xf]
      %v2539 = vld [vmem:[%s2532 + $0x18] sm:$0xf]
      %v2540 = vld [vmem:[%s2532 + $0x1c] sm:$0xf]
      %v2541 = vld [vmem:[%s2532 + $0x20] sm:$0xf]
      %v2542 = vld [vmem:[%s2532 + $0x24] sm:$0xf]
      %v2543 = vld [vmem:[%s2532 + $0x28] sm:$0xf]
      %v2544 = vld [vmem:[%s2532 + $0x2c] sm:$0xf]
      %v2545 = vld [vmem:[%s2532 + $0x30] sm:$0xf]
      %v2546 = vld [vmem:[%s2532 + $0x34] sm:$0xf]
      %v2547 = vld [vmem:[%s2532 + $0x38] sm:$0xf]
      %v2548 = vld [vmem:[%s2532 + $0x3c] sm:$0xf]
      %s2549 = scalar_lea.vmem %s2, 3
      %v2550 = vld [vmem:[%s2549] sm:$0x1]
      %v2552 = vperm.slane %v2550, 0
      %v2570 = vunpack.c.l.b16 %v2533
      %v2571 = vunpack.c.l.b16 %v2534
      %v2572 = vunpack.c.l.b16 %v2535
      %v2573 = vunpack.c.l.b16 %v2536
      %v2574 = vunpack.c.l.b16 %v2537
      %v2575 = vunpack.c.l.b16 %v2538
      %v2576 = vunpack.c.l.b16 %v2539
      %v2577 = vunpack.c.l.b16 %v2540
      %v2578 = vunpack.c.l.b16 %v2541
      %v2579 = vunpack.c.l.b16 %v2542
      %v2580 = vunpack.c.l.b16 %v2543
      %v2581 = vunpack.c.l.b16 %v2544
      %v2582 = vunpack.c.l.b16 %v2545
      %v2583 = vunpack.c.l.b16 %v2546
      %v2584 = vunpack.c.l.b16 %v2547
      %v2585 = vunpack.c.l.b16 %v2548
      %v2586 = vpack.c.b16 %v2571, %v2570
      %v2587 = vpack.c.b16 %v2573, %v2572
      %v2588 = vpack.c.b16 %v2575, %v2574
      %v2589 = vpack.c.b16 %v2577, %v2576
      %v2590 = vpack.c.b16 %v2579, %v2578
      %v2591 = vpack.c.b16 %v2581, %v2580
      %v2592 = vpack.c.b16 %v2583, %v2582
      %v2593 = vpack.c.b16 %v2585, %v2584
      %2602 = vmatpush.bf16.msra.mxu0 %v2593
      %2603 = vmatpush.bf16.msra.mxu0 %v2592
      %2604 = vmatpush.bf16.msra.mxu0 %v2591
      %2605 = vmatpush.bf16.msra.mxu0 %v2590
      %2606 = vmatpush.bf16.msra.mxu0 %v2589
      %2607 = vmatpush.bf16.msra.mxu0 %v2588
      %2608 = vmatpush.bf16.msra.mxu0 %v2587
      %2609 = vmatpush.bf16.msra.mxu0 %v2586
      %2610 = vmatmul.bf16.gmra.mxu0 %v2468
      %v2611 = vpop.f32.mrf.mxu0
      %v2612 = vadd.f32 %v2552, %v2611
      %v2613 = vpop.f32.mrf.mxu0
      %v2614 = vadd.f32 %v2552, %v2613
      %2615 = vmatmul.bf16.gmra.mxu0 %v2469
      %v2616 = vpop.f32.mrf.mxu0
      %v2617 = vadd.f32 %v2552, %v2616
      %v2618 = vpop.f32.mrf.mxu0
      %v2619 = vadd.f32 %v2552, %v2618
      %2620 = vmatmul.bf16.gmra.mxu0 %v2470
      %v2621 = vpop.f32.mrf.mxu0
      %v2622 = vadd.f32 %v2552, %v2621
      %v2623 = vpop.f32.mrf.mxu0
      %v2624 = vadd.f32 %v2552, %v2623
      %2625 = vmatmul.bf16.gmra.mxu0 %v2471
      %v2626 = vpop.f32.mrf.mxu0
      %v2627 = vadd.f32 %v2552, %v2626
      %v2628 = vpop.f32.mrf.mxu0
      %v2629 = vadd.f32 %v2552, %v2628
      %2630 = vmatmul.bf16.gmra.mxu0 %v2472
      %v2631 = vpop.f32.mrf.mxu0
      %v2632 = vadd.f32 %v2552, %v2631
      %v2633 = vpop.f32.mrf.mxu0
      %v2634 = vadd.f32 %v2552, %v2633
      %2635 = vmatmul.bf16.gmra.mxu0 %v2473
      %v2636 = vpop.f32.mrf.mxu0
      %v2637 = vadd.f32 %v2552, %v2636
      %v2638 = vpop.f32.mrf.mxu0
      %v2639 = vadd.f32 %v2552, %v2638
      %2640 = vmatmul.bf16.gmra.mxu0 %v2474
      %v2641 = vpop.f32.mrf.mxu0
      %v2642 = vadd.f32 %v2552, %v2641
      %v2643 = vpop.f32.mrf.mxu0
      %v2644 = vadd.f32 %v2552, %v2643
      %2645 = vmatmul.bf16.gmra.mxu0 %v2475
      %v2646 = vpop.f32.mrf.mxu0
      %v2647 = vadd.f32 %v2552, %v2646
      %v2648 = vpop.f32.mrf.mxu0
      %v2649 = vadd.f32 %v2552, %v2648
      %2650 = vmatmul.bf16.gmra.mxu0 %v2476
      %v2651 = vpop.f32.mrf.mxu0
      %v2652 = vadd.f32 %v2552, %v2651
      %v2653 = vpop.f32.mrf.mxu0
      %v2654 = vadd.f32 %v2552, %v2653
      %2655 = vmatmul.bf16.gmra.mxu0 %v2477
      %v2656 = vpop.f32.mrf.mxu0
      %v2657 = vadd.f32 %v2552, %v2656
      %v2658 = vpop.f32.mrf.mxu0
      %v2659 = vadd.f32 %v2552, %v2658
      %2660 = vmatmul.bf16.gmra.mxu0 %v2478
      %v2661 = vpop.f32.mrf.mxu0
      %v2662 = vadd.f32 %v2552, %v2661
      %v2663 = vpop.f32.mrf.mxu0
      %v2664 = vadd.f32 %v2552, %v2663
      %2665 = vmatmul.bf16.gmra.mxu0 %v2479
      %v2666 = vpop.f32.mrf.mxu0
      %v2667 = vadd.f32 %v2552, %v2666
      %v2668 = vpop.f32.mrf.mxu0
      %v2669 = vadd.f32 %v2552, %v2668
      %2670 = vmatmul.bf16.gmra.mxu0 %v2480
      %v2671 = vpop.f32.mrf.mxu0
      %v2672 = vadd.f32 %v2552, %v2671
      %v2673 = vpop.f32.mrf.mxu0
      %v2674 = vadd.f32 %v2552, %v2673
      %2675 = vmatmul.bf16.gmra.mxu0 %v2481
      %v2676 = vpop.f32.mrf.mxu0
      %v2677 = vadd.f32 %v2552, %v2676
      %v2678 = vpop.f32.mrf.mxu0
      %v2679 = vadd.f32 %v2552, %v2678
      %2680 = vmatmul.bf16.gmra.mxu0 %v2482
      %v2681 = vpop.f32.mrf.mxu0
      %v2682 = vadd.f32 %v2552, %v2681
      %v2683 = vpop.f32.mrf.mxu0
      %v2684 = vadd.f32 %v2552, %v2683
      %2685 = vmatmul.bf16.gmra.mxu0 %v2483
      %v2686 = vpop.f32.mrf.mxu0
      %v2687 = vadd.f32 %v2552, %v2686
      %v2688 = vpop.f32.mrf.mxu0
      %v2689 = vadd.f32 %v2552, %v2688
      %2690 = vmatmul.bf16.gmra.mxu0 %v2484
      %v2691 = vpop.f32.mrf.mxu0
      %v2692 = vadd.f32 %v2552, %v2691
      %v2693 = vpop.f32.mrf.mxu0
      %v2694 = vadd.f32 %v2552, %v2693
      %2695 = vmatmul.bf16.gmra.mxu0 %v2485
      %v2696 = vpop.f32.mrf.mxu0
      %v2697 = vadd.f32 %v2552, %v2696
      %v2698 = vpop.f32.mrf.mxu0
      %v2699 = vadd.f32 %v2552, %v2698
      %2700 = vmatmul.bf16.gmra.mxu0 %v2486
      %v2701 = vpop.f32.mrf.mxu0
      %v2702 = vadd.f32 %v2552, %v2701
      %v2703 = vpop.f32.mrf.mxu0
      %v2704 = vadd.f32 %v2552, %v2703
      %2705 = vmatmul.bf16.gmra.mxu0 %v2487
      %v2706 = vpop.f32.mrf.mxu0
      %v2707 = vadd.f32 %v2552, %v2706
      %v2708 = vpop.f32.mrf.mxu0
      %v2709 = vadd.f32 %v2552, %v2708
      %2710 = vmatmul.bf16.gmra.mxu0 %v2488
      %v2711 = vpop.f32.mrf.mxu0
      %v2712 = vadd.f32 %v2552, %v2711
      %v2713 = vpop.f32.mrf.mxu0
      %v2714 = vadd.f32 %v2552, %v2713
      %2715 = vmatmul.bf16.gmra.mxu0 %v2489
      %v2716 = vpop.f32.mrf.mxu0
      %v2717 = vadd.f32 %v2552, %v2716
      %v2718 = vpop.f32.mrf.mxu0
      %v2719 = vadd.f32 %v2552, %v2718
      %2720 = vmatmul.bf16.gmra.mxu0 %v2490
      %v2721 = vpop.f32.mrf.mxu0
      %v2722 = vadd.f32 %v2552, %v2721
      %v2723 = vpop.f32.mrf.mxu0
      %v2724 = vadd.f32 %v2552, %v2723
      %2725 = vmatmul.bf16.gmra.mxu0 %v2491
      %v2726 = vpop.f32.mrf.mxu0
      %v2727 = vadd.f32 %v2552, %v2726
      %v2728 = vpop.f32.mrf.mxu0
      %v2729 = vadd.f32 %v2552, %v2728
      %2730 = vmatmul.bf16.gmra.mxu0 %v2492
      %v2731 = vpop.f32.mrf.mxu0
      %v2732 = vadd.f32 %v2552, %v2731
      %v2733 = vpop.f32.mrf.mxu0
      %v2734 = vadd.f32 %v2552, %v2733
      %2735 = vmatmul.bf16.gmra.mxu0 %v2493
      %v2736 = vpop.f32.mrf.mxu0
      %v2737 = vadd.f32 %v2552, %v2736
      %v2738 = vpop.f32.mrf.mxu0
      %v2739 = vadd.f32 %v2552, %v2738
      %2740 = vmatmul.bf16.gmra.mxu0 %v2494
      %v2741 = vpop.f32.mrf.mxu0
      %v2742 = vadd.f32 %v2552, %v2741
      %v2743 = vpop.f32.mrf.mxu0
      %v2744 = vadd.f32 %v2552, %v2743
      %2745 = vmatmul.bf16.gmra.mxu0 %v2495
      %v2746 = vpop.f32.mrf.mxu0
      %v2747 = vadd.f32 %v2552, %v2746
      %v2748 = vpop.f32.mrf.mxu0
      %v2749 = vadd.f32 %v2552, %v2748
      %2750 = vmatmul.bf16.gmra.mxu0 %v2496
      %v2751 = vpop.f32.mrf.mxu0
      %v2752 = vadd.f32 %v2552, %v2751
      %v2753 = vpop.f32.mrf.mxu0
      %v2754 = vadd.f32 %v2552, %v2753
      %2755 = vmatmul.bf16.gmra.mxu0 %v2497
      %v2756 = vpop.f32.mrf.mxu0
      %v2757 = vadd.f32 %v2552, %v2756
      %v2758 = vpop.f32.mrf.mxu0
      %v2759 = vadd.f32 %v2552, %v2758
      %2760 = vmatmul.bf16.gmra.mxu0 %v2498
      %v2761 = vpop.f32.mrf.mxu0
      %v2762 = vadd.f32 %v2552, %v2761
      %v2763 = vpop.f32.mrf.mxu0
      %v2764 = vadd.f32 %v2552, %v2763
      %2765 = vmatmul.bf16.gmra.mxu0 %v2499
      %v2766 = vpop.f32.mrf.mxu0
      %v2767 = vadd.f32 %v2552, %v2766
      %v2768 = vpop.f32.mrf.mxu0
      %v2769 = vadd.f32 %v2552, %v2768
      %2770 = vmatmul.bf16.gmra.mxu0 %v2500
      %v2771 = vpop.f32.mrf.mxu0
      %v2772 = vadd.f32 %v2552, %v2771
      %v2773 = vpop.f32.mrf.mxu0
      %v2774 = vadd.f32 %v2552, %v2773
      %2775 = vmatmul.bf16.gmra.mxu0 %v2501
      %v2776 = vpop.f32.mrf.mxu0
      %v2777 = vadd.f32 %v2552, %v2776
      %v2778 = vpop.f32.mrf.mxu0
      %v2779 = vadd.f32 %v2552, %v2778
      %2780 = vmatmul.bf16.gmra.mxu0 %v2502
      %v2781 = vpop.f32.mrf.mxu0
      %v2782 = vadd.f32 %v2552, %v2781
      %v2783 = vpop.f32.mrf.mxu0
      %v2784 = vadd.f32 %v2552, %v2783
      %2785 = vmatmul.bf16.gmra.mxu0 %v2503
      %v2786 = vpop.f32.mrf.mxu0
      %v2787 = vadd.f32 %v2552, %v2786
      %v2788 = vpop.f32.mrf.mxu0
      %v2789 = vadd.f32 %v2552, %v2788
      %2790 = vmatmul.bf16.gmra.mxu0 %v2504
      %v2791 = vpop.f32.mrf.mxu0
      %v2792 = vadd.f32 %v2552, %v2791
      %v2793 = vpop.f32.mrf.mxu0
      %v2794 = vadd.f32 %v2552, %v2793
      %2795 = vmatmul.bf16.gmra.mxu0 %v2505
      %v2796 = vpop.f32.mrf.mxu0
      %v2797 = vadd.f32 %v2552, %v2796
      %v2798 = vpop.f32.mrf.mxu0
      %v2799 = vadd.f32 %v2552, %v2798
      %2800 = vmatmul.bf16.gmra.mxu0 %v2506
      %v2801 = vpop.f32.mrf.mxu0
      %v2802 = vadd.f32 %v2552, %v2801
      %v2803 = vpop.f32.mrf.mxu0
      %v2804 = vadd.f32 %v2552, %v2803
      %2805 = vmatmul.bf16.gmra.mxu0 %v2507
      %v2806 = vpop.f32.mrf.mxu0
      %v2807 = vadd.f32 %v2552, %v2806
      %v2808 = vpop.f32.mrf.mxu0
      %v2809 = vadd.f32 %v2552, %v2808
      %2810 = vmatmul.bf16.gmra.mxu0 %v2508
      %v2811 = vpop.f32.mrf.mxu0
      %v2812 = vadd.f32 %v2552, %v2811
      %v2813 = vpop.f32.mrf.mxu0
      %v2814 = vadd.f32 %v2552, %v2813
      %2815 = vmatmul.bf16.gmra.mxu0 %v2509
      %v2816 = vpop.f32.mrf.mxu0
      %v2817 = vadd.f32 %v2552, %v2816
      %v2818 = vpop.f32.mrf.mxu0
      %v2819 = vadd.f32 %v2552, %v2818
      %2820 = vmatmul.bf16.gmra.mxu0 %v2510
      %v2821 = vpop.f32.mrf.mxu0
      %v2822 = vadd.f32 %v2552, %v2821
      %v2823 = vpop.f32.mrf.mxu0
      %v2824 = vadd.f32 %v2552, %v2823
      %2825 = vmatmul.bf16.gmra.mxu0 %v2511
      %v2826 = vpop.f32.mrf.mxu0
      %v2827 = vadd.f32 %v2552, %v2826
      %v2828 = vpop.f32.mrf.mxu0
      %v2829 = vadd.f32 %v2552, %v2828
      %2830 = vmatmul.bf16.gmra.mxu0 %v2512
      %v2831 = vpop.f32.mrf.mxu0
      %v2832 = vadd.f32 %v2552, %v2831
      %v2833 = vpop.f32.mrf.mxu0
      %v2834 = vadd.f32 %v2552, %v2833
      %2835 = vmatmul.bf16.gmra.mxu0 %v2513
      %v2836 = vpop.f32.mrf.mxu0
      %v2837 = vadd.f32 %v2552, %v2836
      %v2838 = vpop.f32.mrf.mxu0
      %v2839 = vadd.f32 %v2552, %v2838
      %2840 = vmatmul.bf16.gmra.mxu0 %v2514
      %v2841 = vpop.f32.mrf.mxu0
      %v2842 = vadd.f32 %v2552, %v2841
      %v2843 = vpop.f32.mrf.mxu0
      %v2844 = vadd.f32 %v2552, %v2843
      %2845 = vmatmul.bf16.gmra.mxu0 %v2515
      %v2846 = vpop.f32.mrf.mxu0
      %v2847 = vadd.f32 %v2552, %v2846
      %v2848 = vpop.f32.mrf.mxu0
      %v2849 = vadd.f32 %v2552, %v2848
      %2850 = vmatmul.bf16.gmra.mxu0 %v2516
      %v2851 = vpop.f32.mrf.mxu0
      %v2852 = vadd.f32 %v2552, %v2851
      %v2853 = vpop.f32.mrf.mxu0
      %v2854 = vadd.f32 %v2552, %v2853
      %2855 = vmatmul.bf16.gmra.mxu0 %v2517
      %v2856 = vpop.f32.mrf.mxu0
      %v2857 = vadd.f32 %v2552, %v2856
      %v2858 = vpop.f32.mrf.mxu0
      %v2859 = vadd.f32 %v2552, %v2858
      %2860 = vmatmul.bf16.gmra.mxu0 %v2518
      %v2861 = vpop.f32.mrf.mxu0
      %v2862 = vadd.f32 %v2552, %v2861
      %v2863 = vpop.f32.mrf.mxu0
      %v2864 = vadd.f32 %v2552, %v2863
      %2865 = vmatmul.bf16.gmra.mxu0 %v2519
      %v2866 = vpop.f32.mrf.mxu0
      %v2867 = vadd.f32 %v2552, %v2866
      %v2868 = vpop.f32.mrf.mxu0
      %v2869 = vadd.f32 %v2552, %v2868
      %2870 = vmatmul.bf16.gmra.mxu0 %v2520
      %v2871 = vpop.f32.mrf.mxu0
      %v2872 = vadd.f32 %v2552, %v2871
      %v2873 = vpop.f32.mrf.mxu0
      %v2874 = vadd.f32 %v2552, %v2873
      %2875 = vmatmul.bf16.gmra.mxu0 %v2521
      %v2876 = vpop.f32.mrf.mxu0
      %v2877 = vadd.f32 %v2552, %v2876
      %v2878 = vpop.f32.mrf.mxu0
      %v2879 = vadd.f32 %v2552, %v2878
      %2880 = vmatmul.bf16.gmra.mxu0 %v2522
      %v2881 = vpop.f32.mrf.mxu0
      %v2882 = vadd.f32 %v2552, %v2881
      %v2883 = vpop.f32.mrf.mxu0
      %v2884 = vadd.f32 %v2552, %v2883
      %2885 = vmatmul.bf16.gmra.mxu0 %v2523
      %v2886 = vpop.f32.mrf.mxu0
      %v2887 = vadd.f32 %v2552, %v2886
      %v2888 = vpop.f32.mrf.mxu0
      %v2889 = vadd.f32 %v2552, %v2888
      %2890 = vmatmul.bf16.gmra.mxu0 %v2524
      %v2891 = vpop.f32.mrf.mxu0
      %v2892 = vadd.f32 %v2552, %v2891
      %v2893 = vpop.f32.mrf.mxu0
      %v2894 = vadd.f32 %v2552, %v2893
      %2895 = vmatmul.bf16.gmra.mxu0 %v2525
      %v2896 = vpop.f32.mrf.mxu0
      %v2897 = vadd.f32 %v2552, %v2896
      %v2898 = vpop.f32.mrf.mxu0
      %v2899 = vadd.f32 %v2552, %v2898
      %2900 = vmatmul.bf16.gmra.mxu0 %v2526
      %v2901 = vpop.f32.mrf.mxu0
      %v2902 = vadd.f32 %v2552, %v2901
      %v2903 = vpop.f32.mrf.mxu0
      %v2904 = vadd.f32 %v2552, %v2903
      %2905 = vmatmul.bf16.gmra.mxu0 %v2527
      %v2906 = vpop.f32.mrf.mxu0
      %v2907 = vadd.f32 %v2552, %v2906
      %v2908 = vpop.f32.mrf.mxu0
      %v2909 = vadd.f32 %v2552, %v2908
      %2910 = vmatmul.bf16.gmra.mxu0 %v2528
      %v2911 = vpop.f32.mrf.mxu0
      %v2912 = vadd.f32 %v2552, %v2911
      %v2913 = vpop.f32.mrf.mxu0
      %v2914 = vadd.f32 %v2552, %v2913
      %2915 = vmatmul.bf16.gmra.mxu0 %v2529
      %v2916 = vpop.f32.mrf.mxu0
      %v2917 = vadd.f32 %v2552, %v2916
      %v2918 = vpop.f32.mrf.mxu0
      %v2919 = vadd.f32 %v2552, %v2918
      %2920 = vmatmul.bf16.gmra.mxu0 %v2530
      %v2921 = vpop.f32.mrf.mxu0
      %v2922 = vadd.f32 %v2552, %v2921
      %v2923 = vpop.f32.mrf.mxu0
      %v2924 = vadd.f32 %v2552, %v2923
      %2925 = vmatmul.bf16.gmra.mxu0 %v2531
      %v2926 = vpop.f32.mrf.mxu0
      %v2927 = vadd.f32 %v2552, %v2926
      %v2928 = vpop.f32.mrf.mxu0
      %v2929 = vadd.f32 %v2552, %v2928
      %2930 = vdwg.mxu0
      %v2931 = vtanh.pop %v2612
      %v2932 = vtanh.pop %v2614
      %v2933 = vtanh.pop %v2617
      %v2934 = vtanh.pop %v2619
      %v2935 = vtanh.pop %v2622
      %v2936 = vtanh.pop %v2624
      %v2937 = vtanh.pop %v2627
      %v2938 = vtanh.pop %v2629
      %v2939 = vtanh.pop %v2632
      %v2940 = vtanh.pop %v2634
      %v2941 = vtanh.pop %v2637
      %v2942 = vtanh.pop %v2639
      %v2943 = vtanh.pop %v2642
      %v2944 = vtanh.pop %v2644
      %v2945 = vtanh.pop %v2647
      %v2946 = vtanh.pop %v2649
      %v2947 = vtanh.pop %v2652
      %v2948 = vtanh.pop %v2654
      %v2949 = vtanh.pop %v2657
      %v2950 = vtanh.pop %v2659
      %v2951 = vtanh.pop %v2662
      %v2952 = vtanh.pop %v2664
      %v2953 = vtanh.pop %v2667
      %v2954 = vtanh.pop %v2669
      %v2955 = vtanh.pop %v2672
      %v2956 = vtanh.pop %v2674
      %v2957 = vtanh.pop %v2677
      %v2958 = vtanh.pop %v2679
      %v2959 = vtanh.pop %v2682
      %v2960 = vtanh.pop %v2684
      %v2961 = vtanh.pop %v2687
      %v2962 = vtanh.pop %v2689
      %v2963 = vtanh.pop %v2692
      %v2964 = vtanh.pop %v2694
      %v2965 = vtanh.pop %v2697
      %v2966 = vtanh.pop %v2699
      %v2967 = vtanh.pop %v2702
      %v2968 = vtanh.pop %v2704
      %v2969 = vtanh.pop %v2707
      %v2970 = vtanh.pop %v2709
      %v2971 = vtanh.pop %v2712
      %v2972 = vtanh.pop %v2714
      %v2973 = vtanh.pop %v2717
      %v2974 = vtanh.pop %v2719
      %v2975 = vtanh.pop %v2722
      %v2976 = vtanh.pop %v2724
      %v2977 = vtanh.pop %v2727
      %v2978 = vtanh.pop %v2729
      %v2979 = vtanh.pop %v2732
      %v2980 = vtanh.pop %v2734
      %v2981 = vtanh.pop %v2737
      %v2982 = vtanh.pop %v2739
      %v2983 = vtanh.pop %v2742
      %v2984 = vtanh.pop %v2744
      %v2985 = vtanh.pop %v2747
      %v2986 = vtanh.pop %v2749
      %v2987 = vtanh.pop %v2752
      %v2988 = vtanh.pop %v2754
      %v2989 = vtanh.pop %v2757
      %v2990 = vtanh.pop %v2759
      %v2991 = vtanh.pop %v2762
      %v2992 = vtanh.pop %v2764
      %v2993 = vtanh.pop %v2767
      %v2994 = vtanh.pop %v2769
      %v2995 = vtanh.pop %v2772
      %v2996 = vtanh.pop %v2774
      %v2997 = vtanh.pop %v2777
      %v2998 = vtanh.pop %v2779
      %v2999 = vtanh.pop %v2782
      %v3000 = vtanh.pop %v2784
      %v3001 = vtanh.pop %v2787
      %v3002 = vtanh.pop %v2789
      %v3003 = vtanh.pop %v2792
      %v3004 = vtanh.pop %v2794
      %v3005 = vtanh.pop %v2797
      %v3006 = vtanh.pop %v2799
      %v3007 = vtanh.pop %v2802
      %v3008 = vtanh.pop %v2804
      %v3009 = vtanh.pop %v2807
      %v3010 = vtanh.pop %v2809
      %v3011 = vtanh.pop %v2812
      %v3012 = vtanh.pop %v2814
      %v3013 = vtanh.pop %v2817
      %v3014 = vtanh.pop %v2819
      %v3015 = vtanh.pop %v2822
      %v3016 = vtanh.pop %v2824
      %v3017 = vtanh.pop %v2827
      %v3018 = vtanh.pop %v2829
      %v3019 = vtanh.pop %v2832
      %v3020 = vtanh.pop %v2834
      %v3021 = vtanh.pop %v2837
      %v3022 = vtanh.pop %v2839
      %v3023 = vtanh.pop %v2842
      %v3024 = vtanh.pop %v2844
      %v3025 = vtanh.pop %v2847
      %v3026 = vtanh.pop %v2849
      %v3027 = vtanh.pop %v2852
      %v3028 = vtanh.pop %v2854
      %v3029 = vtanh.pop %v2857
      %v3030 = vtanh.pop %v2859
      %v3031 = vtanh.pop %v2862
      %v3032 = vtanh.pop %v2864
      %v3033 = vtanh.pop %v2867
      %v3034 = vtanh.pop %v2869
      %v3035 = vtanh.pop %v2872
      %v3036 = vtanh.pop %v2874
      %v3037 = vtanh.pop %v2877
      %v3038 = vtanh.pop %v2879
      %v3039 = vtanh.pop %v2882
      %v3040 = vtanh.pop %v2884
      %v3041 = vtanh.pop %v2887
      %v3042 = vtanh.pop %v2889
      %v3043 = vtanh.pop %v2892
      %v3044 = vtanh.pop %v2894
      %v3045 = vtanh.pop %v2897
      %v3046 = vtanh.pop %v2899
      %v3047 = vtanh.pop %v2902
      %v3048 = vtanh.pop %v2904
      %v3049 = vtanh.pop %v2907
      %v3050 = vtanh.pop %v2909
      %v3051 = vtanh.pop %v2912
      %v3052 = vtanh.pop %v2914
      %v3053 = vtanh.pop %v2917
      %v3054 = vtanh.pop %v2919
      %v3055 = vtanh.pop %v2922
      %v3056 = vtanh.pop %v2924
      %v3057 = vtanh.pop %v2927
      %v3058 = vtanh.pop %v2929
      %v3059 = vpack.c.bf16 %v2932, %v2931
      %v3060 = vpack.c.bf16 %v2934, %v2933
      %v3061 = vpack.c.bf16 %v2936, %v2935
      %v3062 = vpack.c.bf16 %v2938, %v2937
      %v3063 = vpack.c.bf16 %v2940, %v2939
      %v3064 = vpack.c.bf16 %v2942, %v2941
      %v3065 = vpack.c.bf16 %v2944, %v2943
      %v3066 = vpack.c.bf16 %v2946, %v2945
      %v3067 = vpack.c.bf16 %v2948, %v2947
      %v3068 = vpack.c.bf16 %v2950, %v2949
      %v3069 = vpack.c.bf16 %v2952, %v2951
      %v3070 = vpack.c.bf16 %v2954, %v2953
      %v3071 = vpack.c.bf16 %v2956, %v2955
      %v3072 = vpack.c.bf16 %v2958, %v2957
      %v3073 = vpack.c.bf16 %v2960, %v2959
      %v3074 = vpack.c.bf16 %v2962, %v2961
      %v3075 = vpack.c.bf16 %v2964, %v2963
      %v3076 = vpack.c.bf16 %v2966, %v2965
      %v3077 = vpack.c.bf16 %v2968, %v2967
      %v3078 = vpack.c.bf16 %v2970, %v2969
      %v3079 = vpack.c.bf16 %v2972, %v2971
      %v3080 = vpack.c.bf16 %v2974, %v2973
      %v3081 = vpack.c.bf16 %v2976, %v2975
      %v3082 = vpack.c.bf16 %v2978, %v2977
      %v3083 = vpack.c.bf16 %v2980, %v2979
      %v3084 = vpack.c.bf16 %v2982, %v2981
      %v3085 = vpack.c.bf16 %v2984, %v2983
      %v3086 = vpack.c.bf16 %v2986, %v2985
      %v3087 = vpack.c.bf16 %v2988, %v2987
      %v3088 = vpack.c.bf16 %v2990, %v2989
      %v3089 = vpack.c.bf16 %v2992, %v2991
      %v3090 = vpack.c.bf16 %v2994, %v2993
      %v3091 = vpack.c.bf16 %v2996, %v2995
      %v3092 = vpack.c.bf16 %v2998, %v2997
      %v3093 = vpack.c.bf16 %v3000, %v2999
      %v3094 = vpack.c.bf16 %v3002, %v3001
      %v3095 = vpack.c.bf16 %v3004, %v3003
      %v3096 = vpack.c.bf16 %v3006, %v3005
      %v3097 = vpack.c.bf16 %v3008, %v3007
      %v3098 = vpack.c.bf16 %v3010, %v3009
      %v3099 = vpack.c.bf16 %v3012, %v3011
      %v3100 = vpack.c.bf16 %v3014, %v3013
      %v3101 = vpack.c.bf16 %v3016, %v3015
      %v3102 = vpack.c.bf16 %v3018, %v3017
      %v3103 = vpack.c.bf16 %v3020, %v3019
      %v3104 = vpack.c.bf16 %v3022, %v3021
      %v3105 = vpack.c.bf16 %v3024, %v3023
      %v3106 = vpack.c.bf16 %v3026, %v3025
      %v3107 = vpack.c.bf16 %v3028, %v3027
      %v3108 = vpack.c.bf16 %v3030, %v3029
      %v3109 = vpack.c.bf16 %v3032, %v3031
      %v3110 = vpack.c.bf16 %v3034, %v3033
      %v3111 = vpack.c.bf16 %v3036, %v3035
      %v3112 = vpack.c.bf16 %v3038, %v3037
      %v3113 = vpack.c.bf16 %v3040, %v3039
      %v3114 = vpack.c.bf16 %v3042, %v3041
      %v3115 = vpack.c.bf16 %v3044, %v3043
      %v3116 = vpack.c.bf16 %v3046, %v3045
      %v3117 = vpack.c.bf16 %v3048, %v3047
      %v3118 = vpack.c.bf16 %v3050, %v3049
      %v3119 = vpack.c.bf16 %v3052, %v3051
      %v3120 = vpack.c.bf16 %v3054, %v3053
      %v3121 = vpack.c.bf16 %v3056, %v3055
      %v3122 = vpack.c.bf16 %v3058, %v3057
      %s3123 = scalar_lea.vmem %s1, 256
      %v3124 = vld [vmem:[%s3123] sm:$0xf]
      %v3125 = vld [vmem:[%s3123 + $0x4] sm:$0xf]
      %v3126 = vld [vmem:[%s3123 + $0x8] sm:$0xf]
      %v3127 = vld [vmem:[%s3123 + $0xc] sm:$0xf]
      %v3128 = vld [vmem:[%s3123 + $0x10] sm:$0xf]
      %v3129 = vld [vmem:[%s3123 + $0x14] sm:$0xf]
      %v3130 = vld [vmem:[%s3123 + $0x18] sm:$0xf]
      %v3131 = vld [vmem:[%s3123 + $0x1c] sm:$0xf]
      %v3132 = vld [vmem:[%s3123 + $0x20] sm:$0xf]
      %v3133 = vld [vmem:[%s3123 + $0x24] sm:$0xf]
      %v3134 = vld [vmem:[%s3123 + $0x28] sm:$0xf]
      %v3135 = vld [vmem:[%s3123 + $0x2c] sm:$0xf]
      %v3136 = vld [vmem:[%s3123 + $0x30] sm:$0xf]
      %v3137 = vld [vmem:[%s3123 + $0x34] sm:$0xf]
      %v3138 = vld [vmem:[%s3123 + $0x38] sm:$0xf]
      %v3139 = vld [vmem:[%s3123 + $0x3c] sm:$0xf]
      %s3140 = scalar_lea.vmem %s2, 4
      %v3141 = vld [vmem:[%s3140] sm:$0x1]
      %v3143 = vperm.slane %v3141, 0
      %v3161 = vunpack.c.l.b16 %v3124
      %v3162 = vunpack.c.l.b16 %v3125
      %v3163 = vunpack.c.l.b16 %v3126
      %v3164 = vunpack.c.l.b16 %v3127
      %v3165 = vunpack.c.l.b16 %v3128
      %v3166 = vunpack.c.l.b16 %v3129
      %v3167 = vunpack.c.l.b16 %v3130
      %v3168 = vunpack.c.l.b16 %v3131
      %v3169 = vunpack.c.l.b16 %v3132
      %v3170 = vunpack.c.l.b16 %v3133
      %v3171 = vunpack.c.l.b16 %v3134
      %v3172 = vunpack.c.l.b16 %v3135
      %v3173 = vunpack.c.l.b16 %v3136
      %v3174 = vunpack.c.l.b16 %v3137
      %v3175 = vunpack.c.l.b16 %v3138
      %v3176 = vunpack.c.l.b16 %v3139
      %v3177 = vpack.c.b16 %v3162, %v3161
      %v3178 = vpack.c.b16 %v3164, %v3163
      %v3179 = vpack.c.b16 %v3166, %v3165
      %v3180 = vpack.c.b16 %v3168, %v3167
      %v3181 = vpack.c.b16 %v3170, %v3169
      %v3182 = vpack.c.b16 %v3172, %v3171
      %v3183 = vpack.c.b16 %v3174, %v3173
      %v3184 = vpack.c.b16 %v3176, %v3175
      %3193 = vmatpush.bf16.msra.mxu0 %v3184
      %3194 = vmatpush.bf16.msra.mxu0 %v3183
      %3195 = vmatpush.bf16.msra.mxu0 %v3182
      %3196 = vmatpush.bf16.msra.mxu0 %v3181
      %3197 = vmatpush.bf16.msra.mxu0 %v3180
      %3198 = vmatpush.bf16.msra.mxu0 %v3179
      %3199 = vmatpush.bf16.msra.mxu0 %v3178
      %3200 = vmatpush.bf16.msra.mxu0 %v3177
      %3201 = vmatmul.bf16.gmra.mxu0 %v3059
      %v3202 = vpop.f32.mrf.mxu0
      %v3203 = vadd.f32 %v3143, %v3202
      %v3204 = vpop.f32.mrf.mxu0
      %v3205 = vadd.f32 %v3143, %v3204
      %3206 = vmatmul.bf16.gmra.mxu0 %v3060
      %v3207 = vpop.f32.mrf.mxu0
      %v3208 = vadd.f32 %v3143, %v3207
      %v3209 = vpop.f32.mrf.mxu0
      %v3210 = vadd.f32 %v3143, %v3209
      %3211 = vmatmul.bf16.gmra.mxu0 %v3061
      %v3212 = vpop.f32.mrf.mxu0
      %v3213 = vadd.f32 %v3143, %v3212
      %v3214 = vpop.f32.mrf.mxu0
      %v3215 = vadd.f32 %v3143, %v3214
      %3216 = vmatmul.bf16.gmra.mxu0 %v3062
      %v3217 = vpop.f32.mrf.mxu0
      %v3218 = vadd.f32 %v3143, %v3217
      %v3219 = vpop.f32.mrf.mxu0
      %v3220 = vadd.f32 %v3143, %v3219
      %3221 = vmatmul.bf16.gmra.mxu0 %v3063
      %v3222 = vpop.f32.mrf.mxu0
      %v3223 = vadd.f32 %v3143, %v3222
      %v3224 = vpop.f32.mrf.mxu0
      %v3225 = vadd.f32 %v3143, %v3224
      %3226 = vmatmul.bf16.gmra.mxu0 %v3064
      %v3227 = vpop.f32.mrf.mxu0
      %v3228 = vadd.f32 %v3143, %v3227
      %v3229 = vpop.f32.mrf.mxu0
      %v3230 = vadd.f32 %v3143, %v3229
      %3231 = vmatmul.bf16.gmra.mxu0 %v3065
      %v3232 = vpop.f32.mrf.mxu0
      %v3233 = vadd.f32 %v3143, %v3232
      %v3234 = vpop.f32.mrf.mxu0
      %v3235 = vadd.f32 %v3143, %v3234
      %3236 = vmatmul.bf16.gmra.mxu0 %v3066
      %v3237 = vpop.f32.mrf.mxu0
      %v3238 = vadd.f32 %v3143, %v3237
      %v3239 = vpop.f32.mrf.mxu0
      %v3240 = vadd.f32 %v3143, %v3239
      %3241 = vmatmul.bf16.gmra.mxu0 %v3067
      %v3242 = vpop.f32.mrf.mxu0
      %v3243 = vadd.f32 %v3143, %v3242
      %v3244 = vpop.f32.mrf.mxu0
      %v3245 = vadd.f32 %v3143, %v3244
      %3246 = vmatmul.bf16.gmra.mxu0 %v3068
      %v3247 = vpop.f32.mrf.mxu0
      %v3248 = vadd.f32 %v3143, %v3247
      %v3249 = vpop.f32.mrf.mxu0
      %v3250 = vadd.f32 %v3143, %v3249
      %3251 = vmatmul.bf16.gmra.mxu0 %v3069
      %v3252 = vpop.f32.mrf.mxu0
      %v3253 = vadd.f32 %v3143, %v3252
      %v3254 = vpop.f32.mrf.mxu0
      %v3255 = vadd.f32 %v3143, %v3254
      %3256 = vmatmul.bf16.gmra.mxu0 %v3070
      %v3257 = vpop.f32.mrf.mxu0
      %v3258 = vadd.f32 %v3143, %v3257
      %v3259 = vpop.f32.mrf.mxu0
      %v3260 = vadd.f32 %v3143, %v3259
      %3261 = vmatmul.bf16.gmra.mxu0 %v3071
      %v3262 = vpop.f32.mrf.mxu0
      %v3263 = vadd.f32 %v3143, %v3262
      %v3264 = vpop.f32.mrf.mxu0
      %v3265 = vadd.f32 %v3143, %v3264
      %3266 = vmatmul.bf16.gmra.mxu0 %v3072
      %v3267 = vpop.f32.mrf.mxu0
      %v3268 = vadd.f32 %v3143, %v3267
      %v3269 = vpop.f32.mrf.mxu0
      %v3270 = vadd.f32 %v3143, %v3269
      %3271 = vmatmul.bf16.gmra.mxu0 %v3073
      %v3272 = vpop.f32.mrf.mxu0
      %v3273 = vadd.f32 %v3143, %v3272
      %v3274 = vpop.f32.mrf.mxu0
      %v3275 = vadd.f32 %v3143, %v3274
      %3276 = vmatmul.bf16.gmra.mxu0 %v3074
      %v3277 = vpop.f32.mrf.mxu0
      %v3278 = vadd.f32 %v3143, %v3277
      %v3279 = vpop.f32.mrf.mxu0
      %v3280 = vadd.f32 %v3143, %v3279
      %3281 = vmatmul.bf16.gmra.mxu0 %v3075
      %v3282 = vpop.f32.mrf.mxu0
      %v3283 = vadd.f32 %v3143, %v3282
      %v3284 = vpop.f32.mrf.mxu0
      %v3285 = vadd.f32 %v3143, %v3284
      %3286 = vmatmul.bf16.gmra.mxu0 %v3076
      %v3287 = vpop.f32.mrf.mxu0
      %v3288 = vadd.f32 %v3143, %v3287
      %v3289 = vpop.f32.mrf.mxu0
      %v3290 = vadd.f32 %v3143, %v3289
      %3291 = vmatmul.bf16.gmra.mxu0 %v3077
      %v3292 = vpop.f32.mrf.mxu0
      %v3293 = vadd.f32 %v3143, %v3292
      %v3294 = vpop.f32.mrf.mxu0
      %v3295 = vadd.f32 %v3143, %v3294
      %3296 = vmatmul.bf16.gmra.mxu0 %v3078
      %v3297 = vpop.f32.mrf.mxu0
      %v3298 = vadd.f32 %v3143, %v3297
      %v3299 = vpop.f32.mrf.mxu0
      %v3300 = vadd.f32 %v3143, %v3299
      %3301 = vmatmul.bf16.gmra.mxu0 %v3079
      %v3302 = vpop.f32.mrf.mxu0
      %v3303 = vadd.f32 %v3143, %v3302
      %v3304 = vpop.f32.mrf.mxu0
      %v3305 = vadd.f32 %v3143, %v3304
      %3306 = vmatmul.bf16.gmra.mxu0 %v3080
      %v3307 = vpop.f32.mrf.mxu0
      %v3308 = vadd.f32 %v3143, %v3307
      %v3309 = vpop.f32.mrf.mxu0
      %v3310 = vadd.f32 %v3143, %v3309
      %3311 = vmatmul.bf16.gmra.mxu0 %v3081
      %v3312 = vpop.f32.mrf.mxu0
      %v3313 = vadd.f32 %v3143, %v3312
      %v3314 = vpop.f32.mrf.mxu0
      %v3315 = vadd.f32 %v3143, %v3314
      %3316 = vmatmul.bf16.gmra.mxu0 %v3082
      %v3317 = vpop.f32.mrf.mxu0
      %v3318 = vadd.f32 %v3143, %v3317
      %v3319 = vpop.f32.mrf.mxu0
      %v3320 = vadd.f32 %v3143, %v3319
      %3321 = vmatmul.bf16.gmra.mxu0 %v3083
      %v3322 = vpop.f32.mrf.mxu0
      %v3323 = vadd.f32 %v3143, %v3322
      %v3324 = vpop.f32.mrf.mxu0
      %v3325 = vadd.f32 %v3143, %v3324
      %3326 = vmatmul.bf16.gmra.mxu0 %v3084
      %v3327 = vpop.f32.mrf.mxu0
      %v3328 = vadd.f32 %v3143, %v3327
      %v3329 = vpop.f32.mrf.mxu0
      %v3330 = vadd.f32 %v3143, %v3329
      %3331 = vmatmul.bf16.gmra.mxu0 %v3085
      %v3332 = vpop.f32.mrf.mxu0
      %v3333 = vadd.f32 %v3143, %v3332
      %v3334 = vpop.f32.mrf.mxu0
      %v3335 = vadd.f32 %v3143, %v3334
      %3336 = vmatmul.bf16.gmra.mxu0 %v3086
      %v3337 = vpop.f32.mrf.mxu0
      %v3338 = vadd.f32 %v3143, %v3337
      %v3339 = vpop.f32.mrf.mxu0
      %v3340 = vadd.f32 %v3143, %v3339
      %3341 = vmatmul.bf16.gmra.mxu0 %v3087
      %v3342 = vpop.f32.mrf.mxu0
      %v3343 = vadd.f32 %v3143, %v3342
      %v3344 = vpop.f32.mrf.mxu0
      %v3345 = vadd.f32 %v3143, %v3344
      %3346 = vmatmul.bf16.gmra.mxu0 %v3088
      %v3347 = vpop.f32.mrf.mxu0
      %v3348 = vadd.f32 %v3143, %v3347
      %v3349 = vpop.f32.mrf.mxu0
      %v3350 = vadd.f32 %v3143, %v3349
      %3351 = vmatmul.bf16.gmra.mxu0 %v3089
      %v3352 = vpop.f32.mrf.mxu0
      %v3353 = vadd.f32 %v3143, %v3352
      %v3354 = vpop.f32.mrf.mxu0
      %v3355 = vadd.f32 %v3143, %v3354
      %3356 = vmatmul.bf16.gmra.mxu0 %v3090
      %v3357 = vpop.f32.mrf.mxu0
      %v3358 = vadd.f32 %v3143, %v3357
      %v3359 = vpop.f32.mrf.mxu0
      %v3360 = vadd.f32 %v3143, %v3359
      %3361 = vmatmul.bf16.gmra.mxu0 %v3091
      %v3362 = vpop.f32.mrf.mxu0
      %v3363 = vadd.f32 %v3143, %v3362
      %v3364 = vpop.f32.mrf.mxu0
      %v3365 = vadd.f32 %v3143, %v3364
      %3366 = vmatmul.bf16.gmra.mxu0 %v3092
      %v3367 = vpop.f32.mrf.mxu0
      %v3368 = vadd.f32 %v3143, %v3367
      %v3369 = vpop.f32.mrf.mxu0
      %v3370 = vadd.f32 %v3143, %v3369
      %3371 = vmatmul.bf16.gmra.mxu0 %v3093
      %v3372 = vpop.f32.mrf.mxu0
      %v3373 = vadd.f32 %v3143, %v3372
      %v3374 = vpop.f32.mrf.mxu0
      %v3375 = vadd.f32 %v3143, %v3374
      %3376 = vmatmul.bf16.gmra.mxu0 %v3094
      %v3377 = vpop.f32.mrf.mxu0
      %v3378 = vadd.f32 %v3143, %v3377
      %v3379 = vpop.f32.mrf.mxu0
      %v3380 = vadd.f32 %v3143, %v3379
      %3381 = vmatmul.bf16.gmra.mxu0 %v3095
      %v3382 = vpop.f32.mrf.mxu0
      %v3383 = vadd.f32 %v3143, %v3382
      %v3384 = vpop.f32.mrf.mxu0
      %v3385 = vadd.f32 %v3143, %v3384
      %3386 = vmatmul.bf16.gmra.mxu0 %v3096
      %v3387 = vpop.f32.mrf.mxu0
      %v3388 = vadd.f32 %v3143, %v3387
      %v3389 = vpop.f32.mrf.mxu0
      %v3390 = vadd.f32 %v3143, %v3389
      %3391 = vmatmul.bf16.gmra.mxu0 %v3097
      %v3392 = vpop.f32.mrf.mxu0
      %v3393 = vadd.f32 %v3143, %v3392
      %v3394 = vpop.f32.mrf.mxu0
      %v3395 = vadd.f32 %v3143, %v3394
      %3396 = vmatmul.bf16.gmra.mxu0 %v3098
      %v3397 = vpop.f32.mrf.mxu0
      %v3398 = vadd.f32 %v3143, %v3397
      %v3399 = vpop.f32.mrf.mxu0
      %v3400 = vadd.f32 %v3143, %v3399
      %3401 = vmatmul.bf16.gmra.mxu0 %v3099
      %v3402 = vpop.f32.mrf.mxu0
      %v3403 = vadd.f32 %v3143, %v3402
      %v3404 = vpop.f32.mrf.mxu0
      %v3405 = vadd.f32 %v3143, %v3404
      %3406 = vmatmul.bf16.gmra.mxu0 %v3100
      %v3407 = vpop.f32.mrf.mxu0
      %v3408 = vadd.f32 %v3143, %v3407
      %v3409 = vpop.f32.mrf.mxu0
      %v3410 = vadd.f32 %v3143, %v3409
      %3411 = vmatmul.bf16.gmra.mxu0 %v3101
      %v3412 = vpop.f32.mrf.mxu0
      %v3413 = vadd.f32 %v3143, %v3412
      %v3414 = vpop.f32.mrf.mxu0
      %v3415 = vadd.f32 %v3143, %v3414
      %3416 = vmatmul.bf16.gmra.mxu0 %v3102
      %v3417 = vpop.f32.mrf.mxu0
      %v3418 = vadd.f32 %v3143, %v3417
      %v3419 = vpop.f32.mrf.mxu0
      %v3420 = vadd.f32 %v3143, %v3419
      %3421 = vmatmul.bf16.gmra.mxu0 %v3103
      %v3422 = vpop.f32.mrf.mxu0
      %v3423 = vadd.f32 %v3143, %v3422
      %v3424 = vpop.f32.mrf.mxu0
      %v3425 = vadd.f32 %v3143, %v3424
      %3426 = vmatmul.bf16.gmra.mxu0 %v3104
      %v3427 = vpop.f32.mrf.mxu0
      %v3428 = vadd.f32 %v3143, %v3427
      %v3429 = vpop.f32.mrf.mxu0
      %v3430 = vadd.f32 %v3143, %v3429
      %3431 = vmatmul.bf16.gmra.mxu0 %v3105
      %v3432 = vpop.f32.mrf.mxu0
      %v3433 = vadd.f32 %v3143, %v3432
      %v3434 = vpop.f32.mrf.mxu0
      %v3435 = vadd.f32 %v3143, %v3434
      %3436 = vmatmul.bf16.gmra.mxu0 %v3106
      %v3437 = vpop.f32.mrf.mxu0
      %v3438 = vadd.f32 %v3143, %v3437
      %v3439 = vpop.f32.mrf.mxu0
      %v3440 = vadd.f32 %v3143, %v3439
      %3441 = vmatmul.bf16.gmra.mxu0 %v3107
      %v3442 = vpop.f32.mrf.mxu0
      %v3443 = vadd.f32 %v3143, %v3442
      %v3444 = vpop.f32.mrf.mxu0
      %v3445 = vadd.f32 %v3143, %v3444
      %3446 = vmatmul.bf16.gmra.mxu0 %v3108
      %v3447 = vpop.f32.mrf.mxu0
      %v3448 = vadd.f32 %v3143, %v3447
      %v3449 = vpop.f32.mrf.mxu0
      %v3450 = vadd.f32 %v3143, %v3449
      %3451 = vmatmul.bf16.gmra.mxu0 %v3109
      %v3452 = vpop.f32.mrf.mxu0
      %v3453 = vadd.f32 %v3143, %v3452
      %v3454 = vpop.f32.mrf.mxu0
      %v3455 = vadd.f32 %v3143, %v3454
      %3456 = vmatmul.bf16.gmra.mxu0 %v3110
      %v3457 = vpop.f32.mrf.mxu0
      %v3458 = vadd.f32 %v3143, %v3457
      %v3459 = vpop.f32.mrf.mxu0
      %v3460 = vadd.f32 %v3143, %v3459
      %3461 = vmatmul.bf16.gmra.mxu0 %v3111
      %v3462 = vpop.f32.mrf.mxu0
      %v3463 = vadd.f32 %v3143, %v3462
      %v3464 = vpop.f32.mrf.mxu0
      %v3465 = vadd.f32 %v3143, %v3464
      %3466 = vmatmul.bf16.gmra.mxu0 %v3112
      %v3467 = vpop.f32.mrf.mxu0
      %v3468 = vadd.f32 %v3143, %v3467
      %v3469 = vpop.f32.mrf.mxu0
      %v3470 = vadd.f32 %v3143, %v3469
      %3471 = vmatmul.bf16.gmra.mxu0 %v3113
      %v3472 = vpop.f32.mrf.mxu0
      %v3473 = vadd.f32 %v3143, %v3472
      %v3474 = vpop.f32.mrf.mxu0
      %v3475 = vadd.f32 %v3143, %v3474
      %3476 = vmatmul.bf16.gmra.mxu0 %v3114
      %v3477 = vpop.f32.mrf.mxu0
      %v3478 = vadd.f32 %v3143, %v3477
      %v3479 = vpop.f32.mrf.mxu0
      %v3480 = vadd.f32 %v3143, %v3479
      %3481 = vmatmul.bf16.gmra.mxu0 %v3115
      %v3482 = vpop.f32.mrf.mxu0
      %v3483 = vadd.f32 %v3143, %v3482
      %v3484 = vpop.f32.mrf.mxu0
      %v3485 = vadd.f32 %v3143, %v3484
      %3486 = vmatmul.bf16.gmra.mxu0 %v3116
      %v3487 = vpop.f32.mrf.mxu0
      %v3488 = vadd.f32 %v3143, %v3487
      %v3489 = vpop.f32.mrf.mxu0
      %v3490 = vadd.f32 %v3143, %v3489
      %3491 = vmatmul.bf16.gmra.mxu0 %v3117
      %v3492 = vpop.f32.mrf.mxu0
      %v3493 = vadd.f32 %v3143, %v3492
      %v3494 = vpop.f32.mrf.mxu0
      %v3495 = vadd.f32 %v3143, %v3494
      %3496 = vmatmul.bf16.gmra.mxu0 %v3118
      %v3497 = vpop.f32.mrf.mxu0
      %v3498 = vadd.f32 %v3143, %v3497
      %v3499 = vpop.f32.mrf.mxu0
      %v3500 = vadd.f32 %v3143, %v3499
      %3501 = vmatmul.bf16.gmra.mxu0 %v3119
      %v3502 = vpop.f32.mrf.mxu0
      %v3503 = vadd.f32 %v3143, %v3502
      %v3504 = vpop.f32.mrf.mxu0
      %v3505 = vadd.f32 %v3143, %v3504
      %3506 = vmatmul.bf16.gmra.mxu0 %v3120
      %v3507 = vpop.f32.mrf.mxu0
      %v3508 = vadd.f32 %v3143, %v3507
      %v3509 = vpop.f32.mrf.mxu0
      %v3510 = vadd.f32 %v3143, %v3509
      %3511 = vmatmul.bf16.gmra.mxu0 %v3121
      %v3512 = vpop.f32.mrf.mxu0
      %v3513 = vadd.f32 %v3143, %v3512
      %v3514 = vpop.f32.mrf.mxu0
      %v3515 = vadd.f32 %v3143, %v3514
      %3516 = vmatmul.bf16.gmra.mxu0 %v3122
      %v3517 = vpop.f32.mrf.mxu0
      %v3518 = vadd.f32 %v3143, %v3517
      %v3519 = vpop.f32.mrf.mxu0
      %v3520 = vadd.f32 %v3143, %v3519
      %3521 = vdwg.mxu0
      %3522 = vrot.lane.b32.xlu0 %v2612, 64
      %v3523 = vpop.permute.xlu0 %3522
      %3524 = vrot.lane.b32.xlu0 %v2614, 64
      %v3525 = vpop.permute.xlu0 %3524
      %3526 = vrot.lane.b32.xlu0 %v2617, 64
      %v3527 = vpop.permute.xlu0 %3526
      %3528 = vrot.lane.b32.xlu0 %v2619, 64
      %v3529 = vpop.permute.xlu0 %3528
      %3530 = vrot.lane.b32.xlu0 %v2622, 64
      %v3531 = vpop.permute.xlu0 %3530
      %3532 = vrot.lane.b32.xlu0 %v2624, 64
      %v3533 = vpop.permute.xlu0 %3532
      %3534 = vrot.lane.b32.xlu0 %v2627, 64
      %v3535 = vpop.permute.xlu0 %3534
      %3536 = vrot.lane.b32.xlu0 %v2629, 64
      %v3537 = vpop.permute.xlu0 %3536
      %3538 = vrot.lane.b32.xlu0 %v2632, 64
      %v3539 = vpop.permute.xlu0 %3538
      %3540 = vrot.lane.b32.xlu0 %v2634, 64
      %v3541 = vpop.permute.xlu0 %3540
      %3542 = vrot.lane.b32.xlu0 %v2637, 64
      %v3543 = vpop.permute.xlu0 %3542
      %3544 = vrot.lane.b32.xlu0 %v2639, 64
      %v3545 = vpop.permute.xlu0 %3544
      %3546 = vrot.lane.b32.xlu0 %v2642, 64
      %v3547 = vpop.permute.xlu0 %3546
      %3548 = vrot.lane.b32.xlu0 %v2644, 64
      %v3549 = vpop.permute.xlu0 %3548
      %3550 = vrot.lane.b32.xlu0 %v2647, 64
      %v3551 = vpop.permute.xlu0 %3550
      %3552 = vrot.lane.b32.xlu0 %v2649, 64
      %v3553 = vpop.permute.xlu0 %3552
      %3554 = vrot.lane.b32.xlu0 %v2652, 64
      %v3555 = vpop.permute.xlu0 %3554
      %3556 = vrot.lane.b32.xlu0 %v2654, 64
      %v3557 = vpop.permute.xlu0 %3556
      %3558 = vrot.lane.b32.xlu0 %v2657, 64
      %v3559 = vpop.permute.xlu0 %3558
      %3560 = vrot.lane.b32.xlu0 %v2659, 64
      %v3561 = vpop.permute.xlu0 %3560
      %3562 = vrot.lane.b32.xlu0 %v2662, 64
      %v3563 = vpop.permute.xlu0 %3562
      %3564 = vrot.lane.b32.xlu0 %v2664, 64
      %v3565 = vpop.permute.xlu0 %3564
      %3566 = vrot.lane.b32.xlu0 %v2667, 64
      %v3567 = vpop.permute.xlu0 %3566
      %3568 = vrot.lane.b32.xlu0 %v2669, 64
      %v3569 = vpop.permute.xlu0 %3568
      %3570 = vrot.lane.b32.xlu0 %v2672, 64
      %v3571 = vpop.permute.xlu0 %3570
      %3572 = vrot.lane.b32.xlu0 %v2674, 64
      %v3573 = vpop.permute.xlu0 %3572
      %3574 = vrot.lane.b32.xlu0 %v2677, 64
      %v3575 = vpop.permute.xlu0 %3574
      %3576 = vrot.lane.b32.xlu0 %v2679, 64
      %v3577 = vpop.permute.xlu0 %3576
      %3578 = vrot.lane.b32.xlu0 %v2682, 64
      %v3579 = vpop.permute.xlu0 %3578
      %3580 = vrot.lane.b32.xlu0 %v2684, 64
      %v3581 = vpop.permute.xlu0 %3580
      %3582 = vrot.lane.b32.xlu0 %v2687, 64
      %v3583 = vpop.permute.xlu0 %3582
      %3584 = vrot.lane.b32.xlu0 %v2689, 64
      %v3585 = vpop.permute.xlu0 %3584
      %3586 = vrot.lane.b32.xlu0 %v2692, 64
      %v3587 = vpop.permute.xlu0 %3586
      %3588 = vrot.lane.b32.xlu0 %v2694, 64
      %v3589 = vpop.permute.xlu0 %3588
      %3590 = vrot.lane.b32.xlu0 %v2697, 64
      %v3591 = vpop.permute.xlu0 %3590
      %3592 = vrot.lane.b32.xlu0 %v2699, 64
      %v3593 = vpop.permute.xlu0 %3592
      %3594 = vrot.lane.b32.xlu0 %v2702, 64
      %v3595 = vpop.permute.xlu0 %3594
      %3596 = vrot.lane.b32.xlu0 %v2704, 64
      %v3597 = vpop.permute.xlu0 %3596
      %3598 = vrot.lane.b32.xlu0 %v2707, 64
      %v3599 = vpop.permute.xlu0 %3598
      %3600 = vrot.lane.b32.xlu0 %v2709, 64
      %v3601 = vpop.permute.xlu0 %3600
      %3602 = vrot.lane.b32.xlu0 %v2712, 64
      %v3603 = vpop.permute.xlu0 %3602
      %3604 = vrot.lane.b32.xlu0 %v2714, 64
      %v3605 = vpop.permute.xlu0 %3604
      %3606 = vrot.lane.b32.xlu0 %v2717, 64
      %v3607 = vpop.permute.xlu0 %3606
      %3608 = vrot.lane.b32.xlu0 %v2719, 64
      %v3609 = vpop.permute.xlu0 %3608
      %3610 = vrot.lane.b32.xlu0 %v2722, 64
      %v3611 = vpop.permute.xlu0 %3610
      %3612 = vrot.lane.b32.xlu0 %v2724, 64
      %v3613 = vpop.permute.xlu0 %3612
      %3614 = vrot.lane.b32.xlu0 %v2727, 64
      %v3615 = vpop.permute.xlu0 %3614
      %3616 = vrot.lane.b32.xlu0 %v2729, 64
      %v3617 = vpop.permute.xlu0 %3616
      %3618 = vrot.lane.b32.xlu0 %v2732, 64
      %v3619 = vpop.permute.xlu0 %3618
      %3620 = vrot.lane.b32.xlu0 %v2734, 64
      %v3621 = vpop.permute.xlu0 %3620
      %3622 = vrot.lane.b32.xlu0 %v2737, 64
      %v3623 = vpop.permute.xlu0 %3622
      %3624 = vrot.lane.b32.xlu0 %v2739, 64
      %v3625 = vpop.permute.xlu0 %3624
      %3626 = vrot.lane.b32.xlu0 %v2742, 64
      %v3627 = vpop.permute.xlu0 %3626
      %3628 = vrot.lane.b32.xlu0 %v2744, 64
      %v3629 = vpop.permute.xlu0 %3628
      %3630 = vrot.lane.b32.xlu0 %v2747, 64
      %v3631 = vpop.permute.xlu0 %3630
      %3632 = vrot.lane.b32.xlu0 %v2749, 64
      %v3633 = vpop.permute.xlu0 %3632
      %3634 = vrot.lane.b32.xlu0 %v2752, 64
      %v3635 = vpop.permute.xlu0 %3634
      %3636 = vrot.lane.b32.xlu0 %v2754, 64
      %v3637 = vpop.permute.xlu0 %3636
      %3638 = vrot.lane.b32.xlu0 %v2757, 64
      %v3639 = vpop.permute.xlu0 %3638
      %3640 = vrot.lane.b32.xlu0 %v2759, 64
      %v3641 = vpop.permute.xlu0 %3640
      %3642 = vrot.lane.b32.xlu0 %v2762, 64
      %v3643 = vpop.permute.xlu0 %3642
      %3644 = vrot.lane.b32.xlu0 %v2764, 64
      %v3645 = vpop.permute.xlu0 %3644
      %3646 = vrot.lane.b32.xlu0 %v2767, 64
      %v3647 = vpop.permute.xlu0 %3646
      %3648 = vrot.lane.b32.xlu0 %v2769, 64
      %v3649 = vpop.permute.xlu0 %3648
      %3650 = vrot.lane.b32.xlu0 %v2772, 64
      %v3651 = vpop.permute.xlu0 %3650
      %3652 = vrot.lane.b32.xlu0 %v2774, 64
      %v3653 = vpop.permute.xlu0 %3652
      %3654 = vrot.lane.b32.xlu0 %v2777, 64
      %v3655 = vpop.permute.xlu0 %3654
      %3656 = vrot.lane.b32.xlu0 %v2779, 64
      %v3657 = vpop.permute.xlu0 %3656
      %3658 = vrot.lane.b32.xlu0 %v2782, 64
      %v3659 = vpop.permute.xlu0 %3658
      %3660 = vrot.lane.b32.xlu0 %v2784, 64
      %v3661 = vpop.permute.xlu0 %3660
      %3662 = vrot.lane.b32.xlu0 %v2787, 64
      %v3663 = vpop.permute.xlu0 %3662
      %3664 = vrot.lane.b32.xlu0 %v2789, 64
      %v3665 = vpop.permute.xlu0 %3664
      %3666 = vrot.lane.b32.xlu0 %v2792, 64
      %v3667 = vpop.permute.xlu0 %3666
      %3668 = vrot.lane.b32.xlu0 %v2794, 64
      %v3669 = vpop.permute.xlu0 %3668
      %3670 = vrot.lane.b32.xlu0 %v2797, 64
      %v3671 = vpop.permute.xlu0 %3670
      %3672 = vrot.lane.b32.xlu0 %v2799, 64
      %v3673 = vpop.permute.xlu0 %3672
      %3674 = vrot.lane.b32.xlu0 %v2802, 64
      %v3675 = vpop.permute.xlu0 %3674
      %3676 = vrot.lane.b32.xlu0 %v2804, 64
      %v3677 = vpop.permute.xlu0 %3676
      %3678 = vrot.lane.b32.xlu0 %v2807, 64
      %v3679 = vpop.permute.xlu0 %3678
      %3680 = vrot.lane.b32.xlu0 %v2809, 64
      %v3681 = vpop.permute.xlu0 %3680
      %3682 = vrot.lane.b32.xlu0 %v2812, 64
      %v3683 = vpop.permute.xlu0 %3682
      %3684 = vrot.lane.b32.xlu0 %v2814, 64
      %v3685 = vpop.permute.xlu0 %3684
      %3686 = vrot.lane.b32.xlu0 %v2817, 64
      %v3687 = vpop.permute.xlu0 %3686
      %3688 = vrot.lane.b32.xlu0 %v2819, 64
      %v3689 = vpop.permute.xlu0 %3688
      %3690 = vrot.lane.b32.xlu0 %v2822, 64
      %v3691 = vpop.permute.xlu0 %3690
      %3692 = vrot.lane.b32.xlu0 %v2824, 64
      %v3693 = vpop.permute.xlu0 %3692
      %3694 = vrot.lane.b32.xlu0 %v2827, 64
      %v3695 = vpop.permute.xlu0 %3694
      %3696 = vrot.lane.b32.xlu0 %v2829, 64
      %v3697 = vpop.permute.xlu0 %3696
      %3698 = vrot.lane.b32.xlu0 %v2832, 64
      %v3699 = vpop.permute.xlu0 %3698
      %3700 = vrot.lane.b32.xlu0 %v2834, 64
      %v3701 = vpop.permute.xlu0 %3700
      %3702 = vrot.lane.b32.xlu0 %v2837, 64
      %v3703 = vpop.permute.xlu0 %3702
      %3704 = vrot.lane.b32.xlu0 %v2839, 64
      %v3705 = vpop.permute.xlu0 %3704
      %3706 = vrot.lane.b32.xlu0 %v2842, 64
      %v3707 = vpop.permute.xlu0 %3706
      %3708 = vrot.lane.b32.xlu0 %v2844, 64
      %v3709 = vpop.permute.xlu0 %3708
      %3710 = vrot.lane.b32.xlu0 %v2847, 64
      %v3711 = vpop.permute.xlu0 %3710
      %3712 = vrot.lane.b32.xlu0 %v2849, 64
      %v3713 = vpop.permute.xlu0 %3712
      %3714 = vrot.lane.b32.xlu0 %v2852, 64
      %v3715 = vpop.permute.xlu0 %3714
      %3716 = vrot.lane.b32.xlu0 %v2854, 64
      %v3717 = vpop.permute.xlu0 %3716
      %3718 = vrot.lane.b32.xlu0 %v2857, 64
      %v3719 = vpop.permute.xlu0 %3718
      %3720 = vrot.lane.b32.xlu0 %v2859, 64
      %v3721 = vpop.permute.xlu0 %3720
      %3722 = vrot.lane.b32.xlu0 %v2862, 64
      %v3723 = vpop.permute.xlu0 %3722
      %3724 = vrot.lane.b32.xlu0 %v2864, 64
      %v3725 = vpop.permute.xlu0 %3724
      %3726 = vrot.lane.b32.xlu0 %v2867, 64
      %v3727 = vpop.permute.xlu0 %3726
      %3728 = vrot.lane.b32.xlu0 %v2869, 64
      %v3729 = vpop.permute.xlu0 %3728
      %3730 = vrot.lane.b32.xlu0 %v2872, 64
      %v3731 = vpop.permute.xlu0 %3730
      %3732 = vrot.lane.b32.xlu0 %v2874, 64
      %v3733 = vpop.permute.xlu0 %3732
      %3734 = vrot.lane.b32.xlu0 %v2877, 64
      %v3735 = vpop.permute.xlu0 %3734
      %3736 = vrot.lane.b32.xlu0 %v2879, 64
      %v3737 = vpop.permute.xlu0 %3736
      %3738 = vrot.lane.b32.xlu0 %v2882, 64
      %v3739 = vpop.permute.xlu0 %3738
      %3740 = vrot.lane.b32.xlu0 %v2884, 64
      %v3741 = vpop.permute.xlu0 %3740
      %3742 = vrot.lane.b32.xlu0 %v2887, 64
      %v3743 = vpop.permute.xlu0 %3742
      %3744 = vrot.lane.b32.xlu0 %v2889, 64
      %v3745 = vpop.permute.xlu0 %3744
      %3746 = vrot.lane.b32.xlu0 %v2892, 64
      %v3747 = vpop.permute.xlu0 %3746
      %3748 = vrot.lane.b32.xlu0 %v2894, 64
      %v3749 = vpop.permute.xlu0 %3748
      %3750 = vrot.lane.b32.xlu0 %v2897, 64
      %v3751 = vpop.permute.xlu0 %3750
      %3752 = vrot.lane.b32.xlu0 %v2899, 64
      %v3753 = vpop.permute.xlu0 %3752
      %3754 = vrot.lane.b32.xlu0 %v2902, 64
      %v3755 = vpop.permute.xlu0 %3754
      %3756 = vrot.lane.b32.xlu0 %v2904, 64
      %v3757 = vpop.permute.xlu0 %3756
      %3758 = vrot.lane.b32.xlu0 %v2907, 64
      %v3759 = vpop.permute.xlu0 %3758
      %3760 = vrot.lane.b32.xlu0 %v2909, 64
      %v3761 = vpop.permute.xlu0 %3760
      %3762 = vrot.lane.b32.xlu0 %v2912, 64
      %v3763 = vpop.permute.xlu0 %3762
      %3764 = vrot.lane.b32.xlu0 %v2914, 64
      %v3765 = vpop.permute.xlu0 %3764
      %3766 = vrot.lane.b32.xlu0 %v2917, 64
      %v3767 = vpop.permute.xlu0 %3766
      %3768 = vrot.lane.b32.xlu0 %v2919, 64
      %v3769 = vpop.permute.xlu0 %3768
      %3770 = vrot.lane.b32.xlu0 %v2922, 64
      %v3771 = vpop.permute.xlu0 %3770
      %3772 = vrot.lane.b32.xlu0 %v2924, 64
      %v3773 = vpop.permute.xlu0 %3772
      %3774 = vrot.lane.b32.xlu0 %v2927, 64
      %v3775 = vpop.permute.xlu0 %3774
      %3776 = vrot.lane.b32.xlu0 %v2929, 64
      %v3777 = vpop.permute.xlu0 %3776
      %v3778 = vmul.f32 %v435, %v435
      %v3779 = vmul.f32 %v436, %v436
      %v3780 = vmul.f32 %v437, %v437
      %v3781 = vmul.f32 %v438, %v438
      %v3782 = vmul.f32 %v439, %v439
      %v3783 = vmul.f32 %v440, %v440
      %v3784 = vmul.f32 %v441, %v441
      %v3785 = vmul.f32 %v442, %v442
      %v3786 = vmul.f32 %v443, %v443
      %v3787 = vmul.f32 %v444, %v444
      %v3788 = vmul.f32 %v445, %v445
      %v3789 = vmul.f32 %v446, %v446
      %v3790 = vmul.f32 %v447, %v447
      %v3791 = vmul.f32 %v448, %v448
      %v3792 = vmul.f32 %v449, %v449
      %v3793 = vmul.f32 %v450, %v450
      %v3794 = vmul.f32 %v451, %v451
      %v3795 = vmul.f32 %v452, %v452
      %v3796 = vmul.f32 %v453, %v453
      %v3797 = vmul.f32 %v454, %v454
      %v3798 = vmul.f32 %v455, %v455
      %v3799 = vmul.f32 %v456, %v456
      %v3800 = vmul.f32 %v457, %v457
      %v3801 = vmul.f32 %v458, %v458
      %v3802 = vmul.f32 %v459, %v459
      %v3803 = vmul.f32 %v460, %v460
      %v3804 = vmul.f32 %v461, %v461
      %v3805 = vmul.f32 %v462, %v462
      %v3806 = vmul.f32 %v463, %v463
      %v3807 = vmul.f32 %v464, %v464
      %v3808 = vmul.f32 %v465, %v465
      %v3809 = vmul.f32 %v466, %v466
      %v3810 = vmul.f32 %v467, %v467
      %v3811 = vmul.f32 %v468, %v468
      %v3812 = vmul.f32 %v469, %v469
      %v3813 = vmul.f32 %v470, %v470
      %v3814 = vmul.f32 %v471, %v471
      %v3815 = vmul.f32 %v472, %v472
      %v3816 = vmul.f32 %v473, %v473
      %v3817 = vmul.f32 %v474, %v474
      %v3818 = vmul.f32 %v475, %v475
      %v3819 = vmul.f32 %v476, %v476
      %v3820 = vmul.f32 %v477, %v477
      %v3821 = vmul.f32 %v478, %v478
      %v3822 = vmul.f32 %v479, %v479
      %v3823 = vmul.f32 %v480, %v480
      %v3824 = vmul.f32 %v481, %v481
      %v3825 = vmul.f32 %v482, %v482
      %v3826 = vmul.f32 %v483, %v483
      %v3827 = vmul.f32 %v484, %v484
      %v3828 = vmul.f32 %v485, %v485
      %v3829 = vmul.f32 %v486, %v486
      %v3830 = vmul.f32 %v487, %v487
      %v3831 = vmul.f32 %v488, %v488
      %v3832 = vmul.f32 %v489, %v489
      %v3833 = vmul.f32 %v490, %v490
      %v3834 = vmul.f32 %v491, %v491
      %v3835 = vmul.f32 %v492, %v492
      %v3836 = vmul.f32 %v493, %v493
      %v3837 = vmul.f32 %v494, %v494
      %v3838 = vmul.f32 %v495, %v495
      %v3839 = vmul.f32 %v496, %v496
      %v3840 = vmul.f32 %v497, %v497
      %v3841 = vmul.f32 %v498, %v498
      %v3842 = vmul.f32 %v499, %v499
      %v3843 = vmul.f32 %v500, %v500
      %v3844 = vmul.f32 %v501, %v501
      %v3845 = vmul.f32 %v502, %v502
      %v3846 = vmul.f32 %v503, %v503
      %v3847 = vmul.f32 %v504, %v504
      %v3848 = vmul.f32 %v505, %v505
      %v3849 = vmul.f32 %v506, %v506
      %v3850 = vmul.f32 %v507, %v507
      %v3851 = vmul.f32 %v508, %v508
      %v3852 = vmul.f32 %v509, %v509
      %v3853 = vmul.f32 %v510, %v510
      %v3854 = vmul.f32 %v511, %v511
      %v3855 = vmul.f32 %v512, %v512
      %v3856 = vmul.f32 %v513, %v513
      %v3857 = vmul.f32 %v514, %v514
      %v3858 = vmul.f32 %v515, %v515
      %v3859 = vmul.f32 %v516, %v516
      %v3860 = vmul.f32 %v517, %v517
      %v3861 = vmul.f32 %v518, %v518
      %v3862 = vmul.f32 %v519, %v519
      %v3863 = vmul.f32 %v520, %v520
      %v3864 = vmul.f32 %v521, %v521
      %v3865 = vmul.f32 %v522, %v522
      %v3866 = vmul.f32 %v523, %v523
      %v3867 = vmul.f32 %v524, %v524
      %v3868 = vmul.f32 %v525, %v525
      %v3869 = vmul.f32 %v526, %v526
      %v3870 = vmul.f32 %v527, %v527
      %v3871 = vmul.f32 %v528, %v528
      %v3872 = vmul.f32 %v529, %v529
      %v3873 = vmul.f32 %v530, %v530
      %v3874 = vmul.f32 %v531, %v531
      %v3875 = vmul.f32 %v532, %v532
      %v3876 = vmul.f32 %v533, %v533
      %v3877 = vmul.f32 %v534, %v534
      %v3878 = vmul.f32 %v535, %v535
      %v3879 = vmul.f32 %v536, %v536
      %v3880 = vmul.f32 %v537, %v537
      %v3881 = vmul.f32 %v538, %v538
      %v3882 = vmul.f32 %v539, %v539
      %v3883 = vmul.f32 %v540, %v540
      %v3884 = vmul.f32 %v541, %v541
      %v3885 = vmul.f32 %v542, %v542
      %v3886 = vmul.f32 %v543, %v543
      %v3887 = vmul.f32 %v544, %v544
      %v3888 = vmul.f32 %v545, %v545
      %v3889 = vmul.f32 %v546, %v546
      %v3890 = vmul.f32 %v547, %v547
      %v3891 = vmul.f32 %v548, %v548
      %v3892 = vmul.f32 %v549, %v549
      %v3893 = vmul.f32 %v550, %v550
      %v3894 = vmul.f32 %v551, %v551
      %v3895 = vmul.f32 %v552, %v552
      %v3896 = vmul.f32 %v553, %v553
      %v3897 = vmul.f32 %v554, %v554
      %v3898 = vmul.f32 %v555, %v555
      %v3899 = vmul.f32 %v556, %v556
      %v3900 = vmul.f32 %v557, %v557
      %v3901 = vmul.f32 %v558, %v558
      %v3902 = vmul.f32 %v559, %v559
      %v3903 = vmul.f32 %v560, %v560
      %v3904 = vmul.f32 %v561, %v561
      %v3905 = vmul.f32 %v562, %v562
      %v3906 = vsel %vm632, %v3778, 0.0
      %3907 = vadd.xlane.f32.xlu0 %v3906
      %v3908 = vpop.xlane.xlu0 %3907
      %v3909 = vsel %vm632, %v3779, 0.0
      %3910 = vadd.xlane.f32.xlu0 %v3909
      %v3911 = vpop.xlane.xlu0 %3910
      %v3912 = vsel %vm632, %v3780, 0.0
      %3913 = vadd.xlane.f32.xlu0 %v3912
      %v3914 = vpop.xlane.xlu0 %3913
      %v3915 = vsel %vm632, %v3781, 0.0
      %3916 = vadd.xlane.f32.xlu0 %v3915
      %v3917 = vpop.xlane.xlu0 %3916
      %v3918 = vsel %vm632, %v3782, 0.0
      %3919 = vadd.xlane.f32.xlu0 %v3918
      %v3920 = vpop.xlane.xlu0 %3919
      %v3921 = vsel %vm632, %v3783, 0.0
      %3922 = vadd.xlane.f32.xlu0 %v3921
      %v3923 = vpop.xlane.xlu0 %3922
      %v3924 = vsel %vm632, %v3784, 0.0
      %3925 = vadd.xlane.f32.xlu0 %v3924
      %v3926 = vpop.xlane.xlu0 %3925
      %v3927 = vsel %vm632, %v3785, 0.0
      %3928 = vadd.xlane.f32.xlu0 %v3927
      %v3929 = vpop.xlane.xlu0 %3928
      %v3930 = vsel %vm632, %v3786, 0.0
      %3931 = vadd.xlane.f32.xlu0 %v3930
      %v3932 = vpop.xlane.xlu0 %3931
      %v3933 = vsel %vm632, %v3787, 0.0
      %3934 = vadd.xlane.f32.xlu0 %v3933
      %v3935 = vpop.xlane.xlu0 %3934
      %v3936 = vsel %vm632, %v3788, 0.0
      %3937 = vadd.xlane.f32.xlu0 %v3936
      %v3938 = vpop.xlane.xlu0 %3937
      %v3939 = vsel %vm632, %v3789, 0.0
      %3940 = vadd.xlane.f32.xlu0 %v3939
      %v3941 = vpop.xlane.xlu0 %3940
      %v3942 = vsel %vm632, %v3790, 0.0
      %3943 = vadd.xlane.f32.xlu0 %v3942
      %v3944 = vpop.xlane.xlu0 %3943
      %v3945 = vsel %vm632, %v3791, 0.0
      %3946 = vadd.xlane.f32.xlu0 %v3945
      %v3947 = vpop.xlane.xlu0 %3946
      %v3948 = vsel %vm632, %v3792, 0.0
      %3949 = vadd.xlane.f32.xlu0 %v3948
      %v3950 = vpop.xlane.xlu0 %3949
      %v3951 = vsel %vm632, %v3793, 0.0
      %3952 = vadd.xlane.f32.xlu0 %v3951
      %v3953 = vpop.xlane.xlu0 %3952
      %v3954 = vsel %vm632, %v3794, 0.0
      %3955 = vadd.xlane.f32.xlu0 %v3954
      %v3956 = vpop.xlane.xlu0 %3955
      %v3957 = vsel %vm632, %v3795, 0.0
      %3958 = vadd.xlane.f32.xlu0 %v3957
      %v3959 = vpop.xlane.xlu0 %3958
      %v3960 = vsel %vm632, %v3796, 0.0
      %3961 = vadd.xlane.f32.xlu0 %v3960
      %v3962 = vpop.xlane.xlu0 %3961
      %v3963 = vsel %vm632, %v3797, 0.0
      %3964 = vadd.xlane.f32.xlu0 %v3963
      %v3965 = vpop.xlane.xlu0 %3964
      %v3966 = vsel %vm632, %v3798, 0.0
      %3967 = vadd.xlane.f32.xlu0 %v3966
      %v3968 = vpop.xlane.xlu0 %3967
      %v3969 = vsel %vm632, %v3799, 0.0
      %3970 = vadd.xlane.f32.xlu0 %v3969
      %v3971 = vpop.xlane.xlu0 %3970
      %v3972 = vsel %vm632, %v3800, 0.0
      %3973 = vadd.xlane.f32.xlu0 %v3972
      %v3974 = vpop.xlane.xlu0 %3973
      %v3975 = vsel %vm632, %v3801, 0.0
      %3976 = vadd.xlane.f32.xlu0 %v3975
      %v3977 = vpop.xlane.xlu0 %3976
      %v3978 = vsel %vm632, %v3802, 0.0
      %3979 = vadd.xlane.f32.xlu0 %v3978
      %v3980 = vpop.xlane.xlu0 %3979
      %v3981 = vsel %vm632, %v3803, 0.0
      %3982 = vadd.xlane.f32.xlu0 %v3981
      %v3983 = vpop.xlane.xlu0 %3982
      %v3984 = vsel %vm632, %v3804, 0.0
      %3985 = vadd.xlane.f32.xlu0 %v3984
      %v3986 = vpop.xlane.xlu0 %3985
      %v3987 = vsel %vm632, %v3805, 0.0
      %3988 = vadd.xlane.f32.xlu0 %v3987
      %v3989 = vpop.xlane.xlu0 %3988
      %v3990 = vsel %vm632, %v3806, 0.0
      %3991 = vadd.xlane.f32.xlu0 %v3990
      %v3992 = vpop.xlane.xlu0 %3991
      %v3993 = vsel %vm632, %v3807, 0.0
      %3994 = vadd.xlane.f32.xlu0 %v3993
      %v3995 = vpop.xlane.xlu0 %3994
      %v3996 = vsel %vm632, %v3808, 0.0
      %3997 = vadd.xlane.f32.xlu0 %v3996
      %v3998 = vpop.xlane.xlu0 %3997
      %v3999 = vsel %vm632, %v3809, 0.0
      %4000 = vadd.xlane.f32.xlu0 %v3999
      %v4001 = vpop.xlane.xlu0 %4000
      %v4002 = vsel %vm632, %v3810, 0.0
      %4003 = vadd.xlane.f32.xlu0 %v4002
      %v4004 = vpop.xlane.xlu0 %4003
      %v4005 = vsel %vm632, %v3811, 0.0
      %4006 = vadd.xlane.f32.xlu0 %v4005
      %v4007 = vpop.xlane.xlu0 %4006
      %v4008 = vsel %vm632, %v3812, 0.0
      %4009 = vadd.xlane.f32.xlu0 %v4008
      %v4010 = vpop.xlane.xlu0 %4009
      %v4011 = vsel %vm632, %v3813, 0.0
      %4012 = vadd.xlane.f32.xlu0 %v4011
      %v4013 = vpop.xlane.xlu0 %4012
      %v4014 = vsel %vm632, %v3814, 0.0
      %4015 = vadd.xlane.f32.xlu0 %v4014
      %v4016 = vpop.xlane.xlu0 %4015
      %v4017 = vsel %vm632, %v3815, 0.0
      %4018 = vadd.xlane.f32.xlu0 %v4017
      %v4019 = vpop.xlane.xlu0 %4018
      %v4020 = vsel %vm632, %v3816, 0.0
      %4021 = vadd.xlane.f32.xlu0 %v4020
      %v4022 = vpop.xlane.xlu0 %4021
      %v4023 = vsel %vm632, %v3817, 0.0
      %4024 = vadd.xlane.f32.xlu0 %v4023
      %v4025 = vpop.xlane.xlu0 %4024
      %v4026 = vsel %vm632, %v3818, 0.0
      %4027 = vadd.xlane.f32.xlu0 %v4026
      %v4028 = vpop.xlane.xlu0 %4027
      %v4029 = vsel %vm632, %v3819, 0.0
      %4030 = vadd.xlane.f32.xlu0 %v4029
      %v4031 = vpop.xlane.xlu0 %4030
      %v4032 = vsel %vm632, %v3820, 0.0
      %4033 = vadd.xlane.f32.xlu0 %v4032
      %v4034 = vpop.xlane.xlu0 %4033
      %v4035 = vsel %vm632, %v3821, 0.0
      %4036 = vadd.xlane.f32.xlu0 %v4035
      %v4037 = vpop.xlane.xlu0 %4036
      %v4038 = vsel %vm632, %v3822, 0.0
      %4039 = vadd.xlane.f32.xlu0 %v4038
      %v4040 = vpop.xlane.xlu0 %4039
      %v4041 = vsel %vm632, %v3823, 0.0
      %4042 = vadd.xlane.f32.xlu0 %v4041
      %v4043 = vpop.xlane.xlu0 %4042
      %v4044 = vsel %vm632, %v3824, 0.0
      %4045 = vadd.xlane.f32.xlu0 %v4044
      %v4046 = vpop.xlane.xlu0 %4045
      %v4047 = vsel %vm632, %v3825, 0.0
      %4048 = vadd.xlane.f32.xlu0 %v4047
      %v4049 = vpop.xlane.xlu0 %4048
      %v4050 = vsel %vm632, %v3826, 0.0
      %4051 = vadd.xlane.f32.xlu0 %v4050
      %v4052 = vpop.xlane.xlu0 %4051
      %v4053 = vsel %vm632, %v3827, 0.0
      %4054 = vadd.xlane.f32.xlu0 %v4053
      %v4055 = vpop.xlane.xlu0 %4054
      %v4056 = vsel %vm632, %v3828, 0.0
      %4057 = vadd.xlane.f32.xlu0 %v4056
      %v4058 = vpop.xlane.xlu0 %4057
      %v4059 = vsel %vm632, %v3829, 0.0
      %4060 = vadd.xlane.f32.xlu0 %v4059
      %v4061 = vpop.xlane.xlu0 %4060
      %v4062 = vsel %vm632, %v3830, 0.0
      %4063 = vadd.xlane.f32.xlu0 %v4062
      %v4064 = vpop.xlane.xlu0 %4063
      %v4065 = vsel %vm632, %v3831, 0.0
      %4066 = vadd.xlane.f32.xlu0 %v4065
      %v4067 = vpop.xlane.xlu0 %4066
      %v4068 = vsel %vm632, %v3832, 0.0
      %4069 = vadd.xlane.f32.xlu0 %v4068
      %v4070 = vpop.xlane.xlu0 %4069
      %v4071 = vsel %vm632, %v3833, 0.0
      %4072 = vadd.xlane.f32.xlu0 %v4071
      %v4073 = vpop.xlane.xlu0 %4072
      %v4074 = vsel %vm632, %v3834, 0.0
      %4075 = vadd.xlane.f32.xlu0 %v4074
      %v4076 = vpop.xlane.xlu0 %4075
      %v4077 = vsel %vm632, %v3835, 0.0
      %4078 = vadd.xlane.f32.xlu0 %v4077
      %v4079 = vpop.xlane.xlu0 %4078
      %v4080 = vsel %vm632, %v3836, 0.0
      %4081 = vadd.xlane.f32.xlu0 %v4080
      %v4082 = vpop.xlane.xlu0 %4081
      %v4083 = vsel %vm632, %v3837, 0.0
      %4084 = vadd.xlane.f32.xlu0 %v4083
      %v4085 = vpop.xlane.xlu0 %4084
      %v4086 = vsel %vm632, %v3838, 0.0
      %4087 = vadd.xlane.f32.xlu0 %v4086
      %v4088 = vpop.xlane.xlu0 %4087
      %v4089 = vsel %vm632, %v3839, 0.0
      %4090 = vadd.xlane.f32.xlu0 %v4089
      %v4091 = vpop.xlane.xlu0 %4090
      %v4092 = vsel %vm632, %v3840, 0.0
      %4093 = vadd.xlane.f32.xlu0 %v4092
      %v4094 = vpop.xlane.xlu0 %4093
      %v4095 = vsel %vm632, %v3841, 0.0
      %4096 = vadd.xlane.f32.xlu0 %v4095
      %v4097 = vpop.xlane.xlu0 %4096
      %v4098 = vsel %vm632, %v3842, 0.0
      %4099 = vadd.xlane.f32.xlu0 %v4098
      %v4100 = vpop.xlane.xlu0 %4099
      %v4101 = vsel %vm632, %v3843, 0.0
      %4102 = vadd.xlane.f32.xlu0 %v4101
      %v4103 = vpop.xlane.xlu0 %4102
      %v4104 = vsel %vm632, %v3844, 0.0
      %4105 = vadd.xlane.f32.xlu0 %v4104
      %v4106 = vpop.xlane.xlu0 %4105
      %v4107 = vsel %vm632, %v3845, 0.0
      %4108 = vadd.xlane.f32.xlu0 %v4107
      %v4109 = vpop.xlane.xlu0 %4108
      %v4110 = vsel %vm632, %v3846, 0.0
      %4111 = vadd.xlane.f32.xlu0 %v4110
      %v4112 = vpop.xlane.xlu0 %4111
      %v4113 = vsel %vm632, %v3847, 0.0
      %4114 = vadd.xlane.f32.xlu0 %v4113
      %v4115 = vpop.xlane.xlu0 %4114
      %v4116 = vsel %vm632, %v3848, 0.0
      %4117 = vadd.xlane.f32.xlu0 %v4116
      %v4118 = vpop.xlane.xlu0 %4117
      %v4119 = vsel %vm632, %v3849, 0.0
      %4120 = vadd.xlane.f32.xlu0 %v4119
      %v4121 = vpop.xlane.xlu0 %4120
      %v4122 = vsel %vm632, %v3850, 0.0
      %4123 = vadd.xlane.f32.xlu0 %v4122
      %v4124 = vpop.xlane.xlu0 %4123
      %v4125 = vsel %vm632, %v3851, 0.0
      %4126 = vadd.xlane.f32.xlu0 %v4125
      %v4127 = vpop.xlane.xlu0 %4126
      %v4128 = vsel %vm632, %v3852, 0.0
      %4129 = vadd.xlane.f32.xlu0 %v4128
      %v4130 = vpop.xlane.xlu0 %4129
      %v4131 = vsel %vm632, %v3853, 0.0
      %4132 = vadd.xlane.f32.xlu0 %v4131
      %v4133 = vpop.xlane.xlu0 %4132
      %v4134 = vsel %vm632, %v3854, 0.0
      %4135 = vadd.xlane.f32.xlu0 %v4134
      %v4136 = vpop.xlane.xlu0 %4135
      %v4137 = vsel %vm632, %v3855, 0.0
      %4138 = vadd.xlane.f32.xlu0 %v4137
      %v4139 = vpop.xlane.xlu0 %4138
      %v4140 = vsel %vm632, %v3856, 0.0
      %4141 = vadd.xlane.f32.xlu0 %v4140
      %v4142 = vpop.xlane.xlu0 %4141
      %v4143 = vsel %vm632, %v3857, 0.0
      %4144 = vadd.xlane.f32.xlu0 %v4143
      %v4145 = vpop.xlane.xlu0 %4144
      %v4146 = vsel %vm632, %v3858, 0.0
      %4147 = vadd.xlane.f32.xlu0 %v4146
      %v4148 = vpop.xlane.xlu0 %4147
      %v4149 = vsel %vm632, %v3859, 0.0
      %4150 = vadd.xlane.f32.xlu0 %v4149
      %v4151 = vpop.xlane.xlu0 %4150
      %v4152 = vsel %vm632, %v3860, 0.0
      %4153 = vadd.xlane.f32.xlu0 %v4152
      %v4154 = vpop.xlane.xlu0 %4153
      %v4155 = vsel %vm632, %v3861, 0.0
      %4156 = vadd.xlane.f32.xlu0 %v4155
      %v4157 = vpop.xlane.xlu0 %4156
      %v4158 = vsel %vm632, %v3862, 0.0
      %4159 = vadd.xlane.f32.xlu0 %v4158
      %v4160 = vpop.xlane.xlu0 %4159
      %v4161 = vsel %vm632, %v3863, 0.0
      %4162 = vadd.xlane.f32.xlu0 %v4161
      %v4163 = vpop.xlane.xlu0 %4162
      %v4164 = vsel %vm632, %v3864, 0.0
      %4165 = vadd.xlane.f32.xlu0 %v4164
      %v4166 = vpop.xlane.xlu0 %4165
      %v4167 = vsel %vm632, %v3865, 0.0
      %4168 = vadd.xlane.f32.xlu0 %v4167
      %v4169 = vpop.xlane.xlu0 %4168
      %v4170 = vsel %vm632, %v3866, 0.0
      %4171 = vadd.xlane.f32.xlu0 %v4170
      %v4172 = vpop.xlane.xlu0 %4171
      %v4173 = vsel %vm632, %v3867, 0.0
      %4174 = vadd.xlane.f32.xlu0 %v4173
      %v4175 = vpop.xlane.xlu0 %4174
      %v4176 = vsel %vm632, %v3868, 0.0
      %4177 = vadd.xlane.f32.xlu0 %v4176
      %v4178 = vpop.xlane.xlu0 %4177
      %v4179 = vsel %vm632, %v3869, 0.0
      %4180 = vadd.xlane.f32.xlu0 %v4179
      %v4181 = vpop.xlane.xlu0 %4180
      %v4182 = vsel %vm632, %v3870, 0.0
      %4183 = vadd.xlane.f32.xlu0 %v4182
      %v4184 = vpop.xlane.xlu0 %4183
      %v4185 = vsel %vm632, %v3871, 0.0
      %4186 = vadd.xlane.f32.xlu0 %v4185
      %v4187 = vpop.xlane.xlu0 %4186
      %v4188 = vsel %vm632, %v3872, 0.0
      %4189 = vadd.xlane.f32.xlu0 %v4188
      %v4190 = vpop.xlane.xlu0 %4189
      %v4191 = vsel %vm632, %v3873, 0.0
      %4192 = vadd.xlane.f32.xlu0 %v4191
      %v4193 = vpop.xlane.xlu0 %4192
      %v4194 = vsel %vm632, %v3874, 0.0
      %4195 = vadd.xlane.f32.xlu0 %v4194
      %v4196 = vpop.xlane.xlu0 %4195
      %v4197 = vsel %vm632, %v3875, 0.0
      %4198 = vadd.xlane.f32.xlu0 %v4197
      %v4199 = vpop.xlane.xlu0 %4198
      %v4200 = vsel %vm632, %v3876, 0.0
      %4201 = vadd.xlane.f32.xlu0 %v4200
      %v4202 = vpop.xlane.xlu0 %4201
      %v4203 = vsel %vm632, %v3877, 0.0
      %4204 = vadd.xlane.f32.xlu0 %v4203
      %v4205 = vpop.xlane.xlu0 %4204
      %v4206 = vsel %vm632, %v3878, 0.0
      %4207 = vadd.xlane.f32.xlu0 %v4206
      %v4208 = vpop.xlane.xlu0 %4207
      %v4209 = vsel %vm632, %v3879, 0.0
      %4210 = vadd.xlane.f32.xlu0 %v4209
      %v4211 = vpop.xlane.xlu0 %4210
      %v4212 = vsel %vm632, %v3880, 0.0
      %4213 = vadd.xlane.f32.xlu0 %v4212
      %v4214 = vpop.xlane.xlu0 %4213
      %v4215 = vsel %vm632, %v3881, 0.0
      %4216 = vadd.xlane.f32.xlu0 %v4215
      %v4217 = vpop.xlane.xlu0 %4216
      %v4218 = vsel %vm632, %v3882, 0.0
      %4219 = vadd.xlane.f32.xlu0 %v4218
      %v4220 = vpop.xlane.xlu0 %4219
      %v4221 = vsel %vm632, %v3883, 0.0
      %4222 = vadd.xlane.f32.xlu0 %v4221
      %v4223 = vpop.xlane.xlu0 %4222
      %v4224 = vsel %vm632, %v3884, 0.0
      %4225 = vadd.xlane.f32.xlu0 %v4224
      %v4226 = vpop.xlane.xlu0 %4225
      %v4227 = vsel %vm632, %v3885, 0.0
      %4228 = vadd.xlane.f32.xlu0 %v4227
      %v4229 = vpop.xlane.xlu0 %4228
      %v4230 = vsel %vm632, %v3886, 0.0
      %4231 = vadd.xlane.f32.xlu0 %v4230
      %v4232 = vpop.xlane.xlu0 %4231
      %v4233 = vsel %vm632, %v3887, 0.0
      %4234 = vadd.xlane.f32.xlu0 %v4233
      %v4235 = vpop.xlane.xlu0 %4234
      %v4236 = vsel %vm632, %v3888, 0.0
      %4237 = vadd.xlane.f32.xlu0 %v4236
      %v4238 = vpop.xlane.xlu0 %4237
      %v4239 = vsel %vm632, %v3889, 0.0
      %4240 = vadd.xlane.f32.xlu0 %v4239
      %v4241 = vpop.xlane.xlu0 %4240
      %v4242 = vsel %vm632, %v3890, 0.0
      %4243 = vadd.xlane.f32.xlu0 %v4242
      %v4244 = vpop.xlane.xlu0 %4243
      %v4245 = vsel %vm632, %v3891, 0.0
      %4246 = vadd.xlane.f32.xlu0 %v4245
      %v4247 = vpop.xlane.xlu0 %4246
      %v4248 = vsel %vm632, %v3892, 0.0
      %4249 = vadd.xlane.f32.xlu0 %v4248
      %v4250 = vpop.xlane.xlu0 %4249
      %v4251 = vsel %vm632, %v3893, 0.0
      %4252 = vadd.xlane.f32.xlu0 %v4251
      %v4253 = vpop.xlane.xlu0 %4252
      %v4254 = vsel %vm632, %v3894, 0.0
      %4255 = vadd.xlane.f32.xlu0 %v4254
      %v4256 = vpop.xlane.xlu0 %4255
      %v4257 = vsel %vm632, %v3895, 0.0
      %4258 = vadd.xlane.f32.xlu0 %v4257
      %v4259 = vpop.xlane.xlu0 %4258
      %v4260 = vsel %vm632, %v3896, 0.0
      %4261 = vadd.xlane.f32.xlu0 %v4260
      %v4262 = vpop.xlane.xlu0 %4261
      %v4263 = vsel %vm632, %v3897, 0.0
      %4264 = vadd.xlane.f32.xlu0 %v4263
      %v4265 = vpop.xlane.xlu0 %4264
      %v4266 = vsel %vm632, %v3898, 0.0
      %4267 = vadd.xlane.f32.xlu0 %v4266
      %v4268 = vpop.xlane.xlu0 %4267
      %v4269 = vsel %vm632, %v3899, 0.0
      %4270 = vadd.xlane.f32.xlu0 %v4269
      %v4271 = vpop.xlane.xlu0 %4270
      %v4272 = vsel %vm632, %v3900, 0.0
      %4273 = vadd.xlane.f32.xlu0 %v4272
      %v4274 = vpop.xlane.xlu0 %4273
      %v4275 = vsel %vm632, %v3901, 0.0
      %4276 = vadd.xlane.f32.xlu0 %v4275
      %v4277 = vpop.xlane.xlu0 %4276
      %v4278 = vsel %vm632, %v3902, 0.0
      %4279 = vadd.xlane.f32.xlu0 %v4278
      %v4280 = vpop.xlane.xlu0 %4279
      %v4281 = vsel %vm632, %v3903, 0.0
      %4282 = vadd.xlane.f32.xlu0 %v4281
      %v4283 = vpop.xlane.xlu0 %4282
      %v4284 = vsel %vm632, %v3904, 0.0
      %4285 = vadd.xlane.f32.xlu0 %v4284
      %v4286 = vpop.xlane.xlu0 %4285
      %v4287 = vsel %vm632, %v3905, 0.0
      %4288 = vadd.xlane.f32.xlu0 %v4287
      %v4289 = vpop.xlane.xlu0 %4288
      %vm4290 = vcmp.eq.s32.totalorder %v433, 4
      %v4291 = vsel %vm4290, %v304, 0.0
      %v4292 = vsel %vm4290, %v305, 0.0
      %v4293 = vsel %vm4290, %v306, 0.0
      %v4294 = vsel %vm4290, %v307, 0.0
      %v4295 = vsel %vm4290, %v308, 0.0
      %v4296 = vsel %vm4290, %v309, 0.0
      %v4297 = vsel %vm4290, %v310, 0.0
      %v4298 = vsel %vm4290, %v311, 0.0
      %v4299 = vsel %vm4290, %v312, 0.0
      %v4300 = vsel %vm4290, %v313, 0.0
      %v4301 = vsel %vm4290, %v314, 0.0
      %v4302 = vsel %vm4290, %v315, 0.0
      %v4303 = vsel %vm4290, %v316, 0.0
      %v4304 = vsel %vm4290, %v317, 0.0
      %v4305 = vsel %vm4290, %v318, 0.0
      %v4306 = vsel %vm4290, %v319, 0.0
      %v4307 = vsel %vm4290, %v320, 0.0
      %v4308 = vsel %vm4290, %v321, 0.0
      %v4309 = vsel %vm4290, %v322, 0.0
      %v4310 = vsel %vm4290, %v323, 0.0
      %v4311 = vsel %vm4290, %v324, 0.0
      %v4312 = vsel %vm4290, %v325, 0.0
      %v4313 = vsel %vm4290, %v326, 0.0
      %v4314 = vsel %vm4290, %v327, 0.0
      %v4315 = vsel %vm4290, %v328, 0.0
      %v4316 = vsel %vm4290, %v329, 0.0
      %v4317 = vsel %vm4290, %v330, 0.0
      %v4318 = vsel %vm4290, %v331, 0.0
      %v4319 = vsel %vm4290, %v332, 0.0
      %v4320 = vsel %vm4290, %v333, 0.0
      %v4321 = vsel %vm4290, %v334, 0.0
      %v4322 = vsel %vm4290, %v335, 0.0
      %v4323 = vsel %vm4290, %v336, 0.0
      %v4324 = vsel %vm4290, %v337, 0.0
      %v4325 = vsel %vm4290, %v338, 0.0
      %v4326 = vsel %vm4290, %v339, 0.0
      %v4327 = vsel %vm4290, %v340, 0.0
      %v4328 = vsel %vm4290, %v341, 0.0
      %v4329 = vsel %vm4290, %v342, 0.0
      %v4330 = vsel %vm4290, %v343, 0.0
      %v4331 = vsel %vm4290, %v344, 0.0
      %v4332 = vsel %vm4290, %v345, 0.0
      %v4333 = vsel %vm4290, %v346, 0.0
      %v4334 = vsel %vm4290, %v347, 0.0
      %v4335 = vsel %vm4290, %v348, 0.0
      %v4336 = vsel %vm4290, %v349, 0.0
      %v4337 = vsel %vm4290, %v350, 0.0
      %v4338 = vsel %vm4290, %v351, 0.0
      %v4339 = vsel %vm4290, %v352, 0.0
      %v4340 = vsel %vm4290, %v353, 0.0
      %v4341 = vsel %vm4290, %v354, 0.0
      %v4342 = vsel %vm4290, %v355, 0.0
      %v4343 = vsel %vm4290, %v356, 0.0
      %v4344 = vsel %vm4290, %v357, 0.0
      %v4345 = vsel %vm4290, %v358, 0.0
      %v4346 = vsel %vm4290, %v359, 0.0
      %v4347 = vsel %vm4290, %v360, 0.0
      %v4348 = vsel %vm4290, %v361, 0.0
      %v4349 = vsel %vm4290, %v362, 0.0
      %v4350 = vsel %vm4290, %v363, 0.0
      %v4351 = vsel %vm4290, %v364, 0.0
      %v4352 = vsel %vm4290, %v365, 0.0
      %v4353 = vsel %vm4290, %v366, 0.0
      %v4354 = vsel %vm4290, %v367, 0.0
      %v4355 = vsel %vm4290, %v368, 0.0
      %v4356 = vsel %vm4290, %v369, 0.0
      %v4357 = vsel %vm4290, %v370, 0.0
      %v4358 = vsel %vm4290, %v371, 0.0
      %v4359 = vsel %vm4290, %v372, 0.0
      %v4360 = vsel %vm4290, %v373, 0.0
      %v4361 = vsel %vm4290, %v374, 0.0
      %v4362 = vsel %vm4290, %v375, 0.0
      %v4363 = vsel %vm4290, %v376, 0.0
      %v4364 = vsel %vm4290, %v377, 0.0
      %v4365 = vsel %vm4290, %v378, 0.0
      %v4366 = vsel %vm4290, %v379, 0.0
      %v4367 = vsel %vm4290, %v380, 0.0
      %v4368 = vsel %vm4290, %v381, 0.0
      %v4369 = vsel %vm4290, %v382, 0.0
      %v4370 = vsel %vm4290, %v383, 0.0
      %v4371 = vsel %vm4290, %v384, 0.0
      %v4372 = vsel %vm4290, %v385, 0.0
      %v4373 = vsel %vm4290, %v386, 0.0
      %v4374 = vsel %vm4290, %v387, 0.0
      %v4375 = vsel %vm4290, %v388, 0.0
      %v4376 = vsel %vm4290, %v389, 0.0
      %v4377 = vsel %vm4290, %v390, 0.0
      %v4378 = vsel %vm4290, %v391, 0.0
      %v4379 = vsel %vm4290, %v392, 0.0
      %v4380 = vsel %vm4290, %v393, 0.0
      %v4381 = vsel %vm4290, %v394, 0.0
      %v4382 = vsel %vm4290, %v395, 0.0
      %v4383 = vsel %vm4290, %v396, 0.0
      %v4384 = vsel %vm4290, %v397, 0.0
      %v4385 = vsel %vm4290, %v398, 0.0
      %v4386 = vsel %vm4290, %v399, 0.0
      %v4387 = vsel %vm4290, %v400, 0.0
      %v4388 = vsel %vm4290, %v401, 0.0
      %v4389 = vsel %vm4290, %v402, 0.0
      %v4390 = vsel %vm4290, %v403, 0.0
      %v4391 = vsel %vm4290, %v404, 0.0
      %v4392 = vsel %vm4290, %v405, 0.0
      %v4393 = vsel %vm4290, %v406, 0.0
      %v4394 = vsel %vm4290, %v407, 0.0
      %v4395 = vsel %vm4290, %v408, 0.0
      %v4396 = vsel %vm4290, %v409, 0.0
      %v4397 = vsel %vm4290, %v410, 0.0
      %v4398 = vsel %vm4290, %v411, 0.0
      %v4399 = vsel %vm4290, %v412, 0.0
      %v4400 = vsel %vm4290, %v413, 0.0
      %v4401 = vsel %vm4290, %v414, 0.0
      %v4402 = vsel %vm4290, %v415, 0.0
      %v4403 = vsel %vm4290, %v416, 0.0
      %v4404 = vsel %vm4290, %v417, 0.0
      %v4405 = vsel %vm4290, %v418, 0.0
      %v4406 = vsel %vm4290, %v419, 0.0
      %v4407 = vsel %vm4290, %v420, 0.0
      %v4408 = vsel %vm4290, %v421, 0.0
      %v4409 = vsel %vm4290, %v422, 0.0
      %v4410 = vsel %vm4290, %v423, 0.0
      %v4411 = vsel %vm4290, %v424, 0.0
      %v4412 = vsel %vm4290, %v425, 0.0
      %v4413 = vsel %vm4290, %v426, 0.0
      %v4414 = vsel %vm4290, %v427, 0.0
      %v4415 = vsel %vm4290, %v428, 0.0
      %v4416 = vsel %vm4290, %v429, 0.0
      %v4417 = vsel %vm4290, %v430, 0.0
      %v4418 = vsel %vm4290, %v431, 0.0
      %v4419 = vsel %vm632, %v4291, 0.0
      %4420 = vadd.xlane.f32.xlu0 %v4419
      %v4421 = vpop.xlane.xlu0 %4420
      %v4422 = vsel %vm632, %v4292, 0.0
      %4423 = vadd.xlane.f32.xlu0 %v4422
      %v4424 = vpop.xlane.xlu0 %4423
      %v4425 = vsel %vm632, %v4293, 0.0
      %4426 = vadd.xlane.f32.xlu0 %v4425
      %v4427 = vpop.xlane.xlu0 %4426
      %v4428 = vsel %vm632, %v4294, 0.0
      %4429 = vadd.xlane.f32.xlu0 %v4428
      %v4430 = vpop.xlane.xlu0 %4429
      %v4431 = vsel %vm632, %v4295, 0.0
      %4432 = vadd.xlane.f32.xlu0 %v4431
      %v4433 = vpop.xlane.xlu0 %4432
      %v4434 = vsel %vm632, %v4296, 0.0
      %4435 = vadd.xlane.f32.xlu0 %v4434
      %v4436 = vpop.xlane.xlu0 %4435
      %v4437 = vsel %vm632, %v4297, 0.0
      %4438 = vadd.xlane.f32.xlu0 %v4437
      %v4439 = vpop.xlane.xlu0 %4438
      %v4440 = vsel %vm632, %v4298, 0.0
      %4441 = vadd.xlane.f32.xlu0 %v4440
      %v4442 = vpop.xlane.xlu0 %4441
      %v4443 = vsel %vm632, %v4299, 0.0
      %4444 = vadd.xlane.f32.xlu0 %v4443
      %v4445 = vpop.xlane.xlu0 %4444
      %v4446 = vsel %vm632, %v4300, 0.0
      %4447 = vadd.xlane.f32.xlu0 %v4446
      %v4448 = vpop.xlane.xlu0 %4447
      %v4449 = vsel %vm632, %v4301, 0.0
      %4450 = vadd.xlane.f32.xlu0 %v4449
      %v4451 = vpop.xlane.xlu0 %4450
      %v4452 = vsel %vm632, %v4302, 0.0
      %4453 = vadd.xlane.f32.xlu0 %v4452
      %v4454 = vpop.xlane.xlu0 %4453
      %v4455 = vsel %vm632, %v4303, 0.0
      %4456 = vadd.xlane.f32.xlu0 %v4455
      %v4457 = vpop.xlane.xlu0 %4456
      %v4458 = vsel %vm632, %v4304, 0.0
      %4459 = vadd.xlane.f32.xlu0 %v4458
      %v4460 = vpop.xlane.xlu0 %4459
      %v4461 = vsel %vm632, %v4305, 0.0
      %4462 = vadd.xlane.f32.xlu0 %v4461
      %v4463 = vpop.xlane.xlu0 %4462
      %v4464 = vsel %vm632, %v4306, 0.0
      %4465 = vadd.xlane.f32.xlu0 %v4464
      %v4466 = vpop.xlane.xlu0 %4465
      %v4467 = vsel %vm632, %v4307, 0.0
      %4468 = vadd.xlane.f32.xlu0 %v4467
      %v4469 = vpop.xlane.xlu0 %4468
      %v4470 = vsel %vm632, %v4308, 0.0
      %4471 = vadd.xlane.f32.xlu0 %v4470
      %v4472 = vpop.xlane.xlu0 %4471
      %v4473 = vsel %vm632, %v4309, 0.0
      %4474 = vadd.xlane.f32.xlu0 %v4473
      %v4475 = vpop.xlane.xlu0 %4474
      %v4476 = vsel %vm632, %v4310, 0.0
      %4477 = vadd.xlane.f32.xlu0 %v4476
      %v4478 = vpop.xlane.xlu0 %4477
      %v4479 = vsel %vm632, %v4311, 0.0
      %4480 = vadd.xlane.f32.xlu0 %v4479
      %v4481 = vpop.xlane.xlu0 %4480
      %v4482 = vsel %vm632, %v4312, 0.0
      %4483 = vadd.xlane.f32.xlu0 %v4482
      %v4484 = vpop.xlane.xlu0 %4483
      %v4485 = vsel %vm632, %v4313, 0.0
      %4486 = vadd.xlane.f32.xlu0 %v4485
      %v4487 = vpop.xlane.xlu0 %4486
      %v4488 = vsel %vm632, %v4314, 0.0
      %4489 = vadd.xlane.f32.xlu0 %v4488
      %v4490 = vpop.xlane.xlu0 %4489
      %v4491 = vsel %vm632, %v4315, 0.0
      %4492 = vadd.xlane.f32.xlu0 %v4491
      %v4493 = vpop.xlane.xlu0 %4492
      %v4494 = vsel %vm632, %v4316, 0.0
      %4495 = vadd.xlane.f32.xlu0 %v4494
      %v4496 = vpop.xlane.xlu0 %4495
      %v4497 = vsel %vm632, %v4317, 0.0
      %4498 = vadd.xlane.f32.xlu0 %v4497
      %v4499 = vpop.xlane.xlu0 %4498
      %v4500 = vsel %vm632, %v4318, 0.0
      %4501 = vadd.xlane.f32.xlu0 %v4500
      %v4502 = vpop.xlane.xlu0 %4501
      %v4503 = vsel %vm632, %v4319, 0.0
      %4504 = vadd.xlane.f32.xlu0 %v4503
      %v4505 = vpop.xlane.xlu0 %4504
      %v4506 = vsel %vm632, %v4320, 0.0
      %4507 = vadd.xlane.f32.xlu0 %v4506
      %v4508 = vpop.xlane.xlu0 %4507
      %v4509 = vsel %vm632, %v4321, 0.0
      %4510 = vadd.xlane.f32.xlu0 %v4509
      %v4511 = vpop.xlane.xlu0 %4510
      %v4512 = vsel %vm632, %v4322, 0.0
      %4513 = vadd.xlane.f32.xlu0 %v4512
      %v4514 = vpop.xlane.xlu0 %4513
      %v4515 = vsel %vm632, %v4323, 0.0
      %4516 = vadd.xlane.f32.xlu0 %v4515
      %v4517 = vpop.xlane.xlu0 %4516
      %v4518 = vsel %vm632, %v4324, 0.0
      %4519 = vadd.xlane.f32.xlu0 %v4518
      %v4520 = vpop.xlane.xlu0 %4519
      %v4521 = vsel %vm632, %v4325, 0.0
      %4522 = vadd.xlane.f32.xlu0 %v4521
      %v4523 = vpop.xlane.xlu0 %4522
      %v4524 = vsel %vm632, %v4326, 0.0
      %4525 = vadd.xlane.f32.xlu0 %v4524
      %v4526 = vpop.xlane.xlu0 %4525
      %v4527 = vsel %vm632, %v4327, 0.0
      %4528 = vadd.xlane.f32.xlu0 %v4527
      %v4529 = vpop.xlane.xlu0 %4528
      %v4530 = vsel %vm632, %v4328, 0.0
      %4531 = vadd.xlane.f32.xlu0 %v4530
      %v4532 = vpop.xlane.xlu0 %4531
      %v4533 = vsel %vm632, %v4329, 0.0
      %4534 = vadd.xlane.f32.xlu0 %v4533
      %v4535 = vpop.xlane.xlu0 %4534
      %v4536 = vsel %vm632, %v4330, 0.0
      %4537 = vadd.xlane.f32.xlu0 %v4536
      %v4538 = vpop.xlane.xlu0 %4537
      %v4539 = vsel %vm632, %v4331, 0.0
      %4540 = vadd.xlane.f32.xlu0 %v4539
      %v4541 = vpop.xlane.xlu0 %4540
      %v4542 = vsel %vm632, %v4332, 0.0
      %4543 = vadd.xlane.f32.xlu0 %v4542
      %v4544 = vpop.xlane.xlu0 %4543
      %v4545 = vsel %vm632, %v4333, 0.0
      %4546 = vadd.xlane.f32.xlu0 %v4545
      %v4547 = vpop.xlane.xlu0 %4546
      %v4548 = vsel %vm632, %v4334, 0.0
      %4549 = vadd.xlane.f32.xlu0 %v4548
      %v4550 = vpop.xlane.xlu0 %4549
      %v4551 = vsel %vm632, %v4335, 0.0
      %4552 = vadd.xlane.f32.xlu0 %v4551
      %v4553 = vpop.xlane.xlu0 %4552
      %v4554 = vsel %vm632, %v4336, 0.0
      %4555 = vadd.xlane.f32.xlu0 %v4554
      %v4556 = vpop.xlane.xlu0 %4555
      %v4557 = vsel %vm632, %v4337, 0.0
      %4558 = vadd.xlane.f32.xlu0 %v4557
      %v4559 = vpop.xlane.xlu0 %4558
      %v4560 = vsel %vm632, %v4338, 0.0
      %4561 = vadd.xlane.f32.xlu0 %v4560
      %v4562 = vpop.xlane.xlu0 %4561
      %v4563 = vsel %vm632, %v4339, 0.0
      %4564 = vadd.xlane.f32.xlu0 %v4563
      %v4565 = vpop.xlane.xlu0 %4564
      %v4566 = vsel %vm632, %v4340, 0.0
      %4567 = vadd.xlane.f32.xlu0 %v4566
      %v4568 = vpop.xlane.xlu0 %4567
      %v4569 = vsel %vm632, %v4341, 0.0
      %4570 = vadd.xlane.f32.xlu0 %v4569
      %v4571 = vpop.xlane.xlu0 %4570
      %v4572 = vsel %vm632, %v4342, 0.0
      %4573 = vadd.xlane.f32.xlu0 %v4572
      %v4574 = vpop.xlane.xlu0 %4573
      %v4575 = vsel %vm632, %v4343, 0.0
      %4576 = vadd.xlane.f32.xlu0 %v4575
      %v4577 = vpop.xlane.xlu0 %4576
      %v4578 = vsel %vm632, %v4344, 0.0
      %4579 = vadd.xlane.f32.xlu0 %v4578
      %v4580 = vpop.xlane.xlu0 %4579
      %v4581 = vsel %vm632, %v4345, 0.0
      %4582 = vadd.xlane.f32.xlu0 %v4581
      %v4583 = vpop.xlane.xlu0 %4582
      %v4584 = vsel %vm632, %v4346, 0.0
      %4585 = vadd.xlane.f32.xlu0 %v4584
      %v4586 = vpop.xlane.xlu0 %4585
      %v4587 = vsel %vm632, %v4347, 0.0
      %4588 = vadd.xlane.f32.xlu0 %v4587
      %v4589 = vpop.xlane.xlu0 %4588
      %v4590 = vsel %vm632, %v4348, 0.0
      %4591 = vadd.xlane.f32.xlu0 %v4590
      %v4592 = vpop.xlane.xlu0 %4591
      %v4593 = vsel %vm632, %v4349, 0.0
      %4594 = vadd.xlane.f32.xlu0 %v4593
      %v4595 = vpop.xlane.xlu0 %4594
      %v4596 = vsel %vm632, %v4350, 0.0
      %4597 = vadd.xlane.f32.xlu0 %v4596
      %v4598 = vpop.xlane.xlu0 %4597
      %v4599 = vsel %vm632, %v4351, 0.0
      %4600 = vadd.xlane.f32.xlu0 %v4599
      %v4601 = vpop.xlane.xlu0 %4600
      %v4602 = vsel %vm632, %v4352, 0.0
      %4603 = vadd.xlane.f32.xlu0 %v4602
      %v4604 = vpop.xlane.xlu0 %4603
      %v4605 = vsel %vm632, %v4353, 0.0
      %4606 = vadd.xlane.f32.xlu0 %v4605
      %v4607 = vpop.xlane.xlu0 %4606
      %v4608 = vsel %vm632, %v4354, 0.0
      %4609 = vadd.xlane.f32.xlu0 %v4608
      %v4610 = vpop.xlane.xlu0 %4609
      %v4611 = vsel %vm632, %v4355, 0.0
      %4612 = vadd.xlane.f32.xlu0 %v4611
      %v4613 = vpop.xlane.xlu0 %4612
      %v4614 = vsel %vm632, %v4356, 0.0
      %4615 = vadd.xlane.f32.xlu0 %v4614
      %v4616 = vpop.xlane.xlu0 %4615
      %v4617 = vsel %vm632, %v4357, 0.0
      %4618 = vadd.xlane.f32.xlu0 %v4617
      %v4619 = vpop.xlane.xlu0 %4618
      %v4620 = vsel %vm632, %v4358, 0.0
      %4621 = vadd.xlane.f32.xlu0 %v4620
      %v4622 = vpop.xlane.xlu0 %4621
      %v4623 = vsel %vm632, %v4359, 0.0
      %4624 = vadd.xlane.f32.xlu0 %v4623
      %v4625 = vpop.xlane.xlu0 %4624
      %v4626 = vsel %vm632, %v4360, 0.0
      %4627 = vadd.xlane.f32.xlu0 %v4626
      %v4628 = vpop.xlane.xlu0 %4627
      %v4629 = vsel %vm632, %v4361, 0.0
      %4630 = vadd.xlane.f32.xlu0 %v4629
      %v4631 = vpop.xlane.xlu0 %4630
      %v4632 = vsel %vm632, %v4362, 0.0
      %4633 = vadd.xlane.f32.xlu0 %v4632
      %v4634 = vpop.xlane.xlu0 %4633
      %v4635 = vsel %vm632, %v4363, 0.0
      %4636 = vadd.xlane.f32.xlu0 %v4635
      %v4637 = vpop.xlane.xlu0 %4636
      %v4638 = vsel %vm632, %v4364, 0.0
      %4639 = vadd.xlane.f32.xlu0 %v4638
      %v4640 = vpop.xlane.xlu0 %4639
      %v4641 = vsel %vm632, %v4365, 0.0
      %4642 = vadd.xlane.f32.xlu0 %v4641
      %v4643 = vpop.xlane.xlu0 %4642
      %v4644 = vsel %vm632, %v4366, 0.0
      %4645 = vadd.xlane.f32.xlu0 %v4644
      %v4646 = vpop.xlane.xlu0 %4645
      %v4647 = vsel %vm632, %v4367, 0.0
      %4648 = vadd.xlane.f32.xlu0 %v4647
      %v4649 = vpop.xlane.xlu0 %4648
      %v4650 = vsel %vm632, %v4368, 0.0
      %4651 = vadd.xlane.f32.xlu0 %v4650
      %v4652 = vpop.xlane.xlu0 %4651
      %v4653 = vsel %vm632, %v4369, 0.0
      %4654 = vadd.xlane.f32.xlu0 %v4653
      %v4655 = vpop.xlane.xlu0 %4654
      %v4656 = vsel %vm632, %v4370, 0.0
      %4657 = vadd.xlane.f32.xlu0 %v4656
      %v4658 = vpop.xlane.xlu0 %4657
      %v4659 = vsel %vm632, %v4371, 0.0
      %4660 = vadd.xlane.f32.xlu0 %v4659
      %v4661 = vpop.xlane.xlu0 %4660
      %v4662 = vsel %vm632, %v4372, 0.0
      %4663 = vadd.xlane.f32.xlu0 %v4662
      %v4664 = vpop.xlane.xlu0 %4663
      %v4665 = vsel %vm632, %v4373, 0.0
      %4666 = vadd.xlane.f32.xlu0 %v4665
      %v4667 = vpop.xlane.xlu0 %4666
      %v4668 = vsel %vm632, %v4374, 0.0
      %4669 = vadd.xlane.f32.xlu0 %v4668
      %v4670 = vpop.xlane.xlu0 %4669
      %v4671 = vsel %vm632, %v4375, 0.0
      %4672 = vadd.xlane.f32.xlu0 %v4671
      %v4673 = vpop.xlane.xlu0 %4672
      %v4674 = vsel %vm632, %v4376, 0.0
      %4675 = vadd.xlane.f32.xlu0 %v4674
      %v4676 = vpop.xlane.xlu0 %4675
      %v4677 = vsel %vm632, %v4377, 0.0
      %4678 = vadd.xlane.f32.xlu0 %v4677
      %v4679 = vpop.xlane.xlu0 %4678
      %v4680 = vsel %vm632, %v4378, 0.0
      %4681 = vadd.xlane.f32.xlu0 %v4680
      %v4682 = vpop.xlane.xlu0 %4681
      %v4683 = vsel %vm632, %v4379, 0.0
      %4684 = vadd.xlane.f32.xlu0 %v4683
      %v4685 = vpop.xlane.xlu0 %4684
      %v4686 = vsel %vm632, %v4380, 0.0
      %4687 = vadd.xlane.f32.xlu0 %v4686
      %v4688 = vpop.xlane.xlu0 %4687
      %v4689 = vsel %vm632, %v4381, 0.0
      %4690 = vadd.xlane.f32.xlu0 %v4689
      %v4691 = vpop.xlane.xlu0 %4690
      %v4692 = vsel %vm632, %v4382, 0.0
      %4693 = vadd.xlane.f32.xlu0 %v4692
      %v4694 = vpop.xlane.xlu0 %4693
      %v4695 = vsel %vm632, %v4383, 0.0
      %4696 = vadd.xlane.f32.xlu0 %v4695
      %v4697 = vpop.xlane.xlu0 %4696
      %v4698 = vsel %vm632, %v4384, 0.0
      %4699 = vadd.xlane.f32.xlu0 %v4698
      %v4700 = vpop.xlane.xlu0 %4699
      %v4701 = vsel %vm632, %v4385, 0.0
      %4702 = vadd.xlane.f32.xlu0 %v4701
      %v4703 = vpop.xlane.xlu0 %4702
      %v4704 = vsel %vm632, %v4386, 0.0
      %4705 = vadd.xlane.f32.xlu0 %v4704
      %v4706 = vpop.xlane.xlu0 %4705
      %v4707 = vsel %vm632, %v4387, 0.0
      %4708 = vadd.xlane.f32.xlu0 %v4707
      %v4709 = vpop.xlane.xlu0 %4708
      %v4710 = vsel %vm632, %v4388, 0.0
      %4711 = vadd.xlane.f32.xlu0 %v4710
      %v4712 = vpop.xlane.xlu0 %4711
      %v4713 = vsel %vm632, %v4389, 0.0
      %4714 = vadd.xlane.f32.xlu0 %v4713
      %v4715 = vpop.xlane.xlu0 %4714
      %v4716 = vsel %vm632, %v4390, 0.0
      %4717 = vadd.xlane.f32.xlu0 %v4716
      %v4718 = vpop.xlane.xlu0 %4717
      %v4719 = vsel %vm632, %v4391, 0.0
      %4720 = vadd.xlane.f32.xlu0 %v4719
      %v4721 = vpop.xlane.xlu0 %4720
      %v4722 = vsel %vm632, %v4392, 0.0
      %4723 = vadd.xlane.f32.xlu0 %v4722
      %v4724 = vpop.xlane.xlu0 %4723
      %v4725 = vsel %vm632, %v4393, 0.0
      %4726 = vadd.xlane.f32.xlu0 %v4725
      %v4727 = vpop.xlane.xlu0 %4726
      %v4728 = vsel %vm632, %v4394, 0.0
      %4729 = vadd.xlane.f32.xlu0 %v4728
      %v4730 = vpop.xlane.xlu0 %4729
      %v4731 = vsel %vm632, %v4395, 0.0
      %4732 = vadd.xlane.f32.xlu0 %v4731
      %v4733 = vpop.xlane.xlu0 %4732
      %v4734 = vsel %vm632, %v4396, 0.0
      %4735 = vadd.xlane.f32.xlu0 %v4734
      %v4736 = vpop.xlane.xlu0 %4735
      %v4737 = vsel %vm632, %v4397, 0.0
      %4738 = vadd.xlane.f32.xlu0 %v4737
      %v4739 = vpop.xlane.xlu0 %4738
      %v4740 = vsel %vm632, %v4398, 0.0
      %4741 = vadd.xlane.f32.xlu0 %v4740
      %v4742 = vpop.xlane.xlu0 %4741
      %v4743 = vsel %vm632, %v4399, 0.0
      %4744 = vadd.xlane.f32.xlu0 %v4743
      %v4745 = vpop.xlane.xlu0 %4744
      %v4746 = vsel %vm632, %v4400, 0.0
      %4747 = vadd.xlane.f32.xlu0 %v4746
      %v4748 = vpop.xlane.xlu0 %4747
      %v4749 = vsel %vm632, %v4401, 0.0
      %4750 = vadd.xlane.f32.xlu0 %v4749
      %v4751 = vpop.xlane.xlu0 %4750
      %v4752 = vsel %vm632, %v4402, 0.0
      %4753 = vadd.xlane.f32.xlu0 %v4752
      %v4754 = vpop.xlane.xlu0 %4753
      %v4755 = vsel %vm632, %v4403, 0.0
      %4756 = vadd.xlane.f32.xlu0 %v4755
      %v4757 = vpop.xlane.xlu0 %4756
      %v4758 = vsel %vm632, %v4404, 0.0
      %4759 = vadd.xlane.f32.xlu0 %v4758
      %v4760 = vpop.xlane.xlu0 %4759
      %v4761 = vsel %vm632, %v4405, 0.0
      %4762 = vadd.xlane.f32.xlu0 %v4761
      %v4763 = vpop.xlane.xlu0 %4762
      %v4764 = vsel %vm632, %v4406, 0.0
      %4765 = vadd.xlane.f32.xlu0 %v4764
      %v4766 = vpop.xlane.xlu0 %4765
      %v4767 = vsel %vm632, %v4407, 0.0
      %4768 = vadd.xlane.f32.xlu0 %v4767
      %v4769 = vpop.xlane.xlu0 %4768
      %v4770 = vsel %vm632, %v4408, 0.0
      %4771 = vadd.xlane.f32.xlu0 %v4770
      %v4772 = vpop.xlane.xlu0 %4771
      %v4773 = vsel %vm632, %v4409, 0.0
      %4774 = vadd.xlane.f32.xlu0 %v4773
      %v4775 = vpop.xlane.xlu0 %4774
      %v4776 = vsel %vm632, %v4410, 0.0
      %4777 = vadd.xlane.f32.xlu0 %v4776
      %v4778 = vpop.xlane.xlu0 %4777
      %v4779 = vsel %vm632, %v4411, 0.0
      %4780 = vadd.xlane.f32.xlu0 %v4779
      %v4781 = vpop.xlane.xlu0 %4780
      %v4782 = vsel %vm632, %v4412, 0.0
      %4783 = vadd.xlane.f32.xlu0 %v4782
      %v4784 = vpop.xlane.xlu0 %4783
      %v4785 = vsel %vm632, %v4413, 0.0
      %4786 = vadd.xlane.f32.xlu0 %v4785
      %v4787 = vpop.xlane.xlu0 %4786
      %v4788 = vsel %vm632, %v4414, 0.0
      %4789 = vadd.xlane.f32.xlu0 %v4788
      %v4790 = vpop.xlane.xlu0 %4789
      %v4791 = vsel %vm632, %v4415, 0.0
      %4792 = vadd.xlane.f32.xlu0 %v4791
      %v4793 = vpop.xlane.xlu0 %4792
      %v4794 = vsel %vm632, %v4416, 0.0
      %4795 = vadd.xlane.f32.xlu0 %v4794
      %v4796 = vpop.xlane.xlu0 %4795
      %v4797 = vsel %vm632, %v4417, 0.0
      %4798 = vadd.xlane.f32.xlu0 %v4797
      %v4799 = vpop.xlane.xlu0 %4798
      %v4800 = vsel %vm632, %v4418, 0.0
      %4801 = vadd.xlane.f32.xlu0 %v4800
      %v4802 = vpop.xlane.xlu0 %4801
      %v4803 = vmul.f32 %v3908, 0.5
      %v4804 = vmul.f32 %v3911, 0.5
      %v4805 = vmul.f32 %v3914, 0.5
      %v4806 = vmul.f32 %v3917, 0.5
      %v4807 = vmul.f32 %v3920, 0.5
      %v4808 = vmul.f32 %v3923, 0.5
      %v4809 = vmul.f32 %v3926, 0.5
      %v4810 = vmul.f32 %v3929, 0.5
      %v4811 = vmul.f32 %v3932, 0.5
      %v4812 = vmul.f32 %v3935, 0.5
      %v4813 = vmul.f32 %v3938, 0.5
      %v4814 = vmul.f32 %v3941, 0.5
      %v4815 = vmul.f32 %v3944, 0.5
      %v4816 = vmul.f32 %v3947, 0.5
      %v4817 = vmul.f32 %v3950, 0.5
      %v4818 = vmul.f32 %v3953, 0.5
      %v4819 = vmul.f32 %v3956, 0.5
      %v4820 = vmul.f32 %v3959, 0.5
      %v4821 = vmul.f32 %v3962, 0.5
      %v4822 = vmul.f32 %v3965, 0.5
      %v4823 = vmul.f32 %v3968, 0.5
      %v4824 = vmul.f32 %v3971, 0.5
      %v4825 = vmul.f32 %v3974, 0.5
      %v4826 = vmul.f32 %v3977, 0.5
      %v4827 = vmul.f32 %v3980, 0.5
      %v4828 = vmul.f32 %v3983, 0.5
      %v4829 = vmul.f32 %v3986, 0.5
      %v4830 = vmul.f32 %v3989, 0.5
      %v4831 = vmul.f32 %v3992, 0.5
      %v4832 = vmul.f32 %v3995, 0.5
      %v4833 = vmul.f32 %v3998, 0.5
      %v4834 = vmul.f32 %v4001, 0.5
      %v4835 = vmul.f32 %v4004, 0.5
      %v4836 = vmul.f32 %v4007, 0.5
      %v4837 = vmul.f32 %v4010, 0.5
      %v4838 = vmul.f32 %v4013, 0.5
      %v4839 = vmul.f32 %v4016, 0.5
      %v4840 = vmul.f32 %v4019, 0.5
      %v4841 = vmul.f32 %v4022, 0.5
      %v4842 = vmul.f32 %v4025, 0.5
      %v4843 = vmul.f32 %v4028, 0.5
      %v4844 = vmul.f32 %v4031, 0.5
      %v4845 = vmul.f32 %v4034, 0.5
      %v4846 = vmul.f32 %v4037, 0.5
      %v4847 = vmul.f32 %v4040, 0.5
      %v4848 = vmul.f32 %v4043, 0.5
      %v4849 = vmul.f32 %v4046, 0.5
      %v4850 = vmul.f32 %v4049, 0.5
      %v4851 = vmul.f32 %v4052, 0.5
      %v4852 = vmul.f32 %v4055, 0.5
      %v4853 = vmul.f32 %v4058, 0.5
      %v4854 = vmul.f32 %v4061, 0.5
      %v4855 = vmul.f32 %v4064, 0.5
      %v4856 = vmul.f32 %v4067, 0.5
      %v4857 = vmul.f32 %v4070, 0.5
      %v4858 = vmul.f32 %v4073, 0.5
      %v4859 = vmul.f32 %v4076, 0.5
      %v4860 = vmul.f32 %v4079, 0.5
      %v4861 = vmul.f32 %v4082, 0.5
      %v4862 = vmul.f32 %v4085, 0.5
      %v4863 = vmul.f32 %v4088, 0.5
      %v4864 = vmul.f32 %v4091, 0.5
      %v4865 = vmul.f32 %v4094, 0.5
      %v4866 = vmul.f32 %v4097, 0.5
      %v4867 = vmul.f32 %v4100, 0.5
      %v4868 = vmul.f32 %v4103, 0.5
      %v4869 = vmul.f32 %v4106, 0.5
      %v4870 = vmul.f32 %v4109, 0.5
      %v4871 = vmul.f32 %v4112, 0.5
      %v4872 = vmul.f32 %v4115, 0.5
      %v4873 = vmul.f32 %v4118, 0.5
      %v4874 = vmul.f32 %v4121, 0.5
      %v4875 = vmul.f32 %v4124, 0.5
      %v4876 = vmul.f32 %v4127, 0.5
      %v4877 = vmul.f32 %v4130, 0.5
      %v4878 = vmul.f32 %v4133, 0.5
      %v4879 = vmul.f32 %v4136, 0.5
      %v4880 = vmul.f32 %v4139, 0.5
      %v4881 = vmul.f32 %v4142, 0.5
      %v4882 = vmul.f32 %v4145, 0.5
      %v4883 = vmul.f32 %v4148, 0.5
      %v4884 = vmul.f32 %v4151, 0.5
      %v4885 = vmul.f32 %v4154, 0.5
      %v4886 = vmul.f32 %v4157, 0.5
      %v4887 = vmul.f32 %v4160, 0.5
      %v4888 = vmul.f32 %v4163, 0.5
      %v4889 = vmul.f32 %v4166, 0.5
      %v4890 = vmul.f32 %v4169, 0.5
      %v4891 = vmul.f32 %v4172, 0.5
      %v4892 = vmul.f32 %v4175, 0.5
      %v4893 = vmul.f32 %v4178, 0.5
      %v4894 = vmul.f32 %v4181, 0.5
      %v4895 = vmul.f32 %v4184, 0.5
      %v4896 = vmul.f32 %v4187, 0.5
      %v4897 = vmul.f32 %v4190, 0.5
      %v4898 = vmul.f32 %v4193, 0.5
      %v4899 = vmul.f32 %v4196, 0.5
      %v4900 = vmul.f32 %v4199, 0.5
      %v4901 = vmul.f32 %v4202, 0.5
      %v4902 = vmul.f32 %v4205, 0.5
      %v4903 = vmul.f32 %v4208, 0.5
      %v4904 = vmul.f32 %v4211, 0.5
      %v4905 = vmul.f32 %v4214, 0.5
      %v4906 = vmul.f32 %v4217, 0.5
      %v4907 = vmul.f32 %v4220, 0.5
      %v4908 = vmul.f32 %v4223, 0.5
      %v4909 = vmul.f32 %v4226, 0.5
      %v4910 = vmul.f32 %v4229, 0.5
      %v4911 = vmul.f32 %v4232, 0.5
      %v4912 = vmul.f32 %v4235, 0.5
      %v4913 = vmul.f32 %v4238, 0.5
      %v4914 = vmul.f32 %v4241, 0.5
      %v4915 = vmul.f32 %v4244, 0.5
      %v4916 = vmul.f32 %v4247, 0.5
      %v4917 = vmul.f32 %v4250, 0.5
      %v4918 = vmul.f32 %v4253, 0.5
      %v4919 = vmul.f32 %v4256, 0.5
      %v4920 = vmul.f32 %v4259, 0.5
      %v4921 = vmul.f32 %v4262, 0.5
      %v4922 = vmul.f32 %v4265, 0.5
      %v4923 = vmul.f32 %v4268, 0.5
      %v4924 = vmul.f32 %v4271, 0.5
      %v4925 = vmul.f32 %v4274, 0.5
      %v4926 = vmul.f32 %v4277, 0.5
      %v4927 = vmul.f32 %v4280, 0.5
      %v4928 = vmul.f32 %v4283, 0.5
      %v4929 = vmul.f32 %v4286, 0.5
      %v4930 = vmul.f32 %v4289, 0.5
      %v4931 = vadd.f32 %v4803, %v4421
      %v4932 = vadd.f32 %v4804, %v4424
      %v4933 = vadd.f32 %v4805, %v4427
      %v4934 = vadd.f32 %v4806, %v4430
      %v4935 = vadd.f32 %v4807, %v4433
      %v4936 = vadd.f32 %v4808, %v4436
      %v4937 = vadd.f32 %v4809, %v4439
      %v4938 = vadd.f32 %v4810, %v4442
      %v4939 = vadd.f32 %v4811, %v4445
      %v4940 = vadd.f32 %v4812, %v4448
      %v4941 = vadd.f32 %v4813, %v4451
      %v4942 = vadd.f32 %v4814, %v4454
      %v4943 = vadd.f32 %v4815, %v4457
      %v4944 = vadd.f32 %v4816, %v4460
      %v4945 = vadd.f32 %v4817, %v4463
      %v4946 = vadd.f32 %v4818, %v4466
      %v4947 = vadd.f32 %v4819, %v4469
      %v4948 = vadd.f32 %v4820, %v4472
      %v4949 = vadd.f32 %v4821, %v4475
      %v4950 = vadd.f32 %v4822, %v4478
      %v4951 = vadd.f32 %v4823, %v4481
      %v4952 = vadd.f32 %v4824, %v4484
      %v4953 = vadd.f32 %v4825, %v4487
      %v4954 = vadd.f32 %v4826, %v4490
      %v4955 = vadd.f32 %v4827, %v4493
      %v4956 = vadd.f32 %v4828, %v4496
      %v4957 = vadd.f32 %v4829, %v4499
      %v4958 = vadd.f32 %v4830, %v4502
      %v4959 = vadd.f32 %v4831, %v4505
      %v4960 = vadd.f32 %v4832, %v4508
      %v4961 = vadd.f32 %v4833, %v4511
      %v4962 = vadd.f32 %v4834, %v4514
      %v4963 = vadd.f32 %v4835, %v4517
      %v4964 = vadd.f32 %v4836, %v4520
      %v4965 = vadd.f32 %v4837, %v4523
      %v4966 = vadd.f32 %v4838, %v4526
      %v4967 = vadd.f32 %v4839, %v4529
      %v4968 = vadd.f32 %v4840, %v4532
      %v4969 = vadd.f32 %v4841, %v4535
      %v4970 = vadd.f32 %v4842, %v4538
      %v4971 = vadd.f32 %v4843, %v4541
      %v4972 = vadd.f32 %v4844, %v4544
      %v4973 = vadd.f32 %v4845, %v4547
      %v4974 = vadd.f32 %v4846, %v4550
      %v4975 = vadd.f32 %v4847, %v4553
      %v4976 = vadd.f32 %v4848, %v4556
      %v4977 = vadd.f32 %v4849, %v4559
      %v4978 = vadd.f32 %v4850, %v4562
      %v4979 = vadd.f32 %v4851, %v4565
      %v4980 = vadd.f32 %v4852, %v4568
      %v4981 = vadd.f32 %v4853, %v4571
      %v4982 = vadd.f32 %v4854, %v4574
      %v4983 = vadd.f32 %v4855, %v4577
      %v4984 = vadd.f32 %v4856, %v4580
      %v4985 = vadd.f32 %v4857, %v4583
      %v4986 = vadd.f32 %v4858, %v4586
      %v4987 = vadd.f32 %v4859, %v4589
      %v4988 = vadd.f32 %v4860, %v4592
      %v4989 = vadd.f32 %v4861, %v4595
      %v4990 = vadd.f32 %v4862, %v4598
      %v4991 = vadd.f32 %v4863, %v4601
      %v4992 = vadd.f32 %v4864, %v4604
      %v4993 = vadd.f32 %v4865, %v4607
      %v4994 = vadd.f32 %v4866, %v4610
      %v4995 = vadd.f32 %v4867, %v4613
      %v4996 = vadd.f32 %v4868, %v4616
      %v4997 = vadd.f32 %v4869, %v4619
      %v4998 = vadd.f32 %v4870, %v4622
      %v4999 = vadd.f32 %v4871, %v4625
      %v5000 = vadd.f32 %v4872, %v4628
      %v5001 = vadd.f32 %v4873, %v4631
      %v5002 = vadd.f32 %v4874, %v4634
      %v5003 = vadd.f32 %v4875, %v4637
      %v5004 = vadd.f32 %v4876, %v4640
      %v5005 = vadd.f32 %v4877, %v4643
      %v5006 = vadd.f32 %v4878, %v4646
      %v5007 = vadd.f32 %v4879, %v4649
      %v5008 = vadd.f32 %v4880, %v4652
      %v5009 = vadd.f32 %v4881, %v4655
      %v5010 = vadd.f32 %v4882, %v4658
      %v5011 = vadd.f32 %v4883, %v4661
      %v5012 = vadd.f32 %v4884, %v4664
      %v5013 = vadd.f32 %v4885, %v4667
      %v5014 = vadd.f32 %v4886, %v4670
      %v5015 = vadd.f32 %v4887, %v4673
      %v5016 = vadd.f32 %v4888, %v4676
      %v5017 = vadd.f32 %v4889, %v4679
      %v5018 = vadd.f32 %v4890, %v4682
      %v5019 = vadd.f32 %v4891, %v4685
      %v5020 = vadd.f32 %v4892, %v4688
      %v5021 = vadd.f32 %v4893, %v4691
      %v5022 = vadd.f32 %v4894, %v4694
      %v5023 = vadd.f32 %v4895, %v4697
      %v5024 = vadd.f32 %v4896, %v4700
      %v5025 = vadd.f32 %v4897, %v4703
      %v5026 = vadd.f32 %v4898, %v4706
      %v5027 = vadd.f32 %v4899, %v4709
      %v5028 = vadd.f32 %v4900, %v4712
      %v5029 = vadd.f32 %v4901, %v4715
      %v5030 = vadd.f32 %v4902, %v4718
      %v5031 = vadd.f32 %v4903, %v4721
      %v5032 = vadd.f32 %v4904, %v4724
      %v5033 = vadd.f32 %v4905, %v4727
      %v5034 = vadd.f32 %v4906, %v4730
      %v5035 = vadd.f32 %v4907, %v4733
      %v5036 = vadd.f32 %v4908, %v4736
      %v5037 = vadd.f32 %v4909, %v4739
      %v5038 = vadd.f32 %v4910, %v4742
      %v5039 = vadd.f32 %v4911, %v4745
      %v5040 = vadd.f32 %v4912, %v4748
      %v5041 = vadd.f32 %v4913, %v4751
      %v5042 = vadd.f32 %v4914, %v4754
      %v5043 = vadd.f32 %v4915, %v4757
      %v5044 = vadd.f32 %v4916, %v4760
      %v5045 = vadd.f32 %v4917, %v4763
      %v5046 = vadd.f32 %v4918, %v4766
      %v5047 = vadd.f32 %v4919, %v4769
      %v5048 = vadd.f32 %v4920, %v4772
      %v5049 = vadd.f32 %v4921, %v4775
      %v5050 = vadd.f32 %v4922, %v4778
      %v5051 = vadd.f32 %v4923, %v4781
      %v5052 = vadd.f32 %v4924, %v4784
      %v5053 = vadd.f32 %v4925, %v4787
      %v5054 = vadd.f32 %v4926, %v4790
      %v5055 = vadd.f32 %v4927, %v4793
      %v5056 = vadd.f32 %v4928, %v4796
      %v5057 = vadd.f32 %v4929, %v4799
      %v5058 = vadd.f32 %v4930, %v4802
      %v5059 = vmul.f32 %v4931, 1.442695
      %v5060 = vpow.pop %v5059
      %v5061 = vmul.f32 %v4932, 1.442695
      %v5062 = vpow.pop %v5061
      %v5063 = vmul.f32 %v4933, 1.442695
      %v5064 = vpow.pop %v5063
      %v5065 = vmul.f32 %v4934, 1.442695
      %v5066 = vpow.pop %v5065
      %v5067 = vmul.f32 %v4935, 1.442695
      %v5068 = vpow.pop %v5067
      %v5069 = vmul.f32 %v4936, 1.442695
      %v5070 = vpow.pop %v5069
      %v5071 = vmul.f32 %v4937, 1.442695
      %v5072 = vpow.pop %v5071
      %v5073 = vmul.f32 %v4938, 1.442695
      %v5074 = vpow.pop %v5073
      %v5075 = vmul.f32 %v4939, 1.442695
      %v5076 = vpow.pop %v5075
      %v5077 = vmul.f32 %v4940, 1.442695
      %v5078 = vpow.pop %v5077
      %v5079 = vmul.f32 %v4941, 1.442695
      %v5080 = vpow.pop %v5079
      %v5081 = vmul.f32 %v4942, 1.442695
      %v5082 = vpow.pop %v5081
      %v5083 = vmul.f32 %v4943, 1.442695
      %v5084 = vpow.pop %v5083
      %v5085 = vmul.f32 %v4944, 1.442695
      %v5086 = vpow.pop %v5085
      %v5087 = vmul.f32 %v4945, 1.442695
      %v5088 = vpow.pop %v5087
      %v5089 = vmul.f32 %v4946, 1.442695
      %v5090 = vpow.pop %v5089
      %v5091 = vmul.f32 %v4947, 1.442695
      %v5092 = vpow.pop %v5091
      %v5093 = vmul.f32 %v4948, 1.442695
      %v5094 = vpow.pop %v5093
      %v5095 = vmul.f32 %v4949, 1.442695
      %v5096 = vpow.pop %v5095
      %v5097 = vmul.f32 %v4950, 1.442695
      %v5098 = vpow.pop %v5097
      %v5099 = vmul.f32 %v4951, 1.442695
      %v5100 = vpow.pop %v5099
      %v5101 = vmul.f32 %v4952, 1.442695
      %v5102 = vpow.pop %v5101
      %v5103 = vmul.f32 %v4953, 1.442695
      %v5104 = vpow.pop %v5103
      %v5105 = vmul.f32 %v4954, 1.442695
      %v5106 = vpow.pop %v5105
      %v5107 = vmul.f32 %v4955, 1.442695
      %v5108 = vpow.pop %v5107
      %v5109 = vmul.f32 %v4956, 1.442695
      %v5110 = vpow.pop %v5109
      %v5111 = vmul.f32 %v4957, 1.442695
      %v5112 = vpow.pop %v5111
      %v5113 = vmul.f32 %v4958, 1.442695
      %v5114 = vpow.pop %v5113
      %v5115 = vmul.f32 %v4959, 1.442695
      %v5116 = vpow.pop %v5115
      %v5117 = vmul.f32 %v4960, 1.442695
      %v5118 = vpow.pop %v5117
      %v5119 = vmul.f32 %v4961, 1.442695
      %v5120 = vpow.pop %v5119
      %v5121 = vmul.f32 %v4962, 1.442695
      %v5122 = vpow.pop %v5121
      %v5123 = vmul.f32 %v4963, 1.442695
      %v5124 = vpow.pop %v5123
      %v5125 = vmul.f32 %v4964, 1.442695
      %v5126 = vpow.pop %v5125
      %v5127 = vmul.f32 %v4965, 1.442695
      %v5128 = vpow.pop %v5127
      %v5129 = vmul.f32 %v4966, 1.442695
      %v5130 = vpow.pop %v5129
      %v5131 = vmul.f32 %v4967, 1.442695
      %v5132 = vpow.pop %v5131
      %v5133 = vmul.f32 %v4968, 1.442695
      %v5134 = vpow.pop %v5133
      %v5135 = vmul.f32 %v4969, 1.442695
      %v5136 = vpow.pop %v5135
      %v5137 = vmul.f32 %v4970, 1.442695
      %v5138 = vpow.pop %v5137
      %v5139 = vmul.f32 %v4971, 1.442695
      %v5140 = vpow.pop %v5139
      %v5141 = vmul.f32 %v4972, 1.442695
      %v5142 = vpow.pop %v5141
      %v5143 = vmul.f32 %v4973, 1.442695
      %v5144 = vpow.pop %v5143
      %v5145 = vmul.f32 %v4974, 1.442695
      %v5146 = vpow.pop %v5145
      %v5147 = vmul.f32 %v4975, 1.442695
      %v5148 = vpow.pop %v5147
      %v5149 = vmul.f32 %v4976, 1.442695
      %v5150 = vpow.pop %v5149
      %v5151 = vmul.f32 %v4977, 1.442695
      %v5152 = vpow.pop %v5151
      %v5153 = vmul.f32 %v4978, 1.442695
      %v5154 = vpow.pop %v5153
      %v5155 = vmul.f32 %v4979, 1.442695
      %v5156 = vpow.pop %v5155
      %v5157 = vmul.f32 %v4980, 1.442695
      %v5158 = vpow.pop %v5157
      %v5159 = vmul.f32 %v4981, 1.442695
      %v5160 = vpow.pop %v5159
      %v5161 = vmul.f32 %v4982, 1.442695
      %v5162 = vpow.pop %v5161
      %v5163 = vmul.f32 %v4983, 1.442695
      %v5164 = vpow.pop %v5163
      %v5165 = vmul.f32 %v4984, 1.442695
      %v5166 = vpow.pop %v5165
      %v5167 = vmul.f32 %v4985, 1.442695
      %v5168 = vpow.pop %v5167
      %v5169 = vmul.f32 %v4986, 1.442695
      %v5170 = vpow.pop %v5169
      %v5171 = vmul.f32 %v4987, 1.442695
      %v5172 = vpow.pop %v5171
      %v5173 = vmul.f32 %v4988, 1.442695
      %v5174 = vpow.pop %v5173
      %v5175 = vmul.f32 %v4989, 1.442695
      %v5176 = vpow.pop %v5175
      %v5177 = vmul.f32 %v4990, 1.442695
      %v5178 = vpow.pop %v5177
      %v5179 = vmul.f32 %v4991, 1.442695
      %v5180 = vpow.pop %v5179
      %v5181 = vmul.f32 %v4992, 1.442695
      %v5182 = vpow.pop %v5181
      %v5183 = vmul.f32 %v4993, 1.442695
      %v5184 = vpow.pop %v5183
      %v5185 = vmul.f32 %v4994, 1.442695
      %v5186 = vpow.pop %v5185
      %v5187 = vmul.f32 %v4995, 1.442695
      %v5188 = vpow.pop %v5187
      %v5189 = vmul.f32 %v4996, 1.442695
      %v5190 = vpow.pop %v5189
      %v5191 = vmul.f32 %v4997, 1.442695
      %v5192 = vpow.pop %v5191
      %v5193 = vmul.f32 %v4998, 1.442695
      %v5194 = vpow.pop %v5193
      %v5195 = vmul.f32 %v4999, 1.442695
      %v5196 = vpow.pop %v5195
      %v5197 = vmul.f32 %v5000, 1.442695
      %v5198 = vpow.pop %v5197
      %v5199 = vmul.f32 %v5001, 1.442695
      %v5200 = vpow.pop %v5199
      %v5201 = vmul.f32 %v5002, 1.442695
      %v5202 = vpow.pop %v5201
      %v5203 = vmul.f32 %v5003, 1.442695
      %v5204 = vpow.pop %v5203
      %v5205 = vmul.f32 %v5004, 1.442695
      %v5206 = vpow.pop %v5205
      %v5207 = vmul.f32 %v5005, 1.442695
      %v5208 = vpow.pop %v5207
      %v5209 = vmul.f32 %v5006, 1.442695
      %v5210 = vpow.pop %v5209
      %v5211 = vmul.f32 %v5007, 1.442695
      %v5212 = vpow.pop %v5211
      %v5213 = vmul.f32 %v5008, 1.442695
      %v5214 = vpow.pop %v5213
      %v5215 = vmul.f32 %v5009, 1.442695
      %v5216 = vpow.pop %v5215
      %v5217 = vmul.f32 %v5010, 1.442695
      %v5218 = vpow.pop %v5217
      %v5219 = vmul.f32 %v5011, 1.442695
      %v5220 = vpow.pop %v5219
      %v5221 = vmul.f32 %v5012, 1.442695
      %v5222 = vpow.pop %v5221
      %v5223 = vmul.f32 %v5013, 1.442695
      %v5224 = vpow.pop %v5223
      %v5225 = vmul.f32 %v5014, 1.442695
      %v5226 = vpow.pop %v5225
      %v5227 = vmul.f32 %v5015, 1.442695
      %v5228 = vpow.pop %v5227
      %v5229 = vmul.f32 %v5016, 1.442695
      %v5230 = vpow.pop %v5229
      %v5231 = vmul.f32 %v5017, 1.442695
      %v5232 = vpow.pop %v5231
      %v5233 = vmul.f32 %v5018, 1.442695
      %v5234 = vpow.pop %v5233
      %v5235 = vmul.f32 %v5019, 1.442695
      %v5236 = vpow.pop %v5235
      %v5237 = vmul.f32 %v5020, 1.442695
      %v5238 = vpow.pop %v5237
      %v5239 = vmul.f32 %v5021, 1.442695
      %v5240 = vpow.pop %v5239
      %v5241 = vmul.f32 %v5022, 1.442695
      %v5242 = vpow.pop %v5241
      %v5243 = vmul.f32 %v5023, 1.442695
      %v5244 = vpow.pop %v5243
      %v5245 = vmul.f32 %v5024, 1.442695
      %v5246 = vpow.pop %v5245
      %v5247 = vmul.f32 %v5025, 1.442695
      %v5248 = vpow.pop %v5247
      %v5249 = vmul.f32 %v5026, 1.442695
      %v5250 = vpow.pop %v5249
      %v5251 = vmul.f32 %v5027, 1.442695
      %v5252 = vpow.pop %v5251
      %v5253 = vmul.f32 %v5028, 1.442695
      %v5254 = vpow.pop %v5253
      %v5255 = vmul.f32 %v5029, 1.442695
      %v5256 = vpow.pop %v5255
      %v5257 = vmul.f32 %v5030, 1.442695
      %v5258 = vpow.pop %v5257
      %v5259 = vmul.f32 %v5031, 1.442695
      %v5260 = vpow.pop %v5259
      %v5261 = vmul.f32 %v5032, 1.442695
      %v5262 = vpow.pop %v5261
      %v5263 = vmul.f32 %v5033, 1.442695
      %v5264 = vpow.pop %v5263
      %v5265 = vmul.f32 %v5034, 1.442695
      %v5266 = vpow.pop %v5265
      %v5267 = vmul.f32 %v5035, 1.442695
      %v5268 = vpow.pop %v5267
      %v5269 = vmul.f32 %v5036, 1.442695
      %v5270 = vpow.pop %v5269
      %v5271 = vmul.f32 %v5037, 1.442695
      %v5272 = vpow.pop %v5271
      %v5273 = vmul.f32 %v5038, 1.442695
      %v5274 = vpow.pop %v5273
      %v5275 = vmul.f32 %v5039, 1.442695
      %v5276 = vpow.pop %v5275
      %v5277 = vmul.f32 %v5040, 1.442695
      %v5278 = vpow.pop %v5277
      %v5279 = vmul.f32 %v5041, 1.442695
      %v5280 = vpow.pop %v5279
      %v5281 = vmul.f32 %v5042, 1.442695
      %v5282 = vpow.pop %v5281
      %v5283 = vmul.f32 %v5043, 1.442695
      %v5284 = vpow.pop %v5283
      %v5285 = vmul.f32 %v5044, 1.442695
      %v5286 = vpow.pop %v5285
      %v5287 = vmul.f32 %v5045, 1.442695
      %v5288 = vpow.pop %v5287
      %v5289 = vmul.f32 %v5046, 1.442695
      %v5290 = vpow.pop %v5289
      %v5291 = vmul.f32 %v5047, 1.442695
      %v5292 = vpow.pop %v5291
      %v5293 = vmul.f32 %v5048, 1.442695
      %v5294 = vpow.pop %v5293
      %v5295 = vmul.f32 %v5049, 1.442695
      %v5296 = vpow.pop %v5295
      %v5297 = vmul.f32 %v5050, 1.442695
      %v5298 = vpow.pop %v5297
      %v5299 = vmul.f32 %v5051, 1.442695
      %v5300 = vpow.pop %v5299
      %v5301 = vmul.f32 %v5052, 1.442695
      %v5302 = vpow.pop %v5301
      %v5303 = vmul.f32 %v5053, 1.442695
      %v5304 = vpow.pop %v5303
      %v5305 = vmul.f32 %v5054, 1.442695
      %v5306 = vpow.pop %v5305
      %v5307 = vmul.f32 %v5055, 1.442695
      %v5308 = vpow.pop %v5307
      %v5309 = vmul.f32 %v5056, 1.442695
      %v5310 = vpow.pop %v5309
      %v5311 = vmul.f32 %v5057, 1.442695
      %v5312 = vpow.pop %v5311
      %v5313 = vmul.f32 %v5058, 1.442695
      %v5314 = vpow.pop %v5313
      %v5315 = vmul.f32 %v4421, -10.0
      %v5316 = vmul.f32 %v4424, -10.0
      %v5317 = vmul.f32 %v4427, -10.0
      %v5318 = vmul.f32 %v4430, -10.0
      %v5319 = vmul.f32 %v4433, -10.0
      %v5320 = vmul.f32 %v4436, -10.0
      %v5321 = vmul.f32 %v4439, -10.0
      %v5322 = vmul.f32 %v4442, -10.0
      %v5323 = vmul.f32 %v4445, -10.0
      %v5324 = vmul.f32 %v4448, -10.0
      %v5325 = vmul.f32 %v4451, -10.0
      %v5326 = vmul.f32 %v4454, -10.0
      %v5327 = vmul.f32 %v4457, -10.0
      %v5328 = vmul.f32 %v4460, -10.0
      %v5329 = vmul.f32 %v4463, -10.0
      %v5330 = vmul.f32 %v4466, -10.0
      %v5331 = vmul.f32 %v4469, -10.0
      %v5332 = vmul.f32 %v4472, -10.0
      %v5333 = vmul.f32 %v4475, -10.0
      %v5334 = vmul.f32 %v4478, -10.0
      %v5335 = vmul.f32 %v4481, -10.0
      %v5336 = vmul.f32 %v4484, -10.0
      %v5337 = vmul.f32 %v4487, -10.0
      %v5338 = vmul.f32 %v4490, -10.0
      %v5339 = vmul.f32 %v4493, -10.0
      %v5340 = vmul.f32 %v4496, -10.0
      %v5341 = vmul.f32 %v4499, -10.0
      %v5342 = vmul.f32 %v4502, -10.0
      %v5343 = vmul.f32 %v4505, -10.0
      %v5344 = vmul.f32 %v4508, -10.0
      %v5345 = vmul.f32 %v4511, -10.0
      %v5346 = vmul.f32 %v4514, -10.0
      %v5347 = vmul.f32 %v4517, -10.0
      %v5348 = vmul.f32 %v4520, -10.0
      %v5349 = vmul.f32 %v4523, -10.0
      %v5350 = vmul.f32 %v4526, -10.0
      %v5351 = vmul.f32 %v4529, -10.0
      %v5352 = vmul.f32 %v4532, -10.0
      %v5353 = vmul.f32 %v4535, -10.0
      %v5354 = vmul.f32 %v4538, -10.0
      %v5355 = vmul.f32 %v4541, -10.0
      %v5356 = vmul.f32 %v4544, -10.0
      %v5357 = vmul.f32 %v4547, -10.0
      %v5358 = vmul.f32 %v4550, -10.0
      %v5359 = vmul.f32 %v4553, -10.0
      %v5360 = vmul.f32 %v4556, -10.0
      %v5361 = vmul.f32 %v4559, -10.0
      %v5362 = vmul.f32 %v4562, -10.0
      %v5363 = vmul.f32 %v4565, -10.0
      %v5364 = vmul.f32 %v4568, -10.0
      %v5365 = vmul.f32 %v4571, -10.0
      %v5366 = vmul.f32 %v4574, -10.0
      %v5367 = vmul.f32 %v4577, -10.0
      %v5368 = vmul.f32 %v4580, -10.0
      %v5369 = vmul.f32 %v4583, -10.0
      %v5370 = vmul.f32 %v4586, -10.0
      %v5371 = vmul.f32 %v4589, -10.0
      %v5372 = vmul.f32 %v4592, -10.0
      %v5373 = vmul.f32 %v4595, -10.0
      %v5374 = vmul.f32 %v4598, -10.0
      %v5375 = vmul.f32 %v4601, -10.0
      %v5376 = vmul.f32 %v4604, -10.0
      %v5377 = vmul.f32 %v4607, -10.0
      %v5378 = vmul.f32 %v4610, -10.0
      %v5379 = vmul.f32 %v4613, -10.0
      %v5380 = vmul.f32 %v4616, -10.0
      %v5381 = vmul.f32 %v4619, -10.0
      %v5382 = vmul.f32 %v4622, -10.0
      %v5383 = vmul.f32 %v4625, -10.0
      %v5384 = vmul.f32 %v4628, -10.0
      %v5385 = vmul.f32 %v4631, -10.0
      %v5386 = vmul.f32 %v4634, -10.0
      %v5387 = vmul.f32 %v4637, -10.0
      %v5388 = vmul.f32 %v4640, -10.0
      %v5389 = vmul.f32 %v4643, -10.0
      %v5390 = vmul.f32 %v4646, -10.0
      %v5391 = vmul.f32 %v4649, -10.0
      %v5392 = vmul.f32 %v4652, -10.0
      %v5393 = vmul.f32 %v4655, -10.0
      %v5394 = vmul.f32 %v4658, -10.0
      %v5395 = vmul.f32 %v4661, -10.0
      %v5396 = vmul.f32 %v4664, -10.0
      %v5397 = vmul.f32 %v4667, -10.0
      %v5398 = vmul.f32 %v4670, -10.0
      %v5399 = vmul.f32 %v4673, -10.0
      %v5400 = vmul.f32 %v4676, -10.0
      %v5401 = vmul.f32 %v4679, -10.0
      %v5402 = vmul.f32 %v4682, -10.0
      %v5403 = vmul.f32 %v4685, -10.0
      %v5404 = vmul.f32 %v4688, -10.0
      %v5405 = vmul.f32 %v4691, -10.0
      %v5406 = vmul.f32 %v4694, -10.0
      %v5407 = vmul.f32 %v4697, -10.0
      %v5408 = vmul.f32 %v4700, -10.0
      %v5409 = vmul.f32 %v4703, -10.0
      %v5410 = vmul.f32 %v4706, -10.0
      %v5411 = vmul.f32 %v4709, -10.0
      %v5412 = vmul.f32 %v4712, -10.0
      %v5413 = vmul.f32 %v4715, -10.0
      %v5414 = vmul.f32 %v4718, -10.0
      %v5415 = vmul.f32 %v4721, -10.0
      %v5416 = vmul.f32 %v4724, -10.0
      %v5417 = vmul.f32 %v4727, -10.0
      %v5418 = vmul.f32 %v4730, -10.0
      %v5419 = vmul.f32 %v4733, -10.0
      %v5420 = vmul.f32 %v4736, -10.0
      %v5421 = vmul.f32 %v4739, -10.0
      %v5422 = vmul.f32 %v4742, -10.0
      %v5423 = vmul.f32 %v4745, -10.0
      %v5424 = vmul.f32 %v4748, -10.0
      %v5425 = vmul.f32 %v4751, -10.0
      %v5426 = vmul.f32 %v4754, -10.0
      %v5427 = vmul.f32 %v4757, -10.0
      %v5428 = vmul.f32 %v4760, -10.0
      %v5429 = vmul.f32 %v4763, -10.0
      %v5430 = vmul.f32 %v4766, -10.0
      %v5431 = vmul.f32 %v4769, -10.0
      %v5432 = vmul.f32 %v4772, -10.0
      %v5433 = vmul.f32 %v4775, -10.0
      %v5434 = vmul.f32 %v4778, -10.0
      %v5435 = vmul.f32 %v4781, -10.0
      %v5436 = vmul.f32 %v4784, -10.0
      %v5437 = vmul.f32 %v4787, -10.0
      %v5438 = vmul.f32 %v4790, -10.0
      %v5439 = vmul.f32 %v4793, -10.0
      %v5440 = vmul.f32 %v4796, -10.0
      %v5441 = vmul.f32 %v4799, -10.0
      %v5442 = vmul.f32 %v4802, -10.0
      %v5443 = vmul.f32 %v5315, 1.442695
      %v5444 = vpow.pop %v5443
      %v5445 = vmul.f32 %v5316, 1.442695
      %v5446 = vpow.pop %v5445
      %v5447 = vmul.f32 %v5317, 1.442695
      %v5448 = vpow.pop %v5447
      %v5449 = vmul.f32 %v5318, 1.442695
      %v5450 = vpow.pop %v5449
      %v5451 = vmul.f32 %v5319, 1.442695
      %v5452 = vpow.pop %v5451
      %v5453 = vmul.f32 %v5320, 1.442695
      %v5454 = vpow.pop %v5453
      %v5455 = vmul.f32 %v5321, 1.442695
      %v5456 = vpow.pop %v5455
      %v5457 = vmul.f32 %v5322, 1.442695
      %v5458 = vpow.pop %v5457
      %v5459 = vmul.f32 %v5323, 1.442695
      %v5460 = vpow.pop %v5459
      %v5461 = vmul.f32 %v5324, 1.442695
      %v5462 = vpow.pop %v5461
      %v5463 = vmul.f32 %v5325, 1.442695
      %v5464 = vpow.pop %v5463
      %v5465 = vmul.f32 %v5326, 1.442695
      %v5466 = vpow.pop %v5465
      %v5467 = vmul.f32 %v5327, 1.442695
      %v5468 = vpow.pop %v5467
      %v5469 = vmul.f32 %v5328, 1.442695
      %v5470 = vpow.pop %v5469
      %v5471 = vmul.f32 %v5329, 1.442695
      %v5472 = vpow.pop %v5471
      %v5473 = vmul.f32 %v5330, 1.442695
      %v5474 = vpow.pop %v5473
      %v5475 = vmul.f32 %v5331, 1.442695
      %v5476 = vpow.pop %v5475
      %v5477 = vmul.f32 %v5332, 1.442695
      %v5478 = vpow.pop %v5477
      %v5479 = vmul.f32 %v5333, 1.442695
      %v5480 = vpow.pop %v5479
      %v5481 = vmul.f32 %v5334, 1.442695
      %v5482 = vpow.pop %v5481
      %v5483 = vmul.f32 %v5335, 1.442695
      %v5484 = vpow.pop %v5483
      %v5485 = vmul.f32 %v5336, 1.442695
      %v5486 = vpow.pop %v5485
      %v5487 = vmul.f32 %v5337, 1.442695
      %v5488 = vpow.pop %v5487
      %v5489 = vmul.f32 %v5338, 1.442695
      %v5490 = vpow.pop %v5489
      %v5491 = vmul.f32 %v5339, 1.442695
      %v5492 = vpow.pop %v5491
      %v5493 = vmul.f32 %v5340, 1.442695
      %v5494 = vpow.pop %v5493
      %v5495 = vmul.f32 %v5341, 1.442695
      %v5496 = vpow.pop %v5495
      %v5497 = vmul.f32 %v5342, 1.442695
      %v5498 = vpow.pop %v5497
      %v5499 = vmul.f32 %v5343, 1.442695
      %v5500 = vpow.pop %v5499
      %v5501 = vmul.f32 %v5344, 1.442695
      %v5502 = vpow.pop %v5501
      %v5503 = vmul.f32 %v5345, 1.442695
      %v5504 = vpow.pop %v5503
      %v5505 = vmul.f32 %v5346, 1.442695
      %v5506 = vpow.pop %v5505
      %v5507 = vmul.f32 %v5347, 1.442695
      %v5508 = vpow.pop %v5507
      %v5509 = vmul.f32 %v5348, 1.442695
      %v5510 = vpow.pop %v5509
      %v5511 = vmul.f32 %v5349, 1.442695
      %v5512 = vpow.pop %v5511
      %v5513 = vmul.f32 %v5350, 1.442695
      %v5514 = vpow.pop %v5513
      %v5515 = vmul.f32 %v5351, 1.442695
      %v5516 = vpow.pop %v5515
      %v5517 = vmul.f32 %v5352, 1.442695
      %v5518 = vpow.pop %v5517
      %v5519 = vmul.f32 %v5353, 1.442695
      %v5520 = vpow.pop %v5519
      %v5521 = vmul.f32 %v5354, 1.442695
      %v5522 = vpow.pop %v5521
      %v5523 = vmul.f32 %v5355, 1.442695
      %v5524 = vpow.pop %v5523
      %v5525 = vmul.f32 %v5356, 1.442695
      %v5526 = vpow.pop %v5525
      %v5527 = vmul.f32 %v5357, 1.442695
      %v5528 = vpow.pop %v5527
      %v5529 = vmul.f32 %v5358, 1.442695
      %v5530 = vpow.pop %v5529
      %v5531 = vmul.f32 %v5359, 1.442695
      %v5532 = vpow.pop %v5531
      %v5533 = vmul.f32 %v5360, 1.442695
      %v5534 = vpow.pop %v5533
      %v5535 = vmul.f32 %v5361, 1.442695
      %v5536 = vpow.pop %v5535
      %v5537 = vmul.f32 %v5362, 1.442695
      %v5538 = vpow.pop %v5537
      %v5539 = vmul.f32 %v5363, 1.442695
      %v5540 = vpow.pop %v5539
      %v5541 = vmul.f32 %v5364, 1.442695
      %v5542 = vpow.pop %v5541
      %v5543 = vmul.f32 %v5365, 1.442695
      %v5544 = vpow.pop %v5543
      %v5545 = vmul.f32 %v5366, 1.442695
      %v5546 = vpow.pop %v5545
      %v5547 = vmul.f32 %v5367, 1.442695
      %v5548 = vpow.pop %v5547
      %v5549 = vmul.f32 %v5368, 1.442695
      %v5550 = vpow.pop %v5549
      %v5551 = vmul.f32 %v5369, 1.442695
      %v5552 = vpow.pop %v5551
      %v5553 = vmul.f32 %v5370, 1.442695
      %v5554 = vpow.pop %v5553
      %v5555 = vmul.f32 %v5371, 1.442695
      %v5556 = vpow.pop %v5555
      %v5557 = vmul.f32 %v5372, 1.442695
      %v5558 = vpow.pop %v5557
      %v5559 = vmul.f32 %v5373, 1.442695
      %v5560 = vpow.pop %v5559
      %v5561 = vmul.f32 %v5374, 1.442695
      %v5562 = vpow.pop %v5561
      %v5563 = vmul.f32 %v5375, 1.442695
      %v5564 = vpow.pop %v5563
      %v5565 = vmul.f32 %v5376, 1.442695
      %v5566 = vpow.pop %v5565
      %v5567 = vmul.f32 %v5377, 1.442695
      %v5568 = vpow.pop %v5567
      %v5569 = vmul.f32 %v5378, 1.442695
      %v5570 = vpow.pop %v5569
      %v5571 = vmul.f32 %v5379, 1.442695
      %v5572 = vpow.pop %v5571
      %v5573 = vmul.f32 %v5380, 1.442695
      %v5574 = vpow.pop %v5573
      %v5575 = vmul.f32 %v5381, 1.442695
      %v5576 = vpow.pop %v5575
      %v5577 = vmul.f32 %v5382, 1.442695
      %v5578 = vpow.pop %v5577
      %v5579 = vmul.f32 %v5383, 1.442695
      %v5580 = vpow.pop %v5579
      %v5581 = vmul.f32 %v5384, 1.442695
      %v5582 = vpow.pop %v5581
      %v5583 = vmul.f32 %v5385, 1.442695
      %v5584 = vpow.pop %v5583
      %v5585 = vmul.f32 %v5386, 1.442695
      %v5586 = vpow.pop %v5585
      %v5587 = vmul.f32 %v5387, 1.442695
      %v5588 = vpow.pop %v5587
      %v5589 = vmul.f32 %v5388, 1.442695
      %v5590 = vpow.pop %v5589
      %v5591 = vmul.f32 %v5389, 1.442695
      %v5592 = vpow.pop %v5591
      %v5593 = vmul.f32 %v5390, 1.442695
      %v5594 = vpow.pop %v5593
      %v5595 = vmul.f32 %v5391, 1.442695
      %v5596 = vpow.pop %v5595
      %v5597 = vmul.f32 %v5392, 1.442695
      %v5598 = vpow.pop %v5597
      %v5599 = vmul.f32 %v5393, 1.442695
      %v5600 = vpow.pop %v5599
      %v5601 = vmul.f32 %v5394, 1.442695
      %v5602 = vpow.pop %v5601
      %v5603 = vmul.f32 %v5395, 1.442695
      %v5604 = vpow.pop %v5603
      %v5605 = vmul.f32 %v5396, 1.442695
      %v5606 = vpow.pop %v5605
      %v5607 = vmul.f32 %v5397, 1.442695
      %v5608 = vpow.pop %v5607
      %v5609 = vmul.f32 %v5398, 1.442695
      %v5610 = vpow.pop %v5609
      %v5611 = vmul.f32 %v5399, 1.442695
      %v5612 = vpow.pop %v5611
      %v5613 = vmul.f32 %v5400, 1.442695
      %v5614 = vpow.pop %v5613
      %v5615 = vmul.f32 %v5401, 1.442695
      %v5616 = vpow.pop %v5615
      %v5617 = vmul.f32 %v5402, 1.442695
      %v5618 = vpow.pop %v5617
      %v5619 = vmul.f32 %v5403, 1.442695
      %v5620 = vpow.pop %v5619
      %v5621 = vmul.f32 %v5404, 1.442695
      %v5622 = vpow.pop %v5621
      %v5623 = vmul.f32 %v5405, 1.442695
      %v5624 = vpow.pop %v5623
      %v5625 = vmul.f32 %v5406, 1.442695
      %v5626 = vpow.pop %v5625
      %v5627 = vmul.f32 %v5407, 1.442695
      %v5628 = vpow.pop %v5627
      %v5629 = vmul.f32 %v5408, 1.442695
      %v5630 = vpow.pop %v5629
      %v5631 = vmul.f32 %v5409, 1.442695
      %v5632 = vpow.pop %v5631
      %v5633 = vmul.f32 %v5410, 1.442695
      %v5634 = vpow.pop %v5633
      %v5635 = vmul.f32 %v5411, 1.442695
      %v5636 = vpow.pop %v5635
      %v5637 = vmul.f32 %v5412, 1.442695
      %v5638 = vpow.pop %v5637
      %v5639 = vmul.f32 %v5413, 1.442695
      %v5640 = vpow.pop %v5639
      %v5641 = vmul.f32 %v5414, 1.442695
      %v5642 = vpow.pop %v5641
      %v5643 = vmul.f32 %v5415, 1.442695
      %v5644 = vpow.pop %v5643
      %v5645 = vmul.f32 %v5416, 1.442695
      %v5646 = vpow.pop %v5645
      %v5647 = vmul.f32 %v5417, 1.442695
      %v5648 = vpow.pop %v5647
      %v5649 = vmul.f32 %v5418, 1.442695
      %v5650 = vpow.pop %v5649
      %v5651 = vmul.f32 %v5419, 1.442695
      %v5652 = vpow.pop %v5651
      %v5653 = vmul.f32 %v5420, 1.442695
      %v5654 = vpow.pop %v5653
      %v5655 = vmul.f32 %v5421, 1.442695
      %v5656 = vpow.pop %v5655
      %v5657 = vmul.f32 %v5422, 1.442695
      %v5658 = vpow.pop %v5657
      %v5659 = vmul.f32 %v5423, 1.442695
      %v5660 = vpow.pop %v5659
      %v5661 = vmul.f32 %v5424, 1.442695
      %v5662 = vpow.pop %v5661
      %v5663 = vmul.f32 %v5425, 1.442695
      %v5664 = vpow.pop %v5663
      %v5665 = vmul.f32 %v5426, 1.442695
      %v5666 = vpow.pop %v5665
      %v5667 = vmul.f32 %v5427, 1.442695
      %v5668 = vpow.pop %v5667
      %v5669 = vmul.f32 %v5428, 1.442695
      %v5670 = vpow.pop %v5669
      %v5671 = vmul.f32 %v5429, 1.442695
      %v5672 = vpow.pop %v5671
      %v5673 = vmul.f32 %v5430, 1.442695
      %v5674 = vpow.pop %v5673
      %v5675 = vmul.f32 %v5431, 1.442695
      %v5676 = vpow.pop %v5675
      %v5677 = vmul.f32 %v5432, 1.442695
      %v5678 = vpow.pop %v5677
      %v5679 = vmul.f32 %v5433, 1.442695
      %v5680 = vpow.pop %v5679
      %v5681 = vmul.f32 %v5434, 1.442695
      %v5682 = vpow.pop %v5681
      %v5683 = vmul.f32 %v5435, 1.442695
      %v5684 = vpow.pop %v5683
      %v5685 = vmul.f32 %v5436, 1.442695
      %v5686 = vpow.pop %v5685
      %v5687 = vmul.f32 %v5437, 1.442695
      %v5688 = vpow.pop %v5687
      %v5689 = vmul.f32 %v5438, 1.442695
      %v5690 = vpow.pop %v5689
      %v5691 = vmul.f32 %v5439, 1.442695
      %v5692 = vpow.pop %v5691
      %v5693 = vmul.f32 %v5440, 1.442695
      %v5694 = vpow.pop %v5693
      %v5695 = vmul.f32 %v5441, 1.442695
      %v5696 = vpow.pop %v5695
      %v5697 = vmul.f32 %v5442, 1.442695
      %v5698 = vpow.pop %v5697
      %v5699 = vsub.f32 1.0, %v3908
      %v5700 = vsub.f32 1.0, %v3911
      %v5701 = vsub.f32 1.0, %v3914
      %v5702 = vsub.f32 1.0, %v3917
      %v5703 = vsub.f32 1.0, %v3920
      %v5704 = vsub.f32 1.0, %v3923
      %v5705 = vsub.f32 1.0, %v3926
      %v5706 = vsub.f32 1.0, %v3929
      %v5707 = vsub.f32 1.0, %v3932
      %v5708 = vsub.f32 1.0, %v3935
      %v5709 = vsub.f32 1.0, %v3938
      %v5710 = vsub.f32 1.0, %v3941
      %v5711 = vsub.f32 1.0, %v3944
      %v5712 = vsub.f32 1.0, %v3947
      %v5713 = vsub.f32 1.0, %v3950
      %v5714 = vsub.f32 1.0, %v3953
      %v5715 = vsub.f32 1.0, %v3956
      %v5716 = vsub.f32 1.0, %v3959
      %v5717 = vsub.f32 1.0, %v3962
      %v5718 = vsub.f32 1.0, %v3965
      %v5719 = vsub.f32 1.0, %v3968
      %v5720 = vsub.f32 1.0, %v3971
      %v5721 = vsub.f32 1.0, %v3974
      %v5722 = vsub.f32 1.0, %v3977
      %v5723 = vsub.f32 1.0, %v3980
      %v5724 = vsub.f32 1.0, %v3983
      %v5725 = vsub.f32 1.0, %v3986
      %v5726 = vsub.f32 1.0, %v3989
      %v5727 = vsub.f32 1.0, %v3992
      %v5728 = vsub.f32 1.0, %v3995
      %v5729 = vsub.f32 1.0, %v3998
      %v5730 = vsub.f32 1.0, %v4001
      %v5731 = vsub.f32 1.0, %v4004
      %v5732 = vsub.f32 1.0, %v4007
      %v5733 = vsub.f32 1.0, %v4010
      %v5734 = vsub.f32 1.0, %v4013
      %v5735 = vsub.f32 1.0, %v4016
      %v5736 = vsub.f32 1.0, %v4019
      %v5737 = vsub.f32 1.0, %v4022
      %v5738 = vsub.f32 1.0, %v4025
      %v5739 = vsub.f32 1.0, %v4028
      %v5740 = vsub.f32 1.0, %v4031
      %v5741 = vsub.f32 1.0, %v4034
      %v5742 = vsub.f32 1.0, %v4037
      %v5743 = vsub.f32 1.0, %v4040
      %v5744 = vsub.f32 1.0, %v4043
      %v5745 = vsub.f32 1.0, %v4046
      %v5746 = vsub.f32 1.0, %v4049
      %v5747 = vsub.f32 1.0, %v4052
      %v5748 = vsub.f32 1.0, %v4055
      %v5749 = vsub.f32 1.0, %v4058
      %v5750 = vsub.f32 1.0, %v4061
      %v5751 = vsub.f32 1.0, %v4064
      %v5752 = vsub.f32 1.0, %v4067
      %v5753 = vsub.f32 1.0, %v4070
      %v5754 = vsub.f32 1.0, %v4073
      %v5755 = vsub.f32 1.0, %v4076
      %v5756 = vsub.f32 1.0, %v4079
      %v5757 = vsub.f32 1.0, %v4082
      %v5758 = vsub.f32 1.0, %v4085
      %v5759 = vsub.f32 1.0, %v4088
      %v5760 = vsub.f32 1.0, %v4091
      %v5761 = vsub.f32 1.0, %v4094
      %v5762 = vsub.f32 1.0, %v4097
      %v5763 = vsub.f32 1.0, %v4100
      %v5764 = vsub.f32 1.0, %v4103
      %v5765 = vsub.f32 1.0, %v4106
      %v5766 = vsub.f32 1.0, %v4109
      %v5767 = vsub.f32 1.0, %v4112
      %v5768 = vsub.f32 1.0, %v4115
      %v5769 = vsub.f32 1.0, %v4118
      %v5770 = vsub.f32 1.0, %v4121
      %v5771 = vsub.f32 1.0, %v4124
      %v5772 = vsub.f32 1.0, %v4127
      %v5773 = vsub.f32 1.0, %v4130
      %v5774 = vsub.f32 1.0, %v4133
      %v5775 = vsub.f32 1.0, %v4136
      %v5776 = vsub.f32 1.0, %v4139
      %v5777 = vsub.f32 1.0, %v4142
      %v5778 = vsub.f32 1.0, %v4145
      %v5779 = vsub.f32 1.0, %v4148
      %v5780 = vsub.f32 1.0, %v4151
      %v5781 = vsub.f32 1.0, %v4154
      %v5782 = vsub.f32 1.0, %v4157
      %v5783 = vsub.f32 1.0, %v4160
      %v5784 = vsub.f32 1.0, %v4163
      %v5785 = vsub.f32 1.0, %v4166
      %v5786 = vsub.f32 1.0, %v4169
      %v5787 = vsub.f32 1.0, %v4172
      %v5788 = vsub.f32 1.0, %v4175
      %v5789 = vsub.f32 1.0, %v4178
      %v5790 = vsub.f32 1.0, %v4181
      %v5791 = vsub.f32 1.0, %v4184
      %v5792 = vsub.f32 1.0, %v4187
      %v5793 = vsub.f32 1.0, %v4190
      %v5794 = vsub.f32 1.0, %v4193
      %v5795 = vsub.f32 1.0, %v4196
      %v5796 = vsub.f32 1.0, %v4199
      %v5797 = vsub.f32 1.0, %v4202
      %v5798 = vsub.f32 1.0, %v4205
      %v5799 = vsub.f32 1.0, %v4208
      %v5800 = vsub.f32 1.0, %v4211
      %v5801 = vsub.f32 1.0, %v4214
      %v5802 = vsub.f32 1.0, %v4217
      %v5803 = vsub.f32 1.0, %v4220
      %v5804 = vsub.f32 1.0, %v4223
      %v5805 = vsub.f32 1.0, %v4226
      %v5806 = vsub.f32 1.0, %v4229
      %v5807 = vsub.f32 1.0, %v4232
      %v5808 = vsub.f32 1.0, %v4235
      %v5809 = vsub.f32 1.0, %v4238
      %v5810 = vsub.f32 1.0, %v4241
      %v5811 = vsub.f32 1.0, %v4244
      %v5812 = vsub.f32 1.0, %v4247
      %v5813 = vsub.f32 1.0, %v4250
      %v5814 = vsub.f32 1.0, %v4253
      %v5815 = vsub.f32 1.0, %v4256
      %v5816 = vsub.f32 1.0, %v4259
      %v5817 = vsub.f32 1.0, %v4262
      %v5818 = vsub.f32 1.0, %v4265
      %v5819 = vsub.f32 1.0, %v4268
      %v5820 = vsub.f32 1.0, %v4271
      %v5821 = vsub.f32 1.0, %v4274
      %v5822 = vsub.f32 1.0, %v4277
      %v5823 = vsub.f32 1.0, %v4280
      %v5824 = vsub.f32 1.0, %v4283
      %v5825 = vsub.f32 1.0, %v4286
      %v5826 = vsub.f32 1.0, %v4289
      %v5827 = vmax.f32 %v3908, 1e-24
      %v5828 = vmax.f32 %v3911, 1e-24
      %v5829 = vmax.f32 %v3914, 1e-24
      %v5830 = vmax.f32 %v3917, 1e-24
      %v5831 = vmax.f32 %v3920, 1e-24
      %v5832 = vmax.f32 %v3923, 1e-24
      %v5833 = vmax.f32 %v3926, 1e-24
      %v5834 = vmax.f32 %v3929, 1e-24
      %v5835 = vmax.f32 %v3932, 1e-24
      %v5836 = vmax.f32 %v3935, 1e-24
      %v5837 = vmax.f32 %v3938, 1e-24
      %v5838 = vmax.f32 %v3941, 1e-24
      %v5839 = vmax.f32 %v3944, 1e-24
      %v5840 = vmax.f32 %v3947, 1e-24
      %v5841 = vmax.f32 %v3950, 1e-24
      %v5842 = vmax.f32 %v3953, 1e-24
      %v5843 = vmax.f32 %v3956, 1e-24
      %v5844 = vmax.f32 %v3959, 1e-24
      %v5845 = vmax.f32 %v3962, 1e-24
      %v5846 = vmax.f32 %v3965, 1e-24
      %v5847 = vmax.f32 %v3968, 1e-24
      %v5848 = vmax.f32 %v3971, 1e-24
      %v5849 = vmax.f32 %v3974, 1e-24
      %v5850 = vmax.f32 %v3977, 1e-24
      %v5851 = vmax.f32 %v3980, 1e-24
      %v5852 = vmax.f32 %v3983, 1e-24
      %v5853 = vmax.f32 %v3986, 1e-24
      %v5854 = vmax.f32 %v3989, 1e-24
      %v5855 = vmax.f32 %v3992, 1e-24
      %v5856 = vmax.f32 %v3995, 1e-24
      %v5857 = vmax.f32 %v3998, 1e-24
      %v5858 = vmax.f32 %v4001, 1e-24
      %v5859 = vmax.f32 %v4004, 1e-24
      %v5860 = vmax.f32 %v4007, 1e-24
      %v5861 = vmax.f32 %v4010, 1e-24
      %v5862 = vmax.f32 %v4013, 1e-24
      %v5863 = vmax.f32 %v4016, 1e-24
      %v5864 = vmax.f32 %v4019, 1e-24
      %v5865 = vmax.f32 %v4022, 1e-24
      %v5866 = vmax.f32 %v4025, 1e-24
      %v5867 = vmax.f32 %v4028, 1e-24
      %v5868 = vmax.f32 %v4031, 1e-24
      %v5869 = vmax.f32 %v4034, 1e-24
      %v5870 = vmax.f32 %v4037, 1e-24
      %v5871 = vmax.f32 %v4040, 1e-24
      %v5872 = vmax.f32 %v4043, 1e-24
      %v5873 = vmax.f32 %v4046, 1e-24
      %v5874 = vmax.f32 %v4049, 1e-24
      %v5875 = vmax.f32 %v4052, 1e-24
      %v5876 = vmax.f32 %v4055, 1e-24
      %v5877 = vmax.f32 %v4058, 1e-24
      %v5878 = vmax.f32 %v4061, 1e-24
      %v5879 = vmax.f32 %v4064, 1e-24
      %v5880 = vmax.f32 %v4067, 1e-24
      %v5881 = vmax.f32 %v4070, 1e-24
      %v5882 = vmax.f32 %v4073, 1e-24
      %v5883 = vmax.f32 %v4076, 1e-24
      %v5884 = vmax.f32 %v4079, 1e-24
      %v5885 = vmax.f32 %v4082, 1e-24
      %v5886 = vmax.f32 %v4085, 1e-24
      %v5887 = vmax.f32 %v4088, 1e-24
      %v5888 = vmax.f32 %v4091, 1e-24
      %v5889 = vmax.f32 %v4094, 1e-24
      %v5890 = vmax.f32 %v4097, 1e-24
      %v5891 = vmax.f32 %v4100, 1e-24
      %v5892 = vmax.f32 %v4103, 1e-24
      %v5893 = vmax.f32 %v4106, 1e-24
      %v5894 = vmax.f32 %v4109, 1e-24
      %v5895 = vmax.f32 %v4112, 1e-24
      %v5896 = vmax.f32 %v4115, 1e-24
      %v5897 = vmax.f32 %v4118, 1e-24
      %v5898 = vmax.f32 %v4121, 1e-24
      %v5899 = vmax.f32 %v4124, 1e-24
      %v5900 = vmax.f32 %v4127, 1e-24
      %v5901 = vmax.f32 %v4130, 1e-24
      %v5902 = vmax.f32 %v4133, 1e-24
      %v5903 = vmax.f32 %v4136, 1e-24
      %v5904 = vmax.f32 %v4139, 1e-24
      %v5905 = vmax.f32 %v4142, 1e-24
      %v5906 = vmax.f32 %v4145, 1e-24
      %v5907 = vmax.f32 %v4148, 1e-24
      %v5908 = vmax.f32 %v4151, 1e-24
      %v5909 = vmax.f32 %v4154, 1e-24
      %v5910 = vmax.f32 %v4157, 1e-24
      %v5911 = vmax.f32 %v4160, 1e-24
      %v5912 = vmax.f32 %v4163, 1e-24
      %v5913 = vmax.f32 %v4166, 1e-24
      %v5914 = vmax.f32 %v4169, 1e-24
      %v5915 = vmax.f32 %v4172, 1e-24
      %v5916 = vmax.f32 %v4175, 1e-24
      %v5917 = vmax.f32 %v4178, 1e-24
      %v5918 = vmax.f32 %v4181, 1e-24
      %v5919 = vmax.f32 %v4184, 1e-24
      %v5920 = vmax.f32 %v4187, 1e-24
      %v5921 = vmax.f32 %v4190, 1e-24
      %v5922 = vmax.f32 %v4193, 1e-24
      %v5923 = vmax.f32 %v4196, 1e-24
      %v5924 = vmax.f32 %v4199, 1e-24
      %v5925 = vmax.f32 %v4202, 1e-24
      %v5926 = vmax.f32 %v4205, 1e-24
      %v5927 = vmax.f32 %v4208, 1e-24
      %v5928 = vmax.f32 %v4211, 1e-24
      %v5929 = vmax.f32 %v4214, 1e-24
      %v5930 = vmax.f32 %v4217, 1e-24
      %v5931 = vmax.f32 %v4220, 1e-24
      %v5932 = vmax.f32 %v4223, 1e-24
      %v5933 = vmax.f32 %v4226, 1e-24
      %v5934 = vmax.f32 %v4229, 1e-24
      %v5935 = vmax.f32 %v4232, 1e-24
      %v5936 = vmax.f32 %v4235, 1e-24
      %v5937 = vmax.f32 %v4238, 1e-24
      %v5938 = vmax.f32 %v4241, 1e-24
      %v5939 = vmax.f32 %v4244, 1e-24
      %v5940 = vmax.f32 %v4247, 1e-24
      %v5941 = vmax.f32 %v4250, 1e-24
      %v5942 = vmax.f32 %v4253, 1e-24
      %v5943 = vmax.f32 %v4256, 1e-24
      %v5944 = vmax.f32 %v4259, 1e-24
      %v5945 = vmax.f32 %v4262, 1e-24
      %v5946 = vmax.f32 %v4265, 1e-24
      %v5947 = vmax.f32 %v4268, 1e-24
      %v5948 = vmax.f32 %v4271, 1e-24
      %v5949 = vmax.f32 %v4274, 1e-24
      %v5950 = vmax.f32 %v4277, 1e-24
      %v5951 = vmax.f32 %v4280, 1e-24
      %v5952 = vmax.f32 %v4283, 1e-24
      %v5953 = vmax.f32 %v4286, 1e-24
      %v5954 = vmax.f32 %v4289, 1e-24
      %v5955 = vrsqrt.pop %v5827
      %v5956 = vmul.f32 %v5955, %v5827
      %v5957 = vmul.f32 %v5956, %v5955
      %v5958 = vmul.f32 0.5, %v5957
      %v5959 = vsub.f32 1.5, %v5958
      %v5960 = vmul.f32 %v5955, %v5959
      %vm5961 = vweird.f32 %v5827
      %vm5962 = vweird.f32 %v5955
      %vm5963 = vmor %vm5961, %vm5962
      %v5964 = vsel %vm5963, %v5955, %v5960
      %v5965 = vrsqrt.pop %v5828
      %v5966 = vmul.f32 %v5965, %v5828
      %v5967 = vmul.f32 %v5966, %v5965
      %v5968 = vmul.f32 0.5, %v5967
      %v5969 = vsub.f32 1.5, %v5968
      %v5970 = vmul.f32 %v5965, %v5969
      %vm5971 = vweird.f32 %v5828
      %vm5972 = vweird.f32 %v5965
      %vm5973 = vmor %vm5971, %vm5972
      %v5974 = vsel %vm5973, %v5965, %v5970
      %v5975 = vrsqrt.pop %v5829
      %v5976 = vmul.f32 %v5975, %v5829
      %v5977 = vmul.f32 %v5976, %v5975
      %v5978 = vmul.f32 0.5, %v5977
      %v5979 = vsub.f32 1.5, %v5978
      %v5980 = vmul.f32 %v5975, %v5979
      %vm5981 = vweird.f32 %v5829
      %vm5982 = vweird.f32 %v5975
      %vm5983 = vmor %vm5981, %vm5982
      %v5984 = vsel %vm5983, %v5975, %v5980
      %v5985 = vrsqrt.pop %v5830
      %v5986 = vmul.f32 %v5985, %v5830
      %v5987 = vmul.f32 %v5986, %v5985
      %v5988 = vmul.f32 0.5, %v5987
      %v5989 = vsub.f32 1.5, %v5988
      %v5990 = vmul.f32 %v5985, %v5989
      %vm5991 = vweird.f32 %v5830
      %vm5992 = vweird.f32 %v5985
      %vm5993 = vmor %vm5991, %vm5992
      %v5994 = vsel %vm5993, %v5985, %v5990
      %v5995 = vrsqrt.pop %v5831
      %v5996 = vmul.f32 %v5995, %v5831
      %v5997 = vmul.f32 %v5996, %v5995
      %v5998 = vmul.f32 0.5, %v5997
      %v5999 = vsub.f32 1.5, %v5998
      %v6000 = vmul.f32 %v5995, %v5999
      %vm6001 = vweird.f32 %v5831
      %vm6002 = vweird.f32 %v5995
      %vm6003 = vmor %vm6001, %vm6002
      %v6004 = vsel %vm6003, %v5995, %v6000
      %v6005 = vrsqrt.pop %v5832
      %v6006 = vmul.f32 %v6005, %v5832
      %v6007 = vmul.f32 %v6006, %v6005
      %v6008 = vmul.f32 0.5, %v6007
      %v6009 = vsub.f32 1.5, %v6008
      %v6010 = vmul.f32 %v6005, %v6009
      %vm6011 = vweird.f32 %v5832
      %vm6012 = vweird.f32 %v6005
      %vm6013 = vmor %vm6011, %vm6012
      %v6014 = vsel %vm6013, %v6005, %v6010
      %v6015 = vrsqrt.pop %v5833
      %v6016 = vmul.f32 %v6015, %v5833
      %v6017 = vmul.f32 %v6016, %v6015
      %v6018 = vmul.f32 0.5, %v6017
      %v6019 = vsub.f32 1.5, %v6018
      %v6020 = vmul.f32 %v6015, %v6019
      %vm6021 = vweird.f32 %v5833
      %vm6022 = vweird.f32 %v6015
      %vm6023 = vmor %vm6021, %vm6022
      %v6024 = vsel %vm6023, %v6015, %v6020
      %v6025 = vrsqrt.pop %v5834
      %v6026 = vmul.f32 %v6025, %v5834
      %v6027 = vmul.f32 %v6026, %v6025
      %v6028 = vmul.f32 0.5, %v6027
      %v6029 = vsub.f32 1.5, %v6028
      %v6030 = vmul.f32 %v6025, %v6029
      %vm6031 = vweird.f32 %v5834
      %vm6032 = vweird.f32 %v6025
      %vm6033 = vmor %vm6031, %vm6032
      %v6034 = vsel %vm6033, %v6025, %v6030
      %v6035 = vrsqrt.pop %v5835
      %v6036 = vmul.f32 %v6035, %v5835
      %v6037 = vmul.f32 %v6036, %v6035
      %v6038 = vmul.f32 0.5, %v6037
      %v6039 = vsub.f32 1.5, %v6038
      %v6040 = vmul.f32 %v6035, %v6039
      %vm6041 = vweird.f32 %v5835
      %vm6042 = vweird.f32 %v6035
      %vm6043 = vmor %vm6041, %vm6042
      %v6044 = vsel %vm6043, %v6035, %v6040
      %v6045 = vrsqrt.pop %v5836
      %v6046 = vmul.f32 %v6045, %v5836
      %v6047 = vmul.f32 %v6046, %v6045
      %v6048 = vmul.f32 0.5, %v6047
      %v6049 = vsub.f32 1.5, %v6048
      %v6050 = vmul.f32 %v6045, %v6049
      %vm6051 = vweird.f32 %v5836
      %vm6052 = vweird.f32 %v6045
      %vm6053 = vmor %vm6051, %vm6052
      %v6054 = vsel %vm6053, %v6045, %v6050
      %v6055 = vrsqrt.pop %v5837
      %v6056 = vmul.f32 %v6055, %v5837
      %v6057 = vmul.f32 %v6056, %v6055
      %v6058 = vmul.f32 0.5, %v6057
      %v6059 = vsub.f32 1.5, %v6058
      %v6060 = vmul.f32 %v6055, %v6059
      %vm6061 = vweird.f32 %v5837
      %vm6062 = vweird.f32 %v6055
      %vm6063 = vmor %vm6061, %vm6062
      %v6064 = vsel %vm6063, %v6055, %v6060
      %v6065 = vrsqrt.pop %v5838
      %v6066 = vmul.f32 %v6065, %v5838
      %v6067 = vmul.f32 %v6066, %v6065
      %v6068 = vmul.f32 0.5, %v6067
      %v6069 = vsub.f32 1.5, %v6068
      %v6070 = vmul.f32 %v6065, %v6069
      %vm6071 = vweird.f32 %v5838
      %vm6072 = vweird.f32 %v6065
      %vm6073 = vmor %vm6071, %vm6072
      %v6074 = vsel %vm6073, %v6065, %v6070
      %v6075 = vrsqrt.pop %v5839
      %v6076 = vmul.f32 %v6075, %v5839
      %v6077 = vmul.f32 %v6076, %v6075
      %v6078 = vmul.f32 0.5, %v6077
      %v6079 = vsub.f32 1.5, %v6078
      %v6080 = vmul.f32 %v6075, %v6079
      %vm6081 = vweird.f32 %v5839
      %vm6082 = vweird.f32 %v6075
      %vm6083 = vmor %vm6081, %vm6082
      %v6084 = vsel %vm6083, %v6075, %v6080
      %v6085 = vrsqrt.pop %v5840
      %v6086 = vmul.f32 %v6085, %v5840
      %v6087 = vmul.f32 %v6086, %v6085
      %v6088 = vmul.f32 0.5, %v6087
      %v6089 = vsub.f32 1.5, %v6088
      %v6090 = vmul.f32 %v6085, %v6089
      %vm6091 = vweird.f32 %v5840
      %vm6092 = vweird.f32 %v6085
      %vm6093 = vmor %vm6091, %vm6092
      %v6094 = vsel %vm6093, %v6085, %v6090
      %v6095 = vrsqrt.pop %v5841
      %v6096 = vmul.f32 %v6095, %v5841
      %v6097 = vmul.f32 %v6096, %v6095
      %v6098 = vmul.f32 0.5, %v6097
      %v6099 = vsub.f32 1.5, %v6098
      %v6100 = vmul.f32 %v6095, %v6099
      %vm6101 = vweird.f32 %v5841
      %vm6102 = vweird.f32 %v6095
      %vm6103 = vmor %vm6101, %vm6102
      %v6104 = vsel %vm6103, %v6095, %v6100
      %v6105 = vrsqrt.pop %v5842
      %v6106 = vmul.f32 %v6105, %v5842
      %v6107 = vmul.f32 %v6106, %v6105
      %v6108 = vmul.f32 0.5, %v6107
      %v6109 = vsub.f32 1.5, %v6108
      %v6110 = vmul.f32 %v6105, %v6109
      %vm6111 = vweird.f32 %v5842
      %vm6112 = vweird.f32 %v6105
      %vm6113 = vmor %vm6111, %vm6112
      %v6114 = vsel %vm6113, %v6105, %v6110
      %v6115 = vrsqrt.pop %v5843
      %v6116 = vmul.f32 %v6115, %v5843
      %v6117 = vmul.f32 %v6116, %v6115
      %v6118 = vmul.f32 0.5, %v6117
      %v6119 = vsub.f32 1.5, %v6118
      %v6120 = vmul.f32 %v6115, %v6119
      %vm6121 = vweird.f32 %v5843
      %vm6122 = vweird.f32 %v6115
      %vm6123 = vmor %vm6121, %vm6122
      %v6124 = vsel %vm6123, %v6115, %v6120
      %v6125 = vrsqrt.pop %v5844
      %v6126 = vmul.f32 %v6125, %v5844
      %v6127 = vmul.f32 %v6126, %v6125
      %v6128 = vmul.f32 0.5, %v6127
      %v6129 = vsub.f32 1.5, %v6128
      %v6130 = vmul.f32 %v6125, %v6129
      %vm6131 = vweird.f32 %v5844
      %vm6132 = vweird.f32 %v6125
      %vm6133 = vmor %vm6131, %vm6132
      %v6134 = vsel %vm6133, %v6125, %v6130
      %v6135 = vrsqrt.pop %v5845
      %v6136 = vmul.f32 %v6135, %v5845
      %v6137 = vmul.f32 %v6136, %v6135
      %v6138 = vmul.f32 0.5, %v6137
      %v6139 = vsub.f32 1.5, %v6138
      %v6140 = vmul.f32 %v6135, %v6139
      %vm6141 = vweird.f32 %v5845
      %vm6142 = vweird.f32 %v6135
      %vm6143 = vmor %vm6141, %vm6142
      %v6144 = vsel %vm6143, %v6135, %v6140
      %v6145 = vrsqrt.pop %v5846
      %v6146 = vmul.f32 %v6145, %v5846
      %v6147 = vmul.f32 %v6146, %v6145
      %v6148 = vmul.f32 0.5, %v6147
      %v6149 = vsub.f32 1.5, %v6148
      %v6150 = vmul.f32 %v6145, %v6149
      %vm6151 = vweird.f32 %v5846
      %vm6152 = vweird.f32 %v6145
      %vm6153 = vmor %vm6151, %vm6152
      %v6154 = vsel %vm6153, %v6145, %v6150
      %v6155 = vrsqrt.pop %v5847
      %v6156 = vmul.f32 %v6155, %v5847
      %v6157 = vmul.f32 %v6156, %v6155
      %v6158 = vmul.f32 0.5, %v6157
      %v6159 = vsub.f32 1.5, %v6158
      %v6160 = vmul.f32 %v6155, %v6159
      %vm6161 = vweird.f32 %v5847
      %vm6162 = vweird.f32 %v6155
      %vm6163 = vmor %vm6161, %vm6162
      %v6164 = vsel %vm6163, %v6155, %v6160
      %v6165 = vrsqrt.pop %v5848
      %v6166 = vmul.f32 %v6165, %v5848
      %v6167 = vmul.f32 %v6166, %v6165
      %v6168 = vmul.f32 0.5, %v6167
      %v6169 = vsub.f32 1.5, %v6168
      %v6170 = vmul.f32 %v6165, %v6169
      %vm6171 = vweird.f32 %v5848
      %vm6172 = vweird.f32 %v6165
      %vm6173 = vmor %vm6171, %vm6172
      %v6174 = vsel %vm6173, %v6165, %v6170
      %v6175 = vrsqrt.pop %v5849
      %v6176 = vmul.f32 %v6175, %v5849
      %v6177 = vmul.f32 %v6176, %v6175
      %v6178 = vmul.f32 0.5, %v6177
      %v6179 = vsub.f32 1.5, %v6178
      %v6180 = vmul.f32 %v6175, %v6179
      %vm6181 = vweird.f32 %v5849
      %vm6182 = vweird.f32 %v6175
      %vm6183 = vmor %vm6181, %vm6182
      %v6184 = vsel %vm6183, %v6175, %v6180
      %v6185 = vrsqrt.pop %v5850
      %v6186 = vmul.f32 %v6185, %v5850
      %v6187 = vmul.f32 %v6186, %v6185
      %v6188 = vmul.f32 0.5, %v6187
      %v6189 = vsub.f32 1.5, %v6188
      %v6190 = vmul.f32 %v6185, %v6189
      %vm6191 = vweird.f32 %v5850
      %vm6192 = vweird.f32 %v6185
      %vm6193 = vmor %vm6191, %vm6192
      %v6194 = vsel %vm6193, %v6185, %v6190
      %v6195 = vrsqrt.pop %v5851
      %v6196 = vmul.f32 %v6195, %v5851
      %v6197 = vmul.f32 %v6196, %v6195
      %v6198 = vmul.f32 0.5, %v6197
      %v6199 = vsub.f32 1.5, %v6198
      %v6200 = vmul.f32 %v6195, %v6199
      %vm6201 = vweird.f32 %v5851
      %vm6202 = vweird.f32 %v6195
      %vm6203 = vmor %vm6201, %vm6202
      %v6204 = vsel %vm6203, %v6195, %v6200
      %v6205 = vrsqrt.pop %v5852
      %v6206 = vmul.f32 %v6205, %v5852
      %v6207 = vmul.f32 %v6206, %v6205
      %v6208 = vmul.f32 0.5, %v6207
      %v6209 = vsub.f32 1.5, %v6208
      %v6210 = vmul.f32 %v6205, %v6209
      %vm6211 = vweird.f32 %v5852
      %vm6212 = vweird.f32 %v6205
      %vm6213 = vmor %vm6211, %vm6212
      %v6214 = vsel %vm6213, %v6205, %v6210
      %v6215 = vrsqrt.pop %v5853
      %v6216 = vmul.f32 %v6215, %v5853
      %v6217 = vmul.f32 %v6216, %v6215
      %v6218 = vmul.f32 0.5, %v6217
      %v6219 = vsub.f32 1.5, %v6218
      %v6220 = vmul.f32 %v6215, %v6219
      %vm6221 = vweird.f32 %v5853
      %vm6222 = vweird.f32 %v6215
      %vm6223 = vmor %vm6221, %vm6222
      %v6224 = vsel %vm6223, %v6215, %v6220
      %v6225 = vrsqrt.pop %v5854
      %v6226 = vmul.f32 %v6225, %v5854
      %v6227 = vmul.f32 %v6226, %v6225
      %v6228 = vmul.f32 0.5, %v6227
      %v6229 = vsub.f32 1.5, %v6228
      %v6230 = vmul.f32 %v6225, %v6229
      %vm6231 = vweird.f32 %v5854
      %vm6232 = vweird.f32 %v6225
      %vm6233 = vmor %vm6231, %vm6232
      %v6234 = vsel %vm6233, %v6225, %v6230
      %v6235 = vrsqrt.pop %v5855
      %v6236 = vmul.f32 %v6235, %v5855
      %v6237 = vmul.f32 %v6236, %v6235
      %v6238 = vmul.f32 0.5, %v6237
      %v6239 = vsub.f32 1.5, %v6238
      %v6240 = vmul.f32 %v6235, %v6239
      %vm6241 = vweird.f32 %v5855
      %vm6242 = vweird.f32 %v6235
      %vm6243 = vmor %vm6241, %vm6242
      %v6244 = vsel %vm6243, %v6235, %v6240
      %v6245 = vrsqrt.pop %v5856
      %v6246 = vmul.f32 %v6245, %v5856
      %v6247 = vmul.f32 %v6246, %v6245
      %v6248 = vmul.f32 0.5, %v6247
      %v6249 = vsub.f32 1.5, %v6248
      %v6250 = vmul.f32 %v6245, %v6249
      %vm6251 = vweird.f32 %v5856
      %vm6252 = vweird.f32 %v6245
      %vm6253 = vmor %vm6251, %vm6252
      %v6254 = vsel %vm6253, %v6245, %v6250
      %v6255 = vrsqrt.pop %v5857
      %v6256 = vmul.f32 %v6255, %v5857
      %v6257 = vmul.f32 %v6256, %v6255
      %v6258 = vmul.f32 0.5, %v6257
      %v6259 = vsub.f32 1.5, %v6258
      %v6260 = vmul.f32 %v6255, %v6259
      %vm6261 = vweird.f32 %v5857
      %vm6262 = vweird.f32 %v6255
      %vm6263 = vmor %vm6261, %vm6262
      %v6264 = vsel %vm6263, %v6255, %v6260
      %v6265 = vrsqrt.pop %v5858
      %v6266 = vmul.f32 %v6265, %v5858
      %v6267 = vmul.f32 %v6266, %v6265
      %v6268 = vmul.f32 0.5, %v6267
      %v6269 = vsub.f32 1.5, %v6268
      %v6270 = vmul.f32 %v6265, %v6269
      %vm6271 = vweird.f32 %v5858
      %vm6272 = vweird.f32 %v6265
      %vm6273 = vmor %vm6271, %vm6272
      %v6274 = vsel %vm6273, %v6265, %v6270
      %v6275 = vrsqrt.pop %v5859
      %v6276 = vmul.f32 %v6275, %v5859
      %v6277 = vmul.f32 %v6276, %v6275
      %v6278 = vmul.f32 0.5, %v6277
      %v6279 = vsub.f32 1.5, %v6278
      %v6280 = vmul.f32 %v6275, %v6279
      %vm6281 = vweird.f32 %v5859
      %vm6282 = vweird.f32 %v6275
      %vm6283 = vmor %vm6281, %vm6282
      %v6284 = vsel %vm6283, %v6275, %v6280
      %v6285 = vrsqrt.pop %v5860
      %v6286 = vmul.f32 %v6285, %v5860
      %v6287 = vmul.f32 %v6286, %v6285
      %v6288 = vmul.f32 0.5, %v6287
      %v6289 = vsub.f32 1.5, %v6288
      %v6290 = vmul.f32 %v6285, %v6289
      %vm6291 = vweird.f32 %v5860
      %vm6292 = vweird.f32 %v6285
      %vm6293 = vmor %vm6291, %vm6292
      %v6294 = vsel %vm6293, %v6285, %v6290
      %v6295 = vrsqrt.pop %v5861
      %v6296 = vmul.f32 %v6295, %v5861
      %v6297 = vmul.f32 %v6296, %v6295
      %v6298 = vmul.f32 0.5, %v6297
      %v6299 = vsub.f32 1.5, %v6298
      %v6300 = vmul.f32 %v6295, %v6299
      %vm6301 = vweird.f32 %v5861
      %vm6302 = vweird.f32 %v6295
      %vm6303 = vmor %vm6301, %vm6302
      %v6304 = vsel %vm6303, %v6295, %v6300
      %v6305 = vrsqrt.pop %v5862
      %v6306 = vmul.f32 %v6305, %v5862
      %v6307 = vmul.f32 %v6306, %v6305
      %v6308 = vmul.f32 0.5, %v6307
      %v6309 = vsub.f32 1.5, %v6308
      %v6310 = vmul.f32 %v6305, %v6309
      %vm6311 = vweird.f32 %v5862
      %vm6312 = vweird.f32 %v6305
      %vm6313 = vmor %vm6311, %vm6312
      %v6314 = vsel %vm6313, %v6305, %v6310
      %v6315 = vrsqrt.pop %v5863
      %v6316 = vmul.f32 %v6315, %v5863
      %v6317 = vmul.f32 %v6316, %v6315
      %v6318 = vmul.f32 0.5, %v6317
      %v6319 = vsub.f32 1.5, %v6318
      %v6320 = vmul.f32 %v6315, %v6319
      %vm6321 = vweird.f32 %v5863
      %vm6322 = vweird.f32 %v6315
      %vm6323 = vmor %vm6321, %vm6322
      %v6324 = vsel %vm6323, %v6315, %v6320
      %v6325 = vrsqrt.pop %v5864
      %v6326 = vmul.f32 %v6325, %v5864
      %v6327 = vmul.f32 %v6326, %v6325
      %v6328 = vmul.f32 0.5, %v6327
      %v6329 = vsub.f32 1.5, %v6328
      %v6330 = vmul.f32 %v6325, %v6329
      %vm6331 = vweird.f32 %v5864
      %vm6332 = vweird.f32 %v6325
      %vm6333 = vmor %vm6331, %vm6332
      %v6334 = vsel %vm6333, %v6325, %v6330
      %v6335 = vrsqrt.pop %v5865
      %v6336 = vmul.f32 %v6335, %v5865
      %v6337 = vmul.f32 %v6336, %v6335
      %v6338 = vmul.f32 0.5, %v6337
      %v6339 = vsub.f32 1.5, %v6338
      %v6340 = vmul.f32 %v6335, %v6339
      %vm6341 = vweird.f32 %v5865
      %vm6342 = vweird.f32 %v6335
      %vm6343 = vmor %vm6341, %vm6342
      %v6344 = vsel %vm6343, %v6335, %v6340
      %v6345 = vrsqrt.pop %v5866
      %v6346 = vmul.f32 %v6345, %v5866
      %v6347 = vmul.f32 %v6346, %v6345
      %v6348 = vmul.f32 0.5, %v6347
      %v6349 = vsub.f32 1.5, %v6348
      %v6350 = vmul.f32 %v6345, %v6349
      %vm6351 = vweird.f32 %v5866
      %vm6352 = vweird.f32 %v6345
      %vm6353 = vmor %vm6351, %vm6352
      %v6354 = vsel %vm6353, %v6345, %v6350
      %v6355 = vrsqrt.pop %v5867
      %v6356 = vmul.f32 %v6355, %v5867
      %v6357 = vmul.f32 %v6356, %v6355
      %v6358 = vmul.f32 0.5, %v6357
      %v6359 = vsub.f32 1.5, %v6358
      %v6360 = vmul.f32 %v6355, %v6359
      %vm6361 = vweird.f32 %v5867
      %vm6362 = vweird.f32 %v6355
      %vm6363 = vmor %vm6361, %vm6362
      %v6364 = vsel %vm6363, %v6355, %v6360
      %v6365 = vrsqrt.pop %v5868
      %v6366 = vmul.f32 %v6365, %v5868
      %v6367 = vmul.f32 %v6366, %v6365
      %v6368 = vmul.f32 0.5, %v6367
      %v6369 = vsub.f32 1.5, %v6368
      %v6370 = vmul.f32 %v6365, %v6369
      %vm6371 = vweird.f32 %v5868
      %vm6372 = vweird.f32 %v6365
      %vm6373 = vmor %vm6371, %vm6372
      %v6374 = vsel %vm6373, %v6365, %v6370
      %v6375 = vrsqrt.pop %v5869
      %v6376 = vmul.f32 %v6375, %v5869
      %v6377 = vmul.f32 %v6376, %v6375
      %v6378 = vmul.f32 0.5, %v6377
      %v6379 = vsub.f32 1.5, %v6378
      %v6380 = vmul.f32 %v6375, %v6379
      %vm6381 = vweird.f32 %v5869
      %vm6382 = vweird.f32 %v6375
      %vm6383 = vmor %vm6381, %vm6382
      %v6384 = vsel %vm6383, %v6375, %v6380
      %v6385 = vrsqrt.pop %v5870
      %v6386 = vmul.f32 %v6385, %v5870
      %v6387 = vmul.f32 %v6386, %v6385
      %v6388 = vmul.f32 0.5, %v6387
      %v6389 = vsub.f32 1.5, %v6388
      %v6390 = vmul.f32 %v6385, %v6389
      %vm6391 = vweird.f32 %v5870
      %vm6392 = vweird.f32 %v6385
      %vm6393 = vmor %vm6391, %vm6392
      %v6394 = vsel %vm6393, %v6385, %v6390
      %v6395 = vrsqrt.pop %v5871
      %v6396 = vmul.f32 %v6395, %v5871
      %v6397 = vmul.f32 %v6396, %v6395
      %v6398 = vmul.f32 0.5, %v6397
      %v6399 = vsub.f32 1.5, %v6398
      %v6400 = vmul.f32 %v6395, %v6399
      %vm6401 = vweird.f32 %v5871
      %vm6402 = vweird.f32 %v6395
      %vm6403 = vmor %vm6401, %vm6402
      %v6404 = vsel %vm6403, %v6395, %v6400
      %v6405 = vrsqrt.pop %v5872
      %v6406 = vmul.f32 %v6405, %v5872
      %v6407 = vmul.f32 %v6406, %v6405
      %v6408 = vmul.f32 0.5, %v6407
      %v6409 = vsub.f32 1.5, %v6408
      %v6410 = vmul.f32 %v6405, %v6409
      %vm6411 = vweird.f32 %v5872
      %vm6412 = vweird.f32 %v6405
      %vm6413 = vmor %vm6411, %vm6412
      %v6414 = vsel %vm6413, %v6405, %v6410
      %v6415 = vrsqrt.pop %v5873
      %v6416 = vmul.f32 %v6415, %v5873
      %v6417 = vmul.f32 %v6416, %v6415
      %v6418 = vmul.f32 0.5, %v6417
      %v6419 = vsub.f32 1.5, %v6418
      %v6420 = vmul.f32 %v6415, %v6419
      %vm6421 = vweird.f32 %v5873
      %vm6422 = vweird.f32 %v6415
      %vm6423 = vmor %vm6421, %vm6422
      %v6424 = vsel %vm6423, %v6415, %v6420
      %v6425 = vrsqrt.pop %v5874
      %v6426 = vmul.f32 %v6425, %v5874
      %v6427 = vmul.f32 %v6426, %v6425
      %v6428 = vmul.f32 0.5, %v6427
      %v6429 = vsub.f32 1.5, %v6428
      %v6430 = vmul.f32 %v6425, %v6429
      %vm6431 = vweird.f32 %v5874
      %vm6432 = vweird.f32 %v6425
      %vm6433 = vmor %vm6431, %vm6432
      %v6434 = vsel %vm6433, %v6425, %v6430
      %v6435 = vrsqrt.pop %v5875
      %v6436 = vmul.f32 %v6435, %v5875
      %v6437 = vmul.f32 %v6436, %v6435
      %v6438 = vmul.f32 0.5, %v6437
      %v6439 = vsub.f32 1.5, %v6438
      %v6440 = vmul.f32 %v6435, %v6439
      %vm6441 = vweird.f32 %v5875
      %vm6442 = vweird.f32 %v6435
      %vm6443 = vmor %vm6441, %vm6442
      %v6444 = vsel %vm6443, %v6435, %v6440
      %v6445 = vrsqrt.pop %v5876
      %v6446 = vmul.f32 %v6445, %v5876
      %v6447 = vmul.f32 %v6446, %v6445
      %v6448 = vmul.f32 0.5, %v6447
      %v6449 = vsub.f32 1.5, %v6448
      %v6450 = vmul.f32 %v6445, %v6449
      %vm6451 = vweird.f32 %v5876
      %vm6452 = vweird.f32 %v6445
      %vm6453 = vmor %vm6451, %vm6452
      %v6454 = vsel %vm6453, %v6445, %v6450
      %v6455 = vrsqrt.pop %v5877
      %v6456 = vmul.f32 %v6455, %v5877
      %v6457 = vmul.f32 %v6456, %v6455
      %v6458 = vmul.f32 0.5, %v6457
      %v6459 = vsub.f32 1.5, %v6458
      %v6460 = vmul.f32 %v6455, %v6459
      %vm6461 = vweird.f32 %v5877
      %vm6462 = vweird.f32 %v6455
      %vm6463 = vmor %vm6461, %vm6462
      %v6464 = vsel %vm6463, %v6455, %v6460
      %v6465 = vrsqrt.pop %v5878
      %v6466 = vmul.f32 %v6465, %v5878
      %v6467 = vmul.f32 %v6466, %v6465
      %v6468 = vmul.f32 0.5, %v6467
      %v6469 = vsub.f32 1.5, %v6468
      %v6470 = vmul.f32 %v6465, %v6469
      %vm6471 = vweird.f32 %v5878
      %vm6472 = vweird.f32 %v6465
      %vm6473 = vmor %vm6471, %vm6472
      %v6474 = vsel %vm6473, %v6465, %v6470
      %v6475 = vrsqrt.pop %v5879
      %v6476 = vmul.f32 %v6475, %v5879
      %v6477 = vmul.f32 %v6476, %v6475
      %v6478 = vmul.f32 0.5, %v6477
      %v6479 = vsub.f32 1.5, %v6478
      %v6480 = vmul.f32 %v6475, %v6479
      %vm6481 = vweird.f32 %v5879
      %vm6482 = vweird.f32 %v6475
      %vm6483 = vmor %vm6481, %vm6482
      %v6484 = vsel %vm6483, %v6475, %v6480
      %v6485 = vrsqrt.pop %v5880
      %v6486 = vmul.f32 %v6485, %v5880
      %v6487 = vmul.f32 %v6486, %v6485
      %v6488 = vmul.f32 0.5, %v6487
      %v6489 = vsub.f32 1.5, %v6488
      %v6490 = vmul.f32 %v6485, %v6489
      %vm6491 = vweird.f32 %v5880
      %vm6492 = vweird.f32 %v6485
      %vm6493 = vmor %vm6491, %vm6492
      %v6494 = vsel %vm6493, %v6485, %v6490
      %v6495 = vrsqrt.pop %v5881
      %v6496 = vmul.f32 %v6495, %v5881
      %v6497 = vmul.f32 %v6496, %v6495
      %v6498 = vmul.f32 0.5, %v6497
      %v6499 = vsub.f32 1.5, %v6498
      %v6500 = vmul.f32 %v6495, %v6499
      %vm6501 = vweird.f32 %v5881
      %vm6502 = vweird.f32 %v6495
      %vm6503 = vmor %vm6501, %vm6502
      %v6504 = vsel %vm6503, %v6495, %v6500
      %v6505 = vrsqrt.pop %v5882
      %v6506 = vmul.f32 %v6505, %v5882
      %v6507 = vmul.f32 %v6506, %v6505
      %v6508 = vmul.f32 0.5, %v6507
      %v6509 = vsub.f32 1.5, %v6508
      %v6510 = vmul.f32 %v6505, %v6509
      %vm6511 = vweird.f32 %v5882
      %vm6512 = vweird.f32 %v6505
      %vm6513 = vmor %vm6511, %vm6512
      %v6514 = vsel %vm6513, %v6505, %v6510
      %v6515 = vrsqrt.pop %v5883
      %v6516 = vmul.f32 %v6515, %v5883
      %v6517 = vmul.f32 %v6516, %v6515
      %v6518 = vmul.f32 0.5, %v6517
      %v6519 = vsub.f32 1.5, %v6518
      %v6520 = vmul.f32 %v6515, %v6519
      %vm6521 = vweird.f32 %v5883
      %vm6522 = vweird.f32 %v6515
      %vm6523 = vmor %vm6521, %vm6522
      %v6524 = vsel %vm6523, %v6515, %v6520
      %v6525 = vrsqrt.pop %v5884
      %v6526 = vmul.f32 %v6525, %v5884
      %v6527 = vmul.f32 %v6526, %v6525
      %v6528 = vmul.f32 0.5, %v6527
      %v6529 = vsub.f32 1.5, %v6528
      %v6530 = vmul.f32 %v6525, %v6529
      %vm6531 = vweird.f32 %v5884
      %vm6532 = vweird.f32 %v6525
      %vm6533 = vmor %vm6531, %vm6532
      %v6534 = vsel %vm6533, %v6525, %v6530
      %v6535 = vrsqrt.pop %v5885
      %v6536 = vmul.f32 %v6535, %v5885
      %v6537 = vmul.f32 %v6536, %v6535
      %v6538 = vmul.f32 0.5, %v6537
      %v6539 = vsub.f32 1.5, %v6538
      %v6540 = vmul.f32 %v6535, %v6539
      %vm6541 = vweird.f32 %v5885
      %vm6542 = vweird.f32 %v6535
      %vm6543 = vmor %vm6541, %vm6542
      %v6544 = vsel %vm6543, %v6535, %v6540
      %v6545 = vrsqrt.pop %v5886
      %v6546 = vmul.f32 %v6545, %v5886
      %v6547 = vmul.f32 %v6546, %v6545
      %v6548 = vmul.f32 0.5, %v6547
      %v6549 = vsub.f32 1.5, %v6548
      %v6550 = vmul.f32 %v6545, %v6549
      %vm6551 = vweird.f32 %v5886
      %vm6552 = vweird.f32 %v6545
      %vm6553 = vmor %vm6551, %vm6552
      %v6554 = vsel %vm6553, %v6545, %v6550
      %v6555 = vrsqrt.pop %v5887
      %v6556 = vmul.f32 %v6555, %v5887
      %v6557 = vmul.f32 %v6556, %v6555
      %v6558 = vmul.f32 0.5, %v6557
      %v6559 = vsub.f32 1.5, %v6558
      %v6560 = vmul.f32 %v6555, %v6559
      %vm6561 = vweird.f32 %v5887
      %vm6562 = vweird.f32 %v6555
      %vm6563 = vmor %vm6561, %vm6562
      %v6564 = vsel %vm6563, %v6555, %v6560
      %v6565 = vrsqrt.pop %v5888
      %v6566 = vmul.f32 %v6565, %v5888
      %v6567 = vmul.f32 %v6566, %v6565
      %v6568 = vmul.f32 0.5, %v6567
      %v6569 = vsub.f32 1.5, %v6568
      %v6570 = vmul.f32 %v6565, %v6569
      %vm6571 = vweird.f32 %v5888
      %vm6572 = vweird.f32 %v6565
      %vm6573 = vmor %vm6571, %vm6572
      %v6574 = vsel %vm6573, %v6565, %v6570
      %v6575 = vrsqrt.pop %v5889
      %v6576 = vmul.f32 %v6575, %v5889
      %v6577 = vmul.f32 %v6576, %v6575
      %v6578 = vmul.f32 0.5, %v6577
      %v6579 = vsub.f32 1.5, %v6578
      %v6580 = vmul.f32 %v6575, %v6579
      %vm6581 = vweird.f32 %v5889
      %vm6582 = vweird.f32 %v6575
      %vm6583 = vmor %vm6581, %vm6582
      %v6584 = vsel %vm6583, %v6575, %v6580
      %v6585 = vrsqrt.pop %v5890
      %v6586 = vmul.f32 %v6585, %v5890
      %v6587 = vmul.f32 %v6586, %v6585
      %v6588 = vmul.f32 0.5, %v6587
      %v6589 = vsub.f32 1.5, %v6588
      %v6590 = vmul.f32 %v6585, %v6589
      %vm6591 = vweird.f32 %v5890
      %vm6592 = vweird.f32 %v6585
      %vm6593 = vmor %vm6591, %vm6592
      %v6594 = vsel %vm6593, %v6585, %v6590
      %v6595 = vrsqrt.pop %v5891
      %v6596 = vmul.f32 %v6595, %v5891
      %v6597 = vmul.f32 %v6596, %v6595
      %v6598 = vmul.f32 0.5, %v6597
      %v6599 = vsub.f32 1.5, %v6598
      %v6600 = vmul.f32 %v6595, %v6599
      %vm6601 = vweird.f32 %v5891
      %vm6602 = vweird.f32 %v6595
      %vm6603 = vmor %vm6601, %vm6602
      %v6604 = vsel %vm6603, %v6595, %v6600
      %v6605 = vrsqrt.pop %v5892
      %v6606 = vmul.f32 %v6605, %v5892
      %v6607 = vmul.f32 %v6606, %v6605
      %v6608 = vmul.f32 0.5, %v6607
      %v6609 = vsub.f32 1.5, %v6608
      %v6610 = vmul.f32 %v6605, %v6609
      %vm6611 = vweird.f32 %v5892
      %vm6612 = vweird.f32 %v6605
      %vm6613 = vmor %vm6611, %vm6612
      %v6614 = vsel %vm6613, %v6605, %v6610
      %v6615 = vrsqrt.pop %v5893
      %v6616 = vmul.f32 %v6615, %v5893
      %v6617 = vmul.f32 %v6616, %v6615
      %v6618 = vmul.f32 0.5, %v6617
      %v6619 = vsub.f32 1.5, %v6618
      %v6620 = vmul.f32 %v6615, %v6619
      %vm6621 = vweird.f32 %v5893
      %vm6622 = vweird.f32 %v6615
      %vm6623 = vmor %vm6621, %vm6622
      %v6624 = vsel %vm6623, %v6615, %v6620
      %v6625 = vrsqrt.pop %v5894
      %v6626 = vmul.f32 %v6625, %v5894
      %v6627 = vmul.f32 %v6626, %v6625
      %v6628 = vmul.f32 0.5, %v6627
      %v6629 = vsub.f32 1.5, %v6628
      %v6630 = vmul.f32 %v6625, %v6629
      %vm6631 = vweird.f32 %v5894
      %vm6632 = vweird.f32 %v6625
      %vm6633 = vmor %vm6631, %vm6632
      %v6634 = vsel %vm6633, %v6625, %v6630
      %v6635 = vrsqrt.pop %v5895
      %v6636 = vmul.f32 %v6635, %v5895
      %v6637 = vmul.f32 %v6636, %v6635
      %v6638 = vmul.f32 0.5, %v6637
      %v6639 = vsub.f32 1.5, %v6638
      %v6640 = vmul.f32 %v6635, %v6639
      %vm6641 = vweird.f32 %v5895
      %vm6642 = vweird.f32 %v6635
      %vm6643 = vmor %vm6641, %vm6642
      %v6644 = vsel %vm6643, %v6635, %v6640
      %v6645 = vrsqrt.pop %v5896
      %v6646 = vmul.f32 %v6645, %v5896
      %v6647 = vmul.f32 %v6646, %v6645
      %v6648 = vmul.f32 0.5, %v6647
      %v6649 = vsub.f32 1.5, %v6648
      %v6650 = vmul.f32 %v6645, %v6649
      %vm6651 = vweird.f32 %v5896
      %vm6652 = vweird.f32 %v6645
      %vm6653 = vmor %vm6651, %vm6652
      %v6654 = vsel %vm6653, %v6645, %v6650
      %v6655 = vrsqrt.pop %v5897
      %v6656 = vmul.f32 %v6655, %v5897
      %v6657 = vmul.f32 %v6656, %v6655
      %v6658 = vmul.f32 0.5, %v6657
      %v6659 = vsub.f32 1.5, %v6658
      %v6660 = vmul.f32 %v6655, %v6659
      %vm6661 = vweird.f32 %v5897
      %vm6662 = vweird.f32 %v6655
      %vm6663 = vmor %vm6661, %vm6662
      %v6664 = vsel %vm6663, %v6655, %v6660
      %v6665 = vrsqrt.pop %v5898
      %v6666 = vmul.f32 %v6665, %v5898
      %v6667 = vmul.f32 %v6666, %v6665
      %v6668 = vmul.f32 0.5, %v6667
      %v6669 = vsub.f32 1.5, %v6668
      %v6670 = vmul.f32 %v6665, %v6669
      %vm6671 = vweird.f32 %v5898
      %vm6672 = vweird.f32 %v6665
      %vm6673 = vmor %vm6671, %vm6672
      %v6674 = vsel %vm6673, %v6665, %v6670
      %v6675 = vrsqrt.pop %v5899
      %v6676 = vmul.f32 %v6675, %v5899
      %v6677 = vmul.f32 %v6676, %v6675
      %v6678 = vmul.f32 0.5, %v6677
      %v6679 = vsub.f32 1.5, %v6678
      %v6680 = vmul.f32 %v6675, %v6679
      %vm6681 = vweird.f32 %v5899
      %vm6682 = vweird.f32 %v6675
      %vm6683 = vmor %vm6681, %vm6682
      %v6684 = vsel %vm6683, %v6675, %v6680
      %v6685 = vrsqrt.pop %v5900
      %v6686 = vmul.f32 %v6685, %v5900
      %v6687 = vmul.f32 %v6686, %v6685
      %v6688 = vmul.f32 0.5, %v6687
      %v6689 = vsub.f32 1.5, %v6688
      %v6690 = vmul.f32 %v6685, %v6689
      %vm6691 = vweird.f32 %v5900
      %vm6692 = vweird.f32 %v6685
      %vm6693 = vmor %vm6691, %vm6692
      %v6694 = vsel %vm6693, %v6685, %v6690
      %v6695 = vrsqrt.pop %v5901
      %v6696 = vmul.f32 %v6695, %v5901
      %v6697 = vmul.f32 %v6696, %v6695
      %v6698 = vmul.f32 0.5, %v6697
      %v6699 = vsub.f32 1.5, %v6698
      %v6700 = vmul.f32 %v6695, %v6699
      %vm6701 = vweird.f32 %v5901
      %vm6702 = vweird.f32 %v6695
      %vm6703 = vmor %vm6701, %vm6702
      %v6704 = vsel %vm6703, %v6695, %v6700
      %v6705 = vrsqrt.pop %v5902
      %v6706 = vmul.f32 %v6705, %v5902
      %v6707 = vmul.f32 %v6706, %v6705
      %v6708 = vmul.f32 0.5, %v6707
      %v6709 = vsub.f32 1.5, %v6708
      %v6710 = vmul.f32 %v6705, %v6709
      %vm6711 = vweird.f32 %v5902
      %vm6712 = vweird.f32 %v6705
      %vm6713 = vmor %vm6711, %vm6712
      %v6714 = vsel %vm6713, %v6705, %v6710
      %v6715 = vrsqrt.pop %v5903
      %v6716 = vmul.f32 %v6715, %v5903
      %v6717 = vmul.f32 %v6716, %v6715
      %v6718 = vmul.f32 0.5, %v6717
      %v6719 = vsub.f32 1.5, %v6718
      %v6720 = vmul.f32 %v6715, %v6719
      %vm6721 = vweird.f32 %v5903
      %vm6722 = vweird.f32 %v6715
      %vm6723 = vmor %vm6721, %vm6722
      %v6724 = vsel %vm6723, %v6715, %v6720
      %v6725 = vrsqrt.pop %v5904
      %v6726 = vmul.f32 %v6725, %v5904
      %v6727 = vmul.f32 %v6726, %v6725
      %v6728 = vmul.f32 0.5, %v6727
      %v6729 = vsub.f32 1.5, %v6728
      %v6730 = vmul.f32 %v6725, %v6729
      %vm6731 = vweird.f32 %v5904
      %vm6732 = vweird.f32 %v6725
      %vm6733 = vmor %vm6731, %vm6732
      %v6734 = vsel %vm6733, %v6725, %v6730
      %v6735 = vrsqrt.pop %v5905
      %v6736 = vmul.f32 %v6735, %v5905
      %v6737 = vmul.f32 %v6736, %v6735
      %v6738 = vmul.f32 0.5, %v6737
      %v6739 = vsub.f32 1.5, %v6738
      %v6740 = vmul.f32 %v6735, %v6739
      %vm6741 = vweird.f32 %v5905
      %vm6742 = vweird.f32 %v6735
      %vm6743 = vmor %vm6741, %vm6742
      %v6744 = vsel %vm6743, %v6735, %v6740
      %v6745 = vrsqrt.pop %v5906
      %v6746 = vmul.f32 %v6745, %v5906
      %v6747 = vmul.f32 %v6746, %v6745
      %v6748 = vmul.f32 0.5, %v6747
      %v6749 = vsub.f32 1.5, %v6748
      %v6750 = vmul.f32 %v6745, %v6749
      %vm6751 = vweird.f32 %v5906
      %vm6752 = vweird.f32 %v6745
      %vm6753 = vmor %vm6751, %vm6752
      %v6754 = vsel %vm6753, %v6745, %v6750
      %v6755 = vrsqrt.pop %v5907
      %v6756 = vmul.f32 %v6755, %v5907
      %v6757 = vmul.f32 %v6756, %v6755
      %v6758 = vmul.f32 0.5, %v6757
      %v6759 = vsub.f32 1.5, %v6758
      %v6760 = vmul.f32 %v6755, %v6759
      %vm6761 = vweird.f32 %v5907
      %vm6762 = vweird.f32 %v6755
      %vm6763 = vmor %vm6761, %vm6762
      %v6764 = vsel %vm6763, %v6755, %v6760
      %v6765 = vrsqrt.pop %v5908
      %v6766 = vmul.f32 %v6765, %v5908
      %v6767 = vmul.f32 %v6766, %v6765
      %v6768 = vmul.f32 0.5, %v6767
      %v6769 = vsub.f32 1.5, %v6768
      %v6770 = vmul.f32 %v6765, %v6769
      %vm6771 = vweird.f32 %v5908
      %vm6772 = vweird.f32 %v6765
      %vm6773 = vmor %vm6771, %vm6772
      %v6774 = vsel %vm6773, %v6765, %v6770
      %v6775 = vrsqrt.pop %v5909
      %v6776 = vmul.f32 %v6775, %v5909
      %v6777 = vmul.f32 %v6776, %v6775
      %v6778 = vmul.f32 0.5, %v6777
      %v6779 = vsub.f32 1.5, %v6778
      %v6780 = vmul.f32 %v6775, %v6779
      %vm6781 = vweird.f32 %v5909
      %vm6782 = vweird.f32 %v6775
      %vm6783 = vmor %vm6781, %vm6782
      %v6784 = vsel %vm6783, %v6775, %v6780
      %v6785 = vrsqrt.pop %v5910
      %v6786 = vmul.f32 %v6785, %v5910
      %v6787 = vmul.f32 %v6786, %v6785
      %v6788 = vmul.f32 0.5, %v6787
      %v6789 = vsub.f32 1.5, %v6788
      %v6790 = vmul.f32 %v6785, %v6789
      %vm6791 = vweird.f32 %v5910
      %vm6792 = vweird.f32 %v6785
      %vm6793 = vmor %vm6791, %vm6792
      %v6794 = vsel %vm6793, %v6785, %v6790
      %v6795 = vrsqrt.pop %v5911
      %v6796 = vmul.f32 %v6795, %v5911
      %v6797 = vmul.f32 %v6796, %v6795
      %v6798 = vmul.f32 0.5, %v6797
      %v6799 = vsub.f32 1.5, %v6798
      %v6800 = vmul.f32 %v6795, %v6799
      %vm6801 = vweird.f32 %v5911
      %vm6802 = vweird.f32 %v6795
      %vm6803 = vmor %vm6801, %vm6802
      %v6804 = vsel %vm6803, %v6795, %v6800
      %v6805 = vrsqrt.pop %v5912
      %v6806 = vmul.f32 %v6805, %v5912
      %v6807 = vmul.f32 %v6806, %v6805
      %v6808 = vmul.f32 0.5, %v6807
      %v6809 = vsub.f32 1.5, %v6808
      %v6810 = vmul.f32 %v6805, %v6809
      %vm6811 = vweird.f32 %v5912
      %vm6812 = vweird.f32 %v6805
      %vm6813 = vmor %vm6811, %vm6812
      %v6814 = vsel %vm6813, %v6805, %v6810
      %v6815 = vrsqrt.pop %v5913
      %v6816 = vmul.f32 %v6815, %v5913
      %v6817 = vmul.f32 %v6816, %v6815
      %v6818 = vmul.f32 0.5, %v6817
      %v6819 = vsub.f32 1.5, %v6818
      %v6820 = vmul.f32 %v6815, %v6819
      %vm6821 = vweird.f32 %v5913
      %vm6822 = vweird.f32 %v6815
      %vm6823 = vmor %vm6821, %vm6822
      %v6824 = vsel %vm6823, %v6815, %v6820
      %v6825 = vrsqrt.pop %v5914
      %v6826 = vmul.f32 %v6825, %v5914
      %v6827 = vmul.f32 %v6826, %v6825
      %v6828 = vmul.f32 0.5, %v6827
      %v6829 = vsub.f32 1.5, %v6828
      %v6830 = vmul.f32 %v6825, %v6829
      %vm6831 = vweird.f32 %v5914
      %vm6832 = vweird.f32 %v6825
      %vm6833 = vmor %vm6831, %vm6832
      %v6834 = vsel %vm6833, %v6825, %v6830
      %v6835 = vrsqrt.pop %v5915
      %v6836 = vmul.f32 %v6835, %v5915
      %v6837 = vmul.f32 %v6836, %v6835
      %v6838 = vmul.f32 0.5, %v6837
      %v6839 = vsub.f32 1.5, %v6838
      %v6840 = vmul.f32 %v6835, %v6839
      %vm6841 = vweird.f32 %v5915
      %vm6842 = vweird.f32 %v6835
      %vm6843 = vmor %vm6841, %vm6842
      %v6844 = vsel %vm6843, %v6835, %v6840
      %v6845 = vrsqrt.pop %v5916
      %v6846 = vmul.f32 %v6845, %v5916
      %v6847 = vmul.f32 %v6846, %v6845
      %v6848 = vmul.f32 0.5, %v6847
      %v6849 = vsub.f32 1.5, %v6848
      %v6850 = vmul.f32 %v6845, %v6849
      %vm6851 = vweird.f32 %v5916
      %vm6852 = vweird.f32 %v6845
      %vm6853 = vmor %vm6851, %vm6852
      %v6854 = vsel %vm6853, %v6845, %v6850
      %v6855 = vrsqrt.pop %v5917
      %v6856 = vmul.f32 %v6855, %v5917
      %v6857 = vmul.f32 %v6856, %v6855
      %v6858 = vmul.f32 0.5, %v6857
      %v6859 = vsub.f32 1.5, %v6858
      %v6860 = vmul.f32 %v6855, %v6859
      %vm6861 = vweird.f32 %v5917
      %vm6862 = vweird.f32 %v6855
      %vm6863 = vmor %vm6861, %vm6862
      %v6864 = vsel %vm6863, %v6855, %v6860
      %v6865 = vrsqrt.pop %v5918
      %v6866 = vmul.f32 %v6865, %v5918
      %v6867 = vmul.f32 %v6866, %v6865
      %v6868 = vmul.f32 0.5, %v6867
      %v6869 = vsub.f32 1.5, %v6868
      %v6870 = vmul.f32 %v6865, %v6869
      %vm6871 = vweird.f32 %v5918
      %vm6872 = vweird.f32 %v6865
      %vm6873 = vmor %vm6871, %vm6872
      %v6874 = vsel %vm6873, %v6865, %v6870
      %v6875 = vrsqrt.pop %v5919
      %v6876 = vmul.f32 %v6875, %v5919
      %v6877 = vmul.f32 %v6876, %v6875
      %v6878 = vmul.f32 0.5, %v6877
      %v6879 = vsub.f32 1.5, %v6878
      %v6880 = vmul.f32 %v6875, %v6879
      %vm6881 = vweird.f32 %v5919
      %vm6882 = vweird.f32 %v6875
      %vm6883 = vmor %vm6881, %vm6882
      %v6884 = vsel %vm6883, %v6875, %v6880
      %v6885 = vrsqrt.pop %v5920
      %v6886 = vmul.f32 %v6885, %v5920
      %v6887 = vmul.f32 %v6886, %v6885
      %v6888 = vmul.f32 0.5, %v6887
      %v6889 = vsub.f32 1.5, %v6888
      %v6890 = vmul.f32 %v6885, %v6889
      %vm6891 = vweird.f32 %v5920
      %vm6892 = vweird.f32 %v6885
      %vm6893 = vmor %vm6891, %vm6892
      %v6894 = vsel %vm6893, %v6885, %v6890
      %v6895 = vrsqrt.pop %v5921
      %v6896 = vmul.f32 %v6895, %v5921
      %v6897 = vmul.f32 %v6896, %v6895
      %v6898 = vmul.f32 0.5, %v6897
      %v6899 = vsub.f32 1.5, %v6898
      %v6900 = vmul.f32 %v6895, %v6899
      %vm6901 = vweird.f32 %v5921
      %vm6902 = vweird.f32 %v6895
      %vm6903 = vmor %vm6901, %vm6902
      %v6904 = vsel %vm6903, %v6895, %v6900
      %v6905 = vrsqrt.pop %v5922
      %v6906 = vmul.f32 %v6905, %v5922
      %v6907 = vmul.f32 %v6906, %v6905
      %v6908 = vmul.f32 0.5, %v6907
      %v6909 = vsub.f32 1.5, %v6908
      %v6910 = vmul.f32 %v6905, %v6909
      %vm6911 = vweird.f32 %v5922
      %vm6912 = vweird.f32 %v6905
      %vm6913 = vmor %vm6911, %vm6912
      %v6914 = vsel %vm6913, %v6905, %v6910
      %v6915 = vrsqrt.pop %v5923
      %v6916 = vmul.f32 %v6915, %v5923
      %v6917 = vmul.f32 %v6916, %v6915
      %v6918 = vmul.f32 0.5, %v6917
      %v6919 = vsub.f32 1.5, %v6918
      %v6920 = vmul.f32 %v6915, %v6919
      %vm6921 = vweird.f32 %v5923
      %vm6922 = vweird.f32 %v6915
      %vm6923 = vmor %vm6921, %vm6922
      %v6924 = vsel %vm6923, %v6915, %v6920
      %v6925 = vrsqrt.pop %v5924
      %v6926 = vmul.f32 %v6925, %v5924
      %v6927 = vmul.f32 %v6926, %v6925
      %v6928 = vmul.f32 0.5, %v6927
      %v6929 = vsub.f32 1.5, %v6928
      %v6930 = vmul.f32 %v6925, %v6929
      %vm6931 = vweird.f32 %v5924
      %vm6932 = vweird.f32 %v6925
      %vm6933 = vmor %vm6931, %vm6932
      %v6934 = vsel %vm6933, %v6925, %v6930
      %v6935 = vrsqrt.pop %v5925
      %v6936 = vmul.f32 %v6935, %v5925
      %v6937 = vmul.f32 %v6936, %v6935
      %v6938 = vmul.f32 0.5, %v6937
      %v6939 = vsub.f32 1.5, %v6938
      %v6940 = vmul.f32 %v6935, %v6939
      %vm6941 = vweird.f32 %v5925
      %vm6942 = vweird.f32 %v6935
      %vm6943 = vmor %vm6941, %vm6942
      %v6944 = vsel %vm6943, %v6935, %v6940
      %v6945 = vrsqrt.pop %v5926
      %v6946 = vmul.f32 %v6945, %v5926
      %v6947 = vmul.f32 %v6946, %v6945
      %v6948 = vmul.f32 0.5, %v6947
      %v6949 = vsub.f32 1.5, %v6948
      %v6950 = vmul.f32 %v6945, %v6949
      %vm6951 = vweird.f32 %v5926
      %vm6952 = vweird.f32 %v6945
      %vm6953 = vmor %vm6951, %vm6952
      %v6954 = vsel %vm6953, %v6945, %v6950
      %v6955 = vrsqrt.pop %v5927
      %v6956 = vmul.f32 %v6955, %v5927
      %v6957 = vmul.f32 %v6956, %v6955
      %v6958 = vmul.f32 0.5, %v6957
      %v6959 = vsub.f32 1.5, %v6958
      %v6960 = vmul.f32 %v6955, %v6959
      %vm6961 = vweird.f32 %v5927
      %vm6962 = vweird.f32 %v6955
      %vm6963 = vmor %vm6961, %vm6962
      %v6964 = vsel %vm6963, %v6955, %v6960
      %v6965 = vrsqrt.pop %v5928
      %v6966 = vmul.f32 %v6965, %v5928
      %v6967 = vmul.f32 %v6966, %v6965
      %v6968 = vmul.f32 0.5, %v6967
      %v6969 = vsub.f32 1.5, %v6968
      %v6970 = vmul.f32 %v6965, %v6969
      %vm6971 = vweird.f32 %v5928
      %vm6972 = vweird.f32 %v6965
      %vm6973 = vmor %vm6971, %vm6972
      %v6974 = vsel %vm6973, %v6965, %v6970
      %v6975 = vrsqrt.pop %v5929
      %v6976 = vmul.f32 %v6975, %v5929
      %v6977 = vmul.f32 %v6976, %v6975
      %v6978 = vmul.f32 0.5, %v6977
      %v6979 = vsub.f32 1.5, %v6978
      %v6980 = vmul.f32 %v6975, %v6979
      %vm6981 = vweird.f32 %v5929
      %vm6982 = vweird.f32 %v6975
      %vm6983 = vmor %vm6981, %vm6982
      %v6984 = vsel %vm6983, %v6975, %v6980
      %v6985 = vrsqrt.pop %v5930
      %v6986 = vmul.f32 %v6985, %v5930
      %v6987 = vmul.f32 %v6986, %v6985
      %v6988 = vmul.f32 0.5, %v6987
      %v6989 = vsub.f32 1.5, %v6988
      %v6990 = vmul.f32 %v6985, %v6989
      %vm6991 = vweird.f32 %v5930
      %vm6992 = vweird.f32 %v6985
      %vm6993 = vmor %vm6991, %vm6992
      %v6994 = vsel %vm6993, %v6985, %v6990
      %v6995 = vrsqrt.pop %v5931
      %v6996 = vmul.f32 %v6995, %v5931
      %v6997 = vmul.f32 %v6996, %v6995
      %v6998 = vmul.f32 0.5, %v6997
      %v6999 = vsub.f32 1.5, %v6998
      %v7000 = vmul.f32 %v6995, %v6999
      %vm7001 = vweird.f32 %v5931
      %vm7002 = vweird.f32 %v6995
      %vm7003 = vmor %vm7001, %vm7002
      %v7004 = vsel %vm7003, %v6995, %v7000
      %v7005 = vrsqrt.pop %v5932
      %v7006 = vmul.f32 %v7005, %v5932
      %v7007 = vmul.f32 %v7006, %v7005
      %v7008 = vmul.f32 0.5, %v7007
      %v7009 = vsub.f32 1.5, %v7008
      %v7010 = vmul.f32 %v7005, %v7009
      %vm7011 = vweird.f32 %v5932
      %vm7012 = vweird.f32 %v7005
      %vm7013 = vmor %vm7011, %vm7012
      %v7014 = vsel %vm7013, %v7005, %v7010
      %v7015 = vrsqrt.pop %v5933
      %v7016 = vmul.f32 %v7015, %v5933
      %v7017 = vmul.f32 %v7016, %v7015
      %v7018 = vmul.f32 0.5, %v7017
      %v7019 = vsub.f32 1.5, %v7018
      %v7020 = vmul.f32 %v7015, %v7019
      %vm7021 = vweird.f32 %v5933
      %vm7022 = vweird.f32 %v7015
      %vm7023 = vmor %vm7021, %vm7022
      %v7024 = vsel %vm7023, %v7015, %v7020
      %v7025 = vrsqrt.pop %v5934
      %v7026 = vmul.f32 %v7025, %v5934
      %v7027 = vmul.f32 %v7026, %v7025
      %v7028 = vmul.f32 0.5, %v7027
      %v7029 = vsub.f32 1.5, %v7028
      %v7030 = vmul.f32 %v7025, %v7029
      %vm7031 = vweird.f32 %v5934
      %vm7032 = vweird.f32 %v7025
      %vm7033 = vmor %vm7031, %vm7032
      %v7034 = vsel %vm7033, %v7025, %v7030
      %v7035 = vrsqrt.pop %v5935
      %v7036 = vmul.f32 %v7035, %v5935
      %v7037 = vmul.f32 %v7036, %v7035
      %v7038 = vmul.f32 0.5, %v7037
      %v7039 = vsub.f32 1.5, %v7038
      %v7040 = vmul.f32 %v7035, %v7039
      %vm7041 = vweird.f32 %v5935
      %vm7042 = vweird.f32 %v7035
      %vm7043 = vmor %vm7041, %vm7042
      %v7044 = vsel %vm7043, %v7035, %v7040
      %v7045 = vrsqrt.pop %v5936
      %v7046 = vmul.f32 %v7045, %v5936
      %v7047 = vmul.f32 %v7046, %v7045
      %v7048 = vmul.f32 0.5, %v7047
      %v7049 = vsub.f32 1.5, %v7048
      %v7050 = vmul.f32 %v7045, %v7049
      %vm7051 = vweird.f32 %v5936
      %vm7052 = vweird.f32 %v7045
      %vm7053 = vmor %vm7051, %vm7052
      %v7054 = vsel %vm7053, %v7045, %v7050
      %v7055 = vrsqrt.pop %v5937
      %v7056 = vmul.f32 %v7055, %v5937
      %v7057 = vmul.f32 %v7056, %v7055
      %v7058 = vmul.f32 0.5, %v7057
      %v7059 = vsub.f32 1.5, %v7058
      %v7060 = vmul.f32 %v7055, %v7059
      %vm7061 = vweird.f32 %v5937
      %vm7062 = vweird.f32 %v7055
      %vm7063 = vmor %vm7061, %vm7062
      %v7064 = vsel %vm7063, %v7055, %v7060
      %v7065 = vrsqrt.pop %v5938
      %v7066 = vmul.f32 %v7065, %v5938
      %v7067 = vmul.f32 %v7066, %v7065
      %v7068 = vmul.f32 0.5, %v7067
      %v7069 = vsub.f32 1.5, %v7068
      %v7070 = vmul.f32 %v7065, %v7069
      %vm7071 = vweird.f32 %v5938
      %vm7072 = vweird.f32 %v7065
      %vm7073 = vmor %vm7071, %vm7072
      %v7074 = vsel %vm7073, %v7065, %v7070
      %v7075 = vrsqrt.pop %v5939
      %v7076 = vmul.f32 %v7075, %v5939
      %v7077 = vmul.f32 %v7076, %v7075
      %v7078 = vmul.f32 0.5, %v7077
      %v7079 = vsub.f32 1.5, %v7078
      %v7080 = vmul.f32 %v7075, %v7079
      %vm7081 = vweird.f32 %v5939
      %vm7082 = vweird.f32 %v7075
      %vm7083 = vmor %vm7081, %vm7082
      %v7084 = vsel %vm7083, %v7075, %v7080
      %v7085 = vrsqrt.pop %v5940
      %v7086 = vmul.f32 %v7085, %v5940
      %v7087 = vmul.f32 %v7086, %v7085
      %v7088 = vmul.f32 0.5, %v7087
      %v7089 = vsub.f32 1.5, %v7088
      %v7090 = vmul.f32 %v7085, %v7089
      %vm7091 = vweird.f32 %v5940
      %vm7092 = vweird.f32 %v7085
      %vm7093 = vmor %vm7091, %vm7092
      %v7094 = vsel %vm7093, %v7085, %v7090
      %v7095 = vrsqrt.pop %v5941
      %v7096 = vmul.f32 %v7095, %v5941
      %v7097 = vmul.f32 %v7096, %v7095
      %v7098 = vmul.f32 0.5, %v7097
      %v7099 = vsub.f32 1.5, %v7098
      %v7100 = vmul.f32 %v7095, %v7099
      %vm7101 = vweird.f32 %v5941
      %vm7102 = vweird.f32 %v7095
      %vm7103 = vmor %vm7101, %vm7102
      %v7104 = vsel %vm7103, %v7095, %v7100
      %v7105 = vrsqrt.pop %v5942
      %v7106 = vmul.f32 %v7105, %v5942
      %v7107 = vmul.f32 %v7106, %v7105
      %v7108 = vmul.f32 0.5, %v7107
      %v7109 = vsub.f32 1.5, %v7108
      %v7110 = vmul.f32 %v7105, %v7109
      %vm7111 = vweird.f32 %v5942
      %vm7112 = vweird.f32 %v7105
      %vm7113 = vmor %vm7111, %vm7112
      %v7114 = vsel %vm7113, %v7105, %v7110
      %v7115 = vrsqrt.pop %v5943
      %v7116 = vmul.f32 %v7115, %v5943
      %v7117 = vmul.f32 %v7116, %v7115
      %v7118 = vmul.f32 0.5, %v7117
      %v7119 = vsub.f32 1.5, %v7118
      %v7120 = vmul.f32 %v7115, %v7119
      %vm7121 = vweird.f32 %v5943
      %vm7122 = vweird.f32 %v7115
      %vm7123 = vmor %vm7121, %vm7122
      %v7124 = vsel %vm7123, %v7115, %v7120
      %v7125 = vrsqrt.pop %v5944
      %v7126 = vmul.f32 %v7125, %v5944
      %v7127 = vmul.f32 %v7126, %v7125
      %v7128 = vmul.f32 0.5, %v7127
      %v7129 = vsub.f32 1.5, %v7128
      %v7130 = vmul.f32 %v7125, %v7129
      %vm7131 = vweird.f32 %v5944
      %vm7132 = vweird.f32 %v7125
      %vm7133 = vmor %vm7131, %vm7132
      %v7134 = vsel %vm7133, %v7125, %v7130
      %v7135 = vrsqrt.pop %v5945
      %v7136 = vmul.f32 %v7135, %v5945
      %v7137 = vmul.f32 %v7136, %v7135
      %v7138 = vmul.f32 0.5, %v7137
      %v7139 = vsub.f32 1.5, %v7138
      %v7140 = vmul.f32 %v7135, %v7139
      %vm7141 = vweird.f32 %v5945
      %vm7142 = vweird.f32 %v7135
      %vm7143 = vmor %vm7141, %vm7142
      %v7144 = vsel %vm7143, %v7135, %v7140
      %v7145 = vrsqrt.pop %v5946
      %v7146 = vmul.f32 %v7145, %v5946
      %v7147 = vmul.f32 %v7146, %v7145
      %v7148 = vmul.f32 0.5, %v7147
      %v7149 = vsub.f32 1.5, %v7148
      %v7150 = vmul.f32 %v7145, %v7149
      %vm7151 = vweird.f32 %v5946
      %vm7152 = vweird.f32 %v7145
      %vm7153 = vmor %vm7151, %vm7152
      %v7154 = vsel %vm7153, %v7145, %v7150
      %v7155 = vrsqrt.pop %v5947
      %v7156 = vmul.f32 %v7155, %v5947
      %v7157 = vmul.f32 %v7156, %v7155
      %v7158 = vmul.f32 0.5, %v7157
      %v7159 = vsub.f32 1.5, %v7158
      %v7160 = vmul.f32 %v7155, %v7159
      %vm7161 = vweird.f32 %v5947
      %vm7162 = vweird.f32 %v7155
      %vm7163 = vmor %vm7161, %vm7162
      %v7164 = vsel %vm7163, %v7155, %v7160
      %v7165 = vrsqrt.pop %v5948
      %v7166 = vmul.f32 %v7165, %v5948
      %v7167 = vmul.f32 %v7166, %v7165
      %v7168 = vmul.f32 0.5, %v7167
      %v7169 = vsub.f32 1.5, %v7168
      %v7170 = vmul.f32 %v7165, %v7169
      %vm7171 = vweird.f32 %v5948
      %vm7172 = vweird.f32 %v7165
      %vm7173 = vmor %vm7171, %vm7172
      %v7174 = vsel %vm7173, %v7165, %v7170
      %v7175 = vrsqrt.pop %v5949
      %v7176 = vmul.f32 %v7175, %v5949
      %v7177 = vmul.f32 %v7176, %v7175
      %v7178 = vmul.f32 0.5, %v7177
      %v7179 = vsub.f32 1.5, %v7178
      %v7180 = vmul.f32 %v7175, %v7179
      %vm7181 = vweird.f32 %v5949
      %vm7182 = vweird.f32 %v7175
      %vm7183 = vmor %vm7181, %vm7182
      %v7184 = vsel %vm7183, %v7175, %v7180
      %v7185 = vrsqrt.pop %v5950
      %v7186 = vmul.f32 %v7185, %v5950
      %v7187 = vmul.f32 %v7186, %v7185
      %v7188 = vmul.f32 0.5, %v7187
      %v7189 = vsub.f32 1.5, %v7188
      %v7190 = vmul.f32 %v7185, %v7189
      %vm7191 = vweird.f32 %v5950
      %vm7192 = vweird.f32 %v7185
      %vm7193 = vmor %vm7191, %vm7192
      %v7194 = vsel %vm7193, %v7185, %v7190
      %v7195 = vrsqrt.pop %v5951
      %v7196 = vmul.f32 %v7195, %v5951
      %v7197 = vmul.f32 %v7196, %v7195
      %v7198 = vmul.f32 0.5, %v7197
      %v7199 = vsub.f32 1.5, %v7198
      %v7200 = vmul.f32 %v7195, %v7199
      %vm7201 = vweird.f32 %v5951
      %vm7202 = vweird.f32 %v7195
      %vm7203 = vmor %vm7201, %vm7202
      %v7204 = vsel %vm7203, %v7195, %v7200
      %v7205 = vrsqrt.pop %v5952
      %v7206 = vmul.f32 %v7205, %v5952
      %v7207 = vmul.f32 %v7206, %v7205
      %v7208 = vmul.f32 0.5, %v7207
      %v7209 = vsub.f32 1.5, %v7208
      %v7210 = vmul.f32 %v7205, %v7209
      %vm7211 = vweird.f32 %v5952
      %vm7212 = vweird.f32 %v7205
      %vm7213 = vmor %vm7211, %vm7212
      %v7214 = vsel %vm7213, %v7205, %v7210
      %v7215 = vrsqrt.pop %v5953
      %v7216 = vmul.f32 %v7215, %v5953
      %v7217 = vmul.f32 %v7216, %v7215
      %v7218 = vmul.f32 0.5, %v7217
      %v7219 = vsub.f32 1.5, %v7218
      %v7220 = vmul.f32 %v7215, %v7219
      %vm7221 = vweird.f32 %v5953
      %vm7222 = vweird.f32 %v7215
      %vm7223 = vmor %vm7221, %vm7222
      %v7224 = vsel %vm7223, %v7215, %v7220
      %v7225 = vrsqrt.pop %v5954
      %v7226 = vmul.f32 %v7225, %v5954
      %v7227 = vmul.f32 %v7226, %v7225
      %v7228 = vmul.f32 0.5, %v7227
      %v7229 = vsub.f32 1.5, %v7228
      %v7230 = vmul.f32 %v7225, %v7229
      %vm7231 = vweird.f32 %v5954
      %vm7232 = vweird.f32 %v7225
      %vm7233 = vmor %vm7231, %vm7232
      %v7234 = vsel %vm7233, %v7225, %v7230
      %v7235 = vmul.f32 %v3908, %v5964
      %v7236 = vmul.f32 %v3911, %v5974
      %v7237 = vmul.f32 %v3914, %v5984
      %v7238 = vmul.f32 %v3917, %v5994
      %v7239 = vmul.f32 %v3920, %v6004
      %v7240 = vmul.f32 %v3923, %v6014
      %v7241 = vmul.f32 %v3926, %v6024
      %v7242 = vmul.f32 %v3929, %v6034
      %v7243 = vmul.f32 %v3932, %v6044
      %v7244 = vmul.f32 %v3935, %v6054
      %v7245 = vmul.f32 %v3938, %v6064
      %v7246 = vmul.f32 %v3941, %v6074
      %v7247 = vmul.f32 %v3944, %v6084
      %v7248 = vmul.f32 %v3947, %v6094
      %v7249 = vmul.f32 %v3950, %v6104
      %v7250 = vmul.f32 %v3953, %v6114
      %v7251 = vmul.f32 %v3956, %v6124
      %v7252 = vmul.f32 %v3959, %v6134
      %v7253 = vmul.f32 %v3962, %v6144
      %v7254 = vmul.f32 %v3965, %v6154
      %v7255 = vmul.f32 %v3968, %v6164
      %v7256 = vmul.f32 %v3971, %v6174
      %v7257 = vmul.f32 %v3974, %v6184
      %v7258 = vmul.f32 %v3977, %v6194
      %v7259 = vmul.f32 %v3980, %v6204
      %v7260 = vmul.f32 %v3983, %v6214
      %v7261 = vmul.f32 %v3986, %v6224
      %v7262 = vmul.f32 %v3989, %v6234
      %v7263 = vmul.f32 %v3992, %v6244
      %v7264 = vmul.f32 %v3995, %v6254
      %v7265 = vmul.f32 %v3998, %v6264
      %v7266 = vmul.f32 %v4001, %v6274
      %v7267 = vmul.f32 %v4004, %v6284
      %v7268 = vmul.f32 %v4007, %v6294
      %v7269 = vmul.f32 %v4010, %v6304
      %v7270 = vmul.f32 %v4013, %v6314
      %v7271 = vmul.f32 %v4016, %v6324
      %v7272 = vmul.f32 %v4019, %v6334
      %v7273 = vmul.f32 %v4022, %v6344
      %v7274 = vmul.f32 %v4025, %v6354
      %v7275 = vmul.f32 %v4028, %v6364
      %v7276 = vmul.f32 %v4031, %v6374
      %v7277 = vmul.f32 %v4034, %v6384
      %v7278 = vmul.f32 %v4037, %v6394
      %v7279 = vmul.f32 %v4040, %v6404
      %v7280 = vmul.f32 %v4043, %v6414
      %v7281 = vmul.f32 %v4046, %v6424
      %v7282 = vmul.f32 %v4049, %v6434
      %v7283 = vmul.f32 %v4052, %v6444
      %v7284 = vmul.f32 %v4055, %v6454
      %v7285 = vmul.f32 %v4058, %v6464
      %v7286 = vmul.f32 %v4061, %v6474
      %v7287 = vmul.f32 %v4064, %v6484
      %v7288 = vmul.f32 %v4067, %v6494
      %v7289 = vmul.f32 %v4070, %v6504
      %v7290 = vmul.f32 %v4073, %v6514
      %v7291 = vmul.f32 %v4076, %v6524
      %v7292 = vmul.f32 %v4079, %v6534
      %v7293 = vmul.f32 %v4082, %v6544
      %v7294 = vmul.f32 %v4085, %v6554
      %v7295 = vmul.f32 %v4088, %v6564
      %v7296 = vmul.f32 %v4091, %v6574
      %v7297 = vmul.f32 %v4094, %v6584
      %v7298 = vmul.f32 %v4097, %v6594
      %v7299 = vmul.f32 %v4100, %v6604
      %v7300 = vmul.f32 %v4103, %v6614
      %v7301 = vmul.f32 %v4106, %v6624
      %v7302 = vmul.f32 %v4109, %v6634
      %v7303 = vmul.f32 %v4112, %v6644
      %v7304 = vmul.f32 %v4115, %v6654
      %v7305 = vmul.f32 %v4118, %v6664
      %v7306 = vmul.f32 %v4121, %v6674
      %v7307 = vmul.f32 %v4124, %v6684
      %v7308 = vmul.f32 %v4127, %v6694
      %v7309 = vmul.f32 %v4130, %v6704
      %v7310 = vmul.f32 %v4133, %v6714
      %v7311 = vmul.f32 %v4136, %v6724
      %v7312 = vmul.f32 %v4139, %v6734
      %v7313 = vmul.f32 %v4142, %v6744
      %v7314 = vmul.f32 %v4145, %v6754
      %v7315 = vmul.f32 %v4148, %v6764
      %v7316 = vmul.f32 %v4151, %v6774
      %v7317 = vmul.f32 %v4154, %v6784
      %v7318 = vmul.f32 %v4157, %v6794
      %v7319 = vmul.f32 %v4160, %v6804
      %v7320 = vmul.f32 %v4163, %v6814
      %v7321 = vmul.f32 %v4166, %v6824
      %v7322 = vmul.f32 %v4169, %v6834
      %v7323 = vmul.f32 %v4172, %v6844
      %v7324 = vmul.f32 %v4175, %v6854
      %v7325 = vmul.f32 %v4178, %v6864
      %v7326 = vmul.f32 %v4181, %v6874
      %v7327 = vmul.f32 %v4184, %v6884
      %v7328 = vmul.f32 %v4187, %v6894
      %v7329 = vmul.f32 %v4190, %v6904
      %v7330 = vmul.f32 %v4193, %v6914
      %v7331 = vmul.f32 %v4196, %v6924
      %v7332 = vmul.f32 %v4199, %v6934
      %v7333 = vmul.f32 %v4202, %v6944
      %v7334 = vmul.f32 %v4205, %v6954
      %v7335 = vmul.f32 %v4208, %v6964
      %v7336 = vmul.f32 %v4211, %v6974
      %v7337 = vmul.f32 %v4214, %v6984
      %v7338 = vmul.f32 %v4217, %v6994
      %v7339 = vmul.f32 %v4220, %v7004
      %v7340 = vmul.f32 %v4223, %v7014
      %v7341 = vmul.f32 %v4226, %v7024
      %v7342 = vmul.f32 %v4229, %v7034
      %v7343 = vmul.f32 %v4232, %v7044
      %v7344 = vmul.f32 %v4235, %v7054
      %v7345 = vmul.f32 %v4238, %v7064
      %v7346 = vmul.f32 %v4241, %v7074
      %v7347 = vmul.f32 %v4244, %v7084
      %v7348 = vmul.f32 %v4247, %v7094
      %v7349 = vmul.f32 %v4250, %v7104
      %v7350 = vmul.f32 %v4253, %v7114
      %v7351 = vmul.f32 %v4256, %v7124
      %v7352 = vmul.f32 %v4259, %v7134
      %v7353 = vmul.f32 %v4262, %v7144
      %v7354 = vmul.f32 %v4265, %v7154
      %v7355 = vmul.f32 %v4268, %v7164
      %v7356 = vmul.f32 %v4271, %v7174
      %v7357 = vmul.f32 %v4274, %v7184
      %v7358 = vmul.f32 %v4277, %v7194
      %v7359 = vmul.f32 %v4280, %v7204
      %v7360 = vmul.f32 %v4283, %v7214
      %v7361 = vmul.f32 %v4286, %v7224
      %v7362 = vmul.f32 %v4289, %v7234
      %v7363 = vmul.f32 %v435, %v5964
      %v7364 = vmul.f32 %v436, %v5974
      %v7365 = vmul.f32 %v437, %v5984
      %v7366 = vmul.f32 %v438, %v5994
      %v7367 = vmul.f32 %v439, %v6004
      %v7368 = vmul.f32 %v440, %v6014
      %v7369 = vmul.f32 %v441, %v6024
      %v7370 = vmul.f32 %v442, %v6034
      %v7371 = vmul.f32 %v443, %v6044
      %v7372 = vmul.f32 %v444, %v6054
      %v7373 = vmul.f32 %v445, %v6064
      %v7374 = vmul.f32 %v446, %v6074
      %v7375 = vmul.f32 %v447, %v6084
      %v7376 = vmul.f32 %v448, %v6094
      %v7377 = vmul.f32 %v449, %v6104
      %v7378 = vmul.f32 %v450, %v6114
      %v7379 = vmul.f32 %v451, %v6124
      %v7380 = vmul.f32 %v452, %v6134
      %v7381 = vmul.f32 %v453, %v6144
      %v7382 = vmul.f32 %v454, %v6154
      %v7383 = vmul.f32 %v455, %v6164
      %v7384 = vmul.f32 %v456, %v6174
      %v7385 = vmul.f32 %v457, %v6184
      %v7386 = vmul.f32 %v458, %v6194
      %v7387 = vmul.f32 %v459, %v6204
      %v7388 = vmul.f32 %v460, %v6214
      %v7389 = vmul.f32 %v461, %v6224
      %v7390 = vmul.f32 %v462, %v6234
      %v7391 = vmul.f32 %v463, %v6244
      %v7392 = vmul.f32 %v464, %v6254
      %v7393 = vmul.f32 %v465, %v6264
      %v7394 = vmul.f32 %v466, %v6274
      %v7395 = vmul.f32 %v467, %v6284
      %v7396 = vmul.f32 %v468, %v6294
      %v7397 = vmul.f32 %v469, %v6304
      %v7398 = vmul.f32 %v470, %v6314
      %v7399 = vmul.f32 %v471, %v6324
      %v7400 = vmul.f32 %v472, %v6334
      %v7401 = vmul.f32 %v473, %v6344
      %v7402 = vmul.f32 %v474, %v6354
      %v7403 = vmul.f32 %v475, %v6364
      %v7404 = vmul.f32 %v476, %v6374
      %v7405 = vmul.f32 %v477, %v6384
      %v7406 = vmul.f32 %v478, %v6394
      %v7407 = vmul.f32 %v479, %v6404
      %v7408 = vmul.f32 %v480, %v6414
      %v7409 = vmul.f32 %v481, %v6424
      %v7410 = vmul.f32 %v482, %v6434
      %v7411 = vmul.f32 %v483, %v6444
      %v7412 = vmul.f32 %v484, %v6454
      %v7413 = vmul.f32 %v485, %v6464
      %v7414 = vmul.f32 %v486, %v6474
      %v7415 = vmul.f32 %v487, %v6484
      %v7416 = vmul.f32 %v488, %v6494
      %v7417 = vmul.f32 %v489, %v6504
      %v7418 = vmul.f32 %v490, %v6514
      %v7419 = vmul.f32 %v491, %v6524
      %v7420 = vmul.f32 %v492, %v6534
      %v7421 = vmul.f32 %v493, %v6544
      %v7422 = vmul.f32 %v494, %v6554
      %v7423 = vmul.f32 %v495, %v6564
      %v7424 = vmul.f32 %v496, %v6574
      %v7425 = vmul.f32 %v497, %v6584
      %v7426 = vmul.f32 %v498, %v6594
      %v7427 = vmul.f32 %v499, %v6604
      %v7428 = vmul.f32 %v500, %v6614
      %v7429 = vmul.f32 %v501, %v6624
      %v7430 = vmul.f32 %v502, %v6634
      %v7431 = vmul.f32 %v503, %v6644
      %v7432 = vmul.f32 %v504, %v6654
      %v7433 = vmul.f32 %v505, %v6664
      %v7434 = vmul.f32 %v506, %v6674
      %v7435 = vmul.f32 %v507, %v6684
      %v7436 = vmul.f32 %v508, %v6694
      %v7437 = vmul.f32 %v509, %v6704
      %v7438 = vmul.f32 %v510, %v6714
      %v7439 = vmul.f32 %v511, %v6724
      %v7440 = vmul.f32 %v512, %v6734
      %v7441 = vmul.f32 %v513, %v6744
      %v7442 = vmul.f32 %v514, %v6754
      %v7443 = vmul.f32 %v515, %v6764
      %v7444 = vmul.f32 %v516, %v6774
      %v7445 = vmul.f32 %v517, %v6784
      %v7446 = vmul.f32 %v518, %v6794
      %v7447 = vmul.f32 %v519, %v6804
      %v7448 = vmul.f32 %v520, %v6814
      %v7449 = vmul.f32 %v521, %v6824
      %v7450 = vmul.f32 %v522, %v6834
      %v7451 = vmul.f32 %v523, %v6844
      %v7452 = vmul.f32 %v524, %v6854
      %v7453 = vmul.f32 %v525, %v6864
      %v7454 = vmul.f32 %v526, %v6874
      %v7455 = vmul.f32 %v527, %v6884
      %v7456 = vmul.f32 %v528, %v6894
      %v7457 = vmul.f32 %v529, %v6904
      %v7458 = vmul.f32 %v530, %v6914
      %v7459 = vmul.f32 %v531, %v6924
      %v7460 = vmul.f32 %v532, %v6934
      %v7461 = vmul.f32 %v533, %v6944
      %v7462 = vmul.f32 %v534, %v6954
      %v7463 = vmul.f32 %v535, %v6964
      %v7464 = vmul.f32 %v536, %v6974
      %v7465 = vmul.f32 %v537, %v6984
      %v7466 = vmul.f32 %v538, %v6994
      %v7467 = vmul.f32 %v539, %v7004
      %v7468 = vmul.f32 %v540, %v7014
      %v7469 = vmul.f32 %v541, %v7024
      %v7470 = vmul.f32 %v542, %v7034
      %v7471 = vmul.f32 %v543, %v7044
      %v7472 = vmul.f32 %v544, %v7054
      %v7473 = vmul.f32 %v545, %v7064
      %v7474 = vmul.f32 %v546, %v7074
      %v7475 = vmul.f32 %v547, %v7084
      %v7476 = vmul.f32 %v548, %v7094
      %v7477 = vmul.f32 %v549, %v7104
      %v7478 = vmul.f32 %v550, %v7114
      %v7479 = vmul.f32 %v551, %v7124
      %v7480 = vmul.f32 %v552, %v7134
      %v7481 = vmul.f32 %v553, %v7144
      %v7482 = vmul.f32 %v554, %v7154
      %v7483 = vmul.f32 %v555, %v7164
      %v7484 = vmul.f32 %v556, %v7174
      %v7485 = vmul.f32 %v557, %v7184
      %v7486 = vmul.f32 %v558, %v7194
      %v7487 = vmul.f32 %v559, %v7204
      %v7488 = vmul.f32 %v560, %v7214
      %v7489 = vmul.f32 %v561, %v7224
      %v7490 = vmul.f32 %v562, %v7234
      %v7491 = vmul.f32 %v3523, %v7363
      %v7492 = vmul.f32 %v3525, %v7364
      %v7493 = vmul.f32 %v3527, %v7365
      %v7494 = vmul.f32 %v3529, %v7366
      %v7495 = vmul.f32 %v3531, %v7367
      %v7496 = vmul.f32 %v3533, %v7368
      %v7497 = vmul.f32 %v3535, %v7369
      %v7498 = vmul.f32 %v3537, %v7370
      %v7499 = vmul.f32 %v3539, %v7371
      %v7500 = vmul.f32 %v3541, %v7372
      %v7501 = vmul.f32 %v3543, %v7373
      %v7502 = vmul.f32 %v3545, %v7374
      %v7503 = vmul.f32 %v3547, %v7375
      %v7504 = vmul.f32 %v3549, %v7376
      %v7505 = vmul.f32 %v3551, %v7377
      %v7506 = vmul.f32 %v3553, %v7378
      %v7507 = vmul.f32 %v3555, %v7379
      %v7508 = vmul.f32 %v3557, %v7380
      %v7509 = vmul.f32 %v3559, %v7381
      %v7510 = vmul.f32 %v3561, %v7382
      %v7511 = vmul.f32 %v3563, %v7383
      %v7512 = vmul.f32 %v3565, %v7384
      %v7513 = vmul.f32 %v3567, %v7385
      %v7514 = vmul.f32 %v3569, %v7386
      %v7515 = vmul.f32 %v3571, %v7387
      %v7516 = vmul.f32 %v3573, %v7388
      %v7517 = vmul.f32 %v3575, %v7389
      %v7518 = vmul.f32 %v3577, %v7390
      %v7519 = vmul.f32 %v3579, %v7391
      %v7520 = vmul.f32 %v3581, %v7392
      %v7521 = vmul.f32 %v3583, %v7393
      %v7522 = vmul.f32 %v3585, %v7394
      %v7523 = vmul.f32 %v3587, %v7395
      %v7524 = vmul.f32 %v3589, %v7396
      %v7525 = vmul.f32 %v3591, %v7397
      %v7526 = vmul.f32 %v3593, %v7398
      %v7527 = vmul.f32 %v3595, %v7399
      %v7528 = vmul.f32 %v3597, %v7400
      %v7529 = vmul.f32 %v3599, %v7401
      %v7530 = vmul.f32 %v3601, %v7402
      %v7531 = vmul.f32 %v3603, %v7403
      %v7532 = vmul.f32 %v3605, %v7404
      %v7533 = vmul.f32 %v3607, %v7405
      %v7534 = vmul.f32 %v3609, %v7406
      %v7535 = vmul.f32 %v3611, %v7407
      %v7536 = vmul.f32 %v3613, %v7408
      %v7537 = vmul.f32 %v3615, %v7409
      %v7538 = vmul.f32 %v3617, %v7410
      %v7539 = vmul.f32 %v3619, %v7411
      %v7540 = vmul.f32 %v3621, %v7412
      %v7541 = vmul.f32 %v3623, %v7413
      %v7542 = vmul.f32 %v3625, %v7414
      %v7543 = vmul.f32 %v3627, %v7415
      %v7544 = vmul.f32 %v3629, %v7416
      %v7545 = vmul.f32 %v3631, %v7417
      %v7546 = vmul.f32 %v3633, %v7418
      %v7547 = vmul.f32 %v3635, %v7419
      %v7548 = vmul.f32 %v3637, %v7420
      %v7549 = vmul.f32 %v3639, %v7421
      %v7550 = vmul.f32 %v3641, %v7422
      %v7551 = vmul.f32 %v3643, %v7423
      %v7552 = vmul.f32 %v3645, %v7424
      %v7553 = vmul.f32 %v3647, %v7425
      %v7554 = vmul.f32 %v3649, %v7426
      %v7555 = vmul.f32 %v3651, %v7427
      %v7556 = vmul.f32 %v3653, %v7428
      %v7557 = vmul.f32 %v3655, %v7429
      %v7558 = vmul.f32 %v3657, %v7430
      %v7559 = vmul.f32 %v3659, %v7431
      %v7560 = vmul.f32 %v3661, %v7432
      %v7561 = vmul.f32 %v3663, %v7433
      %v7562 = vmul.f32 %v3665, %v7434
      %v7563 = vmul.f32 %v3667, %v7435
      %v7564 = vmul.f32 %v3669, %v7436
      %v7565 = vmul.f32 %v3671, %v7437
      %v7566 = vmul.f32 %v3673, %v7438
      %v7567 = vmul.f32 %v3675, %v7439
      %v7568 = vmul.f32 %v3677, %v7440
      %v7569 = vmul.f32 %v3679, %v7441
      %v7570 = vmul.f32 %v3681, %v7442
      %v7571 = vmul.f32 %v3683, %v7443
      %v7572 = vmul.f32 %v3685, %v7444
      %v7573 = vmul.f32 %v3687, %v7445
      %v7574 = vmul.f32 %v3689, %v7446
      %v7575 = vmul.f32 %v3691, %v7447
      %v7576 = vmul.f32 %v3693, %v7448
      %v7577 = vmul.f32 %v3695, %v7449
      %v7578 = vmul.f32 %v3697, %v7450
      %v7579 = vmul.f32 %v3699, %v7451
      %v7580 = vmul.f32 %v3701, %v7452
      %v7581 = vmul.f32 %v3703, %v7453
      %v7582 = vmul.f32 %v3705, %v7454
      %v7583 = vmul.f32 %v3707, %v7455
      %v7584 = vmul.f32 %v3709, %v7456
      %v7585 = vmul.f32 %v3711, %v7457
      %v7586 = vmul.f32 %v3713, %v7458
      %v7587 = vmul.f32 %v3715, %v7459
      %v7588 = vmul.f32 %v3717, %v7460
      %v7589 = vmul.f32 %v3719, %v7461
      %v7590 = vmul.f32 %v3721, %v7462
      %v7591 = vmul.f32 %v3723, %v7463
      %v7592 = vmul.f32 %v3725, %v7464
      %v7593 = vmul.f32 %v3727, %v7465
      %v7594 = vmul.f32 %v3729, %v7466
      %v7595 = vmul.f32 %v3731, %v7467
      %v7596 = vmul.f32 %v3733, %v7468
      %v7597 = vmul.f32 %v3735, %v7469
      %v7598 = vmul.f32 %v3737, %v7470
      %v7599 = vmul.f32 %v3739, %v7471
      %v7600 = vmul.f32 %v3741, %v7472
      %v7601 = vmul.f32 %v3743, %v7473
      %v7602 = vmul.f32 %v3745, %v7474
      %v7603 = vmul.f32 %v3747, %v7475
      %v7604 = vmul.f32 %v3749, %v7476
      %v7605 = vmul.f32 %v3751, %v7477
      %v7606 = vmul.f32 %v3753, %v7478
      %v7607 = vmul.f32 %v3755, %v7479
      %v7608 = vmul.f32 %v3757, %v7480
      %v7609 = vmul.f32 %v3759, %v7481
      %v7610 = vmul.f32 %v3761, %v7482
      %v7611 = vmul.f32 %v3763, %v7483
      %v7612 = vmul.f32 %v3765, %v7484
      %v7613 = vmul.f32 %v3767, %v7485
      %v7614 = vmul.f32 %v3769, %v7486
      %v7615 = vmul.f32 %v3771, %v7487
      %v7616 = vmul.f32 %v3773, %v7488
      %v7617 = vmul.f32 %v3775, %v7489
      %v7618 = vmul.f32 %v3777, %v7490
      %v7619 = vsel %vm632, %v7491, 0.0
      %7620 = vadd.xlane.f32.xlu0 %v7619
      %v7621 = vpop.xlane.xlu0 %7620
      %v7622 = vsel %vm632, %v7492, 0.0
      %7623 = vadd.xlane.f32.xlu0 %v7622
      %v7624 = vpop.xlane.xlu0 %7623
      %v7625 = vsel %vm632, %v7493, 0.0
      %7626 = vadd.xlane.f32.xlu0 %v7625
      %v7627 = vpop.xlane.xlu0 %7626
      %v7628 = vsel %vm632, %v7494, 0.0
      %7629 = vadd.xlane.f32.xlu0 %v7628
      %v7630 = vpop.xlane.xlu0 %7629
      %v7631 = vsel %vm632, %v7495, 0.0
      %7632 = vadd.xlane.f32.xlu0 %v7631
      %v7633 = vpop.xlane.xlu0 %7632
      %v7634 = vsel %vm632, %v7496, 0.0
      %7635 = vadd.xlane.f32.xlu0 %v7634
      %v7636 = vpop.xlane.xlu0 %7635
      %v7637 = vsel %vm632, %v7497, 0.0
      %7638 = vadd.xlane.f32.xlu0 %v7637
      %v7639 = vpop.xlane.xlu0 %7638
      %v7640 = vsel %vm632, %v7498, 0.0
      %7641 = vadd.xlane.f32.xlu0 %v7640
      %v7642 = vpop.xlane.xlu0 %7641
      %v7643 = vsel %vm632, %v7499, 0.0
      %7644 = vadd.xlane.f32.xlu0 %v7643
      %v7645 = vpop.xlane.xlu0 %7644
      %v7646 = vsel %vm632, %v7500, 0.0
      %7647 = vadd.xlane.f32.xlu0 %v7646
      %v7648 = vpop.xlane.xlu0 %7647
      %v7649 = vsel %vm632, %v7501, 0.0
      %7650 = vadd.xlane.f32.xlu0 %v7649
      %v7651 = vpop.xlane.xlu0 %7650
      %v7652 = vsel %vm632, %v7502, 0.0
      %7653 = vadd.xlane.f32.xlu0 %v7652
      %v7654 = vpop.xlane.xlu0 %7653
      %v7655 = vsel %vm632, %v7503, 0.0
      %7656 = vadd.xlane.f32.xlu0 %v7655
      %v7657 = vpop.xlane.xlu0 %7656
      %v7658 = vsel %vm632, %v7504, 0.0
      %7659 = vadd.xlane.f32.xlu0 %v7658
      %v7660 = vpop.xlane.xlu0 %7659
      %v7661 = vsel %vm632, %v7505, 0.0
      %7662 = vadd.xlane.f32.xlu0 %v7661
      %v7663 = vpop.xlane.xlu0 %7662
      %v7664 = vsel %vm632, %v7506, 0.0
      %7665 = vadd.xlane.f32.xlu0 %v7664
      %v7666 = vpop.xlane.xlu0 %7665
      %v7667 = vsel %vm632, %v7507, 0.0
      %7668 = vadd.xlane.f32.xlu0 %v7667
      %v7669 = vpop.xlane.xlu0 %7668
      %v7670 = vsel %vm632, %v7508, 0.0
      %7671 = vadd.xlane.f32.xlu0 %v7670
      %v7672 = vpop.xlane.xlu0 %7671
      %v7673 = vsel %vm632, %v7509, 0.0
      %7674 = vadd.xlane.f32.xlu0 %v7673
      %v7675 = vpop.xlane.xlu0 %7674
      %v7676 = vsel %vm632, %v7510, 0.0
      %7677 = vadd.xlane.f32.xlu0 %v7676
      %v7678 = vpop.xlane.xlu0 %7677
      %v7679 = vsel %vm632, %v7511, 0.0
      %7680 = vadd.xlane.f32.xlu0 %v7679
      %v7681 = vpop.xlane.xlu0 %7680
      %v7682 = vsel %vm632, %v7512, 0.0
      %7683 = vadd.xlane.f32.xlu0 %v7682
      %v7684 = vpop.xlane.xlu0 %7683
      %v7685 = vsel %vm632, %v7513, 0.0
      %7686 = vadd.xlane.f32.xlu0 %v7685
      %v7687 = vpop.xlane.xlu0 %7686
      %v7688 = vsel %vm632, %v7514, 0.0
      %7689 = vadd.xlane.f32.xlu0 %v7688
      %v7690 = vpop.xlane.xlu0 %7689
      %v7691 = vsel %vm632, %v7515, 0.0
      %7692 = vadd.xlane.f32.xlu0 %v7691
      %v7693 = vpop.xlane.xlu0 %7692
      %v7694 = vsel %vm632, %v7516, 0.0
      %7695 = vadd.xlane.f32.xlu0 %v7694
      %v7696 = vpop.xlane.xlu0 %7695
      %v7697 = vsel %vm632, %v7517, 0.0
      %7698 = vadd.xlane.f32.xlu0 %v7697
      %v7699 = vpop.xlane.xlu0 %7698
      %v7700 = vsel %vm632, %v7518, 0.0
      %7701 = vadd.xlane.f32.xlu0 %v7700
      %v7702 = vpop.xlane.xlu0 %7701
      %v7703 = vsel %vm632, %v7519, 0.0
      %7704 = vadd.xlane.f32.xlu0 %v7703
      %v7705 = vpop.xlane.xlu0 %7704
      %v7706 = vsel %vm632, %v7520, 0.0
      %7707 = vadd.xlane.f32.xlu0 %v7706
      %v7708 = vpop.xlane.xlu0 %7707
      %v7709 = vsel %vm632, %v7521, 0.0
      %7710 = vadd.xlane.f32.xlu0 %v7709
      %v7711 = vpop.xlane.xlu0 %7710
      %v7712 = vsel %vm632, %v7522, 0.0
      %7713 = vadd.xlane.f32.xlu0 %v7712
      %v7714 = vpop.xlane.xlu0 %7713
      %v7715 = vsel %vm632, %v7523, 0.0
      %7716 = vadd.xlane.f32.xlu0 %v7715
      %v7717 = vpop.xlane.xlu0 %7716
      %v7718 = vsel %vm632, %v7524, 0.0
      %7719 = vadd.xlane.f32.xlu0 %v7718
      %v7720 = vpop.xlane.xlu0 %7719
      %v7721 = vsel %vm632, %v7525, 0.0
      %7722 = vadd.xlane.f32.xlu0 %v7721
      %v7723 = vpop.xlane.xlu0 %7722
      %v7724 = vsel %vm632, %v7526, 0.0
      %7725 = vadd.xlane.f32.xlu0 %v7724
      %v7726 = vpop.xlane.xlu0 %7725
      %v7727 = vsel %vm632, %v7527, 0.0
      %7728 = vadd.xlane.f32.xlu0 %v7727
      %v7729 = vpop.xlane.xlu0 %7728
      %v7730 = vsel %vm632, %v7528, 0.0
      %7731 = vadd.xlane.f32.xlu0 %v7730
      %v7732 = vpop.xlane.xlu0 %7731
      %v7733 = vsel %vm632, %v7529, 0.0
      %7734 = vadd.xlane.f32.xlu0 %v7733
      %v7735 = vpop.xlane.xlu0 %7734
      %v7736 = vsel %vm632, %v7530, 0.0
      %7737 = vadd.xlane.f32.xlu0 %v7736
      %v7738 = vpop.xlane.xlu0 %7737
      %v7739 = vsel %vm632, %v7531, 0.0
      %7740 = vadd.xlane.f32.xlu0 %v7739
      %v7741 = vpop.xlane.xlu0 %7740
      %v7742 = vsel %vm632, %v7532, 0.0
      %7743 = vadd.xlane.f32.xlu0 %v7742
      %v7744 = vpop.xlane.xlu0 %7743
      %v7745 = vsel %vm632, %v7533, 0.0
      %7746 = vadd.xlane.f32.xlu0 %v7745
      %v7747 = vpop.xlane.xlu0 %7746
      %v7748 = vsel %vm632, %v7534, 0.0
      %7749 = vadd.xlane.f32.xlu0 %v7748
      %v7750 = vpop.xlane.xlu0 %7749
      %v7751 = vsel %vm632, %v7535, 0.0
      %7752 = vadd.xlane.f32.xlu0 %v7751
      %v7753 = vpop.xlane.xlu0 %7752
      %v7754 = vsel %vm632, %v7536, 0.0
      %7755 = vadd.xlane.f32.xlu0 %v7754
      %v7756 = vpop.xlane.xlu0 %7755
      %v7757 = vsel %vm632, %v7537, 0.0
      %7758 = vadd.xlane.f32.xlu0 %v7757
      %v7759 = vpop.xlane.xlu0 %7758
      %v7760 = vsel %vm632, %v7538, 0.0
      %7761 = vadd.xlane.f32.xlu0 %v7760
      %v7762 = vpop.xlane.xlu0 %7761
      %v7763 = vsel %vm632, %v7539, 0.0
      %7764 = vadd.xlane.f32.xlu0 %v7763
      %v7765 = vpop.xlane.xlu0 %7764
      %v7766 = vsel %vm632, %v7540, 0.0
      %7767 = vadd.xlane.f32.xlu0 %v7766
      %v7768 = vpop.xlane.xlu0 %7767
      %v7769 = vsel %vm632, %v7541, 0.0
      %7770 = vadd.xlane.f32.xlu0 %v7769
      %v7771 = vpop.xlane.xlu0 %7770
      %v7772 = vsel %vm632, %v7542, 0.0
      %7773 = vadd.xlane.f32.xlu0 %v7772
      %v7774 = vpop.xlane.xlu0 %7773
      %v7775 = vsel %vm632, %v7543, 0.0
      %7776 = vadd.xlane.f32.xlu0 %v7775
      %v7777 = vpop.xlane.xlu0 %7776
      %v7778 = vsel %vm632, %v7544, 0.0
      %7779 = vadd.xlane.f32.xlu0 %v7778
      %v7780 = vpop.xlane.xlu0 %7779
      %v7781 = vsel %vm632, %v7545, 0.0
      %7782 = vadd.xlane.f32.xlu0 %v7781
      %v7783 = vpop.xlane.xlu0 %7782
      %v7784 = vsel %vm632, %v7546, 0.0
      %7785 = vadd.xlane.f32.xlu0 %v7784
      %v7786 = vpop.xlane.xlu0 %7785
      %v7787 = vsel %vm632, %v7547, 0.0
      %7788 = vadd.xlane.f32.xlu0 %v7787
      %v7789 = vpop.xlane.xlu0 %7788
      %v7790 = vsel %vm632, %v7548, 0.0
      %7791 = vadd.xlane.f32.xlu0 %v7790
      %v7792 = vpop.xlane.xlu0 %7791
      %v7793 = vsel %vm632, %v7549, 0.0
      %7794 = vadd.xlane.f32.xlu0 %v7793
      %v7795 = vpop.xlane.xlu0 %7794
      %v7796 = vsel %vm632, %v7550, 0.0
      %7797 = vadd.xlane.f32.xlu0 %v7796
      %v7798 = vpop.xlane.xlu0 %7797
      %v7799 = vsel %vm632, %v7551, 0.0
      %7800 = vadd.xlane.f32.xlu0 %v7799
      %v7801 = vpop.xlane.xlu0 %7800
      %v7802 = vsel %vm632, %v7552, 0.0
      %7803 = vadd.xlane.f32.xlu0 %v7802
      %v7804 = vpop.xlane.xlu0 %7803
      %v7805 = vsel %vm632, %v7553, 0.0
      %7806 = vadd.xlane.f32.xlu0 %v7805
      %v7807 = vpop.xlane.xlu0 %7806
      %v7808 = vsel %vm632, %v7554, 0.0
      %7809 = vadd.xlane.f32.xlu0 %v7808
      %v7810 = vpop.xlane.xlu0 %7809
      %v7811 = vsel %vm632, %v7555, 0.0
      %7812 = vadd.xlane.f32.xlu0 %v7811
      %v7813 = vpop.xlane.xlu0 %7812
      %v7814 = vsel %vm632, %v7556, 0.0
      %7815 = vadd.xlane.f32.xlu0 %v7814
      %v7816 = vpop.xlane.xlu0 %7815
      %v7817 = vsel %vm632, %v7557, 0.0
      %7818 = vadd.xlane.f32.xlu0 %v7817
      %v7819 = vpop.xlane.xlu0 %7818
      %v7820 = vsel %vm632, %v7558, 0.0
      %7821 = vadd.xlane.f32.xlu0 %v7820
      %v7822 = vpop.xlane.xlu0 %7821
      %v7823 = vsel %vm632, %v7559, 0.0
      %7824 = vadd.xlane.f32.xlu0 %v7823
      %v7825 = vpop.xlane.xlu0 %7824
      %v7826 = vsel %vm632, %v7560, 0.0
      %7827 = vadd.xlane.f32.xlu0 %v7826
      %v7828 = vpop.xlane.xlu0 %7827
      %v7829 = vsel %vm632, %v7561, 0.0
      %7830 = vadd.xlane.f32.xlu0 %v7829
      %v7831 = vpop.xlane.xlu0 %7830
      %v7832 = vsel %vm632, %v7562, 0.0
      %7833 = vadd.xlane.f32.xlu0 %v7832
      %v7834 = vpop.xlane.xlu0 %7833
      %v7835 = vsel %vm632, %v7563, 0.0
      %7836 = vadd.xlane.f32.xlu0 %v7835
      %v7837 = vpop.xlane.xlu0 %7836
      %v7838 = vsel %vm632, %v7564, 0.0
      %7839 = vadd.xlane.f32.xlu0 %v7838
      %v7840 = vpop.xlane.xlu0 %7839
      %v7841 = vsel %vm632, %v7565, 0.0
      %7842 = vadd.xlane.f32.xlu0 %v7841
      %v7843 = vpop.xlane.xlu0 %7842
      %v7844 = vsel %vm632, %v7566, 0.0
      %7845 = vadd.xlane.f32.xlu0 %v7844
      %v7846 = vpop.xlane.xlu0 %7845
      %v7847 = vsel %vm632, %v7567, 0.0
      %7848 = vadd.xlane.f32.xlu0 %v7847
      %v7849 = vpop.xlane.xlu0 %7848
      %v7850 = vsel %vm632, %v7568, 0.0
      %7851 = vadd.xlane.f32.xlu0 %v7850
      %v7852 = vpop.xlane.xlu0 %7851
      %v7853 = vsel %vm632, %v7569, 0.0
      %7854 = vadd.xlane.f32.xlu0 %v7853
      %v7855 = vpop.xlane.xlu0 %7854
      %v7856 = vsel %vm632, %v7570, 0.0
      %7857 = vadd.xlane.f32.xlu0 %v7856
      %v7858 = vpop.xlane.xlu0 %7857
      %v7859 = vsel %vm632, %v7571, 0.0
      %7860 = vadd.xlane.f32.xlu0 %v7859
      %v7861 = vpop.xlane.xlu0 %7860
      %v7862 = vsel %vm632, %v7572, 0.0
      %7863 = vadd.xlane.f32.xlu0 %v7862
      %v7864 = vpop.xlane.xlu0 %7863
      %v7865 = vsel %vm632, %v7573, 0.0
      %7866 = vadd.xlane.f32.xlu0 %v7865
      %v7867 = vpop.xlane.xlu0 %7866
      %v7868 = vsel %vm632, %v7574, 0.0
      %7869 = vadd.xlane.f32.xlu0 %v7868
      %v7870 = vpop.xlane.xlu0 %7869
      %v7871 = vsel %vm632, %v7575, 0.0
      %7872 = vadd.xlane.f32.xlu0 %v7871
      %v7873 = vpop.xlane.xlu0 %7872
      %v7874 = vsel %vm632, %v7576, 0.0
      %7875 = vadd.xlane.f32.xlu0 %v7874
      %v7876 = vpop.xlane.xlu0 %7875
      %v7877 = vsel %vm632, %v7577, 0.0
      %7878 = vadd.xlane.f32.xlu0 %v7877
      %v7879 = vpop.xlane.xlu0 %7878
      %v7880 = vsel %vm632, %v7578, 0.0
      %7881 = vadd.xlane.f32.xlu0 %v7880
      %v7882 = vpop.xlane.xlu0 %7881
      %v7883 = vsel %vm632, %v7579, 0.0
      %7884 = vadd.xlane.f32.xlu0 %v7883
      %v7885 = vpop.xlane.xlu0 %7884
      %v7886 = vsel %vm632, %v7580, 0.0
      %7887 = vadd.xlane.f32.xlu0 %v7886
      %v7888 = vpop.xlane.xlu0 %7887
      %v7889 = vsel %vm632, %v7581, 0.0
      %7890 = vadd.xlane.f32.xlu0 %v7889
      %v7891 = vpop.xlane.xlu0 %7890
      %v7892 = vsel %vm632, %v7582, 0.0
      %7893 = vadd.xlane.f32.xlu0 %v7892
      %v7894 = vpop.xlane.xlu0 %7893
      %v7895 = vsel %vm632, %v7583, 0.0
      %7896 = vadd.xlane.f32.xlu0 %v7895
      %v7897 = vpop.xlane.xlu0 %7896
      %v7898 = vsel %vm632, %v7584, 0.0
      %7899 = vadd.xlane.f32.xlu0 %v7898
      %v7900 = vpop.xlane.xlu0 %7899
      %v7901 = vsel %vm632, %v7585, 0.0
      %7902 = vadd.xlane.f32.xlu0 %v7901
      %v7903 = vpop.xlane.xlu0 %7902
      %v7904 = vsel %vm632, %v7586, 0.0
      %7905 = vadd.xlane.f32.xlu0 %v7904
      %v7906 = vpop.xlane.xlu0 %7905
      %v7907 = vsel %vm632, %v7587, 0.0
      %7908 = vadd.xlane.f32.xlu0 %v7907
      %v7909 = vpop.xlane.xlu0 %7908
      %v7910 = vsel %vm632, %v7588, 0.0
      %7911 = vadd.xlane.f32.xlu0 %v7910
      %v7912 = vpop.xlane.xlu0 %7911
      %v7913 = vsel %vm632, %v7589, 0.0
      %7914 = vadd.xlane.f32.xlu0 %v7913
      %v7915 = vpop.xlane.xlu0 %7914
      %v7916 = vsel %vm632, %v7590, 0.0
      %7917 = vadd.xlane.f32.xlu0 %v7916
      %v7918 = vpop.xlane.xlu0 %7917
      %v7919 = vsel %vm632, %v7591, 0.0
      %7920 = vadd.xlane.f32.xlu0 %v7919
      %v7921 = vpop.xlane.xlu0 %7920
      %v7922 = vsel %vm632, %v7592, 0.0
      %7923 = vadd.xlane.f32.xlu0 %v7922
      %v7924 = vpop.xlane.xlu0 %7923
      %v7925 = vsel %vm632, %v7593, 0.0
      %7926 = vadd.xlane.f32.xlu0 %v7925
      %v7927 = vpop.xlane.xlu0 %7926
      %v7928 = vsel %vm632, %v7594, 0.0
      %7929 = vadd.xlane.f32.xlu0 %v7928
      %v7930 = vpop.xlane.xlu0 %7929
      %v7931 = vsel %vm632, %v7595, 0.0
      %7932 = vadd.xlane.f32.xlu0 %v7931
      %v7933 = vpop.xlane.xlu0 %7932
      %v7934 = vsel %vm632, %v7596, 0.0
      %7935 = vadd.xlane.f32.xlu0 %v7934
      %v7936 = vpop.xlane.xlu0 %7935
      %v7937 = vsel %vm632, %v7597, 0.0
      %7938 = vadd.xlane.f32.xlu0 %v7937
      %v7939 = vpop.xlane.xlu0 %7938
      %v7940 = vsel %vm632, %v7598, 0.0
      %7941 = vadd.xlane.f32.xlu0 %v7940
      %v7942 = vpop.xlane.xlu0 %7941
      %v7943 = vsel %vm632, %v7599, 0.0
      %7944 = vadd.xlane.f32.xlu0 %v7943
      %v7945 = vpop.xlane.xlu0 %7944
      %v7946 = vsel %vm632, %v7600, 0.0
      %7947 = vadd.xlane.f32.xlu0 %v7946
      %v7948 = vpop.xlane.xlu0 %7947
      %v7949 = vsel %vm632, %v7601, 0.0
      %7950 = vadd.xlane.f32.xlu0 %v7949
      %v7951 = vpop.xlane.xlu0 %7950
      %v7952 = vsel %vm632, %v7602, 0.0
      %7953 = vadd.xlane.f32.xlu0 %v7952
      %v7954 = vpop.xlane.xlu0 %7953
      %v7955 = vsel %vm632, %v7603, 0.0
      %7956 = vadd.xlane.f32.xlu0 %v7955
      %v7957 = vpop.xlane.xlu0 %7956
      %v7958 = vsel %vm632, %v7604, 0.0
      %7959 = vadd.xlane.f32.xlu0 %v7958
      %v7960 = vpop.xlane.xlu0 %7959
      %v7961 = vsel %vm632, %v7605, 0.0
      %7962 = vadd.xlane.f32.xlu0 %v7961
      %v7963 = vpop.xlane.xlu0 %7962
      %v7964 = vsel %vm632, %v7606, 0.0
      %7965 = vadd.xlane.f32.xlu0 %v7964
      %v7966 = vpop.xlane.xlu0 %7965
      %v7967 = vsel %vm632, %v7607, 0.0
      %7968 = vadd.xlane.f32.xlu0 %v7967
      %v7969 = vpop.xlane.xlu0 %7968
      %v7970 = vsel %vm632, %v7608, 0.0
      %7971 = vadd.xlane.f32.xlu0 %v7970
      %v7972 = vpop.xlane.xlu0 %7971
      %v7973 = vsel %vm632, %v7609, 0.0
      %7974 = vadd.xlane.f32.xlu0 %v7973
      %v7975 = vpop.xlane.xlu0 %7974
      %v7976 = vsel %vm632, %v7610, 0.0
      %7977 = vadd.xlane.f32.xlu0 %v7976
      %v7978 = vpop.xlane.xlu0 %7977
      %v7979 = vsel %vm632, %v7611, 0.0
      %7980 = vadd.xlane.f32.xlu0 %v7979
      %v7981 = vpop.xlane.xlu0 %7980
      %v7982 = vsel %vm632, %v7612, 0.0
      %7983 = vadd.xlane.f32.xlu0 %v7982
      %v7984 = vpop.xlane.xlu0 %7983
      %v7985 = vsel %vm632, %v7613, 0.0
      %7986 = vadd.xlane.f32.xlu0 %v7985
      %v7987 = vpop.xlane.xlu0 %7986
      %v7988 = vsel %vm632, %v7614, 0.0
      %7989 = vadd.xlane.f32.xlu0 %v7988
      %v7990 = vpop.xlane.xlu0 %7989
      %v7991 = vsel %vm632, %v7615, 0.0
      %7992 = vadd.xlane.f32.xlu0 %v7991
      %v7993 = vpop.xlane.xlu0 %7992
      %v7994 = vsel %vm632, %v7616, 0.0
      %7995 = vadd.xlane.f32.xlu0 %v7994
      %v7996 = vpop.xlane.xlu0 %7995
      %v7997 = vsel %vm632, %v7617, 0.0
      %7998 = vadd.xlane.f32.xlu0 %v7997
      %v7999 = vpop.xlane.xlu0 %7998
      %v8000 = vsel %vm632, %v7618, 0.0
      %8001 = vadd.xlane.f32.xlu0 %v8000
      %v8002 = vpop.xlane.xlu0 %8001
      %v8003 = vmul.f32 %v7235, %v5060
      %v8004 = vmul.f32 %v7236, %v5062
      %v8005 = vmul.f32 %v7237, %v5064
      %v8006 = vmul.f32 %v7238, %v5066
      %v8007 = vmul.f32 %v7239, %v5068
      %v8008 = vmul.f32 %v7240, %v5070
      %v8009 = vmul.f32 %v7241, %v5072
      %v8010 = vmul.f32 %v7242, %v5074
      %v8011 = vmul.f32 %v7243, %v5076
      %v8012 = vmul.f32 %v7244, %v5078
      %v8013 = vmul.f32 %v7245, %v5080
      %v8014 = vmul.f32 %v7246, %v5082
      %v8015 = vmul.f32 %v7247, %v5084
      %v8016 = vmul.f32 %v7248, %v5086
      %v8017 = vmul.f32 %v7249, %v5088
      %v8018 = vmul.f32 %v7250, %v5090
      %v8019 = vmul.f32 %v7251, %v5092
      %v8020 = vmul.f32 %v7252, %v5094
      %v8021 = vmul.f32 %v7253, %v5096
      %v8022 = vmul.f32 %v7254, %v5098
      %v8023 = vmul.f32 %v7255, %v5100
      %v8024 = vmul.f32 %v7256, %v5102
      %v8025 = vmul.f32 %v7257, %v5104
      %v8026 = vmul.f32 %v7258, %v5106
      %v8027 = vmul.f32 %v7259, %v5108
      %v8028 = vmul.f32 %v7260, %v5110
      %v8029 = vmul.f32 %v7261, %v5112
      %v8030 = vmul.f32 %v7262, %v5114
      %v8031 = vmul.f32 %v7263, %v5116
      %v8032 = vmul.f32 %v7264, %v5118
      %v8033 = vmul.f32 %v7265, %v5120
      %v8034 = vmul.f32 %v7266, %v5122
      %v8035 = vmul.f32 %v7267, %v5124
      %v8036 = vmul.f32 %v7268, %v5126
      %v8037 = vmul.f32 %v7269, %v5128
      %v8038 = vmul.f32 %v7270, %v5130
      %v8039 = vmul.f32 %v7271, %v5132
      %v8040 = vmul.f32 %v7272, %v5134
      %v8041 = vmul.f32 %v7273, %v5136
      %v8042 = vmul.f32 %v7274, %v5138
      %v8043 = vmul.f32 %v7275, %v5140
      %v8044 = vmul.f32 %v7276, %v5142
      %v8045 = vmul.f32 %v7277, %v5144
      %v8046 = vmul.f32 %v7278, %v5146
      %v8047 = vmul.f32 %v7279, %v5148
      %v8048 = vmul.f32 %v7280, %v5150
      %v8049 = vmul.f32 %v7281, %v5152
      %v8050 = vmul.f32 %v7282, %v5154
      %v8051 = vmul.f32 %v7283, %v5156
      %v8052 = vmul.f32 %v7284, %v5158
      %v8053 = vmul.f32 %v7285, %v5160
      %v8054 = vmul.f32 %v7286, %v5162
      %v8055 = vmul.f32 %v7287, %v5164
      %v8056 = vmul.f32 %v7288, %v5166
      %v8057 = vmul.f32 %v7289, %v5168
      %v8058 = vmul.f32 %v7290, %v5170
      %v8059 = vmul.f32 %v7291, %v5172
      %v8060 = vmul.f32 %v7292, %v5174
      %v8061 = vmul.f32 %v7293, %v5176
      %v8062 = vmul.f32 %v7294, %v5178
      %v8063 = vmul.f32 %v7295, %v5180
      %v8064 = vmul.f32 %v7296, %v5182
      %v8065 = vmul.f32 %v7297, %v5184
      %v8066 = vmul.f32 %v7298, %v5186
      %v8067 = vmul.f32 %v7299, %v5188
      %v8068 = vmul.f32 %v7300, %v5190
      %v8069 = vmul.f32 %v7301, %v5192
      %v8070 = vmul.f32 %v7302, %v5194
      %v8071 = vmul.f32 %v7303, %v5196
      %v8072 = vmul.f32 %v7304, %v5198
      %v8073 = vmul.f32 %v7305, %v5200
      %v8074 = vmul.f32 %v7306, %v5202
      %v8075 = vmul.f32 %v7307, %v5204
      %v8076 = vmul.f32 %v7308, %v5206
      %v8077 = vmul.f32 %v7309, %v5208
      %v8078 = vmul.f32 %v7310, %v5210
      %v8079 = vmul.f32 %v7311, %v5212
      %v8080 = vmul.f32 %v7312, %v5214
      %v8081 = vmul.f32 %v7313, %v5216
      %v8082 = vmul.f32 %v7314, %v5218
      %v8083 = vmul.f32 %v7315, %v5220
      %v8084 = vmul.f32 %v7316, %v5222
      %v8085 = vmul.f32 %v7317, %v5224
      %v8086 = vmul.f32 %v7318, %v5226
      %v8087 = vmul.f32 %v7319, %v5228
      %v8088 = vmul.f32 %v7320, %v5230
      %v8089 = vmul.f32 %v7321, %v5232
      %v8090 = vmul.f32 %v7322, %v5234
      %v8091 = vmul.f32 %v7323, %v5236
      %v8092 = vmul.f32 %v7324, %v5238
      %v8093 = vmul.f32 %v7325, %v5240
      %v8094 = vmul.f32 %v7326, %v5242
      %v8095 = vmul.f32 %v7327, %v5244
      %v8096 = vmul.f32 %v7328, %v5246
      %v8097 = vmul.f32 %v7329, %v5248
      %v8098 = vmul.f32 %v7330, %v5250
      %v8099 = vmul.f32 %v7331, %v5252
      %v8100 = vmul.f32 %v7332, %v5254
      %v8101 = vmul.f32 %v7333, %v5256
      %v8102 = vmul.f32 %v7334, %v5258
      %v8103 = vmul.f32 %v7335, %v5260
      %v8104 = vmul.f32 %v7336, %v5262
      %v8105 = vmul.f32 %v7337, %v5264
      %v8106 = vmul.f32 %v7338, %v5266
      %v8107 = vmul.f32 %v7339, %v5268
      %v8108 = vmul.f32 %v7340, %v5270
      %v8109 = vmul.f32 %v7341, %v5272
      %v8110 = vmul.f32 %v7342, %v5274
      %v8111 = vmul.f32 %v7343, %v5276
      %v8112 = vmul.f32 %v7344, %v5278
      %v8113 = vmul.f32 %v7345, %v5280
      %v8114 = vmul.f32 %v7346, %v5282
      %v8115 = vmul.f32 %v7347, %v5284
      %v8116 = vmul.f32 %v7348, %v5286
      %v8117 = vmul.f32 %v7349, %v5288
      %v8118 = vmul.f32 %v7350, %v5290
      %v8119 = vmul.f32 %v7351, %v5292
      %v8120 = vmul.f32 %v7352, %v5294
      %v8121 = vmul.f32 %v7353, %v5296
      %v8122 = vmul.f32 %v7354, %v5298
      %v8123 = vmul.f32 %v7355, %v5300
      %v8124 = vmul.f32 %v7356, %v5302
      %v8125 = vmul.f32 %v7357, %v5304
      %v8126 = vmul.f32 %v7358, %v5306
      %v8127 = vmul.f32 %v7359, %v5308
      %v8128 = vmul.f32 %v7360, %v5310
      %v8129 = vmul.f32 %v7361, %v5312
      %v8130 = vmul.f32 %v7362, %v5314
      %v8131 = vsub.f32 %v8003, %v7621
      %v8132 = vsub.f32 %v8004, %v7624
      %v8133 = vsub.f32 %v8005, %v7627
      %v8134 = vsub.f32 %v8006, %v7630
      %v8135 = vsub.f32 %v8007, %v7633
      %v8136 = vsub.f32 %v8008, %v7636
      %v8137 = vsub.f32 %v8009, %v7639
      %v8138 = vsub.f32 %v8010, %v7642
      %v8139 = vsub.f32 %v8011, %v7645
      %v8140 = vsub.f32 %v8012, %v7648
      %v8141 = vsub.f32 %v8013, %v7651
      %v8142 = vsub.f32 %v8014, %v7654
      %v8143 = vsub.f32 %v8015, %v7657
      %v8144 = vsub.f32 %v8016, %v7660
      %v8145 = vsub.f32 %v8017, %v7663
      %v8146 = vsub.f32 %v8018, %v7666
      %v8147 = vsub.f32 %v8019, %v7669
      %v8148 = vsub.f32 %v8020, %v7672
      %v8149 = vsub.f32 %v8021, %v7675
      %v8150 = vsub.f32 %v8022, %v7678
      %v8151 = vsub.f32 %v8023, %v7681
      %v8152 = vsub.f32 %v8024, %v7684
      %v8153 = vsub.f32 %v8025, %v7687
      %v8154 = vsub.f32 %v8026, %v7690
      %v8155 = vsub.f32 %v8027, %v7693
      %v8156 = vsub.f32 %v8028, %v7696
      %v8157 = vsub.f32 %v8029, %v7699
      %v8158 = vsub.f32 %v8030, %v7702
      %v8159 = vsub.f32 %v8031, %v7705
      %v8160 = vsub.f32 %v8032, %v7708
      %v8161 = vsub.f32 %v8033, %v7711
      %v8162 = vsub.f32 %v8034, %v7714
      %v8163 = vsub.f32 %v8035, %v7717
      %v8164 = vsub.f32 %v8036, %v7720
      %v8165 = vsub.f32 %v8037, %v7723
      %v8166 = vsub.f32 %v8038, %v7726
      %v8167 = vsub.f32 %v8039, %v7729
      %v8168 = vsub.f32 %v8040, %v7732
      %v8169 = vsub.f32 %v8041, %v7735
      %v8170 = vsub.f32 %v8042, %v7738
      %v8171 = vsub.f32 %v8043, %v7741
      %v8172 = vsub.f32 %v8044, %v7744
      %v8173 = vsub.f32 %v8045, %v7747
      %v8174 = vsub.f32 %v8046, %v7750
      %v8175 = vsub.f32 %v8047, %v7753
      %v8176 = vsub.f32 %v8048, %v7756
      %v8177 = vsub.f32 %v8049, %v7759
      %v8178 = vsub.f32 %v8050, %v7762
      %v8179 = vsub.f32 %v8051, %v7765
      %v8180 = vsub.f32 %v8052, %v7768
      %v8181 = vsub.f32 %v8053, %v7771
      %v8182 = vsub.f32 %v8054, %v7774
      %v8183 = vsub.f32 %v8055, %v7777
      %v8184 = vsub.f32 %v8056, %v7780
      %v8185 = vsub.f32 %v8057, %v7783
      %v8186 = vsub.f32 %v8058, %v7786
      %v8187 = vsub.f32 %v8059, %v7789
      %v8188 = vsub.f32 %v8060, %v7792
      %v8189 = vsub.f32 %v8061, %v7795
      %v8190 = vsub.f32 %v8062, %v7798
      %v8191 = vsub.f32 %v8063, %v7801
      %v8192 = vsub.f32 %v8064, %v7804
      %v8193 = vsub.f32 %v8065, %v7807
      %v8194 = vsub.f32 %v8066, %v7810
      %v8195 = vsub.f32 %v8067, %v7813
      %v8196 = vsub.f32 %v8068, %v7816
      %v8197 = vsub.f32 %v8069, %v7819
      %v8198 = vsub.f32 %v8070, %v7822
      %v8199 = vsub.f32 %v8071, %v7825
      %v8200 = vsub.f32 %v8072, %v7828
      %v8201 = vsub.f32 %v8073, %v7831
      %v8202 = vsub.f32 %v8074, %v7834
      %v8203 = vsub.f32 %v8075, %v7837
      %v8204 = vsub.f32 %v8076, %v7840
      %v8205 = vsub.f32 %v8077, %v7843
      %v8206 = vsub.f32 %v8078, %v7846
      %v8207 = vsub.f32 %v8079, %v7849
      %v8208 = vsub.f32 %v8080, %v7852
      %v8209 = vsub.f32 %v8081, %v7855
      %v8210 = vsub.f32 %v8082, %v7858
      %v8211 = vsub.f32 %v8083, %v7861
      %v8212 = vsub.f32 %v8084, %v7864
      %v8213 = vsub.f32 %v8085, %v7867
      %v8214 = vsub.f32 %v8086, %v7870
      %v8215 = vsub.f32 %v8087, %v7873
      %v8216 = vsub.f32 %v8088, %v7876
      %v8217 = vsub.f32 %v8089, %v7879
      %v8218 = vsub.f32 %v8090, %v7882
      %v8219 = vsub.f32 %v8091, %v7885
      %v8220 = vsub.f32 %v8092, %v7888
      %v8221 = vsub.f32 %v8093, %v7891
      %v8222 = vsub.f32 %v8094, %v7894
      %v8223 = vsub.f32 %v8095, %v7897
      %v8224 = vsub.f32 %v8096, %v7900
      %v8225 = vsub.f32 %v8097, %v7903
      %v8226 = vsub.f32 %v8098, %v7906
      %v8227 = vsub.f32 %v8099, %v7909
      %v8228 = vsub.f32 %v8100, %v7912
      %v8229 = vsub.f32 %v8101, %v7915
      %v8230 = vsub.f32 %v8102, %v7918
      %v8231 = vsub.f32 %v8103, %v7921
      %v8232 = vsub.f32 %v8104, %v7924
      %v8233 = vsub.f32 %v8105, %v7927
      %v8234 = vsub.f32 %v8106, %v7930
      %v8235 = vsub.f32 %v8107, %v7933
      %v8236 = vsub.f32 %v8108, %v7936
      %v8237 = vsub.f32 %v8109, %v7939
      %v8238 = vsub.f32 %v8110, %v7942
      %v8239 = vsub.f32 %v8111, %v7945
      %v8240 = vsub.f32 %v8112, %v7948
      %v8241 = vsub.f32 %v8113, %v7951
      %v8242 = vsub.f32 %v8114, %v7954
      %v8243 = vsub.f32 %v8115, %v7957
      %v8244 = vsub.f32 %v8116, %v7960
      %v8245 = vsub.f32 %v8117, %v7963
      %v8246 = vsub.f32 %v8118, %v7966
      %v8247 = vsub.f32 %v8119, %v7969
      %v8248 = vsub.f32 %v8120, %v7972
      %v8249 = vsub.f32 %v8121, %v7975
      %v8250 = vsub.f32 %v8122, %v7978
      %v8251 = vsub.f32 %v8123, %v7981
      %v8252 = vsub.f32 %v8124, %v7984
      %v8253 = vsub.f32 %v8125, %v7987
      %v8254 = vsub.f32 %v8126, %v7990
      %v8255 = vsub.f32 %v8127, %v7993
      %v8256 = vsub.f32 %v8128, %v7996
      %v8257 = vsub.f32 %v8129, %v7999
      %v8258 = vsub.f32 %v8130, %v8002
      %v8259 = vmul.f32 %v8131, %v7363
      %v8260 = vmul.f32 %v8132, %v7364
      %v8261 = vmul.f32 %v8133, %v7365
      %v8262 = vmul.f32 %v8134, %v7366
      %v8263 = vmul.f32 %v8135, %v7367
      %v8264 = vmul.f32 %v8136, %v7368
      %v8265 = vmul.f32 %v8137, %v7369
      %v8266 = vmul.f32 %v8138, %v7370
      %v8267 = vmul.f32 %v8139, %v7371
      %v8268 = vmul.f32 %v8140, %v7372
      %v8269 = vmul.f32 %v8141, %v7373
      %v8270 = vmul.f32 %v8142, %v7374
      %v8271 = vmul.f32 %v8143, %v7375
      %v8272 = vmul.f32 %v8144, %v7376
      %v8273 = vmul.f32 %v8145, %v7377
      %v8274 = vmul.f32 %v8146, %v7378
      %v8275 = vmul.f32 %v8147, %v7379
      %v8276 = vmul.f32 %v8148, %v7380
      %v8277 = vmul.f32 %v8149, %v7381
      %v8278 = vmul.f32 %v8150, %v7382
      %v8279 = vmul.f32 %v8151, %v7383
      %v8280 = vmul.f32 %v8152, %v7384
      %v8281 = vmul.f32 %v8153, %v7385
      %v8282 = vmul.f32 %v8154, %v7386
      %v8283 = vmul.f32 %v8155, %v7387
      %v8284 = vmul.f32 %v8156, %v7388
      %v8285 = vmul.f32 %v8157, %v7389
      %v8286 = vmul.f32 %v8158, %v7390
      %v8287 = vmul.f32 %v8159, %v7391
      %v8288 = vmul.f32 %v8160, %v7392
      %v8289 = vmul.f32 %v8161, %v7393
      %v8290 = vmul.f32 %v8162, %v7394
      %v8291 = vmul.f32 %v8163, %v7395
      %v8292 = vmul.f32 %v8164, %v7396
      %v8293 = vmul.f32 %v8165, %v7397
      %v8294 = vmul.f32 %v8166, %v7398
      %v8295 = vmul.f32 %v8167, %v7399
      %v8296 = vmul.f32 %v8168, %v7400
      %v8297 = vmul.f32 %v8169, %v7401
      %v8298 = vmul.f32 %v8170, %v7402
      %v8299 = vmul.f32 %v8171, %v7403
      %v8300 = vmul.f32 %v8172, %v7404
      %v8301 = vmul.f32 %v8173, %v7405
      %v8302 = vmul.f32 %v8174, %v7406
      %v8303 = vmul.f32 %v8175, %v7407
      %v8304 = vmul.f32 %v8176, %v7408
      %v8305 = vmul.f32 %v8177, %v7409
      %v8306 = vmul.f32 %v8178, %v7410
      %v8307 = vmul.f32 %v8179, %v7411
      %v8308 = vmul.f32 %v8180, %v7412
      %v8309 = vmul.f32 %v8181, %v7413
      %v8310 = vmul.f32 %v8182, %v7414
      %v8311 = vmul.f32 %v8183, %v7415
      %v8312 = vmul.f32 %v8184, %v7416
      %v8313 = vmul.f32 %v8185, %v7417
      %v8314 = vmul.f32 %v8186, %v7418
      %v8315 = vmul.f32 %v8187, %v7419
      %v8316 = vmul.f32 %v8188, %v7420
      %v8317 = vmul.f32 %v8189, %v7421
      %v8318 = vmul.f32 %v8190, %v7422
      %v8319 = vmul.f32 %v8191, %v7423
      %v8320 = vmul.f32 %v8192, %v7424
      %v8321 = vmul.f32 %v8193, %v7425
      %v8322 = vmul.f32 %v8194, %v7426
      %v8323 = vmul.f32 %v8195, %v7427
      %v8324 = vmul.f32 %v8196, %v7428
      %v8325 = vmul.f32 %v8197, %v7429
      %v8326 = vmul.f32 %v8198, %v7430
      %v8327 = vmul.f32 %v8199, %v7431
      %v8328 = vmul.f32 %v8200, %v7432
      %v8329 = vmul.f32 %v8201, %v7433
      %v8330 = vmul.f32 %v8202, %v7434
      %v8331 = vmul.f32 %v8203, %v7435
      %v8332 = vmul.f32 %v8204, %v7436
      %v8333 = vmul.f32 %v8205, %v7437
      %v8334 = vmul.f32 %v8206, %v7438
      %v8335 = vmul.f32 %v8207, %v7439
      %v8336 = vmul.f32 %v8208, %v7440
      %v8337 = vmul.f32 %v8209, %v7441
      %v8338 = vmul.f32 %v8210, %v7442
      %v8339 = vmul.f32 %v8211, %v7443
      %v8340 = vmul.f32 %v8212, %v7444
      %v8341 = vmul.f32 %v8213, %v7445
      %v8342 = vmul.f32 %v8214, %v7446
      %v8343 = vmul.f32 %v8215, %v7447
      %v8344 = vmul.f32 %v8216, %v7448
      %v8345 = vmul.f32 %v8217, %v7449
      %v8346 = vmul.f32 %v8218, %v7450
      %v8347 = vmul.f32 %v8219, %v7451
      %v8348 = vmul.f32 %v8220, %v7452
      %v8349 = vmul.f32 %v8221, %v7453
      %v8350 = vmul.f32 %v8222, %v7454
      %v8351 = vmul.f32 %v8223, %v7455
      %v8352 = vmul.f32 %v8224, %v7456
      %v8353 = vmul.f32 %v8225, %v7457
      %v8354 = vmul.f32 %v8226, %v7458
      %v8355 = vmul.f32 %v8227, %v7459
      %v8356 = vmul.f32 %v8228, %v7460
      %v8357 = vmul.f32 %v8229, %v7461
      %v8358 = vmul.f32 %v8230, %v7462
      %v8359 = vmul.f32 %v8231, %v7463
      %v8360 = vmul.f32 %v8232, %v7464
      %v8361 = vmul.f32 %v8233, %v7465
      %v8362 = vmul.f32 %v8234, %v7466
      %v8363 = vmul.f32 %v8235, %v7467
      %v8364 = vmul.f32 %v8236, %v7468
      %v8365 = vmul.f32 %v8237, %v7469
      %v8366 = vmul.f32 %v8238, %v7470
      %v8367 = vmul.f32 %v8239, %v7471
      %v8368 = vmul.f32 %v8240, %v7472
      %v8369 = vmul.f32 %v8241, %v7473
      %v8370 = vmul.f32 %v8242, %v7474
      %v8371 = vmul.f32 %v8243, %v7475
      %v8372 = vmul.f32 %v8244, %v7476
      %v8373 = vmul.f32 %v8245, %v7477
      %v8374 = vmul.f32 %v8246, %v7478
      %v8375 = vmul.f32 %v8247, %v7479
      %v8376 = vmul.f32 %v8248, %v7480
      %v8377 = vmul.f32 %v8249, %v7481
      %v8378 = vmul.f32 %v8250, %v7482
      %v8379 = vmul.f32 %v8251, %v7483
      %v8380 = vmul.f32 %v8252, %v7484
      %v8381 = vmul.f32 %v8253, %v7485
      %v8382 = vmul.f32 %v8254, %v7486
      %v8383 = vmul.f32 %v8255, %v7487
      %v8384 = vmul.f32 %v8256, %v7488
      %v8385 = vmul.f32 %v8257, %v7489
      %v8386 = vmul.f32 %v8258, %v7490
      %v8387 = vadd.f32 %v3523, %v8259
      %v8388 = vadd.f32 %v3525, %v8260
      %v8389 = vadd.f32 %v3527, %v8261
      %v8390 = vadd.f32 %v3529, %v8262
      %v8391 = vadd.f32 %v3531, %v8263
      %v8392 = vadd.f32 %v3533, %v8264
      %v8393 = vadd.f32 %v3535, %v8265
      %v8394 = vadd.f32 %v3537, %v8266
      %v8395 = vadd.f32 %v3539, %v8267
      %v8396 = vadd.f32 %v3541, %v8268
      %v8397 = vadd.f32 %v3543, %v8269
      %v8398 = vadd.f32 %v3545, %v8270
      %v8399 = vadd.f32 %v3547, %v8271
      %v8400 = vadd.f32 %v3549, %v8272
      %v8401 = vadd.f32 %v3551, %v8273
      %v8402 = vadd.f32 %v3553, %v8274
      %v8403 = vadd.f32 %v3555, %v8275
      %v8404 = vadd.f32 %v3557, %v8276
      %v8405 = vadd.f32 %v3559, %v8277
      %v8406 = vadd.f32 %v3561, %v8278
      %v8407 = vadd.f32 %v3563, %v8279
      %v8408 = vadd.f32 %v3565, %v8280
      %v8409 = vadd.f32 %v3567, %v8281
      %v8410 = vadd.f32 %v3569, %v8282
      %v8411 = vadd.f32 %v3571, %v8283
      %v8412 = vadd.f32 %v3573, %v8284
      %v8413 = vadd.f32 %v3575, %v8285
      %v8414 = vadd.f32 %v3577, %v8286
      %v8415 = vadd.f32 %v3579, %v8287
      %v8416 = vadd.f32 %v3581, %v8288
      %v8417 = vadd.f32 %v3583, %v8289
      %v8418 = vadd.f32 %v3585, %v8290
      %v8419 = vadd.f32 %v3587, %v8291
      %v8420 = vadd.f32 %v3589, %v8292
      %v8421 = vadd.f32 %v3591, %v8293
      %v8422 = vadd.f32 %v3593, %v8294
      %v8423 = vadd.f32 %v3595, %v8295
      %v8424 = vadd.f32 %v3597, %v8296
      %v8425 = vadd.f32 %v3599, %v8297
      %v8426 = vadd.f32 %v3601, %v8298
      %v8427 = vadd.f32 %v3603, %v8299
      %v8428 = vadd.f32 %v3605, %v8300
      %v8429 = vadd.f32 %v3607, %v8301
      %v8430 = vadd.f32 %v3609, %v8302
      %v8431 = vadd.f32 %v3611, %v8303
      %v8432 = vadd.f32 %v3613, %v8304
      %v8433 = vadd.f32 %v3615, %v8305
      %v8434 = vadd.f32 %v3617, %v8306
      %v8435 = vadd.f32 %v3619, %v8307
      %v8436 = vadd.f32 %v3621, %v8308
      %v8437 = vadd.f32 %v3623, %v8309
      %v8438 = vadd.f32 %v3625, %v8310
      %v8439 = vadd.f32 %v3627, %v8311
      %v8440 = vadd.f32 %v3629, %v8312
      %v8441 = vadd.f32 %v3631, %v8313
      %v8442 = vadd.f32 %v3633, %v8314
      %v8443 = vadd.f32 %v3635, %v8315
      %v8444 = vadd.f32 %v3637, %v8316
      %v8445 = vadd.f32 %v3639, %v8317
      %v8446 = vadd.f32 %v3641, %v8318
      %v8447 = vadd.f32 %v3643, %v8319
      %v8448 = vadd.f32 %v3645, %v8320
      %v8449 = vadd.f32 %v3647, %v8321
      %v8450 = vadd.f32 %v3649, %v8322
      %v8451 = vadd.f32 %v3651, %v8323
      %v8452 = vadd.f32 %v3653, %v8324
      %v8453 = vadd.f32 %v3655, %v8325
      %v8454 = vadd.f32 %v3657, %v8326
      %v8455 = vadd.f32 %v3659, %v8327
      %v8456 = vadd.f32 %v3661, %v8328
      %v8457 = vadd.f32 %v3663, %v8329
      %v8458 = vadd.f32 %v3665, %v8330
      %v8459 = vadd.f32 %v3667, %v8331
      %v8460 = vadd.f32 %v3669, %v8332
      %v8461 = vadd.f32 %v3671, %v8333
      %v8462 = vadd.f32 %v3673, %v8334
      %v8463 = vadd.f32 %v3675, %v8335
      %v8464 = vadd.f32 %v3677, %v8336
      %v8465 = vadd.f32 %v3679, %v8337
      %v8466 = vadd.f32 %v3681, %v8338
      %v8467 = vadd.f32 %v3683, %v8339
      %v8468 = vadd.f32 %v3685, %v8340
      %v8469 = vadd.f32 %v3687, %v8341
      %v8470 = vadd.f32 %v3689, %v8342
      %v8471 = vadd.f32 %v3691, %v8343
      %v8472 = vadd.f32 %v3693, %v8344
      %v8473 = vadd.f32 %v3695, %v8345
      %v8474 = vadd.f32 %v3697, %v8346
      %v8475 = vadd.f32 %v3699, %v8347
      %v8476 = vadd.f32 %v3701, %v8348
      %v8477 = vadd.f32 %v3703, %v8349
      %v8478 = vadd.f32 %v3705, %v8350
      %v8479 = vadd.f32 %v3707, %v8351
      %v8480 = vadd.f32 %v3709, %v8352
      %v8481 = vadd.f32 %v3711, %v8353
      %v8482 = vadd.f32 %v3713, %v8354
      %v8483 = vadd.f32 %v3715, %v8355
      %v8484 = vadd.f32 %v3717, %v8356
      %v8485 = vadd.f32 %v3719, %v8357
      %v8486 = vadd.f32 %v3721, %v8358
      %v8487 = vadd.f32 %v3723, %v8359
      %v8488 = vadd.f32 %v3725, %v8360
      %v8489 = vadd.f32 %v3727, %v8361
      %v8490 = vadd.f32 %v3729, %v8362
      %v8491 = vadd.f32 %v3731, %v8363
      %v8492 = vadd.f32 %v3733, %v8364
      %v8493 = vadd.f32 %v3735, %v8365
      %v8494 = vadd.f32 %v3737, %v8366
      %v8495 = vadd.f32 %v3739, %v8367
      %v8496 = vadd.f32 %v3741, %v8368
      %v8497 = vadd.f32 %v3743, %v8369
      %v8498 = vadd.f32 %v3745, %v8370
      %v8499 = vadd.f32 %v3747, %v8371
      %v8500 = vadd.f32 %v3749, %v8372
      %v8501 = vadd.f32 %v3751, %v8373
      %v8502 = vadd.f32 %v3753, %v8374
      %v8503 = vadd.f32 %v3755, %v8375
      %v8504 = vadd.f32 %v3757, %v8376
      %v8505 = vadd.f32 %v3759, %v8377
      %v8506 = vadd.f32 %v3761, %v8378
      %v8507 = vadd.f32 %v3763, %v8379
      %v8508 = vadd.f32 %v3765, %v8380
      %v8509 = vadd.f32 %v3767, %v8381
      %v8510 = vadd.f32 %v3769, %v8382
      %v8511 = vadd.f32 %v3771, %v8383
      %v8512 = vadd.f32 %v3773, %v8384
      %v8513 = vadd.f32 %v3775, %v8385
      %v8514 = vadd.f32 %v3777, %v8386
      %v8515 = vsub.f32 1.0, %v5444
      %v8516 = vsub.f32 1.0, %v5446
      %v8517 = vsub.f32 1.0, %v5448
      %v8518 = vsub.f32 1.0, %v5450
      %v8519 = vsub.f32 1.0, %v5452
      %v8520 = vsub.f32 1.0, %v5454
      %v8521 = vsub.f32 1.0, %v5456
      %v8522 = vsub.f32 1.0, %v5458
      %v8523 = vsub.f32 1.0, %v5460
      %v8524 = vsub.f32 1.0, %v5462
      %v8525 = vsub.f32 1.0, %v5464
      %v8526 = vsub.f32 1.0, %v5466
      %v8527 = vsub.f32 1.0, %v5468
      %v8528 = vsub.f32 1.0, %v5470
      %v8529 = vsub.f32 1.0, %v5472
      %v8530 = vsub.f32 1.0, %v5474
      %v8531 = vsub.f32 1.0, %v5476
      %v8532 = vsub.f32 1.0, %v5478
      %v8533 = vsub.f32 1.0, %v5480
      %v8534 = vsub.f32 1.0, %v5482
      %v8535 = vsub.f32 1.0, %v5484
      %v8536 = vsub.f32 1.0, %v5486
      %v8537 = vsub.f32 1.0, %v5488
      %v8538 = vsub.f32 1.0, %v5490
      %v8539 = vsub.f32 1.0, %v5492
      %v8540 = vsub.f32 1.0, %v5494
      %v8541 = vsub.f32 1.0, %v5496
      %v8542 = vsub.f32 1.0, %v5498
      %v8543 = vsub.f32 1.0, %v5500
      %v8544 = vsub.f32 1.0, %v5502
      %v8545 = vsub.f32 1.0, %v5504
      %v8546 = vsub.f32 1.0, %v5506
      %v8547 = vsub.f32 1.0, %v5508
      %v8548 = vsub.f32 1.0, %v5510
      %v8549 = vsub.f32 1.0, %v5512
      %v8550 = vsub.f32 1.0, %v5514
      %v8551 = vsub.f32 1.0, %v5516
      %v8552 = vsub.f32 1.0, %v5518
      %v8553 = vsub.f32 1.0, %v5520
      %v8554 = vsub.f32 1.0, %v5522
      %v8555 = vsub.f32 1.0, %v5524
      %v8556 = vsub.f32 1.0, %v5526
      %v8557 = vsub.f32 1.0, %v5528
      %v8558 = vsub.f32 1.0, %v5530
      %v8559 = vsub.f32 1.0, %v5532
      %v8560 = vsub.f32 1.0, %v5534
      %v8561 = vsub.f32 1.0, %v5536
      %v8562 = vsub.f32 1.0, %v5538
      %v8563 = vsub.f32 1.0, %v5540
      %v8564 = vsub.f32 1.0, %v5542
      %v8565 = vsub.f32 1.0, %v5544
      %v8566 = vsub.f32 1.0, %v5546
      %v8567 = vsub.f32 1.0, %v5548
      %v8568 = vsub.f32 1.0, %v5550
      %v8569 = vsub.f32 1.0, %v5552
      %v8570 = vsub.f32 1.0, %v5554
      %v8571 = vsub.f32 1.0, %v5556
      %v8572 = vsub.f32 1.0, %v5558
      %v8573 = vsub.f32 1.0, %v5560
      %v8574 = vsub.f32 1.0, %v5562
      %v8575 = vsub.f32 1.0, %v5564
      %v8576 = vsub.f32 1.0, %v5566
      %v8577 = vsub.f32 1.0, %v5568
      %v8578 = vsub.f32 1.0, %v5570
      %v8579 = vsub.f32 1.0, %v5572
      %v8580 = vsub.f32 1.0, %v5574
      %v8581 = vsub.f32 1.0, %v5576
      %v8582 = vsub.f32 1.0, %v5578
      %v8583 = vsub.f32 1.0, %v5580
      %v8584 = vsub.f32 1.0, %v5582
      %v8585 = vsub.f32 1.0, %v5584
      %v8586 = vsub.f32 1.0, %v5586
      %v8587 = vsub.f32 1.0, %v5588
      %v8588 = vsub.f32 1.0, %v5590
      %v8589 = vsub.f32 1.0, %v5592
      %v8590 = vsub.f32 1.0, %v5594
      %v8591 = vsub.f32 1.0, %v5596
      %v8592 = vsub.f32 1.0, %v5598
      %v8593 = vsub.f32 1.0, %v5600
      %v8594 = vsub.f32 1.0, %v5602
      %v8595 = vsub.f32 1.0, %v5604
      %v8596 = vsub.f32 1.0, %v5606
      %v8597 = vsub.f32 1.0, %v5608
      %v8598 = vsub.f32 1.0, %v5610
      %v8599 = vsub.f32 1.0, %v5612
      %v8600 = vsub.f32 1.0, %v5614
      %v8601 = vsub.f32 1.0, %v5616
      %v8602 = vsub.f32 1.0, %v5618
      %v8603 = vsub.f32 1.0, %v5620
      %v8604 = vsub.f32 1.0, %v5622
      %v8605 = vsub.f32 1.0, %v5624
      %v8606 = vsub.f32 1.0, %v5626
      %v8607 = vsub.f32 1.0, %v5628
      %v8608 = vsub.f32 1.0, %v5630
      %v8609 = vsub.f32 1.0, %v5632
      %v8610 = vsub.f32 1.0, %v5634
      %v8611 = vsub.f32 1.0, %v5636
      %v8612 = vsub.f32 1.0, %v5638
      %v8613 = vsub.f32 1.0, %v5640
      %v8614 = vsub.f32 1.0, %v5642
      %v8615 = vsub.f32 1.0, %v5644
      %v8616 = vsub.f32 1.0, %v5646
      %v8617 = vsub.f32 1.0, %v5648
      %v8618 = vsub.f32 1.0, %v5650
      %v8619 = vsub.f32 1.0, %v5652
      %v8620 = vsub.f32 1.0, %v5654
      %v8621 = vsub.f32 1.0, %v5656
      %v8622 = vsub.f32 1.0, %v5658
      %v8623 = vsub.f32 1.0, %v5660
      %v8624 = vsub.f32 1.0, %v5662
      %v8625 = vsub.f32 1.0, %v5664
      %v8626 = vsub.f32 1.0, %v5666
      %v8627 = vsub.f32 1.0, %v5668
      %v8628 = vsub.f32 1.0, %v5670
      %v8629 = vsub.f32 1.0, %v5672
      %v8630 = vsub.f32 1.0, %v5674
      %v8631 = vsub.f32 1.0, %v5676
      %v8632 = vsub.f32 1.0, %v5678
      %v8633 = vsub.f32 1.0, %v5680
      %v8634 = vsub.f32 1.0, %v5682
      %v8635 = vsub.f32 1.0, %v5684
      %v8636 = vsub.f32 1.0, %v5686
      %v8637 = vsub.f32 1.0, %v5688
      %v8638 = vsub.f32 1.0, %v5690
      %v8639 = vsub.f32 1.0, %v5692
      %v8640 = vsub.f32 1.0, %v5694
      %v8641 = vsub.f32 1.0, %v5696
      %v8642 = vsub.f32 1.0, %v5698
      %v8643 = vmul.f32 %v3203, %v8515
      %v8644 = vmul.f32 %v3205, %v8516
      %v8645 = vmul.f32 %v3208, %v8517
      %v8646 = vmul.f32 %v3210, %v8518
      %v8647 = vmul.f32 %v3213, %v8519
      %v8648 = vmul.f32 %v3215, %v8520
      %v8649 = vmul.f32 %v3218, %v8521
      %v8650 = vmul.f32 %v3220, %v8522
      %v8651 = vmul.f32 %v3223, %v8523
      %v8652 = vmul.f32 %v3225, %v8524
      %v8653 = vmul.f32 %v3228, %v8525
      %v8654 = vmul.f32 %v3230, %v8526
      %v8655 = vmul.f32 %v3233, %v8527
      %v8656 = vmul.f32 %v3235, %v8528
      %v8657 = vmul.f32 %v3238, %v8529
      %v8658 = vmul.f32 %v3240, %v8530
      %v8659 = vmul.f32 %v3243, %v8531
      %v8660 = vmul.f32 %v3245, %v8532
      %v8661 = vmul.f32 %v3248, %v8533
      %v8662 = vmul.f32 %v3250, %v8534
      %v8663 = vmul.f32 %v3253, %v8535
      %v8664 = vmul.f32 %v3255, %v8536
      %v8665 = vmul.f32 %v3258, %v8537
      %v8666 = vmul.f32 %v3260, %v8538
      %v8667 = vmul.f32 %v3263, %v8539
      %v8668 = vmul.f32 %v3265, %v8540
      %v8669 = vmul.f32 %v3268, %v8541
      %v8670 = vmul.f32 %v3270, %v8542
      %v8671 = vmul.f32 %v3273, %v8543
      %v8672 = vmul.f32 %v3275, %v8544
      %v8673 = vmul.f32 %v3278, %v8545
      %v8674 = vmul.f32 %v3280, %v8546
      %v8675 = vmul.f32 %v3283, %v8547
      %v8676 = vmul.f32 %v3285, %v8548
      %v8677 = vmul.f32 %v3288, %v8549
      %v8678 = vmul.f32 %v3290, %v8550
      %v8679 = vmul.f32 %v3293, %v8551
      %v8680 = vmul.f32 %v3295, %v8552
      %v8681 = vmul.f32 %v3298, %v8553
      %v8682 = vmul.f32 %v3300, %v8554
      %v8683 = vmul.f32 %v3303, %v8555
      %v8684 = vmul.f32 %v3305, %v8556
      %v8685 = vmul.f32 %v3308, %v8557
      %v8686 = vmul.f32 %v3310, %v8558
      %v8687 = vmul.f32 %v3313, %v8559
      %v8688 = vmul.f32 %v3315, %v8560
      %v8689 = vmul.f32 %v3318, %v8561
      %v8690 = vmul.f32 %v3320, %v8562
      %v8691 = vmul.f32 %v3323, %v8563
      %v8692 = vmul.f32 %v3325, %v8564
      %v8693 = vmul.f32 %v3328, %v8565
      %v8694 = vmul.f32 %v3330, %v8566
      %v8695 = vmul.f32 %v3333, %v8567
      %v8696 = vmul.f32 %v3335, %v8568
      %v8697 = vmul.f32 %v3338, %v8569
      %v8698 = vmul.f32 %v3340, %v8570
      %v8699 = vmul.f32 %v3343, %v8571
      %v8700 = vmul.f32 %v3345, %v8572
      %v8701 = vmul.f32 %v3348, %v8573
      %v8702 = vmul.f32 %v3350, %v8574
      %v8703 = vmul.f32 %v3353, %v8575
      %v8704 = vmul.f32 %v3355, %v8576
      %v8705 = vmul.f32 %v3358, %v8577
      %v8706 = vmul.f32 %v3360, %v8578
      %v8707 = vmul.f32 %v3363, %v8579
      %v8708 = vmul.f32 %v3365, %v8580
      %v8709 = vmul.f32 %v3368, %v8581
      %v8710 = vmul.f32 %v3370, %v8582
      %v8711 = vmul.f32 %v3373, %v8583
      %v8712 = vmul.f32 %v3375, %v8584
      %v8713 = vmul.f32 %v3378, %v8585
      %v8714 = vmul.f32 %v3380, %v8586
      %v8715 = vmul.f32 %v3383, %v8587
      %v8716 = vmul.f32 %v3385, %v8588
      %v8717 = vmul.f32 %v3388, %v8589
      %v8718 = vmul.f32 %v3390, %v8590
      %v8719 = vmul.f32 %v3393, %v8591
      %v8720 = vmul.f32 %v3395, %v8592
      %v8721 = vmul.f32 %v3398, %v8593
      %v8722 = vmul.f32 %v3400, %v8594
      %v8723 = vmul.f32 %v3403, %v8595
      %v8724 = vmul.f32 %v3405, %v8596
      %v8725 = vmul.f32 %v3408, %v8597
      %v8726 = vmul.f32 %v3410, %v8598
      %v8727 = vmul.f32 %v3413, %v8599
      %v8728 = vmul.f32 %v3415, %v8600
      %v8729 = vmul.f32 %v3418, %v8601
      %v8730 = vmul.f32 %v3420, %v8602
      %v8731 = vmul.f32 %v3423, %v8603
      %v8732 = vmul.f32 %v3425, %v8604
      %v8733 = vmul.f32 %v3428, %v8605
      %v8734 = vmul.f32 %v3430, %v8606
      %v8735 = vmul.f32 %v3433, %v8607
      %v8736 = vmul.f32 %v3435, %v8608
      %v8737 = vmul.f32 %v3438, %v8609
      %v8738 = vmul.f32 %v3440, %v8610
      %v8739 = vmul.f32 %v3443, %v8611
      %v8740 = vmul.f32 %v3445, %v8612
      %v8741 = vmul.f32 %v3448, %v8613
      %v8742 = vmul.f32 %v3450, %v8614
      %v8743 = vmul.f32 %v3453, %v8615
      %v8744 = vmul.f32 %v3455, %v8616
      %v8745 = vmul.f32 %v3458, %v8617
      %v8746 = vmul.f32 %v3460, %v8618
      %v8747 = vmul.f32 %v3463, %v8619
      %v8748 = vmul.f32 %v3465, %v8620
      %v8749 = vmul.f32 %v3468, %v8621
      %v8750 = vmul.f32 %v3470, %v8622
      %v8751 = vmul.f32 %v3473, %v8623
      %v8752 = vmul.f32 %v3475, %v8624
      %v8753 = vmul.f32 %v3478, %v8625
      %v8754 = vmul.f32 %v3480, %v8626
      %v8755 = vmul.f32 %v3483, %v8627
      %v8756 = vmul.f32 %v3485, %v8628
      %v8757 = vmul.f32 %v3488, %v8629
      %v8758 = vmul.f32 %v3490, %v8630
      %v8759 = vmul.f32 %v3493, %v8631
      %v8760 = vmul.f32 %v3495, %v8632
      %v8761 = vmul.f32 %v3498, %v8633
      %v8762 = vmul.f32 %v3500, %v8634
      %v8763 = vmul.f32 %v3503, %v8635
      %v8764 = vmul.f32 %v3505, %v8636
      %v8765 = vmul.f32 %v3508, %v8637
      %v8766 = vmul.f32 %v3510, %v8638
      %v8767 = vmul.f32 %v3513, %v8639
      %v8768 = vmul.f32 %v3515, %v8640
      %v8769 = vmul.f32 %v3518, %v8641
      %v8770 = vmul.f32 %v3520, %v8642
      %v8771 = vmul.f32 %v5060, %v5444
      %v8772 = vmul.f32 %v5062, %v5446
      %v8773 = vmul.f32 %v5064, %v5448
      %v8774 = vmul.f32 %v5066, %v5450
      %v8775 = vmul.f32 %v5068, %v5452
      %v8776 = vmul.f32 %v5070, %v5454
      %v8777 = vmul.f32 %v5072, %v5456
      %v8778 = vmul.f32 %v5074, %v5458
      %v8779 = vmul.f32 %v5076, %v5460
      %v8780 = vmul.f32 %v5078, %v5462
      %v8781 = vmul.f32 %v5080, %v5464
      %v8782 = vmul.f32 %v5082, %v5466
      %v8783 = vmul.f32 %v5084, %v5468
      %v8784 = vmul.f32 %v5086, %v5470
      %v8785 = vmul.f32 %v5088, %v5472
      %v8786 = vmul.f32 %v5090, %v5474
      %v8787 = vmul.f32 %v5092, %v5476
      %v8788 = vmul.f32 %v5094, %v5478
      %v8789 = vmul.f32 %v5096, %v5480
      %v8790 = vmul.f32 %v5098, %v5482
      %v8791 = vmul.f32 %v5100, %v5484
      %v8792 = vmul.f32 %v5102, %v5486
      %v8793 = vmul.f32 %v5104, %v5488
      %v8794 = vmul.f32 %v5106, %v5490
      %v8795 = vmul.f32 %v5108, %v5492
      %v8796 = vmul.f32 %v5110, %v5494
      %v8797 = vmul.f32 %v5112, %v5496
      %v8798 = vmul.f32 %v5114, %v5498
      %v8799 = vmul.f32 %v5116, %v5500
      %v8800 = vmul.f32 %v5118, %v5502
      %v8801 = vmul.f32 %v5120, %v5504
      %v8802 = vmul.f32 %v5122, %v5506
      %v8803 = vmul.f32 %v5124, %v5508
      %v8804 = vmul.f32 %v5126, %v5510
      %v8805 = vmul.f32 %v5128, %v5512
      %v8806 = vmul.f32 %v5130, %v5514
      %v8807 = vmul.f32 %v5132, %v5516
      %v8808 = vmul.f32 %v5134, %v5518
      %v8809 = vmul.f32 %v5136, %v5520
      %v8810 = vmul.f32 %v5138, %v5522
      %v8811 = vmul.f32 %v5140, %v5524
      %v8812 = vmul.f32 %v5142, %v5526
      %v8813 = vmul.f32 %v5144, %v5528
      %v8814 = vmul.f32 %v5146, %v5530
      %v8815 = vmul.f32 %v5148, %v5532
      %v8816 = vmul.f32 %v5150, %v5534
      %v8817 = vmul.f32 %v5152, %v5536
      %v8818 = vmul.f32 %v5154, %v5538
      %v8819 = vmul.f32 %v5156, %v5540
      %v8820 = vmul.f32 %v5158, %v5542
      %v8821 = vmul.f32 %v5160, %v5544
      %v8822 = vmul.f32 %v5162, %v5546
      %v8823 = vmul.f32 %v5164, %v5548
      %v8824 = vmul.f32 %v5166, %v5550
      %v8825 = vmul.f32 %v5168, %v5552
      %v8826 = vmul.f32 %v5170, %v5554
      %v8827 = vmul.f32 %v5172, %v5556
      %v8828 = vmul.f32 %v5174, %v5558
      %v8829 = vmul.f32 %v5176, %v5560
      %v8830 = vmul.f32 %v5178, %v5562
      %v8831 = vmul.f32 %v5180, %v5564
      %v8832 = vmul.f32 %v5182, %v5566
      %v8833 = vmul.f32 %v5184, %v5568
      %v8834 = vmul.f32 %v5186, %v5570
      %v8835 = vmul.f32 %v5188, %v5572
      %v8836 = vmul.f32 %v5190, %v5574
      %v8837 = vmul.f32 %v5192, %v5576
      %v8838 = vmul.f32 %v5194, %v5578
      %v8839 = vmul.f32 %v5196, %v5580
      %v8840 = vmul.f32 %v5198, %v5582
      %v8841 = vmul.f32 %v5200, %v5584
      %v8842 = vmul.f32 %v5202, %v5586
      %v8843 = vmul.f32 %v5204, %v5588
      %v8844 = vmul.f32 %v5206, %v5590
      %v8845 = vmul.f32 %v5208, %v5592
      %v8846 = vmul.f32 %v5210, %v5594
      %v8847 = vmul.f32 %v5212, %v5596
      %v8848 = vmul.f32 %v5214, %v5598
      %v8849 = vmul.f32 %v5216, %v5600
      %v8850 = vmul.f32 %v5218, %v5602
      %v8851 = vmul.f32 %v5220, %v5604
      %v8852 = vmul.f32 %v5222, %v5606
      %v8853 = vmul.f32 %v5224, %v5608
      %v8854 = vmul.f32 %v5226, %v5610
      %v8855 = vmul.f32 %v5228, %v5612
      %v8856 = vmul.f32 %v5230, %v5614
      %v8857 = vmul.f32 %v5232, %v5616
      %v8858 = vmul.f32 %v5234, %v5618
      %v8859 = vmul.f32 %v5236, %v5620
      %v8860 = vmul.f32 %v5238, %v5622
      %v8861 = vmul.f32 %v5240, %v5624
      %v8862 = vmul.f32 %v5242, %v5626
      %v8863 = vmul.f32 %v5244, %v5628
      %v8864 = vmul.f32 %v5246, %v5630
      %v8865 = vmul.f32 %v5248, %v5632
      %v8866 = vmul.f32 %v5250, %v5634
      %v8867 = vmul.f32 %v5252, %v5636
      %v8868 = vmul.f32 %v5254, %v5638
      %v8869 = vmul.f32 %v5256, %v5640
      %v8870 = vmul.f32 %v5258, %v5642
      %v8871 = vmul.f32 %v5260, %v5644
      %v8872 = vmul.f32 %v5262, %v5646
      %v8873 = vmul.f32 %v5264, %v5648
      %v8874 = vmul.f32 %v5266, %v5650
      %v8875 = vmul.f32 %v5268, %v5652
      %v8876 = vmul.f32 %v5270, %v5654
      %v8877 = vmul.f32 %v5272, %v5656
      %v8878 = vmul.f32 %v5274, %v5658
      %v8879 = vmul.f32 %v5276, %v5660
      %v8880 = vmul.f32 %v5278, %v5662
      %v8881 = vmul.f32 %v5280, %v5664
      %v8882 = vmul.f32 %v5282, %v5666
      %v8883 = vmul.f32 %v5284, %v5668
      %v8884 = vmul.f32 %v5286, %v5670
      %v8885 = vmul.f32 %v5288, %v5672
      %v8886 = vmul.f32 %v5290, %v5674
      %v8887 = vmul.f32 %v5292, %v5676
      %v8888 = vmul.f32 %v5294, %v5678
      %v8889 = vmul.f32 %v5296, %v5680
      %v8890 = vmul.f32 %v5298, %v5682
      %v8891 = vmul.f32 %v5300, %v5684
      %v8892 = vmul.f32 %v5302, %v5686
      %v8893 = vmul.f32 %v5304, %v5688
      %v8894 = vmul.f32 %v5306, %v5690
      %v8895 = vmul.f32 %v5308, %v5692
      %v8896 = vmul.f32 %v5310, %v5694
      %v8897 = vmul.f32 %v5312, %v5696
      %v8898 = vmul.f32 %v5314, %v5698
      %v8899 = vadd.f32 %v8643, %v8771
      %v8900 = vadd.f32 %v8644, %v8772
      %v8901 = vadd.f32 %v8645, %v8773
      %v8902 = vadd.f32 %v8646, %v8774
      %v8903 = vadd.f32 %v8647, %v8775
      %v8904 = vadd.f32 %v8648, %v8776
      %v8905 = vadd.f32 %v8649, %v8777
      %v8906 = vadd.f32 %v8650, %v8778
      %v8907 = vadd.f32 %v8651, %v8779
      %v8908 = vadd.f32 %v8652, %v8780
      %v8909 = vadd.f32 %v8653, %v8781
      %v8910 = vadd.f32 %v8654, %v8782
      %v8911 = vadd.f32 %v8655, %v8783
      %v8912 = vadd.f32 %v8656, %v8784
      %v8913 = vadd.f32 %v8657, %v8785
      %v8914 = vadd.f32 %v8658, %v8786
      %v8915 = vadd.f32 %v8659, %v8787
      %v8916 = vadd.f32 %v8660, %v8788
      %v8917 = vadd.f32 %v8661, %v8789
      %v8918 = vadd.f32 %v8662, %v8790
      %v8919 = vadd.f32 %v8663, %v8791
      %v8920 = vadd.f32 %v8664, %v8792
      %v8921 = vadd.f32 %v8665, %v8793
      %v8922 = vadd.f32 %v8666, %v8794
      %v8923 = vadd.f32 %v8667, %v8795
      %v8924 = vadd.f32 %v8668, %v8796
      %v8925 = vadd.f32 %v8669, %v8797
      %v8926 = vadd.f32 %v8670, %v8798
      %v8927 = vadd.f32 %v8671, %v8799
      %v8928 = vadd.f32 %v8672, %v8800
      %v8929 = vadd.f32 %v8673, %v8801
      %v8930 = vadd.f32 %v8674, %v8802
      %v8931 = vadd.f32 %v8675, %v8803
      %v8932 = vadd.f32 %v8676, %v8804
      %v8933 = vadd.f32 %v8677, %v8805
      %v8934 = vadd.f32 %v8678, %v8806
      %v8935 = vadd.f32 %v8679, %v8807
      %v8936 = vadd.f32 %v8680, %v8808
      %v8937 = vadd.f32 %v8681, %v8809
      %v8938 = vadd.f32 %v8682, %v8810
      %v8939 = vadd.f32 %v8683, %v8811
      %v8940 = vadd.f32 %v8684, %v8812
      %v8941 = vadd.f32 %v8685, %v8813
      %v8942 = vadd.f32 %v8686, %v8814
      %v8943 = vadd.f32 %v8687, %v8815
      %v8944 = vadd.f32 %v8688, %v8816
      %v8945 = vadd.f32 %v8689, %v8817
      %v8946 = vadd.f32 %v8690, %v8818
      %v8947 = vadd.f32 %v8691, %v8819
      %v8948 = vadd.f32 %v8692, %v8820
      %v8949 = vadd.f32 %v8693, %v8821
      %v8950 = vadd.f32 %v8694, %v8822
      %v8951 = vadd.f32 %v8695, %v8823
      %v8952 = vadd.f32 %v8696, %v8824
      %v8953 = vadd.f32 %v8697, %v8825
      %v8954 = vadd.f32 %v8698, %v8826
      %v8955 = vadd.f32 %v8699, %v8827
      %v8956 = vadd.f32 %v8700, %v8828
      %v8957 = vadd.f32 %v8701, %v8829
      %v8958 = vadd.f32 %v8702, %v8830
      %v8959 = vadd.f32 %v8703, %v8831
      %v8960 = vadd.f32 %v8704, %v8832
      %v8961 = vadd.f32 %v8705, %v8833
      %v8962 = vadd.f32 %v8706, %v8834
      %v8963 = vadd.f32 %v8707, %v8835
      %v8964 = vadd.f32 %v8708, %v8836
      %v8965 = vadd.f32 %v8709, %v8837
      %v8966 = vadd.f32 %v8710, %v8838
      %v8967 = vadd.f32 %v8711, %v8839
      %v8968 = vadd.f32 %v8712, %v8840
      %v8969 = vadd.f32 %v8713, %v8841
      %v8970 = vadd.f32 %v8714, %v8842
      %v8971 = vadd.f32 %v8715, %v8843
      %v8972 = vadd.f32 %v8716, %v8844
      %v8973 = vadd.f32 %v8717, %v8845
      %v8974 = vadd.f32 %v8718, %v8846
      %v8975 = vadd.f32 %v8719, %v8847
      %v8976 = vadd.f32 %v8720, %v8848
      %v8977 = vadd.f32 %v8721, %v8849
      %v8978 = vadd.f32 %v8722, %v8850
      %v8979 = vadd.f32 %v8723, %v8851
      %v8980 = vadd.f32 %v8724, %v8852
      %v8981 = vadd.f32 %v8725, %v8853
      %v8982 = vadd.f32 %v8726, %v8854
      %v8983 = vadd.f32 %v8727, %v8855
      %v8984 = vadd.f32 %v8728, %v8856
      %v8985 = vadd.f32 %v8729, %v8857
      %v8986 = vadd.f32 %v8730, %v8858
      %v8987 = vadd.f32 %v8731, %v8859
      %v8988 = vadd.f32 %v8732, %v8860
      %v8989 = vadd.f32 %v8733, %v8861
      %v8990 = vadd.f32 %v8734, %v8862
      %v8991 = vadd.f32 %v8735, %v8863
      %v8992 = vadd.f32 %v8736, %v8864
      %v8993 = vadd.f32 %v8737, %v8865
      %v8994 = vadd.f32 %v8738, %v8866
      %v8995 = vadd.f32 %v8739, %v8867
      %v8996 = vadd.f32 %v8740, %v8868
      %v8997 = vadd.f32 %v8741, %v8869
      %v8998 = vadd.f32 %v8742, %v8870
      %v8999 = vadd.f32 %v8743, %v8871
      %v9000 = vadd.f32 %v8744, %v8872
      %v9001 = vadd.f32 %v8745, %v8873
      %v9002 = vadd.f32 %v8746, %v8874
      %v9003 = vadd.f32 %v8747, %v8875
      %v9004 = vadd.f32 %v8748, %v8876
      %v9005 = vadd.f32 %v8749, %v8877
      %v9006 = vadd.f32 %v8750, %v8878
      %v9007 = vadd.f32 %v8751, %v8879
      %v9008 = vadd.f32 %v8752, %v8880
      %v9009 = vadd.f32 %v8753, %v8881
      %v9010 = vadd.f32 %v8754, %v8882
      %v9011 = vadd.f32 %v8755, %v8883
      %v9012 = vadd.f32 %v8756, %v8884
      %v9013 = vadd.f32 %v8757, %v8885
      %v9014 = vadd.f32 %v8758, %v8886
      %v9015 = vadd.f32 %v8759, %v8887
      %v9016 = vadd.f32 %v8760, %v8888
      %v9017 = vadd.f32 %v8761, %v8889
      %v9018 = vadd.f32 %v8762, %v8890
      %v9019 = vadd.f32 %v8763, %v8891
      %v9020 = vadd.f32 %v8764, %v8892
      %v9021 = vadd.f32 %v8765, %v8893
      %v9022 = vadd.f32 %v8766, %v8894
      %v9023 = vadd.f32 %v8767, %v8895
      %v9024 = vadd.f32 %v8768, %v8896
      %v9025 = vadd.f32 %v8769, %v8897
      %v9026 = vadd.f32 %v8770, %v8898
      %v9027 = vmul.f32 %v3203, %v5699
      %v9028 = vmul.f32 %v3205, %v5700
      %v9029 = vmul.f32 %v3208, %v5701
      %v9030 = vmul.f32 %v3210, %v5702
      %v9031 = vmul.f32 %v3213, %v5703
      %v9032 = vmul.f32 %v3215, %v5704
      %v9033 = vmul.f32 %v3218, %v5705
      %v9034 = vmul.f32 %v3220, %v5706
      %v9035 = vmul.f32 %v3223, %v5707
      %v9036 = vmul.f32 %v3225, %v5708
      %v9037 = vmul.f32 %v3228, %v5709
      %v9038 = vmul.f32 %v3230, %v5710
      %v9039 = vmul.f32 %v3233, %v5711
      %v9040 = vmul.f32 %v3235, %v5712
      %v9041 = vmul.f32 %v3238, %v5713
      %v9042 = vmul.f32 %v3240, %v5714
      %v9043 = vmul.f32 %v3243, %v5715
      %v9044 = vmul.f32 %v3245, %v5716
      %v9045 = vmul.f32 %v3248, %v5717
      %v9046 = vmul.f32 %v3250, %v5718
      %v9047 = vmul.f32 %v3253, %v5719
      %v9048 = vmul.f32 %v3255, %v5720
      %v9049 = vmul.f32 %v3258, %v5721
      %v9050 = vmul.f32 %v3260, %v5722
      %v9051 = vmul.f32 %v3263, %v5723
      %v9052 = vmul.f32 %v3265, %v5724
      %v9053 = vmul.f32 %v3268, %v5725
      %v9054 = vmul.f32 %v3270, %v5726
      %v9055 = vmul.f32 %v3273, %v5727
      %v9056 = vmul.f32 %v3275, %v5728
      %v9057 = vmul.f32 %v3278, %v5729
      %v9058 = vmul.f32 %v3280, %v5730
      %v9059 = vmul.f32 %v3283, %v5731
      %v9060 = vmul.f32 %v3285, %v5732
      %v9061 = vmul.f32 %v3288, %v5733
      %v9062 = vmul.f32 %v3290, %v5734
      %v9063 = vmul.f32 %v3293, %v5735
      %v9064 = vmul.f32 %v3295, %v5736
      %v9065 = vmul.f32 %v3298, %v5737
      %v9066 = vmul.f32 %v3300, %v5738
      %v9067 = vmul.f32 %v3303, %v5739
      %v9068 = vmul.f32 %v3305, %v5740
      %v9069 = vmul.f32 %v3308, %v5741
      %v9070 = vmul.f32 %v3310, %v5742
      %v9071 = vmul.f32 %v3313, %v5743
      %v9072 = vmul.f32 %v3315, %v5744
      %v9073 = vmul.f32 %v3318, %v5745
      %v9074 = vmul.f32 %v3320, %v5746
      %v9075 = vmul.f32 %v3323, %v5747
      %v9076 = vmul.f32 %v3325, %v5748
      %v9077 = vmul.f32 %v3328, %v5749
      %v9078 = vmul.f32 %v3330, %v5750
      %v9079 = vmul.f32 %v3333, %v5751
      %v9080 = vmul.f32 %v3335, %v5752
      %v9081 = vmul.f32 %v3338, %v5753
      %v9082 = vmul.f32 %v3340, %v5754
      %v9083 = vmul.f32 %v3343, %v5755
      %v9084 = vmul.f32 %v3345, %v5756
      %v9085 = vmul.f32 %v3348, %v5757
      %v9086 = vmul.f32 %v3350, %v5758
      %v9087 = vmul.f32 %v3353, %v5759
      %v9088 = vmul.f32 %v3355, %v5760
      %v9089 = vmul.f32 %v3358, %v5761
      %v9090 = vmul.f32 %v3360, %v5762
      %v9091 = vmul.f32 %v3363, %v5763
      %v9092 = vmul.f32 %v3365, %v5764
      %v9093 = vmul.f32 %v3368, %v5765
      %v9094 = vmul.f32 %v3370, %v5766
      %v9095 = vmul.f32 %v3373, %v5767
      %v9096 = vmul.f32 %v3375, %v5768
      %v9097 = vmul.f32 %v3378, %v5769
      %v9098 = vmul.f32 %v3380, %v5770
      %v9099 = vmul.f32 %v3383, %v5771
      %v9100 = vmul.f32 %v3385, %v5772
      %v9101 = vmul.f32 %v3388, %v5773
      %v9102 = vmul.f32 %v3390, %v5774
      %v9103 = vmul.f32 %v3393, %v5775
      %v9104 = vmul.f32 %v3395, %v5776
      %v9105 = vmul.f32 %v3398, %v5777
      %v9106 = vmul.f32 %v3400, %v5778
      %v9107 = vmul.f32 %v3403, %v5779
      %v9108 = vmul.f32 %v3405, %v5780
      %v9109 = vmul.f32 %v3408, %v5781
      %v9110 = vmul.f32 %v3410, %v5782
      %v9111 = vmul.f32 %v3413, %v5783
      %v9112 = vmul.f32 %v3415, %v5784
      %v9113 = vmul.f32 %v3418, %v5785
      %v9114 = vmul.f32 %v3420, %v5786
      %v9115 = vmul.f32 %v3423, %v5787
      %v9116 = vmul.f32 %v3425, %v5788
      %v9117 = vmul.f32 %v3428, %v5789
      %v9118 = vmul.f32 %v3430, %v5790
      %v9119 = vmul.f32 %v3433, %v5791
      %v9120 = vmul.f32 %v3435, %v5792
      %v9121 = vmul.f32 %v3438, %v5793
      %v9122 = vmul.f32 %v3440, %v5794
      %v9123 = vmul.f32 %v3443, %v5795
      %v9124 = vmul.f32 %v3445, %v5796
      %v9125 = vmul.f32 %v3448, %v5797
      %v9126 = vmul.f32 %v3450, %v5798
      %v9127 = vmul.f32 %v3453, %v5799
      %v9128 = vmul.f32 %v3455, %v5800
      %v9129 = vmul.f32 %v3458, %v5801
      %v9130 = vmul.f32 %v3460, %v5802
      %v9131 = vmul.f32 %v3463, %v5803
      %v9132 = vmul.f32 %v3465, %v5804
      %v9133 = vmul.f32 %v3468, %v5805
      %v9134 = vmul.f32 %v3470, %v5806
      %v9135 = vmul.f32 %v3473, %v5807
      %v9136 = vmul.f32 %v3475, %v5808
      %v9137 = vmul.f32 %v3478, %v5809
      %v9138 = vmul.f32 %v3480, %v5810
      %v9139 = vmul.f32 %v3483, %v5811
      %v9140 = vmul.f32 %v3485, %v5812
      %v9141 = vmul.f32 %v3488, %v5813
      %v9142 = vmul.f32 %v3490, %v5814
      %v9143 = vmul.f32 %v3493, %v5815
      %v9144 = vmul.f32 %v3495, %v5816
      %v9145 = vmul.f32 %v3498, %v5817
      %v9146 = vmul.f32 %v3500, %v5818
      %v9147 = vmul.f32 %v3503, %v5819
      %v9148 = vmul.f32 %v3505, %v5820
      %v9149 = vmul.f32 %v3508, %v5821
      %v9150 = vmul.f32 %v3510, %v5822
      %v9151 = vmul.f32 %v3513, %v5823
      %v9152 = vmul.f32 %v3515, %v5824
      %v9153 = vmul.f32 %v3518, %v5825
      %v9154 = vmul.f32 %v3520, %v5826
      %9283 = vrot.lane.b32.xlu0 %v8387, 1
      %v9284 = vpop.permute.xlu0 %9283
      %9285 = vrot.lane.b32.xlu0 %v8388, 1
      %v9286 = vpop.permute.xlu0 %9285
      %9287 = vrot.lane.b32.xlu0 %v8389, 1
      %v9288 = vpop.permute.xlu0 %9287
      %9289 = vrot.lane.b32.xlu0 %v8390, 1
      %v9290 = vpop.permute.xlu0 %9289
      %9291 = vrot.lane.b32.xlu0 %v8391, 1
      %v9292 = vpop.permute.xlu0 %9291
      %9293 = vrot.lane.b32.xlu0 %v8392, 1
      %v9294 = vpop.permute.xlu0 %9293
      %9295 = vrot.lane.b32.xlu0 %v8393, 1
      %v9296 = vpop.permute.xlu0 %9295
      %9297 = vrot.lane.b32.xlu0 %v8394, 1
      %v9298 = vpop.permute.xlu0 %9297
      %9299 = vrot.lane.b32.xlu0 %v8395, 1
      %v9300 = vpop.permute.xlu0 %9299
      %9301 = vrot.lane.b32.xlu0 %v8396, 1
      %v9302 = vpop.permute.xlu0 %9301
      %9303 = vrot.lane.b32.xlu0 %v8397, 1
      %v9304 = vpop.permute.xlu0 %9303
      %9305 = vrot.lane.b32.xlu0 %v8398, 1
      %v9306 = vpop.permute.xlu0 %9305
      %9307 = vrot.lane.b32.xlu0 %v8399, 1
      %v9308 = vpop.permute.xlu0 %9307
      %9309 = vrot.lane.b32.xlu0 %v8400, 1
      %v9310 = vpop.permute.xlu0 %9309
      %9311 = vrot.lane.b32.xlu0 %v8401, 1
      %v9312 = vpop.permute.xlu0 %9311
      %9313 = vrot.lane.b32.xlu0 %v8402, 1
      %v9314 = vpop.permute.xlu0 %9313
      %9315 = vrot.lane.b32.xlu0 %v8403, 1
      %v9316 = vpop.permute.xlu0 %9315
      %9317 = vrot.lane.b32.xlu0 %v8404, 1
      %v9318 = vpop.permute.xlu0 %9317
      %9319 = vrot.lane.b32.xlu0 %v8405, 1
      %v9320 = vpop.permute.xlu0 %9319
      %9321 = vrot.lane.b32.xlu0 %v8406, 1
      %v9322 = vpop.permute.xlu0 %9321
      %9323 = vrot.lane.b32.xlu0 %v8407, 1
      %v9324 = vpop.permute.xlu0 %9323
      %9325 = vrot.lane.b32.xlu0 %v8408, 1
      %v9326 = vpop.permute.xlu0 %9325
      %9327 = vrot.lane.b32.xlu0 %v8409, 1
      %v9328 = vpop.permute.xlu0 %9327
      %9329 = vrot.lane.b32.xlu0 %v8410, 1
      %v9330 = vpop.permute.xlu0 %9329
      %9331 = vrot.lane.b32.xlu0 %v8411, 1
      %v9332 = vpop.permute.xlu0 %9331
      %9333 = vrot.lane.b32.xlu0 %v8412, 1
      %v9334 = vpop.permute.xlu0 %9333
      %9335 = vrot.lane.b32.xlu0 %v8413, 1
      %v9336 = vpop.permute.xlu0 %9335
      %9337 = vrot.lane.b32.xlu0 %v8414, 1
      %v9338 = vpop.permute.xlu0 %9337
      %9339 = vrot.lane.b32.xlu0 %v8415, 1
      %v9340 = vpop.permute.xlu0 %9339
      %9341 = vrot.lane.b32.xlu0 %v8416, 1
      %v9342 = vpop.permute.xlu0 %9341
      %9343 = vrot.lane.b32.xlu0 %v8417, 1
      %v9344 = vpop.permute.xlu0 %9343
      %9345 = vrot.lane.b32.xlu0 %v8418, 1
      %v9346 = vpop.permute.xlu0 %9345
      %9347 = vrot.lane.b32.xlu0 %v8419, 1
      %v9348 = vpop.permute.xlu0 %9347
      %9349 = vrot.lane.b32.xlu0 %v8420, 1
      %v9350 = vpop.permute.xlu0 %9349
      %9351 = vrot.lane.b32.xlu0 %v8421, 1
      %v9352 = vpop.permute.xlu0 %9351
      %9353 = vrot.lane.b32.xlu0 %v8422, 1
      %v9354 = vpop.permute.xlu0 %9353
      %9355 = vrot.lane.b32.xlu0 %v8423, 1
      %v9356 = vpop.permute.xlu0 %9355
      %9357 = vrot.lane.b32.xlu0 %v8424, 1
      %v9358 = vpop.permute.xlu0 %9357
      %9359 = vrot.lane.b32.xlu0 %v8425, 1
      %v9360 = vpop.permute.xlu0 %9359
      %9361 = vrot.lane.b32.xlu0 %v8426, 1
      %v9362 = vpop.permute.xlu0 %9361
      %9363 = vrot.lane.b32.xlu0 %v8427, 1
      %v9364 = vpop.permute.xlu0 %9363
      %9365 = vrot.lane.b32.xlu0 %v8428, 1
      %v9366 = vpop.permute.xlu0 %9365
      %9367 = vrot.lane.b32.xlu0 %v8429, 1
      %v9368 = vpop.permute.xlu0 %9367
      %9369 = vrot.lane.b32.xlu0 %v8430, 1
      %v9370 = vpop.permute.xlu0 %9369
      %9371 = vrot.lane.b32.xlu0 %v8431, 1
      %v9372 = vpop.permute.xlu0 %9371
      %9373 = vrot.lane.b32.xlu0 %v8432, 1
      %v9374 = vpop.permute.xlu0 %9373
      %9375 = vrot.lane.b32.xlu0 %v8433, 1
      %v9376 = vpop.permute.xlu0 %9375
      %9377 = vrot.lane.b32.xlu0 %v8434, 1
      %v9378 = vpop.permute.xlu0 %9377
      %9379 = vrot.lane.b32.xlu0 %v8435, 1
      %v9380 = vpop.permute.xlu0 %9379
      %9381 = vrot.lane.b32.xlu0 %v8436, 1
      %v9382 = vpop.permute.xlu0 %9381
      %9383 = vrot.lane.b32.xlu0 %v8437, 1
      %v9384 = vpop.permute.xlu0 %9383
      %9385 = vrot.lane.b32.xlu0 %v8438, 1
      %v9386 = vpop.permute.xlu0 %9385
      %9387 = vrot.lane.b32.xlu0 %v8439, 1
      %v9388 = vpop.permute.xlu0 %9387
      %9389 = vrot.lane.b32.xlu0 %v8440, 1
      %v9390 = vpop.permute.xlu0 %9389
      %9391 = vrot.lane.b32.xlu0 %v8441, 1
      %v9392 = vpop.permute.xlu0 %9391
      %9393 = vrot.lane.b32.xlu0 %v8442, 1
      %v9394 = vpop.permute.xlu0 %9393
      %9395 = vrot.lane.b32.xlu0 %v8443, 1
      %v9396 = vpop.permute.xlu0 %9395
      %9397 = vrot.lane.b32.xlu0 %v8444, 1
      %v9398 = vpop.permute.xlu0 %9397
      %9399 = vrot.lane.b32.xlu0 %v8445, 1
      %v9400 = vpop.permute.xlu0 %9399
      %9401 = vrot.lane.b32.xlu0 %v8446, 1
      %v9402 = vpop.permute.xlu0 %9401
      %9403 = vrot.lane.b32.xlu0 %v8447, 1
      %v9404 = vpop.permute.xlu0 %9403
      %9405 = vrot.lane.b32.xlu0 %v8448, 1
      %v9406 = vpop.permute.xlu0 %9405
      %9407 = vrot.lane.b32.xlu0 %v8449, 1
      %v9408 = vpop.permute.xlu0 %9407
      %9409 = vrot.lane.b32.xlu0 %v8450, 1
      %v9410 = vpop.permute.xlu0 %9409
      %9411 = vrot.lane.b32.xlu0 %v8451, 1
      %v9412 = vpop.permute.xlu0 %9411
      %9413 = vrot.lane.b32.xlu0 %v8452, 1
      %v9414 = vpop.permute.xlu0 %9413
      %9415 = vrot.lane.b32.xlu0 %v8453, 1
      %v9416 = vpop.permute.xlu0 %9415
      %9417 = vrot.lane.b32.xlu0 %v8454, 1
      %v9418 = vpop.permute.xlu0 %9417
      %9419 = vrot.lane.b32.xlu0 %v8455, 1
      %v9420 = vpop.permute.xlu0 %9419
      %9421 = vrot.lane.b32.xlu0 %v8456, 1
      %v9422 = vpop.permute.xlu0 %9421
      %9423 = vrot.lane.b32.xlu0 %v8457, 1
      %v9424 = vpop.permute.xlu0 %9423
      %9425 = vrot.lane.b32.xlu0 %v8458, 1
      %v9426 = vpop.permute.xlu0 %9425
      %9427 = vrot.lane.b32.xlu0 %v8459, 1
      %v9428 = vpop.permute.xlu0 %9427
      %9429 = vrot.lane.b32.xlu0 %v8460, 1
      %v9430 = vpop.permute.xlu0 %9429
      %9431 = vrot.lane.b32.xlu0 %v8461, 1
      %v9432 = vpop.permute.xlu0 %9431
      %9433 = vrot.lane.b32.xlu0 %v8462, 1
      %v9434 = vpop.permute.xlu0 %9433
      %9435 = vrot.lane.b32.xlu0 %v8463, 1
      %v9436 = vpop.permute.xlu0 %9435
      %9437 = vrot.lane.b32.xlu0 %v8464, 1
      %v9438 = vpop.permute.xlu0 %9437
      %9439 = vrot.lane.b32.xlu0 %v8465, 1
      %v9440 = vpop.permute.xlu0 %9439
      %9441 = vrot.lane.b32.xlu0 %v8466, 1
      %v9442 = vpop.permute.xlu0 %9441
      %9443 = vrot.lane.b32.xlu0 %v8467, 1
      %v9444 = vpop.permute.xlu0 %9443
      %9445 = vrot.lane.b32.xlu0 %v8468, 1
      %v9446 = vpop.permute.xlu0 %9445
      %9447 = vrot.lane.b32.xlu0 %v8469, 1
      %v9448 = vpop.permute.xlu0 %9447
      %9449 = vrot.lane.b32.xlu0 %v8470, 1
      %v9450 = vpop.permute.xlu0 %9449
      %9451 = vrot.lane.b32.xlu0 %v8471, 1
      %v9452 = vpop.permute.xlu0 %9451
      %9453 = vrot.lane.b32.xlu0 %v8472, 1
      %v9454 = vpop.permute.xlu0 %9453
      %9455 = vrot.lane.b32.xlu0 %v8473, 1
      %v9456 = vpop.permute.xlu0 %9455
      %9457 = vrot.lane.b32.xlu0 %v8474, 1
      %v9458 = vpop.permute.xlu0 %9457
      %9459 = vrot.lane.b32.xlu0 %v8475, 1
      %v9460 = vpop.permute.xlu0 %9459
      %9461 = vrot.lane.b32.xlu0 %v8476, 1
      %v9462 = vpop.permute.xlu0 %9461
      %9463 = vrot.lane.b32.xlu0 %v8477, 1
      %v9464 = vpop.permute.xlu0 %9463
      %9465 = vrot.lane.b32.xlu0 %v8478, 1
      %v9466 = vpop.permute.xlu0 %9465
      %9467 = vrot.lane.b32.xlu0 %v8479, 1
      %v9468 = vpop.permute.xlu0 %9467
      %9469 = vrot.lane.b32.xlu0 %v8480, 1
      %v9470 = vpop.permute.xlu0 %9469
      %9471 = vrot.lane.b32.xlu0 %v8481, 1
      %v9472 = vpop.permute.xlu0 %9471
      %9473 = vrot.lane.b32.xlu0 %v8482, 1
      %v9474 = vpop.permute.xlu0 %9473
      %9475 = vrot.lane.b32.xlu0 %v8483, 1
      %v9476 = vpop.permute.xlu0 %9475
      %9477 = vrot.lane.b32.xlu0 %v8484, 1
      %v9478 = vpop.permute.xlu0 %9477
      %9479 = vrot.lane.b32.xlu0 %v8485, 1
      %v9480 = vpop.permute.xlu0 %9479
      %9481 = vrot.lane.b32.xlu0 %v8486, 1
      %v9482 = vpop.permute.xlu0 %9481
      %9483 = vrot.lane.b32.xlu0 %v8487, 1
      %v9484 = vpop.permute.xlu0 %9483
      %9485 = vrot.lane.b32.xlu0 %v8488, 1
      %v9486 = vpop.permute.xlu0 %9485
      %9487 = vrot.lane.b32.xlu0 %v8489, 1
      %v9488 = vpop.permute.xlu0 %9487
      %9489 = vrot.lane.b32.xlu0 %v8490, 1
      %v9490 = vpop.permute.xlu0 %9489
      %9491 = vrot.lane.b32.xlu0 %v8491, 1
      %v9492 = vpop.permute.xlu0 %9491
      %9493 = vrot.lane.b32.xlu0 %v8492, 1
      %v9494 = vpop.permute.xlu0 %9493
      %9495 = vrot.lane.b32.xlu0 %v8493, 1
      %v9496 = vpop.permute.xlu0 %9495
      %9497 = vrot.lane.b32.xlu0 %v8494, 1
      %v9498 = vpop.permute.xlu0 %9497
      %9499 = vrot.lane.b32.xlu0 %v8495, 1
      %v9500 = vpop.permute.xlu0 %9499
      %9501 = vrot.lane.b32.xlu0 %v8496, 1
      %v9502 = vpop.permute.xlu0 %9501
      %9503 = vrot.lane.b32.xlu0 %v8497, 1
      %v9504 = vpop.permute.xlu0 %9503
      %9505 = vrot.lane.b32.xlu0 %v8498, 1
      %v9506 = vpop.permute.xlu0 %9505
      %9507 = vrot.lane.b32.xlu0 %v8499, 1
      %v9508 = vpop.permute.xlu0 %9507
      %9509 = vrot.lane.b32.xlu0 %v8500, 1
      %v9510 = vpop.permute.xlu0 %9509
      %9511 = vrot.lane.b32.xlu0 %v8501, 1
      %v9512 = vpop.permute.xlu0 %9511
      %9513 = vrot.lane.b32.xlu0 %v8502, 1
      %v9514 = vpop.permute.xlu0 %9513
      %9515 = vrot.lane.b32.xlu0 %v8503, 1
      %v9516 = vpop.permute.xlu0 %9515
      %9517 = vrot.lane.b32.xlu0 %v8504, 1
      %v9518 = vpop.permute.xlu0 %9517
      %9519 = vrot.lane.b32.xlu0 %v8505, 1
      %v9520 = vpop.permute.xlu0 %9519
      %9521 = vrot.lane.b32.xlu0 %v8506, 1
      %v9522 = vpop.permute.xlu0 %9521
      %9523 = vrot.lane.b32.xlu0 %v8507, 1
      %v9524 = vpop.permute.xlu0 %9523
      %9525 = vrot.lane.b32.xlu0 %v8508, 1
      %v9526 = vpop.permute.xlu0 %9525
      %9527 = vrot.lane.b32.xlu0 %v8509, 1
      %v9528 = vpop.permute.xlu0 %9527
      %9529 = vrot.lane.b32.xlu0 %v8510, 1
      %v9530 = vpop.permute.xlu0 %9529
      %9531 = vrot.lane.b32.xlu0 %v8511, 1
      %v9532 = vpop.permute.xlu0 %9531
      %9533 = vrot.lane.b32.xlu0 %v8512, 1
      %v9534 = vpop.permute.xlu0 %9533
      %9535 = vrot.lane.b32.xlu0 %v8513, 1
      %v9536 = vpop.permute.xlu0 %9535
      %9537 = vrot.lane.b32.xlu0 %v8514, 1
      %v9538 = vpop.permute.xlu0 %9537
      %v9667 = vadd.f32 %v9027, %v9284
      %v9668 = vadd.f32 %v9028, %v9286
      %v9669 = vadd.f32 %v9029, %v9288
      %v9670 = vadd.f32 %v9030, %v9290
      %v9671 = vadd.f32 %v9031, %v9292
      %v9672 = vadd.f32 %v9032, %v9294
      %v9673 = vadd.f32 %v9033, %v9296
      %v9674 = vadd.f32 %v9034, %v9298
      %v9675 = vadd.f32 %v9035, %v9300
      %v9676 = vadd.f32 %v9036, %v9302
      %v9677 = vadd.f32 %v9037, %v9304
      %v9678 = vadd.f32 %v9038, %v9306
      %v9679 = vadd.f32 %v9039, %v9308
      %v9680 = vadd.f32 %v9040, %v9310
      %v9681 = vadd.f32 %v9041, %v9312
      %v9682 = vadd.f32 %v9042, %v9314
      %v9683 = vadd.f32 %v9043, %v9316
      %v9684 = vadd.f32 %v9044, %v9318
      %v9685 = vadd.f32 %v9045, %v9320
      %v9686 = vadd.f32 %v9046, %v9322
      %v9687 = vadd.f32 %v9047, %v9324
      %v9688 = vadd.f32 %v9048, %v9326
      %v9689 = vadd.f32 %v9049, %v9328
      %v9690 = vadd.f32 %v9050, %v9330
      %v9691 = vadd.f32 %v9051, %v9332
      %v9692 = vadd.f32 %v9052, %v9334
      %v9693 = vadd.f32 %v9053, %v9336
      %v9694 = vadd.f32 %v9054, %v9338
      %v9695 = vadd.f32 %v9055, %v9340
      %v9696 = vadd.f32 %v9056, %v9342
      %v9697 = vadd.f32 %v9057, %v9344
      %v9698 = vadd.f32 %v9058, %v9346
      %v9699 = vadd.f32 %v9059, %v9348
      %v9700 = vadd.f32 %v9060, %v9350
      %v9701 = vadd.f32 %v9061, %v9352
      %v9702 = vadd.f32 %v9062, %v9354
      %v9703 = vadd.f32 %v9063, %v9356
      %v9704 = vadd.f32 %v9064, %v9358
      %v9705 = vadd.f32 %v9065, %v9360
      %v9706 = vadd.f32 %v9066, %v9362
      %v9707 = vadd.f32 %v9067, %v9364
      %v9708 = vadd.f32 %v9068, %v9366
      %v9709 = vadd.f32 %v9069, %v9368
      %v9710 = vadd.f32 %v9070, %v9370
      %v9711 = vadd.f32 %v9071, %v9372
      %v9712 = vadd.f32 %v9072, %v9374
      %v9713 = vadd.f32 %v9073, %v9376
      %v9714 = vadd.f32 %v9074, %v9378
      %v9715 = vadd.f32 %v9075, %v9380
      %v9716 = vadd.f32 %v9076, %v9382
      %v9717 = vadd.f32 %v9077, %v9384
      %v9718 = vadd.f32 %v9078, %v9386
      %v9719 = vadd.f32 %v9079, %v9388
      %v9720 = vadd.f32 %v9080, %v9390
      %v9721 = vadd.f32 %v9081, %v9392
      %v9722 = vadd.f32 %v9082, %v9394
      %v9723 = vadd.f32 %v9083, %v9396
      %v9724 = vadd.f32 %v9084, %v9398
      %v9725 = vadd.f32 %v9085, %v9400
      %v9726 = vadd.f32 %v9086, %v9402
      %v9727 = vadd.f32 %v9087, %v9404
      %v9728 = vadd.f32 %v9088, %v9406
      %v9729 = vadd.f32 %v9089, %v9408
      %v9730 = vadd.f32 %v9090, %v9410
      %v9731 = vadd.f32 %v9091, %v9412
      %v9732 = vadd.f32 %v9092, %v9414
      %v9733 = vadd.f32 %v9093, %v9416
      %v9734 = vadd.f32 %v9094, %v9418
      %v9735 = vadd.f32 %v9095, %v9420
      %v9736 = vadd.f32 %v9096, %v9422
      %v9737 = vadd.f32 %v9097, %v9424
      %v9738 = vadd.f32 %v9098, %v9426
      %v9739 = vadd.f32 %v9099, %v9428
      %v9740 = vadd.f32 %v9100, %v9430
      %v9741 = vadd.f32 %v9101, %v9432
      %v9742 = vadd.f32 %v9102, %v9434
      %v9743 = vadd.f32 %v9103, %v9436
      %v9744 = vadd.f32 %v9104, %v9438
      %v9745 = vadd.f32 %v9105, %v9440
      %v9746 = vadd.f32 %v9106, %v9442
      %v9747 = vadd.f32 %v9107, %v9444
      %v9748 = vadd.f32 %v9108, %v9446
      %v9749 = vadd.f32 %v9109, %v9448
      %v9750 = vadd.f32 %v9110, %v9450
      %v9751 = vadd.f32 %v9111, %v9452
      %v9752 = vadd.f32 %v9112, %v9454
      %v9753 = vadd.f32 %v9113, %v9456
      %v9754 = vadd.f32 %v9114, %v9458
      %v9755 = vadd.f32 %v9115, %v9460
      %v9756 = vadd.f32 %v9116, %v9462
      %v9757 = vadd.f32 %v9117, %v9464
      %v9758 = vadd.f32 %v9118, %v9466
      %v9759 = vadd.f32 %v9119, %v9468
      %v9760 = vadd.f32 %v9120, %v9470
      %v9761 = vadd.f32 %v9121, %v9472
      %v9762 = vadd.f32 %v9122, %v9474
      %v9763 = vadd.f32 %v9123, %v9476
      %v9764 = vadd.f32 %v9124, %v9478
      %v9765 = vadd.f32 %v9125, %v9480
      %v9766 = vadd.f32 %v9126, %v9482
      %v9767 = vadd.f32 %v9127, %v9484
      %v9768 = vadd.f32 %v9128, %v9486
      %v9769 = vadd.f32 %v9129, %v9488
      %v9770 = vadd.f32 %v9130, %v9490
      %v9771 = vadd.f32 %v9131, %v9492
      %v9772 = vadd.f32 %v9132, %v9494
      %v9773 = vadd.f32 %v9133, %v9496
      %v9774 = vadd.f32 %v9134, %v9498
      %v9775 = vadd.f32 %v9135, %v9500
      %v9776 = vadd.f32 %v9136, %v9502
      %v9777 = vadd.f32 %v9137, %v9504
      %v9778 = vadd.f32 %v9138, %v9506
      %v9779 = vadd.f32 %v9139, %v9508
      %v9780 = vadd.f32 %v9140, %v9510
      %v9781 = vadd.f32 %v9141, %v9512
      %v9782 = vadd.f32 %v9142, %v9514
      %v9783 = vadd.f32 %v9143, %v9516
      %v9784 = vadd.f32 %v9144, %v9518
      %v9785 = vadd.f32 %v9145, %v9520
      %v9786 = vadd.f32 %v9146, %v9522
      %v9787 = vadd.f32 %v9147, %v9524
      %v9788 = vadd.f32 %v9148, %v9526
      %v9789 = vadd.f32 %v9149, %v9528
      %v9790 = vadd.f32 %v9150, %v9530
      %v9791 = vadd.f32 %v9151, %v9532
      %v9792 = vadd.f32 %v9152, %v9534
      %v9793 = vadd.f32 %v9153, %v9536
      %v9794 = vadd.f32 %v9154, %v9538
      %vm9795 = vcmask 7168
      %v9796 = vsel %vm9795, %v8899, %v9667
      %v9797 = vsel %vm9795, %v8900, %v9668
      %v9798 = vsel %vm9795, %v8901, %v9669
      %v9799 = vsel %vm9795, %v8902, %v9670
      %v9800 = vsel %vm9795, %v8903, %v9671
      %v9801 = vsel %vm9795, %v8904, %v9672
      %v9802 = vsel %vm9795, %v8905, %v9673
      %v9803 = vsel %vm9795, %v8906, %v9674
      %v9804 = vsel %vm9795, %v8907, %v9675
      %v9805 = vsel %vm9795, %v8908, %v9676
      %v9806 = vsel %vm9795, %v8909, %v9677
      %v9807 = vsel %vm9795, %v8910, %v9678
      %v9808 = vsel %vm9795, %v8911, %v9679
      %v9809 = vsel %vm9795, %v8912, %v9680
      %v9810 = vsel %vm9795, %v8913, %v9681
      %v9811 = vsel %vm9795, %v8914, %v9682
      %v9812 = vsel %vm9795, %v8915, %v9683
      %v9813 = vsel %vm9795, %v8916, %v9684
      %v9814 = vsel %vm9795, %v8917, %v9685
      %v9815 = vsel %vm9795, %v8918, %v9686
      %v9816 = vsel %vm9795, %v8919, %v9687
      %v9817 = vsel %vm9795, %v8920, %v9688
      %v9818 = vsel %vm9795, %v8921, %v9689
      %v9819 = vsel %vm9795, %v8922, %v9690
      %v9820 = vsel %vm9795, %v8923, %v9691
      %v9821 = vsel %vm9795, %v8924, %v9692
      %v9822 = vsel %vm9795, %v8925, %v9693
      %v9823 = vsel %vm9795, %v8926, %v9694
      %v9824 = vsel %vm9795, %v8927, %v9695
      %v9825 = vsel %vm9795, %v8928, %v9696
      %v9826 = vsel %vm9795, %v8929, %v9697
      %v9827 = vsel %vm9795, %v8930, %v9698
      %v9828 = vsel %vm9795, %v8931, %v9699
      %v9829 = vsel %vm9795, %v8932, %v9700
      %v9830 = vsel %vm9795, %v8933, %v9701
      %v9831 = vsel %vm9795, %v8934, %v9702
      %v9832 = vsel %vm9795, %v8935, %v9703
      %v9833 = vsel %vm9795, %v8936, %v9704
      %v9834 = vsel %vm9795, %v8937, %v9705
      %v9835 = vsel %vm9795, %v8938, %v9706
      %v9836 = vsel %vm9795, %v8939, %v9707
      %v9837 = vsel %vm9795, %v8940, %v9708
      %v9838 = vsel %vm9795, %v8941, %v9709
      %v9839 = vsel %vm9795, %v8942, %v9710
      %v9840 = vsel %vm9795, %v8943, %v9711
      %v9841 = vsel %vm9795, %v8944, %v9712
      %v9842 = vsel %vm9795, %v8945, %v9713
      %v9843 = vsel %vm9795, %v8946, %v9714
      %v9844 = vsel %vm9795, %v8947, %v9715
      %v9845 = vsel %vm9795, %v8948, %v9716
      %v9846 = vsel %vm9795, %v8949, %v9717
      %v9847 = vsel %vm9795, %v8950, %v9718
      %v9848 = vsel %vm9795, %v8951, %v9719
      %v9849 = vsel %vm9795, %v8952, %v9720
      %v9850 = vsel %vm9795, %v8953, %v9721
      %v9851 = vsel %vm9795, %v8954, %v9722
      %v9852 = vsel %vm9795, %v8955, %v9723
      %v9853 = vsel %vm9795, %v8956, %v9724
      %v9854 = vsel %vm9795, %v8957, %v9725
      %v9855 = vsel %vm9795, %v8958, %v9726
      %v9856 = vsel %vm9795, %v8959, %v9727
      %v9857 = vsel %vm9795, %v8960, %v9728
      %v9858 = vsel %vm9795, %v8961, %v9729
      %v9859 = vsel %vm9795, %v8962, %v9730
      %v9860 = vsel %vm9795, %v8963, %v9731
      %v9861 = vsel %vm9795, %v8964, %v9732
      %v9862 = vsel %vm9795, %v8965, %v9733
      %v9863 = vsel %vm9795, %v8966, %v9734
      %v9864 = vsel %vm9795, %v8967, %v9735
      %v9865 = vsel %vm9795, %v8968, %v9736
      %v9866 = vsel %vm9795, %v8969, %v9737
      %v9867 = vsel %vm9795, %v8970, %v9738
      %v9868 = vsel %vm9795, %v8971, %v9739
      %v9869 = vsel %vm9795, %v8972, %v9740
      %v9870 = vsel %vm9795, %v8973, %v9741
      %v9871 = vsel %vm9795, %v8974, %v9742
      %v9872 = vsel %vm9795, %v8975, %v9743
      %v9873 = vsel %vm9795, %v8976, %v9744
      %v9874 = vsel %vm9795, %v8977, %v9745
      %v9875 = vsel %vm9795, %v8978, %v9746
      %v9876 = vsel %vm9795, %v8979, %v9747
      %v9877 = vsel %vm9795, %v8980, %v9748
      %v9878 = vsel %vm9795, %v8981, %v9749
      %v9879 = vsel %vm9795, %v8982, %v9750
      %v9880 = vsel %vm9795, %v8983, %v9751
      %v9881 = vsel %vm9795, %v8984, %v9752
      %v9882 = vsel %vm9795, %v8985, %v9753
      %v9883 = vsel %vm9795, %v8986, %v9754
      %v9884 = vsel %vm9795, %v8987, %v9755
      %v9885 = vsel %vm9795, %v8988, %v9756
      %v9886 = vsel %vm9795, %v8989, %v9757
      %v9887 = vsel %vm9795, %v8990, %v9758
      %v9888 = vsel %vm9795, %v8991, %v9759
      %v9889 = vsel %vm9795, %v8992, %v9760
      %v9890 = vsel %vm9795, %v8993, %v9761
      %v9891 = vsel %vm9795, %v8994, %v9762
      %v9892 = vsel %vm9795, %v8995, %v9763
      %v9893 = vsel %vm9795, %v8996, %v9764
      %v9894 = vsel %vm9795, %v8997, %v9765
      %v9895 = vsel %vm9795, %v8998, %v9766
      %v9896 = vsel %vm9795, %v8999, %v9767
      %v9897 = vsel %vm9795, %v9000, %v9768
      %v9898 = vsel %vm9795, %v9001, %v9769
      %v9899 = vsel %vm9795, %v9002, %v9770
      %v9900 = vsel %vm9795, %v9003, %v9771
      %v9901 = vsel %vm9795, %v9004, %v9772
      %v9902 = vsel %vm9795, %v9005, %v9773
      %v9903 = vsel %vm9795, %v9006, %v9774
      %v9904 = vsel %vm9795, %v9007, %v9775
      %v9905 = vsel %vm9795, %v9008, %v9776
      %v9906 = vsel %vm9795, %v9009, %v9777
      %v9907 = vsel %vm9795, %v9010, %v9778
      %v9908 = vsel %vm9795, %v9011, %v9779
      %v9909 = vsel %vm9795, %v9012, %v9780
      %v9910 = vsel %vm9795, %v9013, %v9781
      %v9911 = vsel %vm9795, %v9014, %v9782
      %v9912 = vsel %vm9795, %v9015, %v9783
      %v9913 = vsel %vm9795, %v9016, %v9784
      %v9914 = vsel %vm9795, %v9017, %v9785
      %v9915 = vsel %vm9795, %v9018, %v9786
      %v9916 = vsel %vm9795, %v9019, %v9787
      %v9917 = vsel %vm9795, %v9020, %v9788
      %v9918 = vsel %vm9795, %v9021, %v9789
      %v9919 = vsel %vm9795, %v9022, %v9790
      %v9920 = vsel %vm9795, %v9023, %v9791
      %v9921 = vsel %vm9795, %v9024, %v9792
      %v9922 = vsel %vm9795, %v9025, %v9793
      %v9923 = vsel %vm9795, %v9026, %v9794
      %9924 = vst.msk [vmem:[%s172] sm:$0xff] %vm303, %v9796
      %9925 = vst.msk [vmem:[%s172 + $0x8] sm:$0xff] %vm303, %v9797
      %9926 = vst.msk [vmem:[%s172 + $0x10] sm:$0xff] %vm303, %v9798
      %9927 = vst.msk [vmem:[%s172 + $0x18] sm:$0xff] %vm303, %v9799
      %9928 = vst.msk [vmem:[%s172 + $0x20] sm:$0xff] %vm303, %v9800
      %9929 = vst.msk [vmem:[%s172 + $0x28] sm:$0xff] %vm303, %v9801
      %9930 = vst.msk [vmem:[%s172 + $0x30] sm:$0xff] %vm303, %v9802
      %9931 = vst.msk [vmem:[%s172 + $0x38] sm:$0xff] %vm303, %v9803
      %9932 = vst.msk [vmem:[%s172 + $0x40] sm:$0xff] %vm303, %v9804
      %9933 = vst.msk [vmem:[%s172 + $0x48] sm:$0xff] %vm303, %v9805
      %9934 = vst.msk [vmem:[%s172 + $0x50] sm:$0xff] %vm303, %v9806
      %9935 = vst.msk [vmem:[%s172 + $0x58] sm:$0xff] %vm303, %v9807
      %9936 = vst.msk [vmem:[%s172 + $0x60] sm:$0xff] %vm303, %v9808
      %9937 = vst.msk [vmem:[%s172 + $0x68] sm:$0xff] %vm303, %v9809
      %9938 = vst.msk [vmem:[%s172 + $0x70] sm:$0xff] %vm303, %v9810
      %9939 = vst.msk [vmem:[%s172 + $0x78] sm:$0xff] %vm303, %v9811
      %9940 = vst.msk [vmem:[%s172 + $0x80] sm:$0xff] %vm303, %v9812
      %9941 = vst.msk [vmem:[%s172 + $0x88] sm:$0xff] %vm303, %v9813
      %9942 = vst.msk [vmem:[%s172 + $0x90] sm:$0xff] %vm303, %v9814
      %9943 = vst.msk [vmem:[%s172 + $0x98] sm:$0xff] %vm303, %v9815
      %9944 = vst.msk [vmem:[%s172 + $0xa0] sm:$0xff] %vm303, %v9816
      %9945 = vst.msk [vmem:[%s172 + $0xa8] sm:$0xff] %vm303, %v9817
      %9946 = vst.msk [vmem:[%s172 + $0xb0] sm:$0xff] %vm303, %v9818
      %9947 = vst.msk [vmem:[%s172 + $0xb8] sm:$0xff] %vm303, %v9819
      %9948 = vst.msk [vmem:[%s172 + $0xc0] sm:$0xff] %vm303, %v9820
      %9949 = vst.msk [vmem:[%s172 + $0xc8] sm:$0xff] %vm303, %v9821
      %9950 = vst.msk [vmem:[%s172 + $0xd0] sm:$0xff] %vm303, %v9822
      %9951 = vst.msk [vmem:[%s172 + $0xd8] sm:$0xff] %vm303, %v9823
      %9952 = vst.msk [vmem:[%s172 + $0xe0] sm:$0xff] %vm303, %v9824
      %9953 = vst.msk [vmem:[%s172 + $0xe8] sm:$0xff] %vm303, %v9825
      %9954 = vst.msk [vmem:[%s172 + $0xf0] sm:$0xff] %vm303, %v9826
      %9955 = vst.msk [vmem:[%s172 + $0xf8] sm:$0xff] %vm303, %v9827
      %9956 = vst.msk [vmem:[%s172 + $0x100] sm:$0xff] %vm303, %v9828
      %9957 = vst.msk [vmem:[%s172 + $0x108] sm:$0xff] %vm303, %v9829
      %9958 = vst.msk [vmem:[%s172 + $0x110] sm:$0xff] %vm303, %v9830
      %9959 = vst.msk [vmem:[%s172 + $0x118] sm:$0xff] %vm303, %v9831
      %9960 = vst.msk [vmem:[%s172 + $0x120] sm:$0xff] %vm303, %v9832
      %9961 = vst.msk [vmem:[%s172 + $0x128] sm:$0xff] %vm303, %v9833
      %9962 = vst.msk [vmem:[%s172 + $0x130] sm:$0xff] %vm303, %v9834
      %9963 = vst.msk [vmem:[%s172 + $0x138] sm:$0xff] %vm303, %v9835
      %9964 = vst.msk [vmem:[%s172 + $0x140] sm:$0xff] %vm303, %v9836
      %9965 = vst.msk [vmem:[%s172 + $0x148] sm:$0xff] %vm303, %v9837
      %9966 = vst.msk [vmem:[%s172 + $0x150] sm:$0xff] %vm303, %v9838
      %9967 = vst.msk [vmem:[%s172 + $0x158] sm:$0xff] %vm303, %v9839
      %9968 = vst.msk [vmem:[%s172 + $0x160] sm:$0xff] %vm303, %v9840
      %9969 = vst.msk [vmem:[%s172 + $0x168] sm:$0xff] %vm303, %v9841
      %9970 = vst.msk [vmem:[%s172 + $0x170] sm:$0xff] %vm303, %v9842
      %9971 = vst.msk [vmem:[%s172 + $0x178] sm:$0xff] %vm303, %v9843
      %9972 = vst.msk [vmem:[%s172 + $0x180] sm:$0xff] %vm303, %v9844
      %9973 = vst.msk [vmem:[%s172 + $0x188] sm:$0xff] %vm303, %v9845
      %9974 = vst.msk [vmem:[%s172 + $0x190] sm:$0xff] %vm303, %v9846
      %9975 = vst.msk [vmem:[%s172 + $0x198] sm:$0xff] %vm303, %v9847
      %9976 = vst.msk [vmem:[%s172 + $0x1a0] sm:$0xff] %vm303, %v9848
      %9977 = vst.msk [vmem:[%s172 + $0x1a8] sm:$0xff] %vm303, %v9849
      %9978 = vst.msk [vmem:[%s172 + $0x1b0] sm:$0xff] %vm303, %v9850
      %9979 = vst.msk [vmem:[%s172 + $0x1b8] sm:$0xff] %vm303, %v9851
      %9980 = vst.msk [vmem:[%s172 + $0x1c0] sm:$0xff] %vm303, %v9852
      %9981 = vst.msk [vmem:[%s172 + $0x1c8] sm:$0xff] %vm303, %v9853
      %9982 = vst.msk [vmem:[%s172 + $0x1d0] sm:$0xff] %vm303, %v9854
      %9983 = vst.msk [vmem:[%s172 + $0x1d8] sm:$0xff] %vm303, %v9855
      %9984 = vst.msk [vmem:[%s172 + $0x1e0] sm:$0xff] %vm303, %v9856
      %9985 = vst.msk [vmem:[%s172 + $0x1e8] sm:$0xff] %vm303, %v9857
      %9986 = vst.msk [vmem:[%s172 + $0x1f0] sm:$0xff] %vm303, %v9858
      %9987 = vst.msk [vmem:[%s172 + $0x1f8] sm:$0xff] %vm303, %v9859
      %9988 = vst.msk [vmem:[%s172 + $0x200] sm:$0xff] %vm303, %v9860
      %9989 = vst.msk [vmem:[%s172 + $0x208] sm:$0xff] %vm303, %v9861
      %9990 = vst.msk [vmem:[%s172 + $0x210] sm:$0xff] %vm303, %v9862
      %9991 = vst.msk [vmem:[%s172 + $0x218] sm:$0xff] %vm303, %v9863
      %9992 = vst.msk [vmem:[%s172 + $0x220] sm:$0xff] %vm303, %v9864
      %9993 = vst.msk [vmem:[%s172 + $0x228] sm:$0xff] %vm303, %v9865
      %9994 = vst.msk [vmem:[%s172 + $0x230] sm:$0xff] %vm303, %v9866
      %9995 = vst.msk [vmem:[%s172 + $0x238] sm:$0xff] %vm303, %v9867
      %9996 = vst.msk [vmem:[%s172 + $0x240] sm:$0xff] %vm303, %v9868
      %9997 = vst.msk [vmem:[%s172 + $0x248] sm:$0xff] %vm303, %v9869
      %9998 = vst.msk [vmem:[%s172 + $0x250] sm:$0xff] %vm303, %v9870
      %9999 = vst.msk [vmem:[%s172 + $0x258] sm:$0xff] %vm303, %v9871
      %10000 = vst.msk [vmem:[%s172 + $0x260] sm:$0xff] %vm303, %v9872
      %10001 = vst.msk [vmem:[%s172 + $0x268] sm:$0xff] %vm303, %v9873
      %10002 = vst.msk [vmem:[%s172 + $0x270] sm:$0xff] %vm303, %v9874
      %10003 = vst.msk [vmem:[%s172 + $0x278] sm:$0xff] %vm303, %v9875
      %10004 = vst.msk [vmem:[%s172 + $0x280] sm:$0xff] %vm303, %v9876
      %10005 = vst.msk [vmem:[%s172 + $0x288] sm:$0xff] %vm303, %v9877
      %10006 = vst.msk [vmem:[%s172 + $0x290] sm:$0xff] %vm303, %v9878
      %10007 = vst.msk [vmem:[%s172 + $0x298] sm:$0xff] %vm303, %v9879
      %10008 = vst.msk [vmem:[%s172 + $0x2a0] sm:$0xff] %vm303, %v9880
      %10009 = vst.msk [vmem:[%s172 + $0x2a8] sm:$0xff] %vm303, %v9881
      %10010 = vst.msk [vmem:[%s172 + $0x2b0] sm:$0xff] %vm303, %v9882
      %10011 = vst.msk [vmem:[%s172 + $0x2b8] sm:$0xff] %vm303, %v9883
      %10012 = vst.msk [vmem:[%s172 + $0x2c0] sm:$0xff] %vm303, %v9884
      %10013 = vst.msk [vmem:[%s172 + $0x2c8] sm:$0xff] %vm303, %v9885
      %10014 = vst.msk [vmem:[%s172 + $0x2d0] sm:$0xff] %vm303, %v9886
      %10015 = vst.msk [vmem:[%s172 + $0x2d8] sm:$0xff] %vm303, %v9887
      %10016 = vst.msk [vmem:[%s172 + $0x2e0] sm:$0xff] %vm303, %v9888
      %10017 = vst.msk [vmem:[%s172 + $0x2e8] sm:$0xff] %vm303, %v9889
      %10018 = vst.msk [vmem:[%s172 + $0x2f0] sm:$0xff] %vm303, %v9890
      %10019 = vst.msk [vmem:[%s172 + $0x2f8] sm:$0xff] %vm303, %v9891
      %10020 = vst.msk [vmem:[%s172 + $0x300] sm:$0xff] %vm303, %v9892
      %10021 = vst.msk [vmem:[%s172 + $0x308] sm:$0xff] %vm303, %v9893
      %10022 = vst.msk [vmem:[%s172 + $0x310] sm:$0xff] %vm303, %v9894
      %10023 = vst.msk [vmem:[%s172 + $0x318] sm:$0xff] %vm303, %v9895
      %10024 = vst.msk [vmem:[%s172 + $0x320] sm:$0xff] %vm303, %v9896
      %10025 = vst.msk [vmem:[%s172 + $0x328] sm:$0xff] %vm303, %v9897
      %10026 = vst.msk [vmem:[%s172 + $0x330] sm:$0xff] %vm303, %v9898
      %10027 = vst.msk [vmem:[%s172 + $0x338] sm:$0xff] %vm303, %v9899
      %10028 = vst.msk [vmem:[%s172 + $0x340] sm:$0xff] %vm303, %v9900
      %10029 = vst.msk [vmem:[%s172 + $0x348] sm:$0xff] %vm303, %v9901
      %10030 = vst.msk [vmem:[%s172 + $0x350] sm:$0xff] %vm303, %v9902
      %10031 = vst.msk [vmem:[%s172 + $0x358] sm:$0xff] %vm303, %v9903
      %10032 = vst.msk [vmem:[%s172 + $0x360] sm:$0xff] %vm303, %v9904
      %10033 = vst.msk [vmem:[%s172 + $0x368] sm:$0xff] %vm303, %v9905
      %10034 = vst.msk [vmem:[%s172 + $0x370] sm:$0xff] %vm303, %v9906
      %10035 = vst.msk [vmem:[%s172 + $0x378] sm:$0xff] %vm303, %v9907
      %10036 = vst.msk [vmem:[%s172 + $0x380] sm:$0xff] %vm303, %v9908
      %10037 = vst.msk [vmem:[%s172 + $0x388] sm:$0xff] %vm303, %v9909
      %10038 = vst.msk [vmem:[%s172 + $0x390] sm:$0xff] %vm303, %v9910
      %10039 = vst.msk [vmem:[%s172 + $0x398] sm:$0xff] %vm303, %v9911
      %10040 = vst.msk [vmem:[%s172 + $0x3a0] sm:$0xff] %vm303, %v9912
      %10041 = vst.msk [vmem:[%s172 + $0x3a8] sm:$0xff] %vm303, %v9913
      %10042 = vst.msk [vmem:[%s172 + $0x3b0] sm:$0xff] %vm303, %v9914
      %10043 = vst.msk [vmem:[%s172 + $0x3b8] sm:$0xff] %vm303, %v9915
      %10044 = vst.msk [vmem:[%s172 + $0x3c0] sm:$0xff] %vm303, %v9916
      %10045 = vst.msk [vmem:[%s172 + $0x3c8] sm:$0xff] %vm303, %v9917
      %10046 = vst.msk [vmem:[%s172 + $0x3d0] sm:$0xff] %vm303, %v9918
      %10047 = vst.msk [vmem:[%s172 + $0x3d8] sm:$0xff] %vm303, %v9919
      %10048 = vst.msk [vmem:[%s172 + $0x3e0] sm:$0xff] %vm303, %v9920
      %10049 = vst.msk [vmem:[%s172 + $0x3e8] sm:$0xff] %vm303, %v9921
      %10050 = vst.msk [vmem:[%s172 + $0x3f0] sm:$0xff] %vm303, %v9922
      %10051 = vst.msk [vmem:[%s172 + $0x3f8] sm:$0xff] %vm303, %v9923
      %s10052 = smul.u32 128, %s14
      %p10053 = scmp.lt.s32.totalorder %s10052, 255
      %s10054 = scalar_select %p10053, %s10052, 255
      %s10055 = smul.addr %s10054, 8
      %s10056 = scalar_lea.vmem %s3, %s10055
      // Predicated region
      $region33: #{hcnn_forward.1} parent=31 // pred_check
        %p10057 = pneg %p100
      $region34: #{hcnn_forward.1} parent=31 // pred_check_branch
        %10059 = sbr.rel (%p10057) target = $region36
      $region35: #{hcnn_forward.1} parent=31 // pred_region
        %s10060 = smul.u32 128, %s14
      $region36: #{hcnn_forward.1} parent=31 // pred_fallthru
        _
    $region32: #{hcnn_forward.1} parent=5 // pred_fallthru
      _
    %p10061 = scmp.le.s32.totalorder 2, %s9
    // Predicated region
    $region37: #{hcnn_forward.1} parent=5 // pred_check
      %p10062 = pneg %p10061
    $region38: #{hcnn_forward.1} parent=5 // pred_check_branch
      %10064 = sbr.rel (%p10062) target = $region40
    $region39: #{hcnn_forward.1} parent=5 // pred_region
      %s10065 = ssub.s32 %s9, 2
      // Predicated region
      $region41: #{hcnn_forward.1} parent=39 // pred_check
        %p10066 = pneg %p106
      $region42: #{hcnn_forward.1} parent=39 // pred_check_branch
        %10068 = sbr.rel (%p10066) target = $region44
      $region43: #{hcnn_forward.1} parent=39 // pred_region
        %s10069 = smul.u32 128, %s15
        %p10070 = scmp.lt.s32.totalorder %s10069, 255
        %s10071 = scalar_select %p10070, %s10069, 255
        %s10072 = smul.addr %s10071, 8
        %s10073 = scalar_lea.vmem %s3, %s10072
      $region44: #{hcnn_forward.1} parent=39 // pred_fallthru
        _
    $region40: #{hcnn_forward.1} parent=5 // pred_fallthru
      _
  $region6: #{hcnn_forward.1} parent=0 // loop_footer
    %s13 = sadd.s32 1, %s9
  $region7: #{hcnn_forward.1} parent=0 // loop_footer_branch
    %8 = sbr.rel target = $region3
  $region8: #{hcnn_forward.1} parent=0 // loop_exit
    _

</llo_original>
